<compile_context>
chip_gen: v5e
topology: v5e:2x2
jax: 0.10.0
libtpu: 0.0.40
codegen_flags: <defaults>
</compile_context>

<pallas_src>
import jax
import jax.numpy as jnp
import numpy as np
from jax.experimental import pallas as pl
from jax.experimental.pallas import tpu as pltpu

H_BERT = 768      # BERT hidden size (fc1 input)
H_FC1 = 512       # fc1 output
N_CLS = 2         # fc3 output (num classes)
N_PAD = 128       # lane-dense padded class dim for fc3 / output
_LOGIT_PAD = -1e30


def _round_up(x, m):
    return ((x + m - 1) // m) * m


def _vmem_capacity_bytes():
    try:
        return int(pltpu.get_tpu_info().vmem_capacity_bytes)
    except Exception:
        return 64 << 20        # conservative fallback (v7x physical VMEM)


def _choose_tiles(B, S):
    """Pick (tb, ts, B_pad, S_pad, vmem_limit) from the device VMEM size."""
    vmem_cap = _vmem_capacity_bytes()
    vmem_limit = min((vmem_cap * 3) // 4, 100 << 20)   # ~48 MiB v7x, ~96 MiB v5e/v6e
    budget = (vmem_limit * 3) // 4                     # headroom for out blocks / internals

    # Batch tile: as large as possible (fills MXU rows in the head matmuls)
    # while keeping >= 2 batch-tile grid steps for megacore sharding.
    tb = _round_up(max(B // 2, 8), 8)
    tb = min(tb, 128, _round_up(B, 8))

    # Constant weights/biases, single-buffered (pl.Buffered(1)).
    weights = (H_BERT * H_BERT + H_BERT * H_FC1 + H_FC1 * N_PAD) * 2      # bf16
    weights += (8 * H_BERT + 8 * H_FC1 + 8 * N_PAD) * 4                   # biases, sublane-padded f32

    def blocks_bytes(tb_, ts_):
        emb_buf = tb_ * ts_ * H_BERT * 2          # bf16 emb tile, per buffer
        w_buf = tb_ * ts_ * 128 * 4               # [tb, ts, 1] f32 pads to 128 lanes
        fixed = weights + tb_ * H_BERT * 4 + 2 * tb_ * N_PAD * 4
        return fixed + 2 * (emb_buf + w_buf)      # double-buffered streams

    while tb > 8 and blocks_bytes(tb, 16) > budget:
        tb = max(8, _round_up(tb // 2, 8))
    B_pad = _round_up(B, tb)

    S16 = _round_up(S, 16)                        # bf16 sublane packing
    if blocks_bytes(tb, S16) <= budget:
        ts = S16                                  # collapse S: one streaming pass
    else:
        per_ts = 2 * tb * (H_BERT * 2 + 128 * 4)
        fixed = weights + tb * H_BERT * 4 + 2 * tb * N_PAD * 4
        ts = max(16, ((budget - fixed) // per_ts) // 16 * 16)
        ts = min(ts, S16)
    S_pad = _round_up(S, ts)
    return tb, ts, B_pad, S_pad, vmem_limit


def bert_arch_kernel(w_ref, emb_ref, wp_ref, bp_ref, w1_ref, b1_ref,
                     w3_ref, b3_ref, out_ref, acc_ref):
    s = pl.program_id(1)

    @pl.when(s == 0)
    def _init():
        acc_ref[...] = jnp.zeros_like(acc_ref)

    # Masked-mean pooling, accumulated in f32 across the (innermost,
    # "arbitrary") S grid axis.  w_ref holds mask/count pre-shaped [tb, ts, 1].
    emb = emb_ref[...].astype(jnp.float32)                    # [tb, ts, H]
    acc_ref[...] += jnp.sum(emb * w_ref[...], axis=1)         # [tb, H]

    @pl.when(s == pl.num_programs(1) - 1)
    def _finalize():
        seq_pool = acc_ref[...]                               # [tb, H] f32

        # Synthetic "bert" pooler: tanh(seq_pool @ Wp + bp) -> cls_hs.
        cls_hs = jnp.tanh(
            jnp.dot(seq_pool.astype(jnp.bfloat16), wp_ref[...],
                    preferred_element_type=jnp.float32) + bp_ref[...])

        # Classification head: fc1 -> ReLU -> Dropout(eval: identity) -> fc3.
        x = jnp.dot(cls_hs.astype(jnp.bfloat16), w1_ref[...],
                    preferred_element_type=jnp.float32) + b1_ref[...]
        x = jnp.maximum(x, 0.0)
        logits = jnp.dot(x.astype(jnp.bfloat16), w3_ref[...],
                         preferred_element_type=jnp.float32) + b3_ref[...]  # [tb, 128]

        # Padded class lanes carry a -1e30 bias (zero weight columns), so
        # they vanish from the log-softmax normalizer automatically.
        mx = jnp.max(logits, axis=-1, keepdims=True)
        shifted = logits - mx
        lse = jnp.log(jnp.sum(jnp.exp(shifted), axis=-1, keepdims=True))
        out_ref[...] = shifted - lse                          # lane-dense store


def prepare_head_params(wp, bp, w1, b1, w3, b3):
    """One-time (hoisted) weight prep: bf16 casts + fc3 lane padding."""
    w3p = jnp.zeros((H_FC1, N_PAD), jnp.bfloat16).at[:, :N_CLS].set(
        w3.astype(jnp.bfloat16))
    b3p = jnp.full((1, N_PAD), _LOGIT_PAD, jnp.float32).at[:, :N_CLS].set(
        b3.reshape(1, -1).astype(jnp.float32))
    return dict(
        wp=wp.astype(jnp.bfloat16), bp=bp.reshape(1, -1).astype(jnp.float32),
        w1=w1.astype(jnp.bfloat16), b1=b1.reshape(1, -1).astype(jnp.float32),
        w3=w3p, b3=b3p)


def bert_arch_forward(emb, mask, params):
    """emb: [B, S, 768] (bf16), mask: [B, S] int -> log-probs [B, 2] f32."""
    B, S, H = emb.shape
    assert H == H_BERT
    tb, ts, B_pad, S_pad, vmem_limit = _choose_tiles(B, S)

    if emb.dtype != jnp.bfloat16:           # avoided when upstream emits bf16
        emb = emb.astype(jnp.bfloat16)

    # Pre-normalized pooling weights, pre-shaped [B, S, 1] f32.
    m = mask.astype(jnp.float32)
    cnt = jnp.maximum(jnp.sum(m, axis=1, keepdims=True), 1.0)
    w_norm = (m / cnt)[..., None]

    if B_pad != B or S_pad != S:            # only hit for ragged shapes
        emb = jnp.pad(emb, ((0, B_pad - B), (0, S_pad - S), (0, 0)))
        w_norm = jnp.pad(w_norm, ((0, B_pad - B), (0, S_pad - S), (0, 0)))

    grid = (B_pad // tb, S_pad // ts)

    # Constant weight/bias blocks: fetched once, single-buffered.
    def wspec(shape):
        return pl.BlockSpec(shape, lambda i, s: (0,) * len(shape),
                            pipeline_mode=pl.Buffered(1))

    out_pad = pl.pallas_call(
        bert_arch_kernel,
        out_shape=jax.ShapeDtypeStruct((B_pad, N_PAD), jnp.float32),
        grid_spec=pltpu.PrefetchScalarGridSpec(
            num_scalar_prefetch=0,
            grid=grid,
            in_specs=[
                pl.BlockSpec((tb, ts, 1), lambda i, s: (i, s, 0)),      # pool w
                pl.BlockSpec((tb, ts, H_BERT), lambda i, s: (i, s, 0)),  # emb
                wspec((H_BERT, H_BERT)),                                 # pooler W
                wspec((1, H_BERT)),                                      # pooler b
                wspec((H_BERT, H_FC1)),                                  # fc1 W
                wspec((1, H_FC1)),                                       # fc1 b
                wspec((H_FC1, N_PAD)),                                   # fc3 W (padded)
                wspec((1, N_PAD)),                                       # fc3 b (padded)
            ],
            out_specs=pl.BlockSpec((tb, N_PAD), lambda i, s: (i, 0)),
            scratch_shapes=[pltpu.VMEM((tb, H_BERT), jnp.float32)],      # pool acc
        ),
        compiler_params=pltpu.CompilerParams(
            dimension_semantics=("parallel", "arbitrary"),
            vmem_limit_bytes=vmem_limit,
        ),
    )(w_norm, emb, params["wp"], params["bp"], params["w1"], params["b1"],
      params["w3"], params["b3"])

    return out_pad[:B, :N_CLS]


if __name__ == "__main__":
    B, S, VOCAB = 32, 64, 128

    key = jax.random.PRNGKey(0)
    k_emb, k_wp, k_w1, k_w3, k_ids, k_msk = jax.random.split(key, 6)

    # Embedding table stored in bf16 so the gathered activations arrive in the
    # kernel's streaming dtype (no wrapper-side full-tensor cast).
    embed_table = (jax.random.normal(k_emb, (VOCAB, H_BERT), jnp.float32)
                   * 0.02).astype(jnp.bfloat16)
    wp = jax.random.normal(k_wp, (H_BERT, H_BERT), jnp.float32) * 0.02
    bp = jnp.zeros((1, H_BERT), jnp.float32)
    w1 = jax.random.normal(k_w1, (H_BERT, H_FC1), jnp.float32) * 0.02
    b1 = jnp.zeros((1, H_FC1), jnp.float32)
    w3 = jax.random.normal(k_w3, (H_BERT // 1 * 0 + H_FC1, N_CLS), jnp.float32) * 0.02
    b3 = jnp.zeros((1, N_CLS), jnp.float32)

    # One-time, hoisted weight preparation (outside the forward path).
    params = prepare_head_params(wp, bp, w1, b1, w3, b3)

    # Inputs: sent_id (token ids) and attention mask, as in forward(sent_id, mask).
    sent_id = jax.random.randint(k_ids, (B, S), 0, VOCAB, dtype=jnp.int32)
    mask = (jax.random.uniform(k_msk, (B, S)) > 0.2).astype(jnp.int32)
    mask = mask.at[:, 0].set(1)     # keep at least one valid token per row

    # Glue: embedding lookup (gather) stays in plain JAX; emits bf16 directly.
    emb = embed_table[sent_id]                                  # [B, S, 768] bf16

    fwd = jax.jit(bert_arch_forward)
    out = jax.block_until_ready(fwd(emb, mask, params))
    assert out.shape == (B, N_CLS)

    # Plain-JAX reference mirroring the kernel's dtype cast points.
    m_f = mask.astype(jnp.float32)
    cnt = jnp.maximum(jnp.sum(m_f, axis=1, keepdims=True), 1.0)
    w_norm = (m_f / cnt)[..., None]
    seq_pool = jnp.sum(emb.astype(jnp.float32) * w_norm, axis=1)
    cls_hs = jnp.tanh(
        jnp.dot(seq_pool.astype(jnp.bfloat16), wp.astype(jnp.bfloat16),
                preferred_element_type=jnp.float32) + bp)
    x_ref = jnp.maximum(
        jnp.dot(cls_hs.astype(jnp.bfloat16), w1.astype(jnp.bfloat16),
                preferred_element_type=jnp.float32) + b1, 0.0)
    logits_ref = jnp.dot(x_ref.astype(jnp.bfloat16), w3.astype(jnp.bfloat16),
                         preferred_element_type=jnp.float32) + b3
    ref = jax.nn.log_softmax(logits_ref, axis=1)

    np.testing.assert_allclose(np.asarray(out), np.asarray(ref),
                               rtol=1e-2, atol=1e-2)

    print("KERNEL_OK")
</pallas_src>

<mosaic_0001>
module attributes {stable_mosaic.version = 11 : i64} {
  func.func @bert_arch_kernel(%arg0: i32, %arg1: i32, %arg2: memref<16x64x1xf32, #tpu.memory_space<vmem>>, %arg3: memref<16x64x768xbf16, #tpu.memory_space<vmem>>, %arg4: memref<768x768xbf16, #tpu.memory_space<vmem>>, %arg5: memref<1x768xf32, #tpu.memory_space<vmem>>, %arg6: memref<768x512xbf16, #tpu.memory_space<vmem>>, %arg7: memref<1x512xf32, #tpu.memory_space<vmem>>, %arg8: memref<512x128xbf16, #tpu.memory_space<vmem>>, %arg9: memref<1x128xf32, #tpu.memory_space<vmem>>, %arg10: memref<16x128xf32, #tpu.memory_space<vmem>>, %arg11: memref<16x768xf32, #tpu.memory_space<vmem>>) attributes {dimension_semantics = [#tpu.dimension_semantics<parallel>, #tpu.dimension_semantics<arbitrary>], iteration_bounds = array<i64: 2, 1>, scalar_prefetch = 0 : i64, scratch_operands = 1 : i64, tpu.core_type = #tpu.core_type<tc>, window_params = [{transform_indices = @transform_0, window_bounds = array<i64: 16, 64, 1>}, {transform_indices = @transform_1, window_bounds = array<i64: 16, 64, 768>}, {pipeline_mode = #tpu.pipeline_mode<synchronous>, transform_indices = @transform_2, window_bounds = array<i64: 768, 768>}, {pipeline_mode = #tpu.pipeline_mode<synchronous>, transform_indices = @transform_3, window_bounds = array<i64: 1, 768>}, {pipeline_mode = #tpu.pipeline_mode<synchronous>, transform_indices = @transform_4, window_bounds = array<i64: 768, 512>}, {pipeline_mode = #tpu.pipeline_mode<synchronous>, transform_indices = @transform_5, window_bounds = array<i64: 1, 512>}, {pipeline_mode = #tpu.pipeline_mode<synchronous>, transform_indices = @transform_6, window_bounds = array<i64: 512, 128>}, {pipeline_mode = #tpu.pipeline_mode<synchronous>, transform_indices = @transform_7, window_bounds = array<i64: 1, 128>}, {transform_indices = @transform_8, window_bounds = array<i64: 16, 128>}]} {
    %c0_i32 = arith.constant 0 : i32
    %0 = arith.cmpi eq, %arg1, %c0_i32 : i32
    %1 = arith.extui %0 : i1 to i32
    %c0_i32_0 = arith.constant 0 : i32
    %2 = arith.cmpi ne, %1, %c0_i32_0 : i32
    scf.if %2 {
      %cst_12 = arith.constant 0.000000e+00 : f32
      %15 = vector.broadcast %cst_12 : f32 to vector<16x768xf32>
      %c0_13 = arith.constant 0 : index
      %c0_14 = arith.constant 0 : index
      %16 = vector.load %arg11[%c0_13, %c0_14] : memref<16x768xf32, #tpu.memory_space<vmem>>, vector<16x768xf32>
      tpu.vector_store %arg11[%c0_13, %c0_14], %15 {strides = array<i32>} : memref<16x768xf32, #tpu.memory_space<vmem>>, vector<16x768xf32>,
    } else {
    }
    %c0 = arith.constant 0 : index
    %c0_1 = arith.constant 0 : index
    %c0_2 = arith.constant 0 : index
    %3 = vector.load %arg3[%c0, %c0_1, %c0_2] : memref<16x64x768xbf16, #tpu.memory_space<vmem>>, vector<16x64x768xbf16>
    %4 = arith.extf %3 : vector<16x64x768xbf16> to vector<16x64x768xf32>
    %c0_3 = arith.constant 0 : index
    %c0_4 = arith.constant 0 : index
    %5 = vector.load %arg11[%c0_3, %c0_4] : memref<16x768xf32, #tpu.memory_space<vmem>>, vector<16x768xf32>
    %c0_5 = arith.constant 0 : index
    %c0_6 = arith.constant 0 : index
    %c0_7 = arith.constant 0 : index
    %6 = vector.load %arg2[%c0_5, %c0_6, %c0_7] : memref<16x64x1xf32, #tpu.memory_space<vmem>>, vector<16x64x1xf32>
    %7 = vector.broadcast %6 : vector<16x64x1xf32> to vector<16x64x768xf32>
    %8 = arith.mulf %4, %7 : vector<16x64x768xf32>
    %cst = arith.constant dense<0.000000e+00> : vector<16x768xf32>
    %9 = vector.multi_reduction <add>, %8, %cst [1] : vector<16x64x768xf32> to vector<16x768xf32>
    %10 = arith.addf %5, %9 : vector<16x768xf32>
    %c0_8 = arith.constant 0 : index
    %c0_9 = arith.constant 0 : index
    %11 = vector.load %arg11[%c0_8, %c0_9] : memref<16x768xf32, #tpu.memory_space<vmem>>, vector<16x768xf32>
    tpu.vector_store %arg11[%c0_8, %c0_9], %10 {strides = array<i32>} : memref<16x768xf32, #tpu.memory_space<vmem>>, vector<16x768xf32>,
    %c0_i32_10 = arith.constant 0 : i32
    %12 = arith.cmpi eq, %arg1, %c0_i32_10 : i32
    %13 = arith.extui %12 : i1 to i32
    %c0_i32_11 = arith.constant 0 : i32
    %14 = arith.cmpi ne, %13, %c0_i32_11 : i32
    scf.if %14 {
      %c0_12 = arith.constant 0 : index
      %c0_13 = arith.constant 0 : index
      %15 = vector.load %arg11[%c0_12, %c0_13] : memref<16x768xf32, #tpu.memory_space<vmem>>, vector<16x768xf32>
      %16 = arith.truncf %15 : vector<16x768xf32> to vector<16x768xbf16>
      %c0_14 = arith.constant 0 : index
      %c0_15 = arith.constant 0 : index
      %17 = vector.load %arg4[%c0_14, %c0_15] : memref<768x768xbf16, #tpu.memory_space<vmem>>, vector<768x768xbf16>
      %cst_16 = arith.constant dense<0.000000e+00> : vector<16x768xf32>
      %18 = tpu.matmul %16, %17, %cst_16 {dimension_numbers = #tpu.dot_dimension_numbers<[1], [0], [0], [1], [0, 0, 1, 1], [], []>} : vector<16x768xbf16>, vector<768x768xbf16>, vector<16x768xf32> -> vector<16x768xf32>
      %c0_17 = arith.constant 0 : index
      %c0_18 = arith.constant 0 : index
      %19 = vector.load %arg5[%c0_17, %c0_18] : memref<1x768xf32, #tpu.memory_space<vmem>>, vector<1x768xf32>
      %20 = vector.broadcast %19 : vector<1x768xf32> to vector<16x768xf32>
      %21 = arith.addf %18, %20 : vector<16x768xf32>
      %22 = math.tanh %21 : vector<16x768xf32>
      %23 = arith.truncf %22 : vector<16x768xf32> to vector<16x768xbf16>
      %c0_19 = arith.constant 0 : index
      %c0_20 = arith.constant 0 : index
      %24 = vector.load %arg6[%c0_19, %c0_20] : memref<768x512xbf16, #tpu.memory_space<vmem>>, vector<768x512xbf16>
      %cst_21 = arith.constant dense<0.000000e+00> : vector<16x512xf32>
      %25 = tpu.matmul %23, %24, %cst_21 {dimension_numbers = #tpu.dot_dimension_numbers<[1], [0], [0], [1], [0, 0, 1, 1], [], []>} : vector<16x768xbf16>, vector<768x512xbf16>, vector<16x512xf32> -> vector<16x512xf32>
      %c0_22 = arith.constant 0 : index
      %c0_23 = arith.constant 0 : index
      %26 = vector.load %arg7[%c0_22, %c0_23] : memref<1x512xf32, #tpu.memory_space<vmem>>, vector<1x512xf32>
      %27 = vector.broadcast %26 : vector<1x512xf32> to vector<16x512xf32>
      %28 = arith.addf %25, %27 : vector<16x512xf32>
      %cst_24 = arith.constant 0.000000e+00 : f32
      %29 = vector.broadcast %cst_24 : f32 to vector<16x512xf32>
      %30 = arith.maximumf %28, %29 : vector<16x512xf32>
      %31 = arith.truncf %30 : vector<16x512xf32> to vector<16x512xbf16>
      %c0_25 = arith.constant 0 : index
      %c0_26 = arith.constant 0 : index
      %32 = vector.load %arg8[%c0_25, %c0_26] : memref<512x128xbf16, #tpu.memory_space<vmem>>, vector<512x128xbf16>
      %cst_27 = arith.constant dense<0.000000e+00> : vector<16x128xf32>
      %33 = tpu.matmul %31, %32, %cst_27 {dimension_numbers = #tpu.dot_dimension_numbers<[1], [0], [0], [1], [0, 0, 1, 1], [], []>} : vector<16x512xbf16>, vector<512x128xbf16>, vector<16x128xf32> -> vector<16x128xf32>
      %c0_28 = arith.constant 0 : index
      %c0_29 = arith.constant 0 : index
      %34 = vector.load %arg9[%c0_28, %c0_29] : memref<1x128xf32, #tpu.memory_space<vmem>>, vector<1x128xf32>
      %35 = vector.broadcast %34 : vector<1x128xf32> to vector<16x128xf32>
      %36 = arith.addf %33, %35 : vector<16x128xf32>
      %cst_30 = arith.constant dense<0xFF800000> : vector<16xf32>
      %37 = vector.multi_reduction <maximumf>, %36, %cst_30 [1] : vector<16x128xf32> to vector<16xf32>
      %38 = vector.shape_cast %37 : vector<16xf32> to vector<16x1xf32>
      %39 = vector.broadcast %38 : vector<16x1xf32> to vector<16x128xf32>
      %40 = arith.subf %36, %39 : vector<16x128xf32>
      %41 = math.exp %40 : vector<16x128xf32>
      %cst_31 = arith.constant dense<0.000000e+00> : vector<16xf32>
      %42 = vector.multi_reduction <add>, %41, %cst_31 [1] : vector<16x128xf32> to vector<16xf32>
      %43 = vector.shape_cast %42 : vector<16xf32> to vector<16x1xf32>
      %44 = math.log %43 : vector<16x1xf32>
      %45 = vector.broadcast %44 : vector<16x1xf32> to vector<16x128xf32>
      %46 = arith.subf %40, %45 : vector<16x128xf32>
      %c0_32 = arith.constant 0 : index
      %c0_33 = arith.constant 0 : index
      %47 = vector.load %arg10[%c0_32, %c0_33] : memref<16x128xf32, #tpu.memory_space<vmem>>, vector<16x128xf32>
      tpu.vector_store %arg10[%c0_32, %c0_33], %46 {strides = array<i32>} : memref<16x128xf32, #tpu.memory_space<vmem>>, vector<16x128xf32>,
    } else {
    }
    return
  }
  func.func @transform_0(%arg0: i32, %arg1: i32) -> (i32, i32, i32) {
    %c0_i32 = arith.constant 0 : i32
    %c0_i32_0 = arith.constant 0 : i32
    return %arg0, %arg1, %c0_i32 : i32, i32, i32
  }
  func.func @transform_1(%arg0: i32, %arg1: i32) -> (i32, i32, i32) {
    %c0_i32 = arith.constant 0 : i32
    %c0_i32_0 = arith.constant 0 : i32
    return %arg0, %arg1, %c0_i32 : i32, i32, i32
  }
  func.func @transform_2(%arg0: i32, %arg1: i32) -> (i32, i32) {
    %c0_i32 = arith.constant 0 : i32
    %c0_i32_0 = arith.constant 0 : i32
    %c0_i32_1 = arith.constant 0 : i32
    return %c0_i32, %c0_i32_0 : i32, i32
  }
  func.func @transform_3(%arg0: i32, %arg1: i32) -> (i32, i32) {
    %c0_i32 = arith.constant 0 : i32
    %c0_i32_0 = arith.constant 0 : i32
    %c0_i32_1 = arith.constant 0 : i32
    return %c0_i32, %c0_i32_0 : i32, i32
  }
  func.func @transform_4(%arg0: i32, %arg1: i32) -> (i32, i32) {
    %c0_i32 = arith.constant 0 : i32
    %c0_i32_0 = arith.constant 0 : i32
    %c0_i32_1 = arith.constant 0 : i32
    return %c0_i32, %c0_i32_0 : i32, i32
  }
  func.func @transform_5(%arg0: i32, %arg1: i32) -> (i32, i32) {
    %c0_i32 = arith.constant 0 : i32
    %c0_i32_0 = arith.constant 0 : i32
    %c0_i32_1 = arith.constant 0 : i32
    return %c0_i32, %c0_i32_0 : i32, i32
  }
  func.func @transform_6(%arg0: i32, %arg1: i32) -> (i32, i32) {
    %c0_i32 = arith.constant 0 : i32
    %c0_i32_0 = arith.constant 0 : i32
    %c0_i32_1 = arith.constant 0 : i32
    return %c0_i32, %c0_i32_0 : i32, i32
  }
  func.func @transform_7(%arg0: i32, %arg1: i32) -> (i32, i32) {
    %c0_i32 = arith.constant 0 : i32
    %c0_i32_0 = arith.constant 0 : i32
    %c0_i32_1 = arith.constant 0 : i32
    return %c0_i32, %c0_i32_0 : i32, i32
  }
  func.func @transform_8(%arg0: i32, %arg1: i32) -> (i32, i32) {
    %c0_i32 = arith.constant 0 : i32
    %c0_i32_0 = arith.constant 0 : i32
    return %arg0, %c0_i32 : i32, i32
  }
}

</mosaic_0001>

<llo_original>
// kernel: bert_arch_forward.1
$region0: #{bert_arch_forward.1}
  #allocation0 [shape = 'u32[]', space=smem, size = 0x4, offset = 0x4, fixed_abs, tag = 'smem constant byte address 0x4 - core index']
  #allocation1 [shape = 'u32[72,128]{1,0:T(1,128)}', space=vmem, size = 0x9000, scoped, tag = 'internal scratch']
  #allocation2 [shape = 'f32[16,768]{1,0:T(8,128)}', space=vmem, size = 0xc000, scoped, tag = 'scratch operand']
  %s0 = inlined_call_operand.vmem [shape: f32[32,64,1], index: 0, kind: input, shape index: {}]
  %s1 = inlined_call_operand.hbm [shape: bf16[32,64,768], index: 1, kind: input, shape index: {}]
  %s2 = inlined_call_operand.hbm [shape: bf16[768,768], index: 2, kind: input, shape index: {}]
  %s3 = inlined_call_operand.hbm [shape: f32[1,768], index: 3, kind: input, shape index: {}]
  %s4 = inlined_call_operand.hbm [shape: bf16[768,512], index: 4, kind: input, shape index: {}]
  %s5 = inlined_call_operand.hbm [shape: f32[1,512], index: 5, kind: input, shape index: {}]
  %s6 = inlined_call_operand.hbm [shape: bf16[512,128], index: 6, kind: input, shape index: {}]
  %s7 = inlined_call_operand.hbm [shape: f32[1,128], index: 7, kind: input, shape index: {}]
  %s8 = inlined_call_operand.vmem [shape: f32[32,128], index: 8, kind: output, shape index: {}]
  %s9 = sld [smem:[#allocation0]]
  $region101: #{bert_arch_forward.1} parent=0
    _
  %s11 = ssub.s32 1, %s9
  %s12 = scalar_select 0, %s11, %s9
  $region1: #{bert_arch_forward.1} parent=0
    #allocation3 [shape = 'u8[3145728]{0}', space=vmem, size = 0x300000, scoped, tag = 'input window, operand 1']
    #allocation4 [shape = 's32[2]{0}', space=sflag, size = 0x8, scoped, tag = 'scoped memory for bert_arch_forward.1']
    #allocation5 [shape = 'u8[1179648]{0}', space=vmem, size = 0x120000, scoped, tag = 'input window, operand 2, single buffered']
    #allocation6 [shape = 's32[1]{0}', space=sflag, size = 0x4, scoped, tag = 'scoped memory for bert_arch_forward.1']
    #allocation7 [shape = 'u8[3072]{0}', space=vmem, size = 0xc00, scoped, tag = 'input window, operand 3, single buffered']
    #allocation8 [shape = 'u8[786432]{0}', space=vmem, size = 0xc0000, scoped, tag = 'input window, operand 4, single buffered']
    #allocation9 [shape = 's32[1]{0}', space=sflag, size = 0x4, scoped, tag = 'scoped memory for bert_arch_forward.1']
    #allocation10 [shape = 'u8[2048]{0}', space=vmem, size = 0x800, scoped, tag = 'input window, operand 5, single buffered']
    #allocation11 [shape = 'u8[131072]{0}', space=vmem, size = 0x20000, scoped, tag = 'input window, operand 6, single buffered']
    #allocation12 [shape = 's32[1]{0}', space=sflag, size = 0x4, scoped, tag = 'scoped memory for bert_arch_forward.1']
    #allocation13 [shape = 'u8[512]{0}', space=vmem, size = 0x400, scoped, tag = 'input window, operand 7, single buffered']
    %13 = vsyncpa [#allocation4], 0
    %s14 = scalar_lea.sflag [#allocation4], 1
    %15 = vsyncpa %s14, 0
    %16 = vsyncpa [#allocation6], 0
    %17 = vsyncpa [#allocation9], 0
    %18 = vsyncpa [#allocation12], 0
    loop: start=0, step=1, limit=4
    $region2: #{bert_arch_forward.1} parent=1 // loop_pre_header
      _
    $region3: #{bert_arch_forward.1} parent=1 // loop_header
      %s20 = sphi 0, %s24
      %p21 = scmp.ge.s32.totalorder %s20, 4
      %s27 = sphi 0, %s39
      %s28 = sphi 0, %s35
      %s29 = sphi 0, %s27
      %s30 = sphi 0, %s28
      %s31 = sphi 0, %s29
      %s32 = sphi 0, %s30
      %s44 = sphi 0, %s46
      %s47 = sphi 0, %s44
      %s48 = sphi 0, %s47
      %s64 = sphi 0, %s48
      %s72 = sphi 0, %s74
      %s75 = sphi 0, %s72
      %s76 = sphi 0, %s75
      %s92 = sphi 0, %s76
      %s96 = sphi 0, %s96
      %s98 = sphi 0, %s96
      %s99 = sphi 0, %s98
      %s113 = sphi 0, %s99
      %s117 = sphi 0, %s117
      %s119 = sphi 0, %s117
      %s120 = sphi 0, %s119
      %s134 = sphi 0, %s120
      %s138 = sphi 0, %s138
      %s140 = sphi 0, %s138
      %s141 = sphi 0, %s140
      %s155 = sphi 0, %s141
      %s159 = sphi 0, %s159
      %s161 = sphi 0, %s159
      %s162 = sphi 0, %s161
      %s176 = sphi 0, %s162
      %s180 = sphi 0, %s180
      %s182 = sphi 0, %s180
      %s183 = sphi 0, %s182
      %s197 = sphi 0, %s183
      %s201 = sphi 0, %s201
      %s203 = sphi 0, %s201
      %s204 = sphi 0, %s203
      %s218 = sphi 0, %s204
      %s224 = sphi 0, %s226
      %s227 = sphi 0, %s224
      %s228 = sphi 0, %s227
      %s244 = sphi 0, %s228
    $region4: #{bert_arch_forward.1} parent=1 // loop_header_branch
      %23 = sbr.rel (%p21) target = $region8
    $region5: #{bert_arch_forward.1} parent=1 // loop_body
      %s25 = ssub.s32 %s20, 1
      %s26 = ssub.s32 %s20, 2
      %s33 = sadd.s32 1, %s28
      %p34 = scmp.ge.s32.totalorder %s33, 1
      %s35 = scalar_select %p34, 0, %s33
      %s36 = sadd.s32 1, %s27
      %s37 = scalar_select %p34, %s36, %s27
      %p38 = scmp.ge.s32.totalorder %s37, 2
      %s39 = scalar_select %p38, 0, %s37
      %s40 = ssub.s32 %s27, %s39
      %s41 = ssub.s32 %s28, %s35
      %s42 = sor.u32 %s40, %s41
      %p43 = scmp.eq.s32.totalorder %s42, 0
      %s45 = sadd.s32 %s44, 1
      %s46 = scalar_select %p43, %s44, %s45
      %p49 = pneg %p43
      %p50 = scmp.eq.s32.totalorder %s20, 1
      %p51 = por %p49, %p50
      %p52 = scmp.ne.s32.totalorder %s44, %s47
      %p53 = scmp.eq.s32.totalorder %s20, 0
      %p54 = por %p52, %p53
      %p55 = scmp.ne.s32.totalorder %s44, %s47
      %p56 = scmp.eq.s32.totalorder %s25, 1
      %p57 = por %p55, %p56
      %p58 = scmp.ne.s32.totalorder %s47, %s48
      %p59 = scmp.eq.s32.totalorder %s25, 0
      %p60 = por %p58, %p59
      %p61 = scmp.ne.s32.totalorder %s47, %s48
      %p62 = scmp.eq.s32.totalorder %s26, 1
      %p63 = por %p61, %p62
      %p65 = scmp.ne.s32.totalorder %s48, %s64
      %p66 = scmp.eq.s32.totalorder %s26, 0
      %p67 = por %p65, %p66
      %s68 = ssub.s32 %s27, %s39
      %s69 = ssub.s32 %s28, %s35
      %s70 = sor.u32 %s68, %s69
      %p71 = scmp.eq.s32.totalorder %s70, 0
      %s73 = sadd.s32 %s72, 1
      %s74 = scalar_select %p71, %s72, %s73
      %p77 = pneg %p71
      %p78 = scmp.eq.s32.totalorder %s20, 1
      %p79 = por %p77, %p78
      %p80 = scmp.ne.s32.totalorder %s72, %s75
      %p81 = scmp.eq.s32.totalorder %s20, 0
      %p82 = por %p80, %p81
      %p83 = scmp.ne.s32.totalorder %s72, %s75
      %p84 = scmp.eq.s32.totalorder %s25, 1
      %p85 = por %p83, %p84
      %p86 = scmp.ne.s32.totalorder %s75, %s76
      %p87 = scmp.eq.s32.totalorder %s25, 0
      %p88 = por %p86, %p87
      %p89 = scmp.ne.s32.totalorder %s75, %s76
      %p90 = scmp.eq.s32.totalorder %s26, 1
      %p91 = por %p89, %p90
      %p93 = scmp.ne.s32.totalorder %s76, %s92
      %p94 = scmp.eq.s32.totalorder %s26, 0
      %p95 = por %p93, %p94
      %s97 = sadd.s32 %s96, 1
      %p100 = scmp.eq.s32.totalorder %s20, 1
      %p101 = scmp.ne.s32.totalorder %s96, %s98
      %p102 = scmp.eq.s32.totalorder %s20, 0
      %p103 = por %p101, %p102
      %p104 = scmp.ne.s32.totalorder %s96, %s98
      %p105 = scmp.eq.s32.totalorder %s25, 1
      %p106 = por %p104, %p105
      %p107 = scmp.ne.s32.totalorder %s98, %s99
      %p108 = scmp.eq.s32.totalorder %s25, 0
      %p109 = por %p107, %p108
      %p110 = scmp.ne.s32.totalorder %s98, %s99
      %p111 = scmp.eq.s32.totalorder %s26, 1
      %p112 = por %p110, %p111
      %p114 = scmp.ne.s32.totalorder %s99, %s113
      %p115 = scmp.eq.s32.totalorder %s26, 0
      %p116 = por %p114, %p115
      %s118 = sadd.s32 %s117, 1
      %p121 = scmp.eq.s32.totalorder %s20, 1
      %p122 = scmp.ne.s32.totalorder %s117, %s119
      %p123 = scmp.eq.s32.totalorder %s20, 0
      %p124 = por %p122, %p123
      %p125 = scmp.ne.s32.totalorder %s117, %s119
      %p126 = scmp.eq.s32.totalorder %s25, 1
      %p127 = por %p125, %p126
      %p128 = scmp.ne.s32.totalorder %s119, %s120
      %p129 = scmp.eq.s32.totalorder %s25, 0
      %p130 = por %p128, %p129
      %p131 = scmp.ne.s32.totalorder %s119, %s120
      %p132 = scmp.eq.s32.totalorder %s26, 1
      %p133 = por %p131, %p132
      %p135 = scmp.ne.s32.totalorder %s120, %s134
      %p136 = scmp.eq.s32.totalorder %s26, 0
      %p137 = por %p135, %p136
      %s139 = sadd.s32 %s138, 1
      %p142 = scmp.eq.s32.totalorder %s20, 1
      %p143 = scmp.ne.s32.totalorder %s138, %s140
      %p144 = scmp.eq.s32.totalorder %s20, 0
      %p145 = por %p143, %p144
      %p146 = scmp.ne.s32.totalorder %s138, %s140
      %p147 = scmp.eq.s32.totalorder %s25, 1
      %p148 = por %p146, %p147
      %p149 = scmp.ne.s32.totalorder %s140, %s141
      %p150 = scmp.eq.s32.totalorder %s25, 0
      %p151 = por %p149, %p150
      %p152 = scmp.ne.s32.totalorder %s140, %s141
      %p153 = scmp.eq.s32.totalorder %s26, 1
      %p154 = por %p152, %p153
      %p156 = scmp.ne.s32.totalorder %s141, %s155
      %p157 = scmp.eq.s32.totalorder %s26, 0
      %p158 = por %p156, %p157
      %s160 = sadd.s32 %s159, 1
      %p163 = scmp.eq.s32.totalorder %s20, 1
      %p164 = scmp.ne.s32.totalorder %s159, %s161
      %p165 = scmp.eq.s32.totalorder %s20, 0
      %p166 = por %p164, %p165
      %p167 = scmp.ne.s32.totalorder %s159, %s161
      %p168 = scmp.eq.s32.totalorder %s25, 1
      %p169 = por %p167, %p168
      %p170 = scmp.ne.s32.totalorder %s161, %s162
      %p171 = scmp.eq.s32.totalorder %s25, 0
      %p172 = por %p170, %p171
      %p173 = scmp.ne.s32.totalorder %s161, %s162
      %p174 = scmp.eq.s32.totalorder %s26, 1
      %p175 = por %p173, %p174
      %p177 = scmp.ne.s32.totalorder %s162, %s176
      %p178 = scmp.eq.s32.totalorder %s26, 0
      %p179 = por %p177, %p178
      %s181 = sadd.s32 %s180, 1
      %p184 = scmp.eq.s32.totalorder %s20, 1
      %p185 = scmp.ne.s32.totalorder %s180, %s182
      %p186 = scmp.eq.s32.totalorder %s20, 0
      %p187 = por %p185, %p186
      %p188 = scmp.ne.s32.totalorder %s180, %s182
      %p189 = scmp.eq.s32.totalorder %s25, 1
      %p190 = por %p188, %p189
      %p191 = scmp.ne.s32.totalorder %s182, %s183
      %p192 = scmp.eq.s32.totalorder %s25, 0
      %p193 = por %p191, %p192
      %p194 = scmp.ne.s32.totalorder %s182, %s183
      %p195 = scmp.eq.s32.totalorder %s26, 1
      %p196 = por %p194, %p195
      %p198 = scmp.ne.s32.totalorder %s183, %s197
      %p199 = scmp.eq.s32.totalorder %s26, 0
      %p200 = por %p198, %p199
      %s202 = sadd.s32 %s201, 1
      %p205 = scmp.eq.s32.totalorder %s20, 1
      %p206 = scmp.ne.s32.totalorder %s201, %s203
      %p207 = scmp.eq.s32.totalorder %s20, 0
      %p208 = por %p206, %p207
      %p209 = scmp.ne.s32.totalorder %s201, %s203
      %p210 = scmp.eq.s32.totalorder %s25, 1
      %p211 = por %p209, %p210
      %p212 = scmp.ne.s32.totalorder %s203, %s204
      %p213 = scmp.eq.s32.totalorder %s25, 0
      %p214 = por %p212, %p213
      %p215 = scmp.ne.s32.totalorder %s203, %s204
      %p216 = scmp.eq.s32.totalorder %s26, 1
      %p217 = por %p215, %p216
      %p219 = scmp.ne.s32.totalorder %s204, %s218
      %p220 = scmp.eq.s32.totalorder %s26, 0
      %p221 = por %p219, %p220
      %s222 = ssub.s32 %s27, %s39
      %p223 = scmp.eq.s32.totalorder %s222, 0
      %s225 = sadd.s32 %s224, 1
      %s226 = scalar_select %p223, %s224, %s225
      %p229 = pneg %p223
      %p230 = scmp.eq.s32.totalorder %s20, 1
      %p231 = por %p229, %p230
      %p232 = scmp.ne.s32.totalorder %s224, %s227
      %p233 = scmp.eq.s32.totalorder %s20, 0
      %p234 = por %p232, %p233
      %p235 = scmp.ne.s32.totalorder %s224, %s227
      %p236 = scmp.eq.s32.totalorder %s25, 1
      %p237 = por %p235, %p236
      %p238 = scmp.ne.s32.totalorder %s227, %s228
      %p239 = scmp.eq.s32.totalorder %s25, 0
      %p240 = por %p238, %p239
      %p241 = scmp.ne.s32.totalorder %s227, %s228
      %p242 = scmp.eq.s32.totalorder %s26, 1
      %p243 = por %p241, %p242
      %p245 = scmp.ne.s32.totalorder %s228, %s244
      %p246 = scmp.eq.s32.totalorder %s26, 0
      %p247 = por %p245, %p246
      %p248 = scmp.le.s32.totalorder 1, %s20
      %p249 = scmp.lt.s32.totalorder %s20, 3
      %p250 = pnand %p248, %p249
      %p251 = pneg %p250
      // Predicated region
      $region9: #{bert_arch_forward.1} parent=5 // pred_check
        _
      $region10: #{bert_arch_forward.1} parent=5 // pred_check_branch
        %253 = sbr.rel (%p250) target = $region12
      $region11: #{bert_arch_forward.1} parent=5 // pred_region
        %s254 = ssub.s32 %s20, 1
        // Predicated region
        $region13: #{bert_arch_forward.1} parent=11 // pred_check
          %p255 = pneg %p109
        $region14: #{bert_arch_forward.1} parent=11 // pred_check_branch
          %257 = sbr.rel (%p255) target = $region16
        $region15: #{bert_arch_forward.1} parent=11 // pred_region
          %259 = vsyncadd [#allocation6], 0
          %s260 = sshll.u32 %s2, 4
          %s261 = int_to_ptr.hbm [resolvable:$true] %s260
          %s262 = sshll.u32 [#allocation5], 4
          %s263 = int_to_ptr.vmem [resolvable:$true] %s262
          %268 = dma.hbm_to_vmem [thread:$0]  %s261, 36864, %s263, [#allocation6], 384, 384, 24
        $region16: #{bert_arch_forward.1} parent=11 // pred_fallthru
          _
        // Predicated region
        $region17: #{bert_arch_forward.1} parent=11 // pred_check
          %p269 = pneg %p130
        $region18: #{bert_arch_forward.1} parent=11 // pred_check_branch
          %271 = sbr.rel (%p269) target = $region20
        $region19: #{bert_arch_forward.1} parent=11 // pred_region
          %273 = vsyncadd [#allocation6], 0
          %s275 = sshll.u32 %s3, 4
          %s276 = int_to_ptr.hbm [resolvable:$true] %s275
          %s277 = sshll.u32 [#allocation7], 4
          %s278 = int_to_ptr.vmem [resolvable:$true] %s277
          %280 = dma.hbm_to_vmem [thread:$0]  %s276, 96, %s278, [#allocation6]
        $region20: #{bert_arch_forward.1} parent=11 // pred_fallthru
          _
        // Predicated region
        $region21: #{bert_arch_forward.1} parent=11 // pred_check
          %p281 = pneg %p151
        $region22: #{bert_arch_forward.1} parent=11 // pred_check_branch
          %283 = sbr.rel (%p281) target = $region24
        $region23: #{bert_arch_forward.1} parent=11 // pred_region
          %285 = vsyncadd [#allocation9], 0
          %s286 = sshll.u32 %s4, 4
          %s287 = int_to_ptr.hbm [resolvable:$true] %s286
          %s288 = sshll.u32 [#allocation8], 4
          %s289 = int_to_ptr.vmem [resolvable:$true] %s288
          %294 = dma.hbm_to_vmem [thread:$0]  %s287, 24576, %s289, [#allocation9], 256, 256, 16
        $region24: #{bert_arch_forward.1} parent=11 // pred_fallthru
          _
        // Predicated region
        $region25: #{bert_arch_forward.1} parent=11 // pred_check
          %p295 = pneg %p172
        $region26: #{bert_arch_forward.1} parent=11 // pred_check_branch
          %297 = sbr.rel (%p295) target = $region28
        $region27: #{bert_arch_forward.1} parent=11 // pred_region
          %299 = vsyncadd [#allocation9], 0
          %s301 = sshll.u32 %s5, 4
          %s302 = int_to_ptr.hbm [resolvable:$true] %s301
          %s303 = sshll.u32 [#allocation10], 4
          %s304 = int_to_ptr.vmem [resolvable:$true] %s303
          %306 = dma.hbm_to_vmem [thread:$0]  %s302, 64, %s304, [#allocation9]
        $region28: #{bert_arch_forward.1} parent=11 // pred_fallthru
          _
        // Predicated region
        $region29: #{bert_arch_forward.1} parent=11 // pred_check
          %p307 = pneg %p193
        $region30: #{bert_arch_forward.1} parent=11 // pred_check_branch
          %309 = sbr.rel (%p307) target = $region32
        $region31: #{bert_arch_forward.1} parent=11 // pred_region
          %311 = vsyncadd [#allocation12], 0
          %s312 = sshll.u32 %s6, 4
          %s313 = int_to_ptr.hbm [resolvable:$true] %s312
          %s314 = sshll.u32 [#allocation11], 4
          %s315 = int_to_ptr.vmem [resolvable:$true] %s314
          %320 = dma.hbm_to_vmem [thread:$0]  %s313, 4096, %s315, [#allocation12], 64, 64, 4
        $region32: #{bert_arch_forward.1} parent=11 // pred_fallthru
          _
        // Predicated region
        $region33: #{bert_arch_forward.1} parent=11 // pred_check
          %p321 = pneg %p214
        $region34: #{bert_arch_forward.1} parent=11 // pred_check_branch
          %323 = sbr.rel (%p321) target = $region36
        $region35: #{bert_arch_forward.1} parent=11 // pred_region
          %325 = vsyncadd [#allocation12], 0
          %s327 = sshll.u32 %s7, 4
          %s328 = int_to_ptr.hbm [resolvable:$true] %s327
          %s329 = sshll.u32 [#allocation13], 4
          %s330 = int_to_ptr.vmem [resolvable:$true] %s329
          %332 = dma.hbm_to_vmem [thread:$0]  %s328, 16, %s330, [#allocation12]
        $region36: #{bert_arch_forward.1} parent=11 // pred_fallthru
          _
      $region12: #{bert_arch_forward.1} parent=5 // pred_fallthru
        _
      %p333 = scmp.lt.s32.totalorder %s20, 2
      // Predicated region
      $region37: #{bert_arch_forward.1} parent=5 // pred_check
        %p334 = pneg %p333
      $region38: #{bert_arch_forward.1} parent=5 // pred_check_branch
        %336 = sbr.rel (%p334) target = $region40
      $region39: #{bert_arch_forward.1} parent=5 // pred_region
        // Predicated region
        $region41: #{bert_arch_forward.1} parent=39 // pred_check
          %p337 = pneg %p54
        $region42: #{bert_arch_forward.1} parent=39 // pred_check_branch
          %339 = sbr.rel (%p337) target = $region44
        $region43: #{bert_arch_forward.1} parent=39 // pred_region
          %s340 = smul.u32 16, %s27
          %s341 = smul.u32 8, %s28
          %p342 = scmp.lt.s32.totalorder %s340, 31
          %s343 = scalar_select %p342, %s340, 31
          %p344 = scmp.lt.s32.totalorder %s341, 7
          %s345 = scalar_select %p344, %s341, 7
          %s346 = smul.addr %s343, 8
          %s347 = sadd.s32 %s345, %s346
          %s348 = smul.addr %s347, 8
          %s349 = scalar_lea.vmem %s0, %s348
          %s350 = smul.u32 16, %s27
          %s351 = smul.u32 8, %s28
        $region44: #{bert_arch_forward.1} parent=39 // pred_fallthru
          _
        // Predicated region
        $region45: #{bert_arch_forward.1} parent=39 // pred_check
          %p352 = pneg %p82
        $region46: #{bert_arch_forward.1} parent=39 // pred_check_branch
          %354 = sbr.rel (%p352) target = $region48
        $region47: #{bert_arch_forward.1} parent=39 // pred_region
          %s355 = sand.u32 %s72, 1
          %s356 = scalar_lea.sflag [#allocation4], %s355
          %s357 = sand.u32 %s72, 1
          %s358 = smul.addr %s357, 3072
          %s359 = scalar_lea.vmem [#allocation3], %s358
          %s360 = smul.u32 16, %s27
          %s361 = smul.u32 8, %s28
          %363 = vsyncadd %s356, 0
          %s364 = smul.addr %s361, 6
          %s365 = smul.addr %s360, 48
          %s366 = sadd.s32 %s364, %s365
          %s367 = smul.addr %s366, 4
          %s368 = scalar_lea.hbm %s1, %s367
          %s369 = sshll.u32 %s368, 4
          %s370 = int_to_ptr.hbm [resolvable:$true] %s369
          %s371 = sshll.u32 %s359, 4
          %s372 = int_to_ptr.vmem [resolvable:$true] %s371
          %377 = dma.hbm_to_vmem [thread:$0]  %s370, 49152, %s372, %s356, 384, 384, 24
        $region48: #{bert_arch_forward.1} parent=39 // pred_fallthru
          _
      $region40: #{bert_arch_forward.1} parent=5 // pred_fallthru
        _
      %p378 = scmp.le.s32.totalorder 1, %s20
      %p379 = scmp.lt.s32.totalorder %s20, 3
      %p380 = pnand %p378, %p379
      %p381 = pneg %p380
      // Predicated region
      $region49: #{bert_arch_forward.1} parent=5 // pred_check
        _
      $region50: #{bert_arch_forward.1} parent=5 // pred_check_branch
        %383 = sbr.rel (%p380) target = $region52
      $region51: #{bert_arch_forward.1} parent=5 // pred_region
        %s384 = ssub.s32 %s20, 1
        %s385 = sand.u32 %s75, 1
        %s386 = scalar_lea.sflag [#allocation4], %s385
        %s387 = sand.u32 %s75, 1
        %s388 = smul.addr %s387, 3072
        %s389 = scalar_lea.vmem [#allocation3], %s388
        // Predicated region
        $region53: #{bert_arch_forward.1} parent=51 // pred_check
          %p390 = pneg %p88
        $region54: #{bert_arch_forward.1} parent=51 // pred_check_branch
          %392 = sbr.rel (%p390) target = $region56
        $region55: #{bert_arch_forward.1} parent=51 // pred_region
          %394 = dma.done %s386, 49152
        $region56: #{bert_arch_forward.1} parent=51 // pred_fallthru
          _
        // Predicated region
        $region57: #{bert_arch_forward.1} parent=51 // pred_check
          %p395 = pneg %p109
        $region58: #{bert_arch_forward.1} parent=51 // pred_check_branch
          %397 = sbr.rel (%p395) target = $region60
        $region59: #{bert_arch_forward.1} parent=51 // pred_region
          %399 = dma.done [#allocation6], 36864
        $region60: #{bert_arch_forward.1} parent=51 // pred_fallthru
          _
        // Predicated region
        $region61: #{bert_arch_forward.1} parent=51 // pred_check
          %p400 = pneg %p130
        $region62: #{bert_arch_forward.1} parent=51 // pred_check_branch
          %402 = sbr.rel (%p400) target = $region64
        $region63: #{bert_arch_forward.1} parent=51 // pred_region
          %404 = dma.done [#allocation6], 96
        $region64: #{bert_arch_forward.1} parent=51 // pred_fallthru
          _
        // Predicated region
        $region65: #{bert_arch_forward.1} parent=51 // pred_check
          %p405 = pneg %p151
        $region66: #{bert_arch_forward.1} parent=51 // pred_check_branch
          %407 = sbr.rel (%p405) target = $region68
        $region67: #{bert_arch_forward.1} parent=51 // pred_region
          %409 = dma.done [#allocation9], 24576
        $region68: #{bert_arch_forward.1} parent=51 // pred_fallthru
          _
        // Predicated region
        $region69: #{bert_arch_forward.1} parent=51 // pred_check
          %p410 = pneg %p172
        $region70: #{bert_arch_forward.1} parent=51 // pred_check_branch
          %412 = sbr.rel (%p410) target = $region72
        $region71: #{bert_arch_forward.1} parent=51 // pred_region
          %414 = dma.done [#allocation9], 64
        $region72: #{bert_arch_forward.1} parent=51 // pred_fallthru
          _
        // Predicated region
        $region73: #{bert_arch_forward.1} parent=51 // pred_check
          %p415 = pneg %p193
        $region74: #{bert_arch_forward.1} parent=51 // pred_check_branch
          %417 = sbr.rel (%p415) target = $region76
        $region75: #{bert_arch_forward.1} parent=51 // pred_region
          %419 = dma.done [#allocation12], 4096
        $region76: #{bert_arch_forward.1} parent=51 // pred_fallthru
          _
        // Predicated region
        $region77: #{bert_arch_forward.1} parent=51 // pred_check
          %p420 = pneg %p214
        $region78: #{bert_arch_forward.1} parent=51 // pred_check_branch
          %422 = sbr.rel (%p420) target = $region80
        $region79: #{bert_arch_forward.1} parent=51 // pred_region
          %424 = dma.done [#allocation12], 16
        $region80: #{bert_arch_forward.1} parent=51 // pred_fallthru
          _
        %s425 = smul.u32 16, %s29
        %s426 = smul.u32 8, %s30
        %p427 = scmp.lt.s32.totalorder %s425, 31
        %s428 = scalar_select %p427, %s425, 31
        %p429 = scmp.lt.s32.totalorder %s426, 7
        %s430 = scalar_select %p429, %s426, 7
        %s431 = smul.addr %s428, 8
        %s432 = sadd.s32 %s430, %s431
        %s433 = smul.addr %s432, 8
        %s434 = scalar_lea.vmem %s0, %s433
        %p435 = pneg %p60
        %p436 = pneg %p57
        %s437 = sand.u32 %s75, 1
        %s438 = scalar_lea.sflag [#allocation4], %s437
        %s439 = sand.u32 %s75, 1
        %s440 = smul.addr %s439, 3072
        %s441 = scalar_lea.vmem [#allocation3], %s440
        %p442 = pneg %p88
        %p443 = pneg %p85
        %p444 = pneg %p109
        %p445 = pneg %p106
        %p446 = pneg %p130
        %p447 = pneg %p127
        %p448 = pneg %p151
        %p449 = pneg %p148
        %p450 = pneg %p172
        %p451 = pneg %p169
        %p452 = pneg %p193
        %p453 = pneg %p190
        %p454 = pneg %p214
        %p455 = pneg %p211
        %p456 = pneg %p240
        %p457 = pneg %p237
        %s458 = smul.u32 2, %s29
        %p459 = scmp.lt.s32.totalorder %s458, 3
        %s460 = scalar_select %p459, %s458, 3
        %s461 = smul.addr %s460, 8
        %s462 = scalar_lea.vmem %s8, %s461
        %s463 = smul.u32 16, %s29
        %s464 = smul.u32 8, %s30
        %p465 = scmp.lt.s32.totalorder %s463, 31
        %s466 = scalar_select %p465, %s463, 31
        %p467 = scmp.lt.s32.totalorder %s464, 7
        %s468 = scalar_select %p467, %s464, 7
        %s469 = smul.addr %s466, 8
        %s470 = sadd.s32 %s468, %s469
        %s471 = smul.addr %s470, 8
        %s472 = scalar_lea.vmem %s0, %s471
        %s473 = smul.u32 16, %s29
        %s474 = smul.u32 8, %s30
        %s475 = smul.u32 16, %s29
        %s476 = smul.u32 8, %s30
        %s477 = smul.u32 2, %s29
        %p478 = scmp.lt.s32.totalorder %s477, 3
        %s479 = scalar_select %p478, %s477, 3
        %s480 = smul.addr %s479, 8
        %s481 = scalar_lea.vmem %s8, %s480
        %s482 = smul.u32 2, %s29
        %p483 = scmp.eq.s32.totalorder %s30, 0
        // Predicated region
        $region81: #{bert_arch_forward.1} parent=51 // pred_check
          %p484 = pneg %p483
        $region82: #{bert_arch_forward.1} parent=51 // pred_check_branch
          %486 = sbr.rel (%p484) target = $region84
        $region83: #{bert_arch_forward.1} parent=51 // pred_region
          %487 = vst [vmem:[#allocation2] sm:$0xff] 0.0
          %488 = vst [vmem:[#allocation2 + $0x8] sm:$0xff] 0.0
          %489 = vst [vmem:[#allocation2 + $0x10] sm:$0xff] 0.0
          %490 = vst [vmem:[#allocation2 + $0x18] sm:$0xff] 0.0
          %491 = vst [vmem:[#allocation2 + $0x20] sm:$0xff] 0.0
          %492 = vst [vmem:[#allocation2 + $0x28] sm:$0xff] 0.0
          %493 = vst [vmem:[#allocation2 + $0x30] sm:$0xff] 0.0
          %494 = vst [vmem:[#allocation2 + $0x38] sm:$0xff] 0.0
          %495 = vst [vmem:[#allocation2 + $0x40] sm:$0xff] 0.0
          %496 = vst [vmem:[#allocation2 + $0x48] sm:$0xff] 0.0
          %497 = vst [vmem:[#allocation2 + $0x50] sm:$0xff] 0.0
          %498 = vst [vmem:[#allocation2 + $0x58] sm:$0xff] 0.0
        $region84: #{bert_arch_forward.1} parent=51 // pred_fallthru
          _
        %v499 = vld [vmem:[%s389] sm:$0xff]
        %v500 = vld [vmem:[%s389 + $0x8] sm:$0xff]
        %v501 = vld [vmem:[%s389 + $0x10] sm:$0xff]
        %v502 = vld [vmem:[%s389 + $0x18] sm:$0xff]
        %v503 = vld [vmem:[%s389 + $0x20] sm:$0xff]
        %v504 = vld [vmem:[%s389 + $0x28] sm:$0xff]
        %v505 = vld [vmem:[%s389 + $0x30] sm:$0xff]
        %v506 = vld [vmem:[%s389 + $0x38] sm:$0xff]
        %v507 = vld [vmem:[%s389 + $0x40] sm:$0xff]
        %v508 = vld [vmem:[%s389 + $0x48] sm:$0xff]
        %v509 = vld [vmem:[%s389 + $0x50] sm:$0xff]
        %v510 = vld [vmem:[%s389 + $0x58] sm:$0xff]
        %v511 = vld [vmem:[%s389 + $0x60] sm:$0xff]
        %v512 = vld [vmem:[%s389 + $0x68] sm:$0xff]
        %v513 = vld [vmem:[%s389 + $0x70] sm:$0xff]
        %v514 = vld [vmem:[%s389 + $0x78] sm:$0xff]
        %v515 = vld [vmem:[%s389 + $0x80] sm:$0xff]
        %v516 = vld [vmem:[%s389 + $0x88] sm:$0xff]
        %v517 = vld [vmem:[%s389 + $0x90] sm:$0xff]
        %v518 = vld [vmem:[%s389 + $0x98] sm:$0xff]
        %v519 = vld [vmem:[%s389 + $0xa0] sm:$0xff]
        %v520 = vld [vmem:[%s389 + $0xa8] sm:$0xff]
        %v521 = vld [vmem:[%s389 + $0xb0] sm:$0xff]
        %v522 = vld [vmem:[%s389 + $0xb8] sm:$0xff]
        %v523 = vld [vmem:[%s389 + $0xc0] sm:$0xff]
        %v524 = vld [vmem:[%s389 + $0xc8] sm:$0xff]
        %v525 = vld [vmem:[%s389 + $0xd0] sm:$0xff]
        %v526 = vld [vmem:[%s389 + $0xd8] sm:$0xff]
        %v527 = vld [vmem:[%s389 + $0xe0] sm:$0xff]
        %v528 = vld [vmem:[%s389 + $0xe8] sm:$0xff]
        %v529 = vld [vmem:[%s389 + $0xf0] sm:$0xff]
        %v530 = vld [vmem:[%s389 + $0xf8] sm:$0xff]
        %v531 = vld [vmem:[%s389 + $0x100] sm:$0xff]
        %v532 = vld [vmem:[%s389 + $0x108] sm:$0xff]
        %v533 = vld [vmem:[%s389 + $0x110] sm:$0xff]
        %v534 = vld [vmem:[%s389 + $0x118] sm:$0xff]
        %v535 = vld [vmem:[%s389 + $0x120] sm:$0xff]
        %v536 = vld [vmem:[%s389 + $0x128] sm:$0xff]
        %v537 = vld [vmem:[%s389 + $0x130] sm:$0xff]
        %v538 = vld [vmem:[%s389 + $0x138] sm:$0xff]
        %v539 = vld [vmem:[%s389 + $0x140] sm:$0xff]
        %v540 = vld [vmem:[%s389 + $0x148] sm:$0xff]
        %v541 = vld [vmem:[%s389 + $0x150] sm:$0xff]
        %v542 = vld [vmem:[%s389 + $0x158] sm:$0xff]
        %v543 = vld [vmem:[%s389 + $0x160] sm:$0xff]
        %v544 = vld [vmem:[%s389 + $0x168] sm:$0xff]
        %v545 = vld [vmem:[%s389 + $0x170] sm:$0xff]
        %v546 = vld [vmem:[%s389 + $0x178] sm:$0xff]
        %v547 = vld [vmem:[%s389 + $0x180] sm:$0xff]
        %v548 = vld [vmem:[%s389 + $0x188] sm:$0xff]
        %v549 = vld [vmem:[%s389 + $0x190] sm:$0xff]
        %v550 = vld [vmem:[%s389 + $0x198] sm:$0xff]
        %v551 = vld [vmem:[%s389 + $0x1a0] sm:$0xff]
        %v552 = vld [vmem:[%s389 + $0x1a8] sm:$0xff]
        %v553 = vld [vmem:[%s389 + $0x1b0] sm:$0xff]
        %v554 = vld [vmem:[%s389 + $0x1b8] sm:$0xff]
        %v555 = vld [vmem:[%s389 + $0x1c0] sm:$0xff]
        %v556 = vld [vmem:[%s389 + $0x1c8] sm:$0xff]
        %v557 = vld [vmem:[%s389 + $0x1d0] sm:$0xff]
        %v558 = vld [vmem:[%s389 + $0x1d8] sm:$0xff]
        %v559 = vld [vmem:[%s389 + $0x1e0] sm:$0xff]
        %v560 = vld [vmem:[%s389 + $0x1e8] sm:$0xff]
        %v561 = vld [vmem:[%s389 + $0x1f0] sm:$0xff]
        %v562 = vld [vmem:[%s389 + $0x1f8] sm:$0xff]
        %v563 = vld [vmem:[%s389 + $0x200] sm:$0xff]
        %v564 = vld [vmem:[%s389 + $0x208] sm:$0xff]
        %v565 = vld [vmem:[%s389 + $0x210] sm:$0xff]
        %v566 = vld [vmem:[%s389 + $0x218] sm:$0xff]
        %v567 = vld [vmem:[%s389 + $0x220] sm:$0xff]
        %v568 = vld [vmem:[%s389 + $0x228] sm:$0xff]
        %v569 = vld [vmem:[%s389 + $0x230] sm:$0xff]
        %v570 = vld [vmem:[%s389 + $0x238] sm:$0xff]
        %v571 = vld [vmem:[%s389 + $0x240] sm:$0xff]
        %v572 = vld [vmem:[%s389 + $0x248] sm:$0xff]
        %v573 = vld [vmem:[%s389 + $0x250] sm:$0xff]
        %v574 = vld [vmem:[%s389 + $0x258] sm:$0xff]
        %v575 = vld [vmem:[%s389 + $0x260] sm:$0xff]
        %v576 = vld [vmem:[%s389 + $0x268] sm:$0xff]
        %v577 = vld [vmem:[%s389 + $0x270] sm:$0xff]
        %v578 = vld [vmem:[%s389 + $0x278] sm:$0xff]
        %v579 = vld [vmem:[%s389 + $0x280] sm:$0xff]
        %v580 = vld [vmem:[%s389 + $0x288] sm:$0xff]
        %v581 = vld [vmem:[%s389 + $0x290] sm:$0xff]
        %v582 = vld [vmem:[%s389 + $0x298] sm:$0xff]
        %v583 = vld [vmem:[%s389 + $0x2a0] sm:$0xff]
        %v584 = vld [vmem:[%s389 + $0x2a8] sm:$0xff]
        %v585 = vld [vmem:[%s389 + $0x2b0] sm:$0xff]
        %v586 = vld [vmem:[%s389 + $0x2b8] sm:$0xff]
        %v587 = vld [vmem:[%s389 + $0x2c0] sm:$0xff]
        %v588 = vld [vmem:[%s389 + $0x2c8] sm:$0xff]
        %v589 = vld [vmem:[%s389 + $0x2d0] sm:$0xff]
        %v590 = vld [vmem:[%s389 + $0x2d8] sm:$0xff]
        %v591 = vld [vmem:[%s389 + $0x2e0] sm:$0xff]
        %v592 = vld [vmem:[%s389 + $0x2e8] sm:$0xff]
        %v593 = vld [vmem:[%s389 + $0x2f0] sm:$0xff]
        %v594 = vld [vmem:[%s389 + $0x2f8] sm:$0xff]
        %v595 = vld [vmem:[%s389 + $0x300] sm:$0xff]
        %v596 = vld [vmem:[%s389 + $0x308] sm:$0xff]
        %v597 = vld [vmem:[%s389 + $0x310] sm:$0xff]
        %v598 = vld [vmem:[%s389 + $0x318] sm:$0xff]
        %v599 = vld [vmem:[%s389 + $0x320] sm:$0xff]
        %v600 = vld [vmem:[%s389 + $0x328] sm:$0xff]
        %v601 = vld [vmem:[%s389 + $0x330] sm:$0xff]
        %v602 = vld [vmem:[%s389 + $0x338] sm:$0xff]
        %v603 = vld [vmem:[%s389 + $0x340] sm:$0xff]
        %v604 = vld [vmem:[%s389 + $0x348] sm:$0xff]
        %v605 = vld [vmem:[%s389 + $0x350] sm:$0xff]
        %v606 = vld [vmem:[%s389 + $0x358] sm:$0xff]
        %v607 = vld [vmem:[%s389 + $0x360] sm:$0xff]
        %v608 = vld [vmem:[%s389 + $0x368] sm:$0xff]
        %v609 = vld [vmem:[%s389 + $0x370] sm:$0xff]
        %v610 = vld [vmem:[%s389 + $0x378] sm:$0xff]
        %v611 = vld [vmem:[%s389 + $0x380] sm:$0xff]
        %v612 = vld [vmem:[%s389 + $0x388] sm:$0xff]
        %v613 = vld [vmem:[%s389 + $0x390] sm:$0xff]
        %v614 = vld [vmem:[%s389 + $0x398] sm:$0xff]
        %v615 = vld [vmem:[%s389 + $0x3a0] sm:$0xff]
        %v616 = vld [vmem:[%s389 + $0x3a8] sm:$0xff]
        %v617 = vld [vmem:[%s389 + $0x3b0] sm:$0xff]
        %v618 = vld [vmem:[%s389 + $0x3b8] sm:$0xff]
        %v619 = vld [vmem:[%s389 + $0x3c0] sm:$0xff]
        %v620 = vld [vmem:[%s389 + $0x3c8] sm:$0xff]
        %v621 = vld [vmem:[%s389 + $0x3d0] sm:$0xff]
        %v622 = vld [vmem:[%s389 + $0x3d8] sm:$0xff]
        %v623 = vld [vmem:[%s389 + $0x3e0] sm:$0xff]
        %v624 = vld [vmem:[%s389 + $0x3e8] sm:$0xff]
        %v625 = vld [vmem:[%s389 + $0x3f0] sm:$0xff]
        %v626 = vld [vmem:[%s389 + $0x3f8] sm:$0xff]
        %v627 = vld [vmem:[%s389 + $0x400] sm:$0xff]
        %v628 = vld [vmem:[%s389 + $0x408] sm:$0xff]
        %v629 = vld [vmem:[%s389 + $0x410] sm:$0xff]
        %v630 = vld [vmem:[%s389 + $0x418] sm:$0xff]
        %v631 = vld [vmem:[%s389 + $0x420] sm:$0xff]
        %v632 = vld [vmem:[%s389 + $0x428] sm:$0xff]
        %v633 = vld [vmem:[%s389 + $0x430] sm:$0xff]
        %v634 = vld [vmem:[%s389 + $0x438] sm:$0xff]
        %v635 = vld [vmem:[%s389 + $0x440] sm:$0xff]
        %v636 = vld [vmem:[%s389 + $0x448] sm:$0xff]
        %v637 = vld [vmem:[%s389 + $0x450] sm:$0xff]
        %v638 = vld [vmem:[%s389 + $0x458] sm:$0xff]
        %v639 = vld [vmem:[%s389 + $0x460] sm:$0xff]
        %v640 = vld [vmem:[%s389 + $0x468] sm:$0xff]
        %v641 = vld [vmem:[%s389 + $0x470] sm:$0xff]
        %v642 = vld [vmem:[%s389 + $0x478] sm:$0xff]
        %v643 = vld [vmem:[%s389 + $0x480] sm:$0xff]
        %v644 = vld [vmem:[%s389 + $0x488] sm:$0xff]
        %v645 = vld [vmem:[%s389 + $0x490] sm:$0xff]
        %v646 = vld [vmem:[%s389 + $0x498] sm:$0xff]
        %v647 = vld [vmem:[%s389 + $0x4a0] sm:$0xff]
        %v648 = vld [vmem:[%s389 + $0x4a8] sm:$0xff]
        %v649 = vld [vmem:[%s389 + $0x4b0] sm:$0xff]
        %v650 = vld [vmem:[%s389 + $0x4b8] sm:$0xff]
        %v651 = vld [vmem:[%s389 + $0x4c0] sm:$0xff]
        %v652 = vld [vmem:[%s389 + $0x4c8] sm:$0xff]
        %v653 = vld [vmem:[%s389 + $0x4d0] sm:$0xff]
        %v654 = vld [vmem:[%s389 + $0x4d8] sm:$0xff]
        %v655 = vld [vmem:[%s389 + $0x4e0] sm:$0xff]
        %v656 = vld [vmem:[%s389 + $0x4e8] sm:$0xff]
        %v657 = vld [vmem:[%s389 + $0x4f0] sm:$0xff]
        %v658 = vld [vmem:[%s389 + $0x4f8] sm:$0xff]
        %v659 = vld [vmem:[%s389 + $0x500] sm:$0xff]
        %v660 = vld [vmem:[%s389 + $0x508] sm:$0xff]
        %v661 = vld [vmem:[%s389 + $0x510] sm:$0xff]
        %v662 = vld [vmem:[%s389 + $0x518] sm:$0xff]
        %v663 = vld [vmem:[%s389 + $0x520] sm:$0xff]
        %v664 = vld [vmem:[%s389 + $0x528] sm:$0xff]
        %v665 = vld [vmem:[%s389 + $0x530] sm:$0xff]
        %v666 = vld [vmem:[%s389 + $0x538] sm:$0xff]
        %v667 = vld [vmem:[%s389 + $0x540] sm:$0xff]
        %v668 = vld [vmem:[%s389 + $0x548] sm:$0xff]
        %v669 = vld [vmem:[%s389 + $0x550] sm:$0xff]
        %v670 = vld [vmem:[%s389 + $0x558] sm:$0xff]
        %v671 = vld [vmem:[%s389 + $0x560] sm:$0xff]
        %v672 = vld [vmem:[%s389 + $0x568] sm:$0xff]
        %v673 = vld [vmem:[%s389 + $0x570] sm:$0xff]
        %v674 = vld [vmem:[%s389 + $0x578] sm:$0xff]
        %v675 = vld [vmem:[%s389 + $0x580] sm:$0xff]
        %v676 = vld [vmem:[%s389 + $0x588] sm:$0xff]
        %v677 = vld [vmem:[%s389 + $0x590] sm:$0xff]
        %v678 = vld [vmem:[%s389 + $0x598] sm:$0xff]
        %v679 = vld [vmem:[%s389 + $0x5a0] sm:$0xff]
        %v680 = vld [vmem:[%s389 + $0x5a8] sm:$0xff]
        %v681 = vld [vmem:[%s389 + $0x5b0] sm:$0xff]
        %v682 = vld [vmem:[%s389 + $0x5b8] sm:$0xff]
        %v683 = vld [vmem:[%s389 + $0x5c0] sm:$0xff]
        %v684 = vld [vmem:[%s389 + $0x5c8] sm:$0xff]
        %v685 = vld [vmem:[%s389 + $0x5d0] sm:$0xff]
        %v686 = vld [vmem:[%s389 + $0x5d8] sm:$0xff]
        %v687 = vld [vmem:[%s389 + $0x5e0] sm:$0xff]
        %v688 = vld [vmem:[%s389 + $0x5e8] sm:$0xff]
        %v689 = vld [vmem:[%s389 + $0x5f0] sm:$0xff]
        %v690 = vld [vmem:[%s389 + $0x5f8] sm:$0xff]
        %v691 = vld [vmem:[%s389 + $0x600] sm:$0xff]
        %v692 = vld [vmem:[%s389 + $0x608] sm:$0xff]
        %v693 = vld [vmem:[%s389 + $0x610] sm:$0xff]
        %v694 = vld [vmem:[%s389 + $0x618] sm:$0xff]
        %v695 = vld [vmem:[%s389 + $0x620] sm:$0xff]
        %v696 = vld [vmem:[%s389 + $0x628] sm:$0xff]
        %v697 = vld [vmem:[%s389 + $0x630] sm:$0xff]
        %v698 = vld [vmem:[%s389 + $0x638] sm:$0xff]
        %v699 = vld [vmem:[%s389 + $0x640] sm:$0xff]
        %v700 = vld [vmem:[%s389 + $0x648] sm:$0xff]
        %v701 = vld [vmem:[%s389 + $0x650] sm:$0xff]
        %v702 = vld [vmem:[%s389 + $0x658] sm:$0xff]
        %v703 = vld [vmem:[%s389 + $0x660] sm:$0xff]
        %v704 = vld [vmem:[%s389 + $0x668] sm:$0xff]
        %v705 = vld [vmem:[%s389 + $0x670] sm:$0xff]
        %v706 = vld [vmem:[%s389 + $0x678] sm:$0xff]
        %v707 = vld [vmem:[%s389 + $0x680] sm:$0xff]
        %v708 = vld [vmem:[%s389 + $0x688] sm:$0xff]
        %v709 = vld [vmem:[%s389 + $0x690] sm:$0xff]
        %v710 = vld [vmem:[%s389 + $0x698] sm:$0xff]
        %v711 = vld [vmem:[%s389 + $0x6a0] sm:$0xff]
        %v712 = vld [vmem:[%s389 + $0x6a8] sm:$0xff]
        %v713 = vld [vmem:[%s389 + $0x6b0] sm:$0xff]
        %v714 = vld [vmem:[%s389 + $0x6b8] sm:$0xff]
        %v715 = vld [vmem:[%s389 + $0x6c0] sm:$0xff]
        %v716 = vld [vmem:[%s389 + $0x6c8] sm:$0xff]
        %v717 = vld [vmem:[%s389 + $0x6d0] sm:$0xff]
        %v718 = vld [vmem:[%s389 + $0x6d8] sm:$0xff]
        %v719 = vld [vmem:[%s389 + $0x6e0] sm:$0xff]
        %v720 = vld [vmem:[%s389 + $0x6e8] sm:$0xff]
        %v721 = vld [vmem:[%s389 + $0x6f0] sm:$0xff]
        %v722 = vld [vmem:[%s389 + $0x6f8] sm:$0xff]
        %v723 = vld [vmem:[%s389 + $0x700] sm:$0xff]
        %v724 = vld [vmem:[%s389 + $0x708] sm:$0xff]
        %v725 = vld [vmem:[%s389 + $0x710] sm:$0xff]
        %v726 = vld [vmem:[%s389 + $0x718] sm:$0xff]
        %v727 = vld [vmem:[%s389 + $0x720] sm:$0xff]
        %v728 = vld [vmem:[%s389 + $0x728] sm:$0xff]
        %v729 = vld [vmem:[%s389 + $0x730] sm:$0xff]
        %v730 = vld [vmem:[%s389 + $0x738] sm:$0xff]
        %v731 = vld [vmem:[%s389 + $0x740] sm:$0xff]
        %v732 = vld [vmem:[%s389 + $0x748] sm:$0xff]
        %v733 = vld [vmem:[%s389 + $0x750] sm:$0xff]
        %v734 = vld [vmem:[%s389 + $0x758] sm:$0xff]
        %v735 = vld [vmem:[%s389 + $0x760] sm:$0xff]
        %v736 = vld [vmem:[%s389 + $0x768] sm:$0xff]
        %v737 = vld [vmem:[%s389 + $0x770] sm:$0xff]
        %v738 = vld [vmem:[%s389 + $0x778] sm:$0xff]
        %v739 = vld [vmem:[%s389 + $0x780] sm:$0xff]
        %v740 = vld [vmem:[%s389 + $0x788] sm:$0xff]
        %v741 = vld [vmem:[%s389 + $0x790] sm:$0xff]
        %v742 = vld [vmem:[%s389 + $0x798] sm:$0xff]
        %v743 = vld [vmem:[%s389 + $0x7a0] sm:$0xff]
        %v744 = vld [vmem:[%s389 + $0x7a8] sm:$0xff]
        %v745 = vld [vmem:[%s389 + $0x7b0] sm:$0xff]
        %v746 = vld [vmem:[%s389 + $0x7b8] sm:$0xff]
        %v747 = vld [vmem:[%s389 + $0x7c0] sm:$0xff]
        %v748 = vld [vmem:[%s389 + $0x7c8] sm:$0xff]
        %v749 = vld [vmem:[%s389 + $0x7d0] sm:$0xff]
        %v750 = vld [vmem:[%s389 + $0x7d8] sm:$0xff]
        %v751 = vld [vmem:[%s389 + $0x7e0] sm:$0xff]
        %v752 = vld [vmem:[%s389 + $0x7e8] sm:$0xff]
        %v753 = vld [vmem:[%s389 + $0x7f0] sm:$0xff]
        %v754 = vld [vmem:[%s389 + $0x7f8] sm:$0xff]
        %v755 = vld [vmem:[%s389 + $0x800] sm:$0xff]
        %v756 = vld [vmem:[%s389 + $0x808] sm:$0xff]
        %v757 = vld [vmem:[%s389 + $0x810] sm:$0xff]
        %v758 = vld [vmem:[%s389 + $0x818] sm:$0xff]
        %v759 = vld [vmem:[%s389 + $0x820] sm:$0xff]
        %v760 = vld [vmem:[%s389 + $0x828] sm:$0xff]
        %v761 = vld [vmem:[%s389 + $0x830] sm:$0xff]
        %v762 = vld [vmem:[%s389 + $0x838] sm:$0xff]
        %v763 = vld [vmem:[%s389 + $0x840] sm:$0xff]
        %v764 = vld [vmem:[%s389 + $0x848] sm:$0xff]
        %v765 = vld [vmem:[%s389 + $0x850] sm:$0xff]
        %v766 = vld [vmem:[%s389 + $0x858] sm:$0xff]
        %v767 = vld [vmem:[%s389 + $0x860] sm:$0xff]
        %v768 = vld [vmem:[%s389 + $0x868] sm:$0xff]
        %v769 = vld [vmem:[%s389 + $0x870] sm:$0xff]
        %v770 = vld [vmem:[%s389 + $0x878] sm:$0xff]
        %v771 = vld [vmem:[%s389 + $0x880] sm:$0xff]
        %v772 = vld [vmem:[%s389 + $0x888] sm:$0xff]
        %v773 = vld [vmem:[%s389 + $0x890] sm:$0xff]
        %v774 = vld [vmem:[%s389 + $0x898] sm:$0xff]
        %v775 = vld [vmem:[%s389 + $0x8a0] sm:$0xff]
        %v776 = vld [vmem:[%s389 + $0x8a8] sm:$0xff]
        %v777 = vld [vmem:[%s389 + $0x8b0] sm:$0xff]
        %v778 = vld [vmem:[%s389 + $0x8b8] sm:$0xff]
        %v779 = vld [vmem:[%s389 + $0x8c0] sm:$0xff]
        %v780 = vld [vmem:[%s389 + $0x8c8] sm:$0xff]
        %v781 = vld [vmem:[%s389 + $0x8d0] sm:$0xff]
        %v782 = vld [vmem:[%s389 + $0x8d8] sm:$0xff]
        %v783 = vld [vmem:[%s389 + $0x8e0] sm:$0xff]
        %v784 = vld [vmem:[%s389 + $0x8e8] sm:$0xff]
        %v785 = vld [vmem:[%s389 + $0x8f0] sm:$0xff]
        %v786 = vld [vmem:[%s389 + $0x8f8] sm:$0xff]
        %v787 = vld [vmem:[%s389 + $0x900] sm:$0xff]
        %v788 = vld [vmem:[%s389 + $0x908] sm:$0xff]
        %v789 = vld [vmem:[%s389 + $0x910] sm:$0xff]
        %v790 = vld [vmem:[%s389 + $0x918] sm:$0xff]
        %v791 = vld [vmem:[%s389 + $0x920] sm:$0xff]
        %v792 = vld [vmem:[%s389 + $0x928] sm:$0xff]
        %v793 = vld [vmem:[%s389 + $0x930] sm:$0xff]
        %v794 = vld [vmem:[%s389 + $0x938] sm:$0xff]
        %v795 = vld [vmem:[%s389 + $0x940] sm:$0xff]
        %v796 = vld [vmem:[%s389 + $0x948] sm:$0xff]
        %v797 = vld [vmem:[%s389 + $0x950] sm:$0xff]
        %v798 = vld [vmem:[%s389 + $0x958] sm:$0xff]
        %v799 = vld [vmem:[%s389 + $0x960] sm:$0xff]
        %v800 = vld [vmem:[%s389 + $0x968] sm:$0xff]
        %v801 = vld [vmem:[%s389 + $0x970] sm:$0xff]
        %v802 = vld [vmem:[%s389 + $0x978] sm:$0xff]
        %v803 = vld [vmem:[%s389 + $0x980] sm:$0xff]
        %v804 = vld [vmem:[%s389 + $0x988] sm:$0xff]
        %v805 = vld [vmem:[%s389 + $0x990] sm:$0xff]
        %v806 = vld [vmem:[%s389 + $0x998] sm:$0xff]
        %v807 = vld [vmem:[%s389 + $0x9a0] sm:$0xff]
        %v808 = vld [vmem:[%s389 + $0x9a8] sm:$0xff]
        %v809 = vld [vmem:[%s389 + $0x9b0] sm:$0xff]
        %v810 = vld [vmem:[%s389 + $0x9b8] sm:$0xff]
        %v811 = vld [vmem:[%s389 + $0x9c0] sm:$0xff]
        %v812 = vld [vmem:[%s389 + $0x9c8] sm:$0xff]
        %v813 = vld [vmem:[%s389 + $0x9d0] sm:$0xff]
        %v814 = vld [vmem:[%s389 + $0x9d8] sm:$0xff]
        %v815 = vld [vmem:[%s389 + $0x9e0] sm:$0xff]
        %v816 = vld [vmem:[%s389 + $0x9e8] sm:$0xff]
        %v817 = vld [vmem:[%s389 + $0x9f0] sm:$0xff]
        %v818 = vld [vmem:[%s389 + $0x9f8] sm:$0xff]
        %v819 = vld [vmem:[%s389 + $0xa00] sm:$0xff]
        %v820 = vld [vmem:[%s389 + $0xa08] sm:$0xff]
        %v821 = vld [vmem:[%s389 + $0xa10] sm:$0xff]
        %v822 = vld [vmem:[%s389 + $0xa18] sm:$0xff]
        %v823 = vld [vmem:[%s389 + $0xa20] sm:$0xff]
        %v824 = vld [vmem:[%s389 + $0xa28] sm:$0xff]
        %v825 = vld [vmem:[%s389 + $0xa30] sm:$0xff]
        %v826 = vld [vmem:[%s389 + $0xa38] sm:$0xff]
        %v827 = vld [vmem:[%s389 + $0xa40] sm:$0xff]
        %v828 = vld [vmem:[%s389 + $0xa48] sm:$0xff]
        %v829 = vld [vmem:[%s389 + $0xa50] sm:$0xff]
        %v830 = vld [vmem:[%s389 + $0xa58] sm:$0xff]
        %v831 = vld [vmem:[%s389 + $0xa60] sm:$0xff]
        %v832 = vld [vmem:[%s389 + $0xa68] sm:$0xff]
        %v833 = vld [vmem:[%s389 + $0xa70] sm:$0xff]
        %v834 = vld [vmem:[%s389 + $0xa78] sm:$0xff]
        %v835 = vld [vmem:[%s389 + $0xa80] sm:$0xff]
        %v836 = vld [vmem:[%s389 + $0xa88] sm:$0xff]
        %v837 = vld [vmem:[%s389 + $0xa90] sm:$0xff]
        %v838 = vld [vmem:[%s389 + $0xa98] sm:$0xff]
        %v839 = vld [vmem:[%s389 + $0xaa0] sm:$0xff]
        %v840 = vld [vmem:[%s389 + $0xaa8] sm:$0xff]
        %v841 = vld [vmem:[%s389 + $0xab0] sm:$0xff]
        %v842 = vld [vmem:[%s389 + $0xab8] sm:$0xff]
        %v843 = vld [vmem:[%s389 + $0xac0] sm:$0xff]
        %v844 = vld [vmem:[%s389 + $0xac8] sm:$0xff]
        %v845 = vld [vmem:[%s389 + $0xad0] sm:$0xff]
        %v846 = vld [vmem:[%s389 + $0xad8] sm:$0xff]
        %v847 = vld [vmem:[%s389 + $0xae0] sm:$0xff]
        %v848 = vld [vmem:[%s389 + $0xae8] sm:$0xff]
        %v849 = vld [vmem:[%s389 + $0xaf0] sm:$0xff]
        %v850 = vld [vmem:[%s389 + $0xaf8] sm:$0xff]
        %v851 = vld [vmem:[%s389 + $0xb00] sm:$0xff]
        %v852 = vld [vmem:[%s389 + $0xb08] sm:$0xff]
        %v853 = vld [vmem:[%s389 + $0xb10] sm:$0xff]
        %v854 = vld [vmem:[%s389 + $0xb18] sm:$0xff]
        %v855 = vld [vmem:[%s389 + $0xb20] sm:$0xff]
        %v856 = vld [vmem:[%s389 + $0xb28] sm:$0xff]
        %v857 = vld [vmem:[%s389 + $0xb30] sm:$0xff]
        %v858 = vld [vmem:[%s389 + $0xb38] sm:$0xff]
        %v859 = vld [vmem:[%s389 + $0xb40] sm:$0xff]
        %v860 = vld [vmem:[%s389 + $0xb48] sm:$0xff]
        %v861 = vld [vmem:[%s389 + $0xb50] sm:$0xff]
        %v862 = vld [vmem:[%s389 + $0xb58] sm:$0xff]
        %v863 = vld [vmem:[%s389 + $0xb60] sm:$0xff]
        %v864 = vld [vmem:[%s389 + $0xb68] sm:$0xff]
        %v865 = vld [vmem:[%s389 + $0xb70] sm:$0xff]
        %v866 = vld [vmem:[%s389 + $0xb78] sm:$0xff]
        %v867 = vld [vmem:[%s389 + $0xb80] sm:$0xff]
        %v868 = vld [vmem:[%s389 + $0xb88] sm:$0xff]
        %v869 = vld [vmem:[%s389 + $0xb90] sm:$0xff]
        %v870 = vld [vmem:[%s389 + $0xb98] sm:$0xff]
        %v871 = vld [vmem:[%s389 + $0xba0] sm:$0xff]
        %v872 = vld [vmem:[%s389 + $0xba8] sm:$0xff]
        %v873 = vld [vmem:[%s389 + $0xbb0] sm:$0xff]
        %v874 = vld [vmem:[%s389 + $0xbb8] sm:$0xff]
        %v875 = vld [vmem:[%s389 + $0xbc0] sm:$0xff]
        %v876 = vld [vmem:[%s389 + $0xbc8] sm:$0xff]
        %v877 = vld [vmem:[%s389 + $0xbd0] sm:$0xff]
        %v878 = vld [vmem:[%s389 + $0xbd8] sm:$0xff]
        %v879 = vld [vmem:[%s389 + $0xbe0] sm:$0xff]
        %v880 = vld [vmem:[%s389 + $0xbe8] sm:$0xff]
        %v881 = vld [vmem:[%s389 + $0xbf0] sm:$0xff]
        %v882 = vld [vmem:[%s389 + $0xbf8] sm:$0xff]
        %v883 = vunpack.c.l.bf16 %v499
        %v884 = vunpack.c.h.bf16 %v499
        %v885 = vunpack.c.l.bf16 %v500
        %v886 = vunpack.c.h.bf16 %v500
        %v887 = vunpack.c.l.bf16 %v501
        %v888 = vunpack.c.h.bf16 %v501
        %v889 = vunpack.c.l.bf16 %v502
        %v890 = vunpack.c.h.bf16 %v502
        %v891 = vunpack.c.l.bf16 %v503
        %v892 = vunpack.c.h.bf16 %v503
        %v893 = vunpack.c.l.bf16 %v504
        %v894 = vunpack.c.h.bf16 %v504
        %v895 = vunpack.c.l.bf16 %v505
        %v896 = vunpack.c.h.bf16 %v505
        %v897 = vunpack.c.l.bf16 %v506
        %v898 = vunpack.c.h.bf16 %v506
        %v899 = vunpack.c.l.bf16 %v507
        %v900 = vunpack.c.h.bf16 %v507
        %v901 = vunpack.c.l.bf16 %v508
        %v902 = vunpack.c.h.bf16 %v508
        %v903 = vunpack.c.l.bf16 %v509
        %v904 = vunpack.c.h.bf16 %v509
        %v905 = vunpack.c.l.bf16 %v510
        %v906 = vunpack.c.h.bf16 %v510
        %v907 = vunpack.c.l.bf16 %v511
        %v908 = vunpack.c.h.bf16 %v511
        %v909 = vunpack.c.l.bf16 %v512
        %v910 = vunpack.c.h.bf16 %v512
        %v911 = vunpack.c.l.bf16 %v513
        %v912 = vunpack.c.h.bf16 %v513
        %v913 = vunpack.c.l.bf16 %v514
        %v914 = vunpack.c.h.bf16 %v514
        %v915 = vunpack.c.l.bf16 %v515
        %v916 = vunpack.c.h.bf16 %v515
        %v917 = vunpack.c.l.bf16 %v516
        %v918 = vunpack.c.h.bf16 %v516
        %v919 = vunpack.c.l.bf16 %v517
        %v920 = vunpack.c.h.bf16 %v517
        %v921 = vunpack.c.l.bf16 %v518
        %v922 = vunpack.c.h.bf16 %v518
        %v923 = vunpack.c.l.bf16 %v519
        %v924 = vunpack.c.h.bf16 %v519
        %v925 = vunpack.c.l.bf16 %v520
        %v926 = vunpack.c.h.bf16 %v520
        %v927 = vunpack.c.l.bf16 %v521
        %v928 = vunpack.c.h.bf16 %v521
        %v929 = vunpack.c.l.bf16 %v522
        %v930 = vunpack.c.h.bf16 %v522
        %v931 = vunpack.c.l.bf16 %v523
        %v932 = vunpack.c.h.bf16 %v523
        %v933 = vunpack.c.l.bf16 %v524
        %v934 = vunpack.c.h.bf16 %v524
        %v935 = vunpack.c.l.bf16 %v525
        %v936 = vunpack.c.h.bf16 %v525
        %v937 = vunpack.c.l.bf16 %v526
        %v938 = vunpack.c.h.bf16 %v526
        %v939 = vunpack.c.l.bf16 %v527
        %v940 = vunpack.c.h.bf16 %v527
        %v941 = vunpack.c.l.bf16 %v528
        %v942 = vunpack.c.h.bf16 %v528
        %v943 = vunpack.c.l.bf16 %v529
        %v944 = vunpack.c.h.bf16 %v529
        %v945 = vunpack.c.l.bf16 %v530
        %v946 = vunpack.c.h.bf16 %v530
        %v947 = vunpack.c.l.bf16 %v531
        %v948 = vunpack.c.h.bf16 %v531
        %v949 = vunpack.c.l.bf16 %v532
        %v950 = vunpack.c.h.bf16 %v532
        %v951 = vunpack.c.l.bf16 %v533
        %v952 = vunpack.c.h.bf16 %v533
        %v953 = vunpack.c.l.bf16 %v534
        %v954 = vunpack.c.h.bf16 %v534
        %v955 = vunpack.c.l.bf16 %v535
        %v956 = vunpack.c.h.bf16 %v535
        %v957 = vunpack.c.l.bf16 %v536
        %v958 = vunpack.c.h.bf16 %v536
        %v959 = vunpack.c.l.bf16 %v537
        %v960 = vunpack.c.h.bf16 %v537
        %v961 = vunpack.c.l.bf16 %v538
        %v962 = vunpack.c.h.bf16 %v538
        %v963 = vunpack.c.l.bf16 %v539
        %v964 = vunpack.c.h.bf16 %v539
        %v965 = vunpack.c.l.bf16 %v540
        %v966 = vunpack.c.h.bf16 %v540
        %v967 = vunpack.c.l.bf16 %v541
        %v968 = vunpack.c.h.bf16 %v541
        %v969 = vunpack.c.l.bf16 %v542
        %v970 = vunpack.c.h.bf16 %v542
        %v971 = vunpack.c.l.bf16 %v543
        %v972 = vunpack.c.h.bf16 %v543
        %v973 = vunpack.c.l.bf16 %v544
        %v974 = vunpack.c.h.bf16 %v544
        %v975 = vunpack.c.l.bf16 %v545
        %v976 = vunpack.c.h.bf16 %v545
        %v977 = vunpack.c.l.bf16 %v546
        %v978 = vunpack.c.h.bf16 %v546
        %v979 = vunpack.c.l.bf16 %v547
        %v980 = vunpack.c.h.bf16 %v547
        %v981 = vunpack.c.l.bf16 %v548
        %v982 = vunpack.c.h.bf16 %v548
        %v983 = vunpack.c.l.bf16 %v549
        %v984 = vunpack.c.h.bf16 %v549
        %v985 = vunpack.c.l.bf16 %v550
        %v986 = vunpack.c.h.bf16 %v550
        %v987 = vunpack.c.l.bf16 %v551
        %v988 = vunpack.c.h.bf16 %v551
        %v989 = vunpack.c.l.bf16 %v552
        %v990 = vunpack.c.h.bf16 %v552
        %v991 = vunpack.c.l.bf16 %v553
        %v992 = vunpack.c.h.bf16 %v553
        %v993 = vunpack.c.l.bf16 %v554
        %v994 = vunpack.c.h.bf16 %v554
        %v995 = vunpack.c.l.bf16 %v555
        %v996 = vunpack.c.h.bf16 %v555
        %v997 = vunpack.c.l.bf16 %v556
        %v998 = vunpack.c.h.bf16 %v556
        %v999 = vunpack.c.l.bf16 %v557
        %v1000 = vunpack.c.h.bf16 %v557
        %v1001 = vunpack.c.l.bf16 %v558
        %v1002 = vunpack.c.h.bf16 %v558
        %v1003 = vunpack.c.l.bf16 %v559
        %v1004 = vunpack.c.h.bf16 %v559
        %v1005 = vunpack.c.l.bf16 %v560
        %v1006 = vunpack.c.h.bf16 %v560
        %v1007 = vunpack.c.l.bf16 %v561
        %v1008 = vunpack.c.h.bf16 %v561
        %v1009 = vunpack.c.l.bf16 %v562
        %v1010 = vunpack.c.h.bf16 %v562
        %v1011 = vunpack.c.l.bf16 %v563
        %v1012 = vunpack.c.h.bf16 %v563
        %v1013 = vunpack.c.l.bf16 %v564
        %v1014 = vunpack.c.h.bf16 %v564
        %v1015 = vunpack.c.l.bf16 %v565
        %v1016 = vunpack.c.h.bf16 %v565
        %v1017 = vunpack.c.l.bf16 %v566
        %v1018 = vunpack.c.h.bf16 %v566
        %v1019 = vunpack.c.l.bf16 %v567
        %v1020 = vunpack.c.h.bf16 %v567
        %v1021 = vunpack.c.l.bf16 %v568
        %v1022 = vunpack.c.h.bf16 %v568
        %v1023 = vunpack.c.l.bf16 %v569
        %v1024 = vunpack.c.h.bf16 %v569
        %v1025 = vunpack.c.l.bf16 %v570
        %v1026 = vunpack.c.h.bf16 %v570
        %v1027 = vunpack.c.l.bf16 %v571
        %v1028 = vunpack.c.h.bf16 %v571
        %v1029 = vunpack.c.l.bf16 %v572
        %v1030 = vunpack.c.h.bf16 %v572
        %v1031 = vunpack.c.l.bf16 %v573
        %v1032 = vunpack.c.h.bf16 %v573
        %v1033 = vunpack.c.l.bf16 %v574
        %v1034 = vunpack.c.h.bf16 %v574
        %v1035 = vunpack.c.l.bf16 %v575
        %v1036 = vunpack.c.h.bf16 %v575
        %v1037 = vunpack.c.l.bf16 %v576
        %v1038 = vunpack.c.h.bf16 %v576
        %v1039 = vunpack.c.l.bf16 %v577
        %v1040 = vunpack.c.h.bf16 %v577
        %v1041 = vunpack.c.l.bf16 %v578
        %v1042 = vunpack.c.h.bf16 %v578
        %v1043 = vunpack.c.l.bf16 %v579
        %v1044 = vunpack.c.h.bf16 %v579
        %v1045 = vunpack.c.l.bf16 %v580
        %v1046 = vunpack.c.h.bf16 %v580
        %v1047 = vunpack.c.l.bf16 %v581
        %v1048 = vunpack.c.h.bf16 %v581
        %v1049 = vunpack.c.l.bf16 %v582
        %v1050 = vunpack.c.h.bf16 %v582
        %v1051 = vunpack.c.l.bf16 %v583
        %v1052 = vunpack.c.h.bf16 %v583
        %v1053 = vunpack.c.l.bf16 %v584
        %v1054 = vunpack.c.h.bf16 %v584
        %v1055 = vunpack.c.l.bf16 %v585
        %v1056 = vunpack.c.h.bf16 %v585
        %v1057 = vunpack.c.l.bf16 %v586
        %v1058 = vunpack.c.h.bf16 %v586
        %v1059 = vunpack.c.l.bf16 %v587
        %v1060 = vunpack.c.h.bf16 %v587
        %v1061 = vunpack.c.l.bf16 %v588
        %v1062 = vunpack.c.h.bf16 %v588
        %v1063 = vunpack.c.l.bf16 %v589
        %v1064 = vunpack.c.h.bf16 %v589
        %v1065 = vunpack.c.l.bf16 %v590
        %v1066 = vunpack.c.h.bf16 %v590
        %v1067 = vunpack.c.l.bf16 %v591
        %v1068 = vunpack.c.h.bf16 %v591
        %v1069 = vunpack.c.l.bf16 %v592
        %v1070 = vunpack.c.h.bf16 %v592
        %v1071 = vunpack.c.l.bf16 %v593
        %v1072 = vunpack.c.h.bf16 %v593
        %v1073 = vunpack.c.l.bf16 %v594
        %v1074 = vunpack.c.h.bf16 %v594
        %v1075 = vunpack.c.l.bf16 %v595
        %v1076 = vunpack.c.h.bf16 %v595
        %v1077 = vunpack.c.l.bf16 %v596
        %v1078 = vunpack.c.h.bf16 %v596
        %v1079 = vunpack.c.l.bf16 %v597
        %v1080 = vunpack.c.h.bf16 %v597
        %v1081 = vunpack.c.l.bf16 %v598
        %v1082 = vunpack.c.h.bf16 %v598
        %v1083 = vunpack.c.l.bf16 %v599
        %v1084 = vunpack.c.h.bf16 %v599
        %v1085 = vunpack.c.l.bf16 %v600
        %v1086 = vunpack.c.h.bf16 %v600
        %v1087 = vunpack.c.l.bf16 %v601
        %v1088 = vunpack.c.h.bf16 %v601
        %v1089 = vunpack.c.l.bf16 %v602
        %v1090 = vunpack.c.h.bf16 %v602
        %v1091 = vunpack.c.l.bf16 %v603
        %v1092 = vunpack.c.h.bf16 %v603
        %v1093 = vunpack.c.l.bf16 %v604
        %v1094 = vunpack.c.h.bf16 %v604
        %v1095 = vunpack.c.l.bf16 %v605
        %v1096 = vunpack.c.h.bf16 %v605
        %v1097 = vunpack.c.l.bf16 %v606
        %v1098 = vunpack.c.h.bf16 %v606
        %v1099 = vunpack.c.l.bf16 %v607
        %v1100 = vunpack.c.h.bf16 %v607
        %v1101 = vunpack.c.l.bf16 %v608
        %v1102 = vunpack.c.h.bf16 %v608
        %v1103 = vunpack.c.l.bf16 %v609
        %v1104 = vunpack.c.h.bf16 %v609
        %v1105 = vunpack.c.l.bf16 %v610
        %v1106 = vunpack.c.h.bf16 %v610
        %v1107 = vunpack.c.l.bf16 %v611
        %v1108 = vunpack.c.h.bf16 %v611
        %v1109 = vunpack.c.l.bf16 %v612
        %v1110 = vunpack.c.h.bf16 %v612
        %v1111 = vunpack.c.l.bf16 %v613
        %v1112 = vunpack.c.h.bf16 %v613
        %v1113 = vunpack.c.l.bf16 %v614
        %v1114 = vunpack.c.h.bf16 %v614
        %v1115 = vunpack.c.l.bf16 %v615
        %v1116 = vunpack.c.h.bf16 %v615
        %v1117 = vunpack.c.l.bf16 %v616
        %v1118 = vunpack.c.h.bf16 %v616
        %v1119 = vunpack.c.l.bf16 %v617
        %v1120 = vunpack.c.h.bf16 %v617
        %v1121 = vunpack.c.l.bf16 %v618
        %v1122 = vunpack.c.h.bf16 %v618
        %v1123 = vunpack.c.l.bf16 %v619
        %v1124 = vunpack.c.h.bf16 %v619
        %v1125 = vunpack.c.l.bf16 %v620
        %v1126 = vunpack.c.h.bf16 %v620
        %v1127 = vunpack.c.l.bf16 %v621
        %v1128 = vunpack.c.h.bf16 %v621
        %v1129 = vunpack.c.l.bf16 %v622
        %v1130 = vunpack.c.h.bf16 %v622
        %v1131 = vunpack.c.l.bf16 %v623
        %v1132 = vunpack.c.h.bf16 %v623
        %v1133 = vunpack.c.l.bf16 %v624
        %v1134 = vunpack.c.h.bf16 %v624
        %v1135 = vunpack.c.l.bf16 %v625
        %v1136 = vunpack.c.h.bf16 %v625
        %v1137 = vunpack.c.l.bf16 %v626
        %v1138 = vunpack.c.h.bf16 %v626
        %v1139 = vunpack.c.l.bf16 %v627
        %v1140 = vunpack.c.h.bf16 %v627
        %v1141 = vunpack.c.l.bf16 %v628
        %v1142 = vunpack.c.h.bf16 %v628
        %v1143 = vunpack.c.l.bf16 %v629
        %v1144 = vunpack.c.h.bf16 %v629
        %v1145 = vunpack.c.l.bf16 %v630
        %v1146 = vunpack.c.h.bf16 %v630
        %v1147 = vunpack.c.l.bf16 %v631
        %v1148 = vunpack.c.h.bf16 %v631
        %v1149 = vunpack.c.l.bf16 %v632
        %v1150 = vunpack.c.h.bf16 %v632
        %v1151 = vunpack.c.l.bf16 %v633
        %v1152 = vunpack.c.h.bf16 %v633
        %v1153 = vunpack.c.l.bf16 %v634
        %v1154 = vunpack.c.h.bf16 %v634
        %v1155 = vunpack.c.l.bf16 %v635
        %v1156 = vunpack.c.h.bf16 %v635
        %v1157 = vunpack.c.l.bf16 %v636
        %v1158 = vunpack.c.h.bf16 %v636
        %v1159 = vunpack.c.l.bf16 %v637
        %v1160 = vunpack.c.h.bf16 %v637
        %v1161 = vunpack.c.l.bf16 %v638
        %v1162 = vunpack.c.h.bf16 %v638
        %v1163 = vunpack.c.l.bf16 %v639
        %v1164 = vunpack.c.h.bf16 %v639
        %v1165 = vunpack.c.l.bf16 %v640
        %v1166 = vunpack.c.h.bf16 %v640
        %v1167 = vunpack.c.l.bf16 %v641
        %v1168 = vunpack.c.h.bf16 %v641
        %v1169 = vunpack.c.l.bf16 %v642
        %v1170 = vunpack.c.h.bf16 %v642
        %v1171 = vunpack.c.l.bf16 %v643
        %v1172 = vunpack.c.h.bf16 %v643
        %v1173 = vunpack.c.l.bf16 %v644
        %v1174 = vunpack.c.h.bf16 %v644
        %v1175 = vunpack.c.l.bf16 %v645
        %v1176 = vunpack.c.h.bf16 %v645
        %v1177 = vunpack.c.l.bf16 %v646
        %v1178 = vunpack.c.h.bf16 %v646
        %v1179 = vunpack.c.l.bf16 %v647
        %v1180 = vunpack.c.h.bf16 %v647
        %v1181 = vunpack.c.l.bf16 %v648
        %v1182 = vunpack.c.h.bf16 %v648
        %v1183 = vunpack.c.l.bf16 %v649
        %v1184 = vunpack.c.h.bf16 %v649
        %v1185 = vunpack.c.l.bf16 %v650
        %v1186 = vunpack.c.h.bf16 %v650
        %v1187 = vunpack.c.l.bf16 %v651
        %v1188 = vunpack.c.h.bf16 %v651
        %v1189 = vunpack.c.l.bf16 %v652
        %v1190 = vunpack.c.h.bf16 %v652
        %v1191 = vunpack.c.l.bf16 %v653
        %v1192 = vunpack.c.h.bf16 %v653
        %v1193 = vunpack.c.l.bf16 %v654
        %v1194 = vunpack.c.h.bf16 %v654
        %v1195 = vunpack.c.l.bf16 %v655
        %v1196 = vunpack.c.h.bf16 %v655
        %v1197 = vunpack.c.l.bf16 %v656
        %v1198 = vunpack.c.h.bf16 %v656
        %v1199 = vunpack.c.l.bf16 %v657
        %v1200 = vunpack.c.h.bf16 %v657
        %v1201 = vunpack.c.l.bf16 %v658
        %v1202 = vunpack.c.h.bf16 %v658
        %v1203 = vunpack.c.l.bf16 %v659
        %v1204 = vunpack.c.h.bf16 %v659
        %v1205 = vunpack.c.l.bf16 %v660
        %v1206 = vunpack.c.h.bf16 %v660
        %v1207 = vunpack.c.l.bf16 %v661
        %v1208 = vunpack.c.h.bf16 %v661
        %v1209 = vunpack.c.l.bf16 %v662
        %v1210 = vunpack.c.h.bf16 %v662
        %v1211 = vunpack.c.l.bf16 %v663
        %v1212 = vunpack.c.h.bf16 %v663
        %v1213 = vunpack.c.l.bf16 %v664
        %v1214 = vunpack.c.h.bf16 %v664
        %v1215 = vunpack.c.l.bf16 %v665
        %v1216 = vunpack.c.h.bf16 %v665
        %v1217 = vunpack.c.l.bf16 %v666
        %v1218 = vunpack.c.h.bf16 %v666
        %v1219 = vunpack.c.l.bf16 %v667
        %v1220 = vunpack.c.h.bf16 %v667
        %v1221 = vunpack.c.l.bf16 %v668
        %v1222 = vunpack.c.h.bf16 %v668
        %v1223 = vunpack.c.l.bf16 %v669
        %v1224 = vunpack.c.h.bf16 %v669
        %v1225 = vunpack.c.l.bf16 %v670
        %v1226 = vunpack.c.h.bf16 %v670
        %v1227 = vunpack.c.l.bf16 %v671
        %v1228 = vunpack.c.h.bf16 %v671
        %v1229 = vunpack.c.l.bf16 %v672
        %v1230 = vunpack.c.h.bf16 %v672
        %v1231 = vunpack.c.l.bf16 %v673
        %v1232 = vunpack.c.h.bf16 %v673
        %v1233 = vunpack.c.l.bf16 %v674
        %v1234 = vunpack.c.h.bf16 %v674
        %v1235 = vunpack.c.l.bf16 %v675
        %v1236 = vunpack.c.h.bf16 %v675
        %v1237 = vunpack.c.l.bf16 %v676
        %v1238 = vunpack.c.h.bf16 %v676
        %v1239 = vunpack.c.l.bf16 %v677
        %v1240 = vunpack.c.h.bf16 %v677
        %v1241 = vunpack.c.l.bf16 %v678
        %v1242 = vunpack.c.h.bf16 %v678
        %v1243 = vunpack.c.l.bf16 %v679
        %v1244 = vunpack.c.h.bf16 %v679
        %v1245 = vunpack.c.l.bf16 %v680
        %v1246 = vunpack.c.h.bf16 %v680
        %v1247 = vunpack.c.l.bf16 %v681
        %v1248 = vunpack.c.h.bf16 %v681
        %v1249 = vunpack.c.l.bf16 %v682
        %v1250 = vunpack.c.h.bf16 %v682
        %v1251 = vunpack.c.l.bf16 %v683
        %v1252 = vunpack.c.h.bf16 %v683
        %v1253 = vunpack.c.l.bf16 %v684
        %v1254 = vunpack.c.h.bf16 %v684
        %v1255 = vunpack.c.l.bf16 %v685
        %v1256 = vunpack.c.h.bf16 %v685
        %v1257 = vunpack.c.l.bf16 %v686
        %v1258 = vunpack.c.h.bf16 %v686
        %v1259 = vunpack.c.l.bf16 %v687
        %v1260 = vunpack.c.h.bf16 %v687
        %v1261 = vunpack.c.l.bf16 %v688
        %v1262 = vunpack.c.h.bf16 %v688
        %v1263 = vunpack.c.l.bf16 %v689
        %v1264 = vunpack.c.h.bf16 %v689
        %v1265 = vunpack.c.l.bf16 %v690
        %v1266 = vunpack.c.h.bf16 %v690
        %v1267 = vunpack.c.l.bf16 %v691
        %v1268 = vunpack.c.h.bf16 %v691
        %v1269 = vunpack.c.l.bf16 %v692
        %v1270 = vunpack.c.h.bf16 %v692
        %v1271 = vunpack.c.l.bf16 %v693
        %v1272 = vunpack.c.h.bf16 %v693
        %v1273 = vunpack.c.l.bf16 %v694
        %v1274 = vunpack.c.h.bf16 %v694
        %v1275 = vunpack.c.l.bf16 %v695
        %v1276 = vunpack.c.h.bf16 %v695
        %v1277 = vunpack.c.l.bf16 %v696
        %v1278 = vunpack.c.h.bf16 %v696
        %v1279 = vunpack.c.l.bf16 %v697
        %v1280 = vunpack.c.h.bf16 %v697
        %v1281 = vunpack.c.l.bf16 %v698
        %v1282 = vunpack.c.h.bf16 %v698
        %v1283 = vunpack.c.l.bf16 %v699
        %v1284 = vunpack.c.h.bf16 %v699
        %v1285 = vunpack.c.l.bf16 %v700
        %v1286 = vunpack.c.h.bf16 %v700
        %v1287 = vunpack.c.l.bf16 %v701
        %v1288 = vunpack.c.h.bf16 %v701
        %v1289 = vunpack.c.l.bf16 %v702
        %v1290 = vunpack.c.h.bf16 %v702
        %v1291 = vunpack.c.l.bf16 %v703
        %v1292 = vunpack.c.h.bf16 %v703
        %v1293 = vunpack.c.l.bf16 %v704
        %v1294 = vunpack.c.h.bf16 %v704
        %v1295 = vunpack.c.l.bf16 %v705
        %v1296 = vunpack.c.h.bf16 %v705
        %v1297 = vunpack.c.l.bf16 %v706
        %v1298 = vunpack.c.h.bf16 %v706
        %v1299 = vunpack.c.l.bf16 %v707
        %v1300 = vunpack.c.h.bf16 %v707
        %v1301 = vunpack.c.l.bf16 %v708
        %v1302 = vunpack.c.h.bf16 %v708
        %v1303 = vunpack.c.l.bf16 %v709
        %v1304 = vunpack.c.h.bf16 %v709
        %v1305 = vunpack.c.l.bf16 %v710
        %v1306 = vunpack.c.h.bf16 %v710
        %v1307 = vunpack.c.l.bf16 %v711
        %v1308 = vunpack.c.h.bf16 %v711
        %v1309 = vunpack.c.l.bf16 %v712
        %v1310 = vunpack.c.h.bf16 %v712
        %v1311 = vunpack.c.l.bf16 %v713
        %v1312 = vunpack.c.h.bf16 %v713
        %v1313 = vunpack.c.l.bf16 %v714
        %v1314 = vunpack.c.h.bf16 %v714
        %v1315 = vunpack.c.l.bf16 %v715
        %v1316 = vunpack.c.h.bf16 %v715
        %v1317 = vunpack.c.l.bf16 %v716
        %v1318 = vunpack.c.h.bf16 %v716
        %v1319 = vunpack.c.l.bf16 %v717
        %v1320 = vunpack.c.h.bf16 %v717
        %v1321 = vunpack.c.l.bf16 %v718
        %v1322 = vunpack.c.h.bf16 %v718
        %v1323 = vunpack.c.l.bf16 %v719
        %v1324 = vunpack.c.h.bf16 %v719
        %v1325 = vunpack.c.l.bf16 %v720
        %v1326 = vunpack.c.h.bf16 %v720
        %v1327 = vunpack.c.l.bf16 %v721
        %v1328 = vunpack.c.h.bf16 %v721
        %v1329 = vunpack.c.l.bf16 %v722
        %v1330 = vunpack.c.h.bf16 %v722
        %v1331 = vunpack.c.l.bf16 %v723
        %v1332 = vunpack.c.h.bf16 %v723
        %v1333 = vunpack.c.l.bf16 %v724
        %v1334 = vunpack.c.h.bf16 %v724
        %v1335 = vunpack.c.l.bf16 %v725
        %v1336 = vunpack.c.h.bf16 %v725
        %v1337 = vunpack.c.l.bf16 %v726
        %v1338 = vunpack.c.h.bf16 %v726
        %v1339 = vunpack.c.l.bf16 %v727
        %v1340 = vunpack.c.h.bf16 %v727
        %v1341 = vunpack.c.l.bf16 %v728
        %v1342 = vunpack.c.h.bf16 %v728
        %v1343 = vunpack.c.l.bf16 %v729
        %v1344 = vunpack.c.h.bf16 %v729
        %v1345 = vunpack.c.l.bf16 %v730
        %v1346 = vunpack.c.h.bf16 %v730
        %v1347 = vunpack.c.l.bf16 %v731
        %v1348 = vunpack.c.h.bf16 %v731
        %v1349 = vunpack.c.l.bf16 %v732
        %v1350 = vunpack.c.h.bf16 %v732
        %v1351 = vunpack.c.l.bf16 %v733
        %v1352 = vunpack.c.h.bf16 %v733
        %v1353 = vunpack.c.l.bf16 %v734
        %v1354 = vunpack.c.h.bf16 %v734
        %v1355 = vunpack.c.l.bf16 %v735
        %v1356 = vunpack.c.h.bf16 %v735
        %v1357 = vunpack.c.l.bf16 %v736
        %v1358 = vunpack.c.h.bf16 %v736
        %v1359 = vunpack.c.l.bf16 %v737
        %v1360 = vunpack.c.h.bf16 %v737
        %v1361 = vunpack.c.l.bf16 %v738
        %v1362 = vunpack.c.h.bf16 %v738
        %v1363 = vunpack.c.l.bf16 %v739
        %v1364 = vunpack.c.h.bf16 %v739
        %v1365 = vunpack.c.l.bf16 %v740
        %v1366 = vunpack.c.h.bf16 %v740
        %v1367 = vunpack.c.l.bf16 %v741
        %v1368 = vunpack.c.h.bf16 %v741
        %v1369 = vunpack.c.l.bf16 %v742
        %v1370 = vunpack.c.h.bf16 %v742
        %v1371 = vunpack.c.l.bf16 %v743
        %v1372 = vunpack.c.h.bf16 %v743
        %v1373 = vunpack.c.l.bf16 %v744
        %v1374 = vunpack.c.h.bf16 %v744
        %v1375 = vunpack.c.l.bf16 %v745
        %v1376 = vunpack.c.h.bf16 %v745
        %v1377 = vunpack.c.l.bf16 %v746
        %v1378 = vunpack.c.h.bf16 %v746
        %v1379 = vunpack.c.l.bf16 %v747
        %v1380 = vunpack.c.h.bf16 %v747
        %v1381 = vunpack.c.l.bf16 %v748
        %v1382 = vunpack.c.h.bf16 %v748
        %v1383 = vunpack.c.l.bf16 %v749
        %v1384 = vunpack.c.h.bf16 %v749
        %v1385 = vunpack.c.l.bf16 %v750
        %v1386 = vunpack.c.h.bf16 %v750
        %v1387 = vunpack.c.l.bf16 %v751
        %v1388 = vunpack.c.h.bf16 %v751
        %v1389 = vunpack.c.l.bf16 %v752
        %v1390 = vunpack.c.h.bf16 %v752
        %v1391 = vunpack.c.l.bf16 %v753
        %v1392 = vunpack.c.h.bf16 %v753
        %v1393 = vunpack.c.l.bf16 %v754
        %v1394 = vunpack.c.h.bf16 %v754
        %v1395 = vunpack.c.l.bf16 %v755
        %v1396 = vunpack.c.h.bf16 %v755
        %v1397 = vunpack.c.l.bf16 %v756
        %v1398 = vunpack.c.h.bf16 %v756
        %v1399 = vunpack.c.l.bf16 %v757
        %v1400 = vunpack.c.h.bf16 %v757
        %v1401 = vunpack.c.l.bf16 %v758
        %v1402 = vunpack.c.h.bf16 %v758
        %v1403 = vunpack.c.l.bf16 %v759
        %v1404 = vunpack.c.h.bf16 %v759
        %v1405 = vunpack.c.l.bf16 %v760
        %v1406 = vunpack.c.h.bf16 %v760
        %v1407 = vunpack.c.l.bf16 %v761
        %v1408 = vunpack.c.h.bf16 %v761
        %v1409 = vunpack.c.l.bf16 %v762
        %v1410 = vunpack.c.h.bf16 %v762
        %v1411 = vunpack.c.l.bf16 %v763
        %v1412 = vunpack.c.h.bf16 %v763
        %v1413 = vunpack.c.l.bf16 %v764
        %v1414 = vunpack.c.h.bf16 %v764
        %v1415 = vunpack.c.l.bf16 %v765
        %v1416 = vunpack.c.h.bf16 %v765
        %v1417 = vunpack.c.l.bf16 %v766
        %v1418 = vunpack.c.h.bf16 %v766
        %v1419 = vunpack.c.l.bf16 %v767
        %v1420 = vunpack.c.h.bf16 %v767
        %v1421 = vunpack.c.l.bf16 %v768
        %v1422 = vunpack.c.h.bf16 %v768
        %v1423 = vunpack.c.l.bf16 %v769
        %v1424 = vunpack.c.h.bf16 %v769
        %v1425 = vunpack.c.l.bf16 %v770
        %v1426 = vunpack.c.h.bf16 %v770
        %v1427 = vunpack.c.l.bf16 %v771
        %v1428 = vunpack.c.h.bf16 %v771
        %v1429 = vunpack.c.l.bf16 %v772
        %v1430 = vunpack.c.h.bf16 %v772
        %v1431 = vunpack.c.l.bf16 %v773
        %v1432 = vunpack.c.h.bf16 %v773
        %v1433 = vunpack.c.l.bf16 %v774
        %v1434 = vunpack.c.h.bf16 %v774
        %v1435 = vunpack.c.l.bf16 %v775
        %v1436 = vunpack.c.h.bf16 %v775
        %v1437 = vunpack.c.l.bf16 %v776
        %v1438 = vunpack.c.h.bf16 %v776
        %v1439 = vunpack.c.l.bf16 %v777
        %v1440 = vunpack.c.h.bf16 %v777
        %v1441 = vunpack.c.l.bf16 %v778
        %v1442 = vunpack.c.h.bf16 %v778
        %v1443 = vunpack.c.l.bf16 %v779
        %v1444 = vunpack.c.h.bf16 %v779
        %v1445 = vunpack.c.l.bf16 %v780
        %v1446 = vunpack.c.h.bf16 %v780
        %v1447 = vunpack.c.l.bf16 %v781
        %v1448 = vunpack.c.h.bf16 %v781
        %v1449 = vunpack.c.l.bf16 %v782
        %v1450 = vunpack.c.h.bf16 %v782
        %v1451 = vunpack.c.l.bf16 %v783
        %v1452 = vunpack.c.h.bf16 %v783
        %v1453 = vunpack.c.l.bf16 %v784
        %v1454 = vunpack.c.h.bf16 %v784
        %v1455 = vunpack.c.l.bf16 %v785
        %v1456 = vunpack.c.h.bf16 %v785
        %v1457 = vunpack.c.l.bf16 %v786
        %v1458 = vunpack.c.h.bf16 %v786
        %v1459 = vunpack.c.l.bf16 %v787
        %v1460 = vunpack.c.h.bf16 %v787
        %v1461 = vunpack.c.l.bf16 %v788
        %v1462 = vunpack.c.h.bf16 %v788
        %v1463 = vunpack.c.l.bf16 %v789
        %v1464 = vunpack.c.h.bf16 %v789
        %v1465 = vunpack.c.l.bf16 %v790
        %v1466 = vunpack.c.h.bf16 %v790
        %v1467 = vunpack.c.l.bf16 %v791
        %v1468 = vunpack.c.h.bf16 %v791
        %v1469 = vunpack.c.l.bf16 %v792
        %v1470 = vunpack.c.h.bf16 %v792
        %v1471 = vunpack.c.l.bf16 %v793
        %v1472 = vunpack.c.h.bf16 %v793
        %v1473 = vunpack.c.l.bf16 %v794
        %v1474 = vunpack.c.h.bf16 %v794
        %v1475 = vunpack.c.l.bf16 %v795
        %v1476 = vunpack.c.h.bf16 %v795
        %v1477 = vunpack.c.l.bf16 %v796
        %v1478 = vunpack.c.h.bf16 %v796
        %v1479 = vunpack.c.l.bf16 %v797
        %v1480 = vunpack.c.h.bf16 %v797
        %v1481 = vunpack.c.l.bf16 %v798
        %v1482 = vunpack.c.h.bf16 %v798
        %v1483 = vunpack.c.l.bf16 %v799
        %v1484 = vunpack.c.h.bf16 %v799
        %v1485 = vunpack.c.l.bf16 %v800
        %v1486 = vunpack.c.h.bf16 %v800
        %v1487 = vunpack.c.l.bf16 %v801
        %v1488 = vunpack.c.h.bf16 %v801
        %v1489 = vunpack.c.l.bf16 %v802
        %v1490 = vunpack.c.h.bf16 %v802
        %v1491 = vunpack.c.l.bf16 %v803
        %v1492 = vunpack.c.h.bf16 %v803
        %v1493 = vunpack.c.l.bf16 %v804
        %v1494 = vunpack.c.h.bf16 %v804
        %v1495 = vunpack.c.l.bf16 %v805
        %v1496 = vunpack.c.h.bf16 %v805
        %v1497 = vunpack.c.l.bf16 %v806
        %v1498 = vunpack.c.h.bf16 %v806
        %v1499 = vunpack.c.l.bf16 %v807
        %v1500 = vunpack.c.h.bf16 %v807
        %v1501 = vunpack.c.l.bf16 %v808
        %v1502 = vunpack.c.h.bf16 %v808
        %v1503 = vunpack.c.l.bf16 %v809
        %v1504 = vunpack.c.h.bf16 %v809
        %v1505 = vunpack.c.l.bf16 %v810
        %v1506 = vunpack.c.h.bf16 %v810
        %v1507 = vunpack.c.l.bf16 %v811
        %v1508 = vunpack.c.h.bf16 %v811
        %v1509 = vunpack.c.l.bf16 %v812
        %v1510 = vunpack.c.h.bf16 %v812
        %v1511 = vunpack.c.l.bf16 %v813
        %v1512 = vunpack.c.h.bf16 %v813
        %v1513 = vunpack.c.l.bf16 %v814
        %v1514 = vunpack.c.h.bf16 %v814
        %v1515 = vunpack.c.l.bf16 %v815
        %v1516 = vunpack.c.h.bf16 %v815
        %v1517 = vunpack.c.l.bf16 %v816
        %v1518 = vunpack.c.h.bf16 %v816
        %v1519 = vunpack.c.l.bf16 %v817
        %v1520 = vunpack.c.h.bf16 %v817
        %v1521 = vunpack.c.l.bf16 %v818
        %v1522 = vunpack.c.h.bf16 %v818
        %v1523 = vunpack.c.l.bf16 %v819
        %v1524 = vunpack.c.h.bf16 %v819
        %v1525 = vunpack.c.l.bf16 %v820
        %v1526 = vunpack.c.h.bf16 %v820
        %v1527 = vunpack.c.l.bf16 %v821
        %v1528 = vunpack.c.h.bf16 %v821
        %v1529 = vunpack.c.l.bf16 %v822
        %v1530 = vunpack.c.h.bf16 %v822
        %v1531 = vunpack.c.l.bf16 %v823
        %v1532 = vunpack.c.h.bf16 %v823
        %v1533 = vunpack.c.l.bf16 %v824
        %v1534 = vunpack.c.h.bf16 %v824
        %v1535 = vunpack.c.l.bf16 %v825
        %v1536 = vunpack.c.h.bf16 %v825
        %v1537 = vunpack.c.l.bf16 %v826
        %v1538 = vunpack.c.h.bf16 %v826
        %v1539 = vunpack.c.l.bf16 %v827
        %v1540 = vunpack.c.h.bf16 %v827
        %v1541 = vunpack.c.l.bf16 %v828
        %v1542 = vunpack.c.h.bf16 %v828
        %v1543 = vunpack.c.l.bf16 %v829
        %v1544 = vunpack.c.h.bf16 %v829
        %v1545 = vunpack.c.l.bf16 %v830
        %v1546 = vunpack.c.h.bf16 %v830
        %v1547 = vunpack.c.l.bf16 %v831
        %v1548 = vunpack.c.h.bf16 %v831
        %v1549 = vunpack.c.l.bf16 %v832
        %v1550 = vunpack.c.h.bf16 %v832
        %v1551 = vunpack.c.l.bf16 %v833
        %v1552 = vunpack.c.h.bf16 %v833
        %v1553 = vunpack.c.l.bf16 %v834
        %v1554 = vunpack.c.h.bf16 %v834
        %v1555 = vunpack.c.l.bf16 %v835
        %v1556 = vunpack.c.h.bf16 %v835
        %v1557 = vunpack.c.l.bf16 %v836
        %v1558 = vunpack.c.h.bf16 %v836
        %v1559 = vunpack.c.l.bf16 %v837
        %v1560 = vunpack.c.h.bf16 %v837
        %v1561 = vunpack.c.l.bf16 %v838
        %v1562 = vunpack.c.h.bf16 %v838
        %v1563 = vunpack.c.l.bf16 %v839
        %v1564 = vunpack.c.h.bf16 %v839
        %v1565 = vunpack.c.l.bf16 %v840
        %v1566 = vunpack.c.h.bf16 %v840
        %v1567 = vunpack.c.l.bf16 %v841
        %v1568 = vunpack.c.h.bf16 %v841
        %v1569 = vunpack.c.l.bf16 %v842
        %v1570 = vunpack.c.h.bf16 %v842
        %v1571 = vunpack.c.l.bf16 %v843
        %v1572 = vunpack.c.h.bf16 %v843
        %v1573 = vunpack.c.l.bf16 %v844
        %v1574 = vunpack.c.h.bf16 %v844
        %v1575 = vunpack.c.l.bf16 %v845
        %v1576 = vunpack.c.h.bf16 %v845
        %v1577 = vunpack.c.l.bf16 %v846
        %v1578 = vunpack.c.h.bf16 %v846
        %v1579 = vunpack.c.l.bf16 %v847
        %v1580 = vunpack.c.h.bf16 %v847
        %v1581 = vunpack.c.l.bf16 %v848
        %v1582 = vunpack.c.h.bf16 %v848
        %v1583 = vunpack.c.l.bf16 %v849
        %v1584 = vunpack.c.h.bf16 %v849
        %v1585 = vunpack.c.l.bf16 %v850
        %v1586 = vunpack.c.h.bf16 %v850
        %v1587 = vunpack.c.l.bf16 %v851
        %v1588 = vunpack.c.h.bf16 %v851
        %v1589 = vunpack.c.l.bf16 %v852
        %v1590 = vunpack.c.h.bf16 %v852
        %v1591 = vunpack.c.l.bf16 %v853
        %v1592 = vunpack.c.h.bf16 %v853
        %v1593 = vunpack.c.l.bf16 %v854
        %v1594 = vunpack.c.h.bf16 %v854
        %v1595 = vunpack.c.l.bf16 %v855
        %v1596 = vunpack.c.h.bf16 %v855
        %v1597 = vunpack.c.l.bf16 %v856
        %v1598 = vunpack.c.h.bf16 %v856
        %v1599 = vunpack.c.l.bf16 %v857
        %v1600 = vunpack.c.h.bf16 %v857
        %v1601 = vunpack.c.l.bf16 %v858
        %v1602 = vunpack.c.h.bf16 %v858
        %v1603 = vunpack.c.l.bf16 %v859
        %v1604 = vunpack.c.h.bf16 %v859
        %v1605 = vunpack.c.l.bf16 %v860
        %v1606 = vunpack.c.h.bf16 %v860
        %v1607 = vunpack.c.l.bf16 %v861
        %v1608 = vunpack.c.h.bf16 %v861
        %v1609 = vunpack.c.l.bf16 %v862
        %v1610 = vunpack.c.h.bf16 %v862
        %v1611 = vunpack.c.l.bf16 %v863
        %v1612 = vunpack.c.h.bf16 %v863
        %v1613 = vunpack.c.l.bf16 %v864
        %v1614 = vunpack.c.h.bf16 %v864
        %v1615 = vunpack.c.l.bf16 %v865
        %v1616 = vunpack.c.h.bf16 %v865
        %v1617 = vunpack.c.l.bf16 %v866
        %v1618 = vunpack.c.h.bf16 %v866
        %v1619 = vunpack.c.l.bf16 %v867
        %v1620 = vunpack.c.h.bf16 %v867
        %v1621 = vunpack.c.l.bf16 %v868
        %v1622 = vunpack.c.h.bf16 %v868
        %v1623 = vunpack.c.l.bf16 %v869
        %v1624 = vunpack.c.h.bf16 %v869
        %v1625 = vunpack.c.l.bf16 %v870
        %v1626 = vunpack.c.h.bf16 %v870
        %v1627 = vunpack.c.l.bf16 %v871
        %v1628 = vunpack.c.h.bf16 %v871
        %v1629 = vunpack.c.l.bf16 %v872
        %v1630 = vunpack.c.h.bf16 %v872
        %v1631 = vunpack.c.l.bf16 %v873
        %v1632 = vunpack.c.h.bf16 %v873
        %v1633 = vunpack.c.l.bf16 %v874
        %v1634 = vunpack.c.h.bf16 %v874
        %v1635 = vunpack.c.l.bf16 %v875
        %v1636 = vunpack.c.h.bf16 %v875
        %v1637 = vunpack.c.l.bf16 %v876
        %v1638 = vunpack.c.h.bf16 %v876
        %v1639 = vunpack.c.l.bf16 %v877
        %v1640 = vunpack.c.h.bf16 %v877
        %v1641 = vunpack.c.l.bf16 %v878
        %v1642 = vunpack.c.h.bf16 %v878
        %v1643 = vunpack.c.l.bf16 %v879
        %v1644 = vunpack.c.h.bf16 %v879
        %v1645 = vunpack.c.l.bf16 %v880
        %v1646 = vunpack.c.h.bf16 %v880
        %v1647 = vunpack.c.l.bf16 %v881
        %v1648 = vunpack.c.h.bf16 %v881
        %v1649 = vunpack.c.l.bf16 %v882
        %v1650 = vunpack.c.h.bf16 %v882
        %v1651 = vld [vmem:[#allocation2] sm:$0xff]
        %v1652 = vld [vmem:[#allocation2 + $0x8] sm:$0xff]
        %v1653 = vld [vmem:[#allocation2 + $0x10] sm:$0xff]
        %v1654 = vld [vmem:[#allocation2 + $0x18] sm:$0xff]
        %v1655 = vld [vmem:[#allocation2 + $0x20] sm:$0xff]
        %v1656 = vld [vmem:[#allocation2 + $0x28] sm:$0xff]
        %v1657 = vld [vmem:[#allocation2 + $0x30] sm:$0xff]
        %v1658 = vld [vmem:[#allocation2 + $0x38] sm:$0xff]
        %v1659 = vld [vmem:[#allocation2 + $0x40] sm:$0xff]
        %v1660 = vld [vmem:[#allocation2 + $0x48] sm:$0xff]
        %v1661 = vld [vmem:[#allocation2 + $0x50] sm:$0xff]
        %v1662 = vld [vmem:[#allocation2 + $0x58] sm:$0xff]
        %v1663 = vld [vmem:[%s472] sm:$0xff]
        %v1664 = vld [vmem:[%s472 + $0x8] sm:$0xff]
        %v1665 = vld [vmem:[%s472 + $0x10] sm:$0xff]
        %v1666 = vld [vmem:[%s472 + $0x18] sm:$0xff]
        %v1667 = vld [vmem:[%s472 + $0x20] sm:$0xff]
        %v1668 = vld [vmem:[%s472 + $0x28] sm:$0xff]
        %v1669 = vld [vmem:[%s472 + $0x30] sm:$0xff]
        %v1670 = vld [vmem:[%s472 + $0x38] sm:$0xff]
        %v1671 = vld [vmem:[%s472 + $0x40] sm:$0xff]
        %v1672 = vld [vmem:[%s472 + $0x48] sm:$0xff]
        %v1673 = vld [vmem:[%s472 + $0x50] sm:$0xff]
        %v1674 = vld [vmem:[%s472 + $0x58] sm:$0xff]
        %v1675 = vld [vmem:[%s472 + $0x60] sm:$0xff]
        %v1676 = vld [vmem:[%s472 + $0x68] sm:$0xff]
        %v1677 = vld [vmem:[%s472 + $0x70] sm:$0xff]
        %v1678 = vld [vmem:[%s472 + $0x78] sm:$0xff]
        %v1679 = vld [vmem:[%s472 + $0x80] sm:$0xff]
        %v1680 = vld [vmem:[%s472 + $0x88] sm:$0xff]
        %v1681 = vld [vmem:[%s472 + $0x90] sm:$0xff]
        %v1682 = vld [vmem:[%s472 + $0x98] sm:$0xff]
        %v1683 = vld [vmem:[%s472 + $0xa0] sm:$0xff]
        %v1684 = vld [vmem:[%s472 + $0xa8] sm:$0xff]
        %v1685 = vld [vmem:[%s472 + $0xb0] sm:$0xff]
        %v1686 = vld [vmem:[%s472 + $0xb8] sm:$0xff]
        %v1687 = vld [vmem:[%s472 + $0xc0] sm:$0xff]
        %v1688 = vld [vmem:[%s472 + $0xc8] sm:$0xff]
        %v1689 = vld [vmem:[%s472 + $0xd0] sm:$0xff]
        %v1690 = vld [vmem:[%s472 + $0xd8] sm:$0xff]
        %v1691 = vld [vmem:[%s472 + $0xe0] sm:$0xff]
        %v1692 = vld [vmem:[%s472 + $0xe8] sm:$0xff]
        %v1693 = vld [vmem:[%s472 + $0xf0] sm:$0xff]
        %v1694 = vld [vmem:[%s472 + $0xf8] sm:$0xff]
        %v1695 = vld [vmem:[%s472 + $0x100] sm:$0xff]
        %v1696 = vld [vmem:[%s472 + $0x108] sm:$0xff]
        %v1697 = vld [vmem:[%s472 + $0x110] sm:$0xff]
        %v1698 = vld [vmem:[%s472 + $0x118] sm:$0xff]
        %v1699 = vld [vmem:[%s472 + $0x120] sm:$0xff]
        %v1700 = vld [vmem:[%s472 + $0x128] sm:$0xff]
        %v1701 = vld [vmem:[%s472 + $0x130] sm:$0xff]
        %v1702 = vld [vmem:[%s472 + $0x138] sm:$0xff]
        %v1703 = vld [vmem:[%s472 + $0x140] sm:$0xff]
        %v1704 = vld [vmem:[%s472 + $0x148] sm:$0xff]
        %v1705 = vld [vmem:[%s472 + $0x150] sm:$0xff]
        %v1706 = vld [vmem:[%s472 + $0x158] sm:$0xff]
        %v1707 = vld [vmem:[%s472 + $0x160] sm:$0xff]
        %v1708 = vld [vmem:[%s472 + $0x168] sm:$0xff]
        %v1709 = vld [vmem:[%s472 + $0x170] sm:$0xff]
        %v1710 = vld [vmem:[%s472 + $0x178] sm:$0xff]
        %v1711 = vld [vmem:[%s472 + $0x180] sm:$0xff]
        %v1712 = vld [vmem:[%s472 + $0x188] sm:$0xff]
        %v1713 = vld [vmem:[%s472 + $0x190] sm:$0xff]
        %v1714 = vld [vmem:[%s472 + $0x198] sm:$0xff]
        %v1715 = vld [vmem:[%s472 + $0x1a0] sm:$0xff]
        %v1716 = vld [vmem:[%s472 + $0x1a8] sm:$0xff]
        %v1717 = vld [vmem:[%s472 + $0x1b0] sm:$0xff]
        %v1718 = vld [vmem:[%s472 + $0x1b8] sm:$0xff]
        %v1719 = vld [vmem:[%s472 + $0x1c0] sm:$0xff]
        %v1720 = vld [vmem:[%s472 + $0x1c8] sm:$0xff]
        %v1721 = vld [vmem:[%s472 + $0x1d0] sm:$0xff]
        %v1722 = vld [vmem:[%s472 + $0x1d8] sm:$0xff]
        %v1723 = vld [vmem:[%s472 + $0x1e0] sm:$0xff]
        %v1724 = vld [vmem:[%s472 + $0x1e8] sm:$0xff]
        %v1725 = vld [vmem:[%s472 + $0x1f0] sm:$0xff]
        %v1726 = vld [vmem:[%s472 + $0x1f8] sm:$0xff]
        %v1727 = vld [vmem:[%s472 + $0x200] sm:$0xff]
        %v1728 = vld [vmem:[%s472 + $0x208] sm:$0xff]
        %v1729 = vld [vmem:[%s472 + $0x210] sm:$0xff]
        %v1730 = vld [vmem:[%s472 + $0x218] sm:$0xff]
        %v1731 = vld [vmem:[%s472 + $0x220] sm:$0xff]
        %v1732 = vld [vmem:[%s472 + $0x228] sm:$0xff]
        %v1733 = vld [vmem:[%s472 + $0x230] sm:$0xff]
        %v1734 = vld [vmem:[%s472 + $0x238] sm:$0xff]
        %v1735 = vld [vmem:[%s472 + $0x240] sm:$0xff]
        %v1736 = vld [vmem:[%s472 + $0x248] sm:$0xff]
        %v1737 = vld [vmem:[%s472 + $0x250] sm:$0xff]
        %v1738 = vld [vmem:[%s472 + $0x258] sm:$0xff]
        %v1739 = vld [vmem:[%s472 + $0x260] sm:$0xff]
        %v1740 = vld [vmem:[%s472 + $0x268] sm:$0xff]
        %v1741 = vld [vmem:[%s472 + $0x270] sm:$0xff]
        %v1742 = vld [vmem:[%s472 + $0x278] sm:$0xff]
        %v1743 = vld [vmem:[%s472 + $0x280] sm:$0xff]
        %v1744 = vld [vmem:[%s472 + $0x288] sm:$0xff]
        %v1745 = vld [vmem:[%s472 + $0x290] sm:$0xff]
        %v1746 = vld [vmem:[%s472 + $0x298] sm:$0xff]
        %v1747 = vld [vmem:[%s472 + $0x2a0] sm:$0xff]
        %v1748 = vld [vmem:[%s472 + $0x2a8] sm:$0xff]
        %v1749 = vld [vmem:[%s472 + $0x2b0] sm:$0xff]
        %v1750 = vld [vmem:[%s472 + $0x2b8] sm:$0xff]
        %v1751 = vld [vmem:[%s472 + $0x2c0] sm:$0xff]
        %v1752 = vld [vmem:[%s472 + $0x2c8] sm:$0xff]
        %v1753 = vld [vmem:[%s472 + $0x2d0] sm:$0xff]
        %v1754 = vld [vmem:[%s472 + $0x2d8] sm:$0xff]
        %v1755 = vld [vmem:[%s472 + $0x2e0] sm:$0xff]
        %v1756 = vld [vmem:[%s472 + $0x2e8] sm:$0xff]
        %v1757 = vld [vmem:[%s472 + $0x2f0] sm:$0xff]
        %v1758 = vld [vmem:[%s472 + $0x2f8] sm:$0xff]
        %v1759 = vld [vmem:[%s472 + $0x300] sm:$0xff]
        %v1760 = vld [vmem:[%s472 + $0x308] sm:$0xff]
        %v1761 = vld [vmem:[%s472 + $0x310] sm:$0xff]
        %v1762 = vld [vmem:[%s472 + $0x318] sm:$0xff]
        %v1763 = vld [vmem:[%s472 + $0x320] sm:$0xff]
        %v1764 = vld [vmem:[%s472 + $0x328] sm:$0xff]
        %v1765 = vld [vmem:[%s472 + $0x330] sm:$0xff]
        %v1766 = vld [vmem:[%s472 + $0x338] sm:$0xff]
        %v1767 = vld [vmem:[%s472 + $0x340] sm:$0xff]
        %v1768 = vld [vmem:[%s472 + $0x348] sm:$0xff]
        %v1769 = vld [vmem:[%s472 + $0x350] sm:$0xff]
        %v1770 = vld [vmem:[%s472 + $0x358] sm:$0xff]
        %v1771 = vld [vmem:[%s472 + $0x360] sm:$0xff]
        %v1772 = vld [vmem:[%s472 + $0x368] sm:$0xff]
        %v1773 = vld [vmem:[%s472 + $0x370] sm:$0xff]
        %v1774 = vld [vmem:[%s472 + $0x378] sm:$0xff]
        %v1775 = vld [vmem:[%s472 + $0x380] sm:$0xff]
        %v1776 = vld [vmem:[%s472 + $0x388] sm:$0xff]
        %v1777 = vld [vmem:[%s472 + $0x390] sm:$0xff]
        %v1778 = vld [vmem:[%s472 + $0x398] sm:$0xff]
        %v1779 = vld [vmem:[%s472 + $0x3a0] sm:$0xff]
        %v1780 = vld [vmem:[%s472 + $0x3a8] sm:$0xff]
        %v1781 = vld [vmem:[%s472 + $0x3b0] sm:$0xff]
        %v1782 = vld [vmem:[%s472 + $0x3b8] sm:$0xff]
        %v1783 = vld [vmem:[%s472 + $0x3c0] sm:$0xff]
        %v1784 = vld [vmem:[%s472 + $0x3c8] sm:$0xff]
        %v1785 = vld [vmem:[%s472 + $0x3d0] sm:$0xff]
        %v1786 = vld [vmem:[%s472 + $0x3d8] sm:$0xff]
        %v1787 = vld [vmem:[%s472 + $0x3e0] sm:$0xff]
        %v1788 = vld [vmem:[%s472 + $0x3e8] sm:$0xff]
        %v1789 = vld [vmem:[%s472 + $0x3f0] sm:$0xff]
        %v1790 = vld [vmem:[%s472 + $0x3f8] sm:$0xff]
        %1792 = vset.pattern.permute.xlu0 0
        %1793 = vperm.xlu0 %1792, %v1663
        %v1794 = vpop.permute.xlu0 %1793
        %1797 = vset.pattern.permute.xlu0 0
        %1798 = vperm.xlu0 %1797, %v1664
        %v1799 = vpop.permute.xlu0 %1798
        %1802 = vset.pattern.permute.xlu0 0
        %1803 = vperm.xlu0 %1802, %v1665
        %v1804 = vpop.permute.xlu0 %1803
        %1807 = vset.pattern.permute.xlu0 0
        %1808 = vperm.xlu0 %1807, %v1666
        %v1809 = vpop.permute.xlu0 %1808
        %1812 = vset.pattern.permute.xlu0 0
        %1813 = vperm.xlu0 %1812, %v1667
        %v1814 = vpop.permute.xlu0 %1813
        %1817 = vset.pattern.permute.xlu0 0
        %1818 = vperm.xlu0 %1817, %v1668
        %v1819 = vpop.permute.xlu0 %1818
        %1822 = vset.pattern.permute.xlu0 0
        %1823 = vperm.xlu0 %1822, %v1669
        %v1824 = vpop.permute.xlu0 %1823
        %1827 = vset.pattern.permute.xlu0 0
        %1828 = vperm.xlu0 %1827, %v1670
        %v1829 = vpop.permute.xlu0 %1828
        %1832 = vset.pattern.permute.xlu0 0
        %1833 = vperm.xlu0 %1832, %v1671
        %v1834 = vpop.permute.xlu0 %1833
        %1837 = vset.pattern.permute.xlu0 0
        %1838 = vperm.xlu0 %1837, %v1672
        %v1839 = vpop.permute.xlu0 %1838
        %1842 = vset.pattern.permute.xlu0 0
        %1843 = vperm.xlu0 %1842, %v1673
        %v1844 = vpop.permute.xlu0 %1843
        %1847 = vset.pattern.permute.xlu0 0
        %1848 = vperm.xlu0 %1847, %v1674
        %v1849 = vpop.permute.xlu0 %1848
        %1852 = vset.pattern.permute.xlu0 0
        %1853 = vperm.xlu0 %1852, %v1675
        %v1854 = vpop.permute.xlu0 %1853
        %1857 = vset.pattern.permute.xlu0 0
        %1858 = vperm.xlu0 %1857, %v1676
        %v1859 = vpop.permute.xlu0 %1858
        %1862 = vset.pattern.permute.xlu0 0
        %1863 = vperm.xlu0 %1862, %v1677
        %v1864 = vpop.permute.xlu0 %1863
        %1867 = vset.pattern.permute.xlu0 0
        %1868 = vperm.xlu0 %1867, %v1678
        %v1869 = vpop.permute.xlu0 %1868
        %1872 = vset.pattern.permute.xlu0 0
        %1873 = vperm.xlu0 %1872, %v1679
        %v1874 = vpop.permute.xlu0 %1873
        %1877 = vset.pattern.permute.xlu0 0
        %1878 = vperm.xlu0 %1877, %v1680
        %v1879 = vpop.permute.xlu0 %1878
        %1882 = vset.pattern.permute.xlu0 0
        %1883 = vperm.xlu0 %1882, %v1681
        %v1884 = vpop.permute.xlu0 %1883
        %1887 = vset.pattern.permute.xlu0 0
        %1888 = vperm.xlu0 %1887, %v1682
        %v1889 = vpop.permute.xlu0 %1888
        %1892 = vset.pattern.permute.xlu0 0
        %1893 = vperm.xlu0 %1892, %v1683
        %v1894 = vpop.permute.xlu0 %1893
        %1897 = vset.pattern.permute.xlu0 0
        %1898 = vperm.xlu0 %1897, %v1684
        %v1899 = vpop.permute.xlu0 %1898
        %1902 = vset.pattern.permute.xlu0 0
        %1903 = vperm.xlu0 %1902, %v1685
        %v1904 = vpop.permute.xlu0 %1903
        %1907 = vset.pattern.permute.xlu0 0
        %1908 = vperm.xlu0 %1907, %v1686
        %v1909 = vpop.permute.xlu0 %1908
        %1912 = vset.pattern.permute.xlu0 0
        %1913 = vperm.xlu0 %1912, %v1687
        %v1914 = vpop.permute.xlu0 %1913
        %1917 = vset.pattern.permute.xlu0 0
        %1918 = vperm.xlu0 %1917, %v1688
        %v1919 = vpop.permute.xlu0 %1918
        %1922 = vset.pattern.permute.xlu0 0
        %1923 = vperm.xlu0 %1922, %v1689
        %v1924 = vpop.permute.xlu0 %1923
        %1927 = vset.pattern.permute.xlu0 0
        %1928 = vperm.xlu0 %1927, %v1690
        %v1929 = vpop.permute.xlu0 %1928
        %1932 = vset.pattern.permute.xlu0 0
        %1933 = vperm.xlu0 %1932, %v1691
        %v1934 = vpop.permute.xlu0 %1933
        %1937 = vset.pattern.permute.xlu0 0
        %1938 = vperm.xlu0 %1937, %v1692
        %v1939 = vpop.permute.xlu0 %1938
        %1942 = vset.pattern.permute.xlu0 0
        %1943 = vperm.xlu0 %1942, %v1693
        %v1944 = vpop.permute.xlu0 %1943
        %1947 = vset.pattern.permute.xlu0 0
        %1948 = vperm.xlu0 %1947, %v1694
        %v1949 = vpop.permute.xlu0 %1948
        %1952 = vset.pattern.permute.xlu0 0
        %1953 = vperm.xlu0 %1952, %v1695
        %v1954 = vpop.permute.xlu0 %1953
        %1957 = vset.pattern.permute.xlu0 0
        %1958 = vperm.xlu0 %1957, %v1696
        %v1959 = vpop.permute.xlu0 %1958
        %1962 = vset.pattern.permute.xlu0 0
        %1963 = vperm.xlu0 %1962, %v1697
        %v1964 = vpop.permute.xlu0 %1963
        %1967 = vset.pattern.permute.xlu0 0
        %1968 = vperm.xlu0 %1967, %v1698
        %v1969 = vpop.permute.xlu0 %1968
        %1972 = vset.pattern.permute.xlu0 0
        %1973 = vperm.xlu0 %1972, %v1699
        %v1974 = vpop.permute.xlu0 %1973
        %1977 = vset.pattern.permute.xlu0 0
        %1978 = vperm.xlu0 %1977, %v1700
        %v1979 = vpop.permute.xlu0 %1978
        %1982 = vset.pattern.permute.xlu0 0
        %1983 = vperm.xlu0 %1982, %v1701
        %v1984 = vpop.permute.xlu0 %1983
        %1987 = vset.pattern.permute.xlu0 0
        %1988 = vperm.xlu0 %1987, %v1702
        %v1989 = vpop.permute.xlu0 %1988
        %1992 = vset.pattern.permute.xlu0 0
        %1993 = vperm.xlu0 %1992, %v1703
        %v1994 = vpop.permute.xlu0 %1993
        %1997 = vset.pattern.permute.xlu0 0
        %1998 = vperm.xlu0 %1997, %v1704
        %v1999 = vpop.permute.xlu0 %1998
        %2002 = vset.pattern.permute.xlu0 0
        %2003 = vperm.xlu0 %2002, %v1705
        %v2004 = vpop.permute.xlu0 %2003
        %2007 = vset.pattern.permute.xlu0 0
        %2008 = vperm.xlu0 %2007, %v1706
        %v2009 = vpop.permute.xlu0 %2008
        %2012 = vset.pattern.permute.xlu0 0
        %2013 = vperm.xlu0 %2012, %v1707
        %v2014 = vpop.permute.xlu0 %2013
        %2017 = vset.pattern.permute.xlu0 0
        %2018 = vperm.xlu0 %2017, %v1708
        %v2019 = vpop.permute.xlu0 %2018
        %2022 = vset.pattern.permute.xlu0 0
        %2023 = vperm.xlu0 %2022, %v1709
        %v2024 = vpop.permute.xlu0 %2023
        %2027 = vset.pattern.permute.xlu0 0
        %2028 = vperm.xlu0 %2027, %v1710
        %v2029 = vpop.permute.xlu0 %2028
        %2032 = vset.pattern.permute.xlu0 0
        %2033 = vperm.xlu0 %2032, %v1711
        %v2034 = vpop.permute.xlu0 %2033
        %2037 = vset.pattern.permute.xlu0 0
        %2038 = vperm.xlu0 %2037, %v1712
        %v2039 = vpop.permute.xlu0 %2038
        %2042 = vset.pattern.permute.xlu0 0
        %2043 = vperm.xlu0 %2042, %v1713
        %v2044 = vpop.permute.xlu0 %2043
        %2047 = vset.pattern.permute.xlu0 0
        %2048 = vperm.xlu0 %2047, %v1714
        %v2049 = vpop.permute.xlu0 %2048
        %2052 = vset.pattern.permute.xlu0 0
        %2053 = vperm.xlu0 %2052, %v1715
        %v2054 = vpop.permute.xlu0 %2053
        %2057 = vset.pattern.permute.xlu0 0
        %2058 = vperm.xlu0 %2057, %v1716
        %v2059 = vpop.permute.xlu0 %2058
        %2062 = vset.pattern.permute.xlu0 0
        %2063 = vperm.xlu0 %2062, %v1717
        %v2064 = vpop.permute.xlu0 %2063
        %2067 = vset.pattern.permute.xlu0 0
        %2068 = vperm.xlu0 %2067, %v1718
        %v2069 = vpop.permute.xlu0 %2068
        %2072 = vset.pattern.permute.xlu0 0
        %2073 = vperm.xlu0 %2072, %v1719
        %v2074 = vpop.permute.xlu0 %2073
        %2077 = vset.pattern.permute.xlu0 0
        %2078 = vperm.xlu0 %2077, %v1720
        %v2079 = vpop.permute.xlu0 %2078
        %2082 = vset.pattern.permute.xlu0 0
        %2083 = vperm.xlu0 %2082, %v1721
        %v2084 = vpop.permute.xlu0 %2083
        %2087 = vset.pattern.permute.xlu0 0
        %2088 = vperm.xlu0 %2087, %v1722
        %v2089 = vpop.permute.xlu0 %2088
        %2092 = vset.pattern.permute.xlu0 0
        %2093 = vperm.xlu0 %2092, %v1723
        %v2094 = vpop.permute.xlu0 %2093
        %2097 = vset.pattern.permute.xlu0 0
        %2098 = vperm.xlu0 %2097, %v1724
        %v2099 = vpop.permute.xlu0 %2098
        %2102 = vset.pattern.permute.xlu0 0
        %2103 = vperm.xlu0 %2102, %v1725
        %v2104 = vpop.permute.xlu0 %2103
        %2107 = vset.pattern.permute.xlu0 0
        %2108 = vperm.xlu0 %2107, %v1726
        %v2109 = vpop.permute.xlu0 %2108
        %2112 = vset.pattern.permute.xlu0 0
        %2113 = vperm.xlu0 %2112, %v1727
        %v2114 = vpop.permute.xlu0 %2113
        %2117 = vset.pattern.permute.xlu0 0
        %2118 = vperm.xlu0 %2117, %v1728
        %v2119 = vpop.permute.xlu0 %2118
        %2122 = vset.pattern.permute.xlu0 0
        %2123 = vperm.xlu0 %2122, %v1729
        %v2124 = vpop.permute.xlu0 %2123
        %2127 = vset.pattern.permute.xlu0 0
        %2128 = vperm.xlu0 %2127, %v1730
        %v2129 = vpop.permute.xlu0 %2128
        %2132 = vset.pattern.permute.xlu0 0
        %2133 = vperm.xlu0 %2132, %v1731
        %v2134 = vpop.permute.xlu0 %2133
        %2137 = vset.pattern.permute.xlu0 0
        %2138 = vperm.xlu0 %2137, %v1732
        %v2139 = vpop.permute.xlu0 %2138
        %2142 = vset.pattern.permute.xlu0 0
        %2143 = vperm.xlu0 %2142, %v1733
        %v2144 = vpop.permute.xlu0 %2143
        %2147 = vset.pattern.permute.xlu0 0
        %2148 = vperm.xlu0 %2147, %v1734
        %v2149 = vpop.permute.xlu0 %2148
        %2152 = vset.pattern.permute.xlu0 0
        %2153 = vperm.xlu0 %2152, %v1735
        %v2154 = vpop.permute.xlu0 %2153
        %2157 = vset.pattern.permute.xlu0 0
        %2158 = vperm.xlu0 %2157, %v1736
        %v2159 = vpop.permute.xlu0 %2158
        %2162 = vset.pattern.permute.xlu0 0
        %2163 = vperm.xlu0 %2162, %v1737
        %v2164 = vpop.permute.xlu0 %2163
        %2167 = vset.pattern.permute.xlu0 0
        %2168 = vperm.xlu0 %2167, %v1738
        %v2169 = vpop.permute.xlu0 %2168
        %2172 = vset.pattern.permute.xlu0 0
        %2173 = vperm.xlu0 %2172, %v1739
        %v2174 = vpop.permute.xlu0 %2173
        %2177 = vset.pattern.permute.xlu0 0
        %2178 = vperm.xlu0 %2177, %v1740
        %v2179 = vpop.permute.xlu0 %2178
        %2182 = vset.pattern.permute.xlu0 0
        %2183 = vperm.xlu0 %2182, %v1741
        %v2184 = vpop.permute.xlu0 %2183
        %2187 = vset.pattern.permute.xlu0 0
        %2188 = vperm.xlu0 %2187, %v1742
        %v2189 = vpop.permute.xlu0 %2188
        %2192 = vset.pattern.permute.xlu0 0
        %2193 = vperm.xlu0 %2192, %v1743
        %v2194 = vpop.permute.xlu0 %2193
        %2197 = vset.pattern.permute.xlu0 0
        %2198 = vperm.xlu0 %2197, %v1744
        %v2199 = vpop.permute.xlu0 %2198
        %2202 = vset.pattern.permute.xlu0 0
        %2203 = vperm.xlu0 %2202, %v1745
        %v2204 = vpop.permute.xlu0 %2203
        %2207 = vset.pattern.permute.xlu0 0
        %2208 = vperm.xlu0 %2207, %v1746
        %v2209 = vpop.permute.xlu0 %2208
        %2212 = vset.pattern.permute.xlu0 0
        %2213 = vperm.xlu0 %2212, %v1747
        %v2214 = vpop.permute.xlu0 %2213
        %2217 = vset.pattern.permute.xlu0 0
        %2218 = vperm.xlu0 %2217, %v1748
        %v2219 = vpop.permute.xlu0 %2218
        %2222 = vset.pattern.permute.xlu0 0
        %2223 = vperm.xlu0 %2222, %v1749
        %v2224 = vpop.permute.xlu0 %2223
        %2227 = vset.pattern.permute.xlu0 0
        %2228 = vperm.xlu0 %2227, %v1750
        %v2229 = vpop.permute.xlu0 %2228
        %2232 = vset.pattern.permute.xlu0 0
        %2233 = vperm.xlu0 %2232, %v1751
        %v2234 = vpop.permute.xlu0 %2233
        %2237 = vset.pattern.permute.xlu0 0
        %2238 = vperm.xlu0 %2237, %v1752
        %v2239 = vpop.permute.xlu0 %2238
        %2242 = vset.pattern.permute.xlu0 0
        %2243 = vperm.xlu0 %2242, %v1753
        %v2244 = vpop.permute.xlu0 %2243
        %2247 = vset.pattern.permute.xlu0 0
        %2248 = vperm.xlu0 %2247, %v1754
        %v2249 = vpop.permute.xlu0 %2248
        %2252 = vset.pattern.permute.xlu0 0
        %2253 = vperm.xlu0 %2252, %v1755
        %v2254 = vpop.permute.xlu0 %2253
        %2257 = vset.pattern.permute.xlu0 0
        %2258 = vperm.xlu0 %2257, %v1756
        %v2259 = vpop.permute.xlu0 %2258
        %2262 = vset.pattern.permute.xlu0 0
        %2263 = vperm.xlu0 %2262, %v1757
        %v2264 = vpop.permute.xlu0 %2263
        %2267 = vset.pattern.permute.xlu0 0
        %2268 = vperm.xlu0 %2267, %v1758
        %v2269 = vpop.permute.xlu0 %2268
        %2272 = vset.pattern.permute.xlu0 0
        %2273 = vperm.xlu0 %2272, %v1759
        %v2274 = vpop.permute.xlu0 %2273
        %2277 = vset.pattern.permute.xlu0 0
        %2278 = vperm.xlu0 %2277, %v1760
        %v2279 = vpop.permute.xlu0 %2278
        %2282 = vset.pattern.permute.xlu0 0
        %2283 = vperm.xlu0 %2282, %v1761
        %v2284 = vpop.permute.xlu0 %2283
        %2287 = vset.pattern.permute.xlu0 0
        %2288 = vperm.xlu0 %2287, %v1762
        %v2289 = vpop.permute.xlu0 %2288
        %2292 = vset.pattern.permute.xlu0 0
        %2293 = vperm.xlu0 %2292, %v1763
        %v2294 = vpop.permute.xlu0 %2293
        %2297 = vset.pattern.permute.xlu0 0
        %2298 = vperm.xlu0 %2297, %v1764
        %v2299 = vpop.permute.xlu0 %2298
        %2302 = vset.pattern.permute.xlu0 0
        %2303 = vperm.xlu0 %2302, %v1765
        %v2304 = vpop.permute.xlu0 %2303
        %2307 = vset.pattern.permute.xlu0 0
        %2308 = vperm.xlu0 %2307, %v1766
        %v2309 = vpop.permute.xlu0 %2308
        %2312 = vset.pattern.permute.xlu0 0
        %2313 = vperm.xlu0 %2312, %v1767
        %v2314 = vpop.permute.xlu0 %2313
        %2317 = vset.pattern.permute.xlu0 0
        %2318 = vperm.xlu0 %2317, %v1768
        %v2319 = vpop.permute.xlu0 %2318
        %2322 = vset.pattern.permute.xlu0 0
        %2323 = vperm.xlu0 %2322, %v1769
        %v2324 = vpop.permute.xlu0 %2323
        %2327 = vset.pattern.permute.xlu0 0
        %2328 = vperm.xlu0 %2327, %v1770
        %v2329 = vpop.permute.xlu0 %2328
        %2332 = vset.pattern.permute.xlu0 0
        %2333 = vperm.xlu0 %2332, %v1771
        %v2334 = vpop.permute.xlu0 %2333
        %2337 = vset.pattern.permute.xlu0 0
        %2338 = vperm.xlu0 %2337, %v1772
        %v2339 = vpop.permute.xlu0 %2338
        %2342 = vset.pattern.permute.xlu0 0
        %2343 = vperm.xlu0 %2342, %v1773
        %v2344 = vpop.permute.xlu0 %2343
        %2347 = vset.pattern.permute.xlu0 0
        %2348 = vperm.xlu0 %2347, %v1774
        %v2349 = vpop.permute.xlu0 %2348
        %2352 = vset.pattern.permute.xlu0 0
        %2353 = vperm.xlu0 %2352, %v1775
        %v2354 = vpop.permute.xlu0 %2353
        %2357 = vset.pattern.permute.xlu0 0
        %2358 = vperm.xlu0 %2357, %v1776
        %v2359 = vpop.permute.xlu0 %2358
        %2362 = vset.pattern.permute.xlu0 0
        %2363 = vperm.xlu0 %2362, %v1777
        %v2364 = vpop.permute.xlu0 %2363
        %2367 = vset.pattern.permute.xlu0 0
        %2368 = vperm.xlu0 %2367, %v1778
        %v2369 = vpop.permute.xlu0 %2368
        %2372 = vset.pattern.permute.xlu0 0
        %2373 = vperm.xlu0 %2372, %v1779
        %v2374 = vpop.permute.xlu0 %2373
        %2377 = vset.pattern.permute.xlu0 0
        %2378 = vperm.xlu0 %2377, %v1780
        %v2379 = vpop.permute.xlu0 %2378
        %2382 = vset.pattern.permute.xlu0 0
        %2383 = vperm.xlu0 %2382, %v1781
        %v2384 = vpop.permute.xlu0 %2383
        %2387 = vset.pattern.permute.xlu0 0
        %2388 = vperm.xlu0 %2387, %v1782
        %v2389 = vpop.permute.xlu0 %2388
        %2392 = vset.pattern.permute.xlu0 0
        %2393 = vperm.xlu0 %2392, %v1783
        %v2394 = vpop.permute.xlu0 %2393
        %2397 = vset.pattern.permute.xlu0 0
        %2398 = vperm.xlu0 %2397, %v1784
        %v2399 = vpop.permute.xlu0 %2398
        %2402 = vset.pattern.permute.xlu0 0
        %2403 = vperm.xlu0 %2402, %v1785
        %v2404 = vpop.permute.xlu0 %2403
        %2407 = vset.pattern.permute.xlu0 0
        %2408 = vperm.xlu0 %2407, %v1786
        %v2409 = vpop.permute.xlu0 %2408
        %2412 = vset.pattern.permute.xlu0 0
        %2413 = vperm.xlu0 %2412, %v1787
        %v2414 = vpop.permute.xlu0 %2413
        %2417 = vset.pattern.permute.xlu0 0
        %2418 = vperm.xlu0 %2417, %v1788
        %v2419 = vpop.permute.xlu0 %2418
        %2422 = vset.pattern.permute.xlu0 0
        %2423 = vperm.xlu0 %2422, %v1789
        %v2424 = vpop.permute.xlu0 %2423
        %2427 = vset.pattern.permute.xlu0 0
        %2428 = vperm.xlu0 %2427, %v1790
        %v2429 = vpop.permute.xlu0 %2428
        %v2431 = vmul.f32 %v883, %v1794
        %v2432 = vmul.f32 %v884, %v1794
        %v2433 = vmul.f32 %v885, %v1794
        %v2434 = vmul.f32 %v886, %v1794
        %v2435 = vmul.f32 %v887, %v1794
        %v2436 = vmul.f32 %v888, %v1794
        %v2437 = vmul.f32 %v889, %v1799
        %v2438 = vmul.f32 %v890, %v1799
        %v2439 = vmul.f32 %v891, %v1799
        %v2440 = vmul.f32 %v892, %v1799
        %v2441 = vmul.f32 %v893, %v1799
        %v2442 = vmul.f32 %v894, %v1799
        %v2443 = vmul.f32 %v895, %v1804
        %v2444 = vmul.f32 %v896, %v1804
        %v2445 = vmul.f32 %v897, %v1804
        %v2446 = vmul.f32 %v898, %v1804
        %v2447 = vmul.f32 %v899, %v1804
        %v2448 = vmul.f32 %v900, %v1804
        %v2449 = vmul.f32 %v901, %v1809
        %v2450 = vmul.f32 %v902, %v1809
        %v2451 = vmul.f32 %v903, %v1809
        %v2452 = vmul.f32 %v904, %v1809
        %v2453 = vmul.f32 %v905, %v1809
        %v2454 = vmul.f32 %v906, %v1809
        %v2455 = vmul.f32 %v907, %v1814
        %v2456 = vmul.f32 %v908, %v1814
        %v2457 = vmul.f32 %v909, %v1814
        %v2458 = vmul.f32 %v910, %v1814
        %v2459 = vmul.f32 %v911, %v1814
        %v2460 = vmul.f32 %v912, %v1814
        %v2461 = vmul.f32 %v913, %v1819
        %v2462 = vmul.f32 %v914, %v1819
        %v2463 = vmul.f32 %v915, %v1819
        %v2464 = vmul.f32 %v916, %v1819
        %v2465 = vmul.f32 %v917, %v1819
        %v2466 = vmul.f32 %v918, %v1819
        %v2467 = vmul.f32 %v919, %v1824
        %v2468 = vmul.f32 %v920, %v1824
        %v2469 = vmul.f32 %v921, %v1824
        %v2470 = vmul.f32 %v922, %v1824
        %v2471 = vmul.f32 %v923, %v1824
        %v2472 = vmul.f32 %v924, %v1824
        %v2473 = vmul.f32 %v925, %v1829
        %v2474 = vmul.f32 %v926, %v1829
        %v2475 = vmul.f32 %v927, %v1829
        %v2476 = vmul.f32 %v928, %v1829
        %v2477 = vmul.f32 %v929, %v1829
        %v2478 = vmul.f32 %v930, %v1829
        %v2479 = vmul.f32 %v931, %v1834
        %v2480 = vmul.f32 %v932, %v1834
        %v2481 = vmul.f32 %v933, %v1834
        %v2482 = vmul.f32 %v934, %v1834
        %v2483 = vmul.f32 %v935, %v1834
        %v2484 = vmul.f32 %v936, %v1834
        %v2485 = vmul.f32 %v937, %v1839
        %v2486 = vmul.f32 %v938, %v1839
        %v2487 = vmul.f32 %v939, %v1839
        %v2488 = vmul.f32 %v940, %v1839
        %v2489 = vmul.f32 %v941, %v1839
        %v2490 = vmul.f32 %v942, %v1839
        %v2491 = vmul.f32 %v943, %v1844
        %v2492 = vmul.f32 %v944, %v1844
        %v2493 = vmul.f32 %v945, %v1844
        %v2494 = vmul.f32 %v946, %v1844
        %v2495 = vmul.f32 %v947, %v1844
        %v2496 = vmul.f32 %v948, %v1844
        %v2497 = vmul.f32 %v949, %v1849
        %v2498 = vmul.f32 %v950, %v1849
        %v2499 = vmul.f32 %v951, %v1849
        %v2500 = vmul.f32 %v952, %v1849
        %v2501 = vmul.f32 %v953, %v1849
        %v2502 = vmul.f32 %v954, %v1849
        %v2503 = vmul.f32 %v955, %v1854
        %v2504 = vmul.f32 %v956, %v1854
        %v2505 = vmul.f32 %v957, %v1854
        %v2506 = vmul.f32 %v958, %v1854
        %v2507 = vmul.f32 %v959, %v1854
        %v2508 = vmul.f32 %v960, %v1854
        %v2509 = vmul.f32 %v961, %v1859
        %v2510 = vmul.f32 %v962, %v1859
        %v2511 = vmul.f32 %v963, %v1859
        %v2512 = vmul.f32 %v964, %v1859
        %v2513 = vmul.f32 %v965, %v1859
        %v2514 = vmul.f32 %v966, %v1859
        %v2515 = vmul.f32 %v967, %v1864
        %v2516 = vmul.f32 %v968, %v1864
        %v2517 = vmul.f32 %v969, %v1864
        %v2518 = vmul.f32 %v970, %v1864
        %v2519 = vmul.f32 %v971, %v1864
        %v2520 = vmul.f32 %v972, %v1864
        %v2521 = vmul.f32 %v973, %v1869
        %v2522 = vmul.f32 %v974, %v1869
        %v2523 = vmul.f32 %v975, %v1869
        %v2524 = vmul.f32 %v976, %v1869
        %v2525 = vmul.f32 %v977, %v1869
        %v2526 = vmul.f32 %v978, %v1869
        %v2527 = vmul.f32 %v979, %v1874
        %v2528 = vmul.f32 %v980, %v1874
        %v2529 = vmul.f32 %v981, %v1874
        %v2530 = vmul.f32 %v982, %v1874
        %v2531 = vmul.f32 %v983, %v1874
        %v2532 = vmul.f32 %v984, %v1874
        %v2533 = vmul.f32 %v985, %v1879
        %v2534 = vmul.f32 %v986, %v1879
        %v2535 = vmul.f32 %v987, %v1879
        %v2536 = vmul.f32 %v988, %v1879
        %v2537 = vmul.f32 %v989, %v1879
        %v2538 = vmul.f32 %v990, %v1879
        %v2539 = vmul.f32 %v991, %v1884
        %v2540 = vmul.f32 %v992, %v1884
        %v2541 = vmul.f32 %v993, %v1884
        %v2542 = vmul.f32 %v994, %v1884
        %v2543 = vmul.f32 %v995, %v1884
        %v2544 = vmul.f32 %v996, %v1884
        %v2545 = vmul.f32 %v997, %v1889
        %v2546 = vmul.f32 %v998, %v1889
        %v2547 = vmul.f32 %v999, %v1889
        %v2548 = vmul.f32 %v1000, %v1889
        %v2549 = vmul.f32 %v1001, %v1889
        %v2550 = vmul.f32 %v1002, %v1889
        %v2551 = vmul.f32 %v1003, %v1894
        %v2552 = vmul.f32 %v1004, %v1894
        %v2553 = vmul.f32 %v1005, %v1894
        %v2554 = vmul.f32 %v1006, %v1894
        %v2555 = vmul.f32 %v1007, %v1894
        %v2556 = vmul.f32 %v1008, %v1894
        %v2557 = vmul.f32 %v1009, %v1899
        %v2558 = vmul.f32 %v1010, %v1899
        %v2559 = vmul.f32 %v1011, %v1899
        %v2560 = vmul.f32 %v1012, %v1899
        %v2561 = vmul.f32 %v1013, %v1899
        %v2562 = vmul.f32 %v1014, %v1899
        %v2563 = vmul.f32 %v1015, %v1904
        %v2564 = vmul.f32 %v1016, %v1904
        %v2565 = vmul.f32 %v1017, %v1904
        %v2566 = vmul.f32 %v1018, %v1904
        %v2567 = vmul.f32 %v1019, %v1904
        %v2568 = vmul.f32 %v1020, %v1904
        %v2569 = vmul.f32 %v1021, %v1909
        %v2570 = vmul.f32 %v1022, %v1909
        %v2571 = vmul.f32 %v1023, %v1909
        %v2572 = vmul.f32 %v1024, %v1909
        %v2573 = vmul.f32 %v1025, %v1909
        %v2574 = vmul.f32 %v1026, %v1909
        %v2575 = vmul.f32 %v1027, %v1914
        %v2576 = vmul.f32 %v1028, %v1914
        %v2577 = vmul.f32 %v1029, %v1914
        %v2578 = vmul.f32 %v1030, %v1914
        %v2579 = vmul.f32 %v1031, %v1914
        %v2580 = vmul.f32 %v1032, %v1914
        %v2581 = vmul.f32 %v1033, %v1919
        %v2582 = vmul.f32 %v1034, %v1919
        %v2583 = vmul.f32 %v1035, %v1919
        %v2584 = vmul.f32 %v1036, %v1919
        %v2585 = vmul.f32 %v1037, %v1919
        %v2586 = vmul.f32 %v1038, %v1919
        %v2587 = vmul.f32 %v1039, %v1924
        %v2588 = vmul.f32 %v1040, %v1924
        %v2589 = vmul.f32 %v1041, %v1924
        %v2590 = vmul.f32 %v1042, %v1924
        %v2591 = vmul.f32 %v1043, %v1924
        %v2592 = vmul.f32 %v1044, %v1924
        %v2593 = vmul.f32 %v1045, %v1929
        %v2594 = vmul.f32 %v1046, %v1929
        %v2595 = vmul.f32 %v1047, %v1929
        %v2596 = vmul.f32 %v1048, %v1929
        %v2597 = vmul.f32 %v1049, %v1929
        %v2598 = vmul.f32 %v1050, %v1929
        %v2599 = vmul.f32 %v1051, %v1934
        %v2600 = vmul.f32 %v1052, %v1934
        %v2601 = vmul.f32 %v1053, %v1934
        %v2602 = vmul.f32 %v1054, %v1934
        %v2603 = vmul.f32 %v1055, %v1934
        %v2604 = vmul.f32 %v1056, %v1934
        %v2605 = vmul.f32 %v1057, %v1939
        %v2606 = vmul.f32 %v1058, %v1939
        %v2607 = vmul.f32 %v1059, %v1939
        %v2608 = vmul.f32 %v1060, %v1939
        %v2609 = vmul.f32 %v1061, %v1939
        %v2610 = vmul.f32 %v1062, %v1939
        %v2611 = vmul.f32 %v1063, %v1944
        %v2612 = vmul.f32 %v1064, %v1944
        %v2613 = vmul.f32 %v1065, %v1944
        %v2614 = vmul.f32 %v1066, %v1944
        %v2615 = vmul.f32 %v1067, %v1944
        %v2616 = vmul.f32 %v1068, %v1944
        %v2617 = vmul.f32 %v1069, %v1949
        %v2618 = vmul.f32 %v1070, %v1949
        %v2619 = vmul.f32 %v1071, %v1949
        %v2620 = vmul.f32 %v1072, %v1949
        %v2621 = vmul.f32 %v1073, %v1949
        %v2622 = vmul.f32 %v1074, %v1949
        %v2623 = vmul.f32 %v1075, %v1954
        %v2624 = vmul.f32 %v1076, %v1954
        %v2625 = vmul.f32 %v1077, %v1954
        %v2626 = vmul.f32 %v1078, %v1954
        %v2627 = vmul.f32 %v1079, %v1954
        %v2628 = vmul.f32 %v1080, %v1954
        %v2629 = vmul.f32 %v1081, %v1959
        %v2630 = vmul.f32 %v1082, %v1959
        %v2631 = vmul.f32 %v1083, %v1959
        %v2632 = vmul.f32 %v1084, %v1959
        %v2633 = vmul.f32 %v1085, %v1959
        %v2634 = vmul.f32 %v1086, %v1959
        %v2635 = vmul.f32 %v1087, %v1964
        %v2636 = vmul.f32 %v1088, %v1964
        %v2637 = vmul.f32 %v1089, %v1964
        %v2638 = vmul.f32 %v1090, %v1964
        %v2639 = vmul.f32 %v1091, %v1964
        %v2640 = vmul.f32 %v1092, %v1964
        %v2641 = vmul.f32 %v1093, %v1969
        %v2642 = vmul.f32 %v1094, %v1969
        %v2643 = vmul.f32 %v1095, %v1969
        %v2644 = vmul.f32 %v1096, %v1969
        %v2645 = vmul.f32 %v1097, %v1969
        %v2646 = vmul.f32 %v1098, %v1969
        %v2647 = vmul.f32 %v1099, %v1974
        %v2648 = vmul.f32 %v1100, %v1974
        %v2649 = vmul.f32 %v1101, %v1974
        %v2650 = vmul.f32 %v1102, %v1974
        %v2651 = vmul.f32 %v1103, %v1974
        %v2652 = vmul.f32 %v1104, %v1974
        %v2653 = vmul.f32 %v1105, %v1979
        %v2654 = vmul.f32 %v1106, %v1979
        %v2655 = vmul.f32 %v1107, %v1979
        %v2656 = vmul.f32 %v1108, %v1979
        %v2657 = vmul.f32 %v1109, %v1979
        %v2658 = vmul.f32 %v1110, %v1979
        %v2659 = vmul.f32 %v1111, %v1984
        %v2660 = vmul.f32 %v1112, %v1984
        %v2661 = vmul.f32 %v1113, %v1984
        %v2662 = vmul.f32 %v1114, %v1984
        %v2663 = vmul.f32 %v1115, %v1984
        %v2664 = vmul.f32 %v1116, %v1984
        %v2665 = vmul.f32 %v1117, %v1989
        %v2666 = vmul.f32 %v1118, %v1989
        %v2667 = vmul.f32 %v1119, %v1989
        %v2668 = vmul.f32 %v1120, %v1989
        %v2669 = vmul.f32 %v1121, %v1989
        %v2670 = vmul.f32 %v1122, %v1989
        %v2671 = vmul.f32 %v1123, %v1994
        %v2672 = vmul.f32 %v1124, %v1994
        %v2673 = vmul.f32 %v1125, %v1994
        %v2674 = vmul.f32 %v1126, %v1994
        %v2675 = vmul.f32 %v1127, %v1994
        %v2676 = vmul.f32 %v1128, %v1994
        %v2677 = vmul.f32 %v1129, %v1999
        %v2678 = vmul.f32 %v1130, %v1999
        %v2679 = vmul.f32 %v1131, %v1999
        %v2680 = vmul.f32 %v1132, %v1999
        %v2681 = vmul.f32 %v1133, %v1999
        %v2682 = vmul.f32 %v1134, %v1999
        %v2683 = vmul.f32 %v1135, %v2004
        %v2684 = vmul.f32 %v1136, %v2004
        %v2685 = vmul.f32 %v1137, %v2004
        %v2686 = vmul.f32 %v1138, %v2004
        %v2687 = vmul.f32 %v1139, %v2004
        %v2688 = vmul.f32 %v1140, %v2004
        %v2689 = vmul.f32 %v1141, %v2009
        %v2690 = vmul.f32 %v1142, %v2009
        %v2691 = vmul.f32 %v1143, %v2009
        %v2692 = vmul.f32 %v1144, %v2009
        %v2693 = vmul.f32 %v1145, %v2009
        %v2694 = vmul.f32 %v1146, %v2009
        %v2695 = vmul.f32 %v1147, %v2014
        %v2696 = vmul.f32 %v1148, %v2014
        %v2697 = vmul.f32 %v1149, %v2014
        %v2698 = vmul.f32 %v1150, %v2014
        %v2699 = vmul.f32 %v1151, %v2014
        %v2700 = vmul.f32 %v1152, %v2014
        %v2701 = vmul.f32 %v1153, %v2019
        %v2702 = vmul.f32 %v1154, %v2019
        %v2703 = vmul.f32 %v1155, %v2019
        %v2704 = vmul.f32 %v1156, %v2019
        %v2705 = vmul.f32 %v1157, %v2019
        %v2706 = vmul.f32 %v1158, %v2019
        %v2707 = vmul.f32 %v1159, %v2024
        %v2708 = vmul.f32 %v1160, %v2024
        %v2709 = vmul.f32 %v1161, %v2024
        %v2710 = vmul.f32 %v1162, %v2024
        %v2711 = vmul.f32 %v1163, %v2024
        %v2712 = vmul.f32 %v1164, %v2024
        %v2713 = vmul.f32 %v1165, %v2029
        %v2714 = vmul.f32 %v1166, %v2029
        %v2715 = vmul.f32 %v1167, %v2029
        %v2716 = vmul.f32 %v1168, %v2029
        %v2717 = vmul.f32 %v1169, %v2029
        %v2718 = vmul.f32 %v1170, %v2029
        %v2719 = vmul.f32 %v1171, %v2034
        %v2720 = vmul.f32 %v1172, %v2034
        %v2721 = vmul.f32 %v1173, %v2034
        %v2722 = vmul.f32 %v1174, %v2034
        %v2723 = vmul.f32 %v1175, %v2034
        %v2724 = vmul.f32 %v1176, %v2034
        %v2725 = vmul.f32 %v1177, %v2039
        %v2726 = vmul.f32 %v1178, %v2039
        %v2727 = vmul.f32 %v1179, %v2039
        %v2728 = vmul.f32 %v1180, %v2039
        %v2729 = vmul.f32 %v1181, %v2039
        %v2730 = vmul.f32 %v1182, %v2039
        %v2731 = vmul.f32 %v1183, %v2044
        %v2732 = vmul.f32 %v1184, %v2044
        %v2733 = vmul.f32 %v1185, %v2044
        %v2734 = vmul.f32 %v1186, %v2044
        %v2735 = vmul.f32 %v1187, %v2044
        %v2736 = vmul.f32 %v1188, %v2044
        %v2737 = vmul.f32 %v1189, %v2049
        %v2738 = vmul.f32 %v1190, %v2049
        %v2739 = vmul.f32 %v1191, %v2049
        %v2740 = vmul.f32 %v1192, %v2049
        %v2741 = vmul.f32 %v1193, %v2049
        %v2742 = vmul.f32 %v1194, %v2049
        %v2743 = vmul.f32 %v1195, %v2054
        %v2744 = vmul.f32 %v1196, %v2054
        %v2745 = vmul.f32 %v1197, %v2054
        %v2746 = vmul.f32 %v1198, %v2054
        %v2747 = vmul.f32 %v1199, %v2054
        %v2748 = vmul.f32 %v1200, %v2054
        %v2749 = vmul.f32 %v1201, %v2059
        %v2750 = vmul.f32 %v1202, %v2059
        %v2751 = vmul.f32 %v1203, %v2059
        %v2752 = vmul.f32 %v1204, %v2059
        %v2753 = vmul.f32 %v1205, %v2059
        %v2754 = vmul.f32 %v1206, %v2059
        %v2755 = vmul.f32 %v1207, %v2064
        %v2756 = vmul.f32 %v1208, %v2064
        %v2757 = vmul.f32 %v1209, %v2064
        %v2758 = vmul.f32 %v1210, %v2064
        %v2759 = vmul.f32 %v1211, %v2064
        %v2760 = vmul.f32 %v1212, %v2064
        %v2761 = vmul.f32 %v1213, %v2069
        %v2762 = vmul.f32 %v1214, %v2069
        %v2763 = vmul.f32 %v1215, %v2069
        %v2764 = vmul.f32 %v1216, %v2069
        %v2765 = vmul.f32 %v1217, %v2069
        %v2766 = vmul.f32 %v1218, %v2069
        %v2767 = vmul.f32 %v1219, %v2074
        %v2768 = vmul.f32 %v1220, %v2074
        %v2769 = vmul.f32 %v1221, %v2074
        %v2770 = vmul.f32 %v1222, %v2074
        %v2771 = vmul.f32 %v1223, %v2074
        %v2772 = vmul.f32 %v1224, %v2074
        %v2773 = vmul.f32 %v1225, %v2079
        %v2774 = vmul.f32 %v1226, %v2079
        %v2775 = vmul.f32 %v1227, %v2079
        %v2776 = vmul.f32 %v1228, %v2079
        %v2777 = vmul.f32 %v1229, %v2079
        %v2778 = vmul.f32 %v1230, %v2079
        %v2779 = vmul.f32 %v1231, %v2084
        %v2780 = vmul.f32 %v1232, %v2084
        %v2781 = vmul.f32 %v1233, %v2084
        %v2782 = vmul.f32 %v1234, %v2084
        %v2783 = vmul.f32 %v1235, %v2084
        %v2784 = vmul.f32 %v1236, %v2084
        %v2785 = vmul.f32 %v1237, %v2089
        %v2786 = vmul.f32 %v1238, %v2089
        %v2787 = vmul.f32 %v1239, %v2089
        %v2788 = vmul.f32 %v1240, %v2089
        %v2789 = vmul.f32 %v1241, %v2089
        %v2790 = vmul.f32 %v1242, %v2089
        %v2791 = vmul.f32 %v1243, %v2094
        %v2792 = vmul.f32 %v1244, %v2094
        %v2793 = vmul.f32 %v1245, %v2094
        %v2794 = vmul.f32 %v1246, %v2094
        %v2795 = vmul.f32 %v1247, %v2094
        %v2796 = vmul.f32 %v1248, %v2094
        %v2797 = vmul.f32 %v1249, %v2099
        %v2798 = vmul.f32 %v1250, %v2099
        %v2799 = vmul.f32 %v1251, %v2099
        %v2800 = vmul.f32 %v1252, %v2099
        %v2801 = vmul.f32 %v1253, %v2099
        %v2802 = vmul.f32 %v1254, %v2099
        %v2803 = vmul.f32 %v1255, %v2104
        %v2804 = vmul.f32 %v1256, %v2104
        %v2805 = vmul.f32 %v1257, %v2104
        %v2806 = vmul.f32 %v1258, %v2104
        %v2807 = vmul.f32 %v1259, %v2104
        %v2808 = vmul.f32 %v1260, %v2104
        %v2809 = vmul.f32 %v1261, %v2109
        %v2810 = vmul.f32 %v1262, %v2109
        %v2811 = vmul.f32 %v1263, %v2109
        %v2812 = vmul.f32 %v1264, %v2109
        %v2813 = vmul.f32 %v1265, %v2109
        %v2814 = vmul.f32 %v1266, %v2109
        %v2815 = vmul.f32 %v1267, %v2114
        %v2816 = vmul.f32 %v1268, %v2114
        %v2817 = vmul.f32 %v1269, %v2114
        %v2818 = vmul.f32 %v1270, %v2114
        %v2819 = vmul.f32 %v1271, %v2114
        %v2820 = vmul.f32 %v1272, %v2114
        %v2821 = vmul.f32 %v1273, %v2119
        %v2822 = vmul.f32 %v1274, %v2119
        %v2823 = vmul.f32 %v1275, %v2119
        %v2824 = vmul.f32 %v1276, %v2119
        %v2825 = vmul.f32 %v1277, %v2119
        %v2826 = vmul.f32 %v1278, %v2119
        %v2827 = vmul.f32 %v1279, %v2124
        %v2828 = vmul.f32 %v1280, %v2124
        %v2829 = vmul.f32 %v1281, %v2124
        %v2830 = vmul.f32 %v1282, %v2124
        %v2831 = vmul.f32 %v1283, %v2124
        %v2832 = vmul.f32 %v1284, %v2124
        %v2833 = vmul.f32 %v1285, %v2129
        %v2834 = vmul.f32 %v1286, %v2129
        %v2835 = vmul.f32 %v1287, %v2129
        %v2836 = vmul.f32 %v1288, %v2129
        %v2837 = vmul.f32 %v1289, %v2129
        %v2838 = vmul.f32 %v1290, %v2129
        %v2839 = vmul.f32 %v1291, %v2134
        %v2840 = vmul.f32 %v1292, %v2134
        %v2841 = vmul.f32 %v1293, %v2134
        %v2842 = vmul.f32 %v1294, %v2134
        %v2843 = vmul.f32 %v1295, %v2134
        %v2844 = vmul.f32 %v1296, %v2134
        %v2845 = vmul.f32 %v1297, %v2139
        %v2846 = vmul.f32 %v1298, %v2139
        %v2847 = vmul.f32 %v1299, %v2139
        %v2848 = vmul.f32 %v1300, %v2139
        %v2849 = vmul.f32 %v1301, %v2139
        %v2850 = vmul.f32 %v1302, %v2139
        %v2851 = vmul.f32 %v1303, %v2144
        %v2852 = vmul.f32 %v1304, %v2144
        %v2853 = vmul.f32 %v1305, %v2144
        %v2854 = vmul.f32 %v1306, %v2144
        %v2855 = vmul.f32 %v1307, %v2144
        %v2856 = vmul.f32 %v1308, %v2144
        %v2857 = vmul.f32 %v1309, %v2149
        %v2858 = vmul.f32 %v1310, %v2149
        %v2859 = vmul.f32 %v1311, %v2149
        %v2860 = vmul.f32 %v1312, %v2149
        %v2861 = vmul.f32 %v1313, %v2149
        %v2862 = vmul.f32 %v1314, %v2149
        %v2863 = vmul.f32 %v1315, %v2154
        %v2864 = vmul.f32 %v1316, %v2154
        %v2865 = vmul.f32 %v1317, %v2154
        %v2866 = vmul.f32 %v1318, %v2154
        %v2867 = vmul.f32 %v1319, %v2154
        %v2868 = vmul.f32 %v1320, %v2154
        %v2869 = vmul.f32 %v1321, %v2159
        %v2870 = vmul.f32 %v1322, %v2159
        %v2871 = vmul.f32 %v1323, %v2159
        %v2872 = vmul.f32 %v1324, %v2159
        %v2873 = vmul.f32 %v1325, %v2159
        %v2874 = vmul.f32 %v1326, %v2159
        %v2875 = vmul.f32 %v1327, %v2164
        %v2876 = vmul.f32 %v1328, %v2164
        %v2877 = vmul.f32 %v1329, %v2164
        %v2878 = vmul.f32 %v1330, %v2164
        %v2879 = vmul.f32 %v1331, %v2164
        %v2880 = vmul.f32 %v1332, %v2164
        %v2881 = vmul.f32 %v1333, %v2169
        %v2882 = vmul.f32 %v1334, %v2169
        %v2883 = vmul.f32 %v1335, %v2169
        %v2884 = vmul.f32 %v1336, %v2169
        %v2885 = vmul.f32 %v1337, %v2169
        %v2886 = vmul.f32 %v1338, %v2169
        %v2887 = vmul.f32 %v1339, %v2174
        %v2888 = vmul.f32 %v1340, %v2174
        %v2889 = vmul.f32 %v1341, %v2174
        %v2890 = vmul.f32 %v1342, %v2174
        %v2891 = vmul.f32 %v1343, %v2174
        %v2892 = vmul.f32 %v1344, %v2174
        %v2893 = vmul.f32 %v1345, %v2179
        %v2894 = vmul.f32 %v1346, %v2179
        %v2895 = vmul.f32 %v1347, %v2179
        %v2896 = vmul.f32 %v1348, %v2179
        %v2897 = vmul.f32 %v1349, %v2179
        %v2898 = vmul.f32 %v1350, %v2179
        %v2899 = vmul.f32 %v1351, %v2184
        %v2900 = vmul.f32 %v1352, %v2184
        %v2901 = vmul.f32 %v1353, %v2184
        %v2902 = vmul.f32 %v1354, %v2184
        %v2903 = vmul.f32 %v1355, %v2184
        %v2904 = vmul.f32 %v1356, %v2184
        %v2905 = vmul.f32 %v1357, %v2189
        %v2906 = vmul.f32 %v1358, %v2189
        %v2907 = vmul.f32 %v1359, %v2189
        %v2908 = vmul.f32 %v1360, %v2189
        %v2909 = vmul.f32 %v1361, %v2189
        %v2910 = vmul.f32 %v1362, %v2189
        %v2911 = vmul.f32 %v1363, %v2194
        %v2912 = vmul.f32 %v1364, %v2194
        %v2913 = vmul.f32 %v1365, %v2194
        %v2914 = vmul.f32 %v1366, %v2194
        %v2915 = vmul.f32 %v1367, %v2194
        %v2916 = vmul.f32 %v1368, %v2194
        %v2917 = vmul.f32 %v1369, %v2199
        %v2918 = vmul.f32 %v1370, %v2199
        %v2919 = vmul.f32 %v1371, %v2199
        %v2920 = vmul.f32 %v1372, %v2199
        %v2921 = vmul.f32 %v1373, %v2199
        %v2922 = vmul.f32 %v1374, %v2199
        %v2923 = vmul.f32 %v1375, %v2204
        %v2924 = vmul.f32 %v1376, %v2204
        %v2925 = vmul.f32 %v1377, %v2204
        %v2926 = vmul.f32 %v1378, %v2204
        %v2927 = vmul.f32 %v1379, %v2204
        %v2928 = vmul.f32 %v1380, %v2204
        %v2929 = vmul.f32 %v1381, %v2209
        %v2930 = vmul.f32 %v1382, %v2209
        %v2931 = vmul.f32 %v1383, %v2209
        %v2932 = vmul.f32 %v1384, %v2209
        %v2933 = vmul.f32 %v1385, %v2209
        %v2934 = vmul.f32 %v1386, %v2209
        %v2935 = vmul.f32 %v1387, %v2214
        %v2936 = vmul.f32 %v1388, %v2214
        %v2937 = vmul.f32 %v1389, %v2214
        %v2938 = vmul.f32 %v1390, %v2214
        %v2939 = vmul.f32 %v1391, %v2214
        %v2940 = vmul.f32 %v1392, %v2214
        %v2941 = vmul.f32 %v1393, %v2219
        %v2942 = vmul.f32 %v1394, %v2219
        %v2943 = vmul.f32 %v1395, %v2219
        %v2944 = vmul.f32 %v1396, %v2219
        %v2945 = vmul.f32 %v1397, %v2219
        %v2946 = vmul.f32 %v1398, %v2219
        %v2947 = vmul.f32 %v1399, %v2224
        %v2948 = vmul.f32 %v1400, %v2224
        %v2949 = vmul.f32 %v1401, %v2224
        %v2950 = vmul.f32 %v1402, %v2224
        %v2951 = vmul.f32 %v1403, %v2224
        %v2952 = vmul.f32 %v1404, %v2224
        %v2953 = vmul.f32 %v1405, %v2229
        %v2954 = vmul.f32 %v1406, %v2229
        %v2955 = vmul.f32 %v1407, %v2229
        %v2956 = vmul.f32 %v1408, %v2229
        %v2957 = vmul.f32 %v1409, %v2229
        %v2958 = vmul.f32 %v1410, %v2229
        %v2959 = vmul.f32 %v1411, %v2234
        %v2960 = vmul.f32 %v1412, %v2234
        %v2961 = vmul.f32 %v1413, %v2234
        %v2962 = vmul.f32 %v1414, %v2234
        %v2963 = vmul.f32 %v1415, %v2234
        %v2964 = vmul.f32 %v1416, %v2234
        %v2965 = vmul.f32 %v1417, %v2239
        %v2966 = vmul.f32 %v1418, %v2239
        %v2967 = vmul.f32 %v1419, %v2239
        %v2968 = vmul.f32 %v1420, %v2239
        %v2969 = vmul.f32 %v1421, %v2239
        %v2970 = vmul.f32 %v1422, %v2239
        %v2971 = vmul.f32 %v1423, %v2244
        %v2972 = vmul.f32 %v1424, %v2244
        %v2973 = vmul.f32 %v1425, %v2244
        %v2974 = vmul.f32 %v1426, %v2244
        %v2975 = vmul.f32 %v1427, %v2244
        %v2976 = vmul.f32 %v1428, %v2244
        %v2977 = vmul.f32 %v1429, %v2249
        %v2978 = vmul.f32 %v1430, %v2249
        %v2979 = vmul.f32 %v1431, %v2249
        %v2980 = vmul.f32 %v1432, %v2249
        %v2981 = vmul.f32 %v1433, %v2249
        %v2982 = vmul.f32 %v1434, %v2249
        %v2983 = vmul.f32 %v1435, %v2254
        %v2984 = vmul.f32 %v1436, %v2254
        %v2985 = vmul.f32 %v1437, %v2254
        %v2986 = vmul.f32 %v1438, %v2254
        %v2987 = vmul.f32 %v1439, %v2254
        %v2988 = vmul.f32 %v1440, %v2254
        %v2989 = vmul.f32 %v1441, %v2259
        %v2990 = vmul.f32 %v1442, %v2259
        %v2991 = vmul.f32 %v1443, %v2259
        %v2992 = vmul.f32 %v1444, %v2259
        %v2993 = vmul.f32 %v1445, %v2259
        %v2994 = vmul.f32 %v1446, %v2259
        %v2995 = vmul.f32 %v1447, %v2264
        %v2996 = vmul.f32 %v1448, %v2264
        %v2997 = vmul.f32 %v1449, %v2264
        %v2998 = vmul.f32 %v1450, %v2264
        %v2999 = vmul.f32 %v1451, %v2264
        %v3000 = vmul.f32 %v1452, %v2264
        %v3001 = vmul.f32 %v1453, %v2269
        %v3002 = vmul.f32 %v1454, %v2269
        %v3003 = vmul.f32 %v1455, %v2269
        %v3004 = vmul.f32 %v1456, %v2269
        %v3005 = vmul.f32 %v1457, %v2269
        %v3006 = vmul.f32 %v1458, %v2269
        %v3007 = vmul.f32 %v1459, %v2274
        %v3008 = vmul.f32 %v1460, %v2274
        %v3009 = vmul.f32 %v1461, %v2274
        %v3010 = vmul.f32 %v1462, %v2274
        %v3011 = vmul.f32 %v1463, %v2274
        %v3012 = vmul.f32 %v1464, %v2274
        %v3013 = vmul.f32 %v1465, %v2279
        %v3014 = vmul.f32 %v1466, %v2279
        %v3015 = vmul.f32 %v1467, %v2279
        %v3016 = vmul.f32 %v1468, %v2279
        %v3017 = vmul.f32 %v1469, %v2279
        %v3018 = vmul.f32 %v1470, %v2279
        %v3019 = vmul.f32 %v1471, %v2284
        %v3020 = vmul.f32 %v1472, %v2284
        %v3021 = vmul.f32 %v1473, %v2284
        %v3022 = vmul.f32 %v1474, %v2284
        %v3023 = vmul.f32 %v1475, %v2284
        %v3024 = vmul.f32 %v1476, %v2284
        %v3025 = vmul.f32 %v1477, %v2289
        %v3026 = vmul.f32 %v1478, %v2289
        %v3027 = vmul.f32 %v1479, %v2289
        %v3028 = vmul.f32 %v1480, %v2289
        %v3029 = vmul.f32 %v1481, %v2289
        %v3030 = vmul.f32 %v1482, %v2289
        %v3031 = vmul.f32 %v1483, %v2294
        %v3032 = vmul.f32 %v1484, %v2294
        %v3033 = vmul.f32 %v1485, %v2294
        %v3034 = vmul.f32 %v1486, %v2294
        %v3035 = vmul.f32 %v1487, %v2294
        %v3036 = vmul.f32 %v1488, %v2294
        %v3037 = vmul.f32 %v1489, %v2299
        %v3038 = vmul.f32 %v1490, %v2299
        %v3039 = vmul.f32 %v1491, %v2299
        %v3040 = vmul.f32 %v1492, %v2299
        %v3041 = vmul.f32 %v1493, %v2299
        %v3042 = vmul.f32 %v1494, %v2299
        %v3043 = vmul.f32 %v1495, %v2304
        %v3044 = vmul.f32 %v1496, %v2304
        %v3045 = vmul.f32 %v1497, %v2304
        %v3046 = vmul.f32 %v1498, %v2304
        %v3047 = vmul.f32 %v1499, %v2304
        %v3048 = vmul.f32 %v1500, %v2304
        %v3049 = vmul.f32 %v1501, %v2309
        %v3050 = vmul.f32 %v1502, %v2309
        %v3051 = vmul.f32 %v1503, %v2309
        %v3052 = vmul.f32 %v1504, %v2309
        %v3053 = vmul.f32 %v1505, %v2309
        %v3054 = vmul.f32 %v1506, %v2309
        %v3055 = vmul.f32 %v1507, %v2314
        %v3056 = vmul.f32 %v1508, %v2314
        %v3057 = vmul.f32 %v1509, %v2314
        %v3058 = vmul.f32 %v1510, %v2314
        %v3059 = vmul.f32 %v1511, %v2314
        %v3060 = vmul.f32 %v1512, %v2314
        %v3061 = vmul.f32 %v1513, %v2319
        %v3062 = vmul.f32 %v1514, %v2319
        %v3063 = vmul.f32 %v1515, %v2319
        %v3064 = vmul.f32 %v1516, %v2319
        %v3065 = vmul.f32 %v1517, %v2319
        %v3066 = vmul.f32 %v1518, %v2319
        %v3067 = vmul.f32 %v1519, %v2324
        %v3068 = vmul.f32 %v1520, %v2324
        %v3069 = vmul.f32 %v1521, %v2324
        %v3070 = vmul.f32 %v1522, %v2324
        %v3071 = vmul.f32 %v1523, %v2324
        %v3072 = vmul.f32 %v1524, %v2324
        %v3073 = vmul.f32 %v1525, %v2329
        %v3074 = vmul.f32 %v1526, %v2329
        %v3075 = vmul.f32 %v1527, %v2329
        %v3076 = vmul.f32 %v1528, %v2329
        %v3077 = vmul.f32 %v1529, %v2329
        %v3078 = vmul.f32 %v1530, %v2329
        %v3079 = vmul.f32 %v1531, %v2334
        %v3080 = vmul.f32 %v1532, %v2334
        %v3081 = vmul.f32 %v1533, %v2334
        %v3082 = vmul.f32 %v1534, %v2334
        %v3083 = vmul.f32 %v1535, %v2334
        %v3084 = vmul.f32 %v1536, %v2334
        %v3085 = vmul.f32 %v1537, %v2339
        %v3086 = vmul.f32 %v1538, %v2339
        %v3087 = vmul.f32 %v1539, %v2339
        %v3088 = vmul.f32 %v1540, %v2339
        %v3089 = vmul.f32 %v1541, %v2339
        %v3090 = vmul.f32 %v1542, %v2339
        %v3091 = vmul.f32 %v1543, %v2344
        %v3092 = vmul.f32 %v1544, %v2344
        %v3093 = vmul.f32 %v1545, %v2344
        %v3094 = vmul.f32 %v1546, %v2344
        %v3095 = vmul.f32 %v1547, %v2344
        %v3096 = vmul.f32 %v1548, %v2344
        %v3097 = vmul.f32 %v1549, %v2349
        %v3098 = vmul.f32 %v1550, %v2349
        %v3099 = vmul.f32 %v1551, %v2349
        %v3100 = vmul.f32 %v1552, %v2349
        %v3101 = vmul.f32 %v1553, %v2349
        %v3102 = vmul.f32 %v1554, %v2349
        %v3103 = vmul.f32 %v1555, %v2354
        %v3104 = vmul.f32 %v1556, %v2354
        %v3105 = vmul.f32 %v1557, %v2354
        %v3106 = vmul.f32 %v1558, %v2354
        %v3107 = vmul.f32 %v1559, %v2354
        %v3108 = vmul.f32 %v1560, %v2354
        %v3109 = vmul.f32 %v1561, %v2359
        %v3110 = vmul.f32 %v1562, %v2359
        %v3111 = vmul.f32 %v1563, %v2359
        %v3112 = vmul.f32 %v1564, %v2359
        %v3113 = vmul.f32 %v1565, %v2359
        %v3114 = vmul.f32 %v1566, %v2359
        %v3115 = vmul.f32 %v1567, %v2364
        %v3116 = vmul.f32 %v1568, %v2364
        %v3117 = vmul.f32 %v1569, %v2364
        %v3118 = vmul.f32 %v1570, %v2364
        %v3119 = vmul.f32 %v1571, %v2364
        %v3120 = vmul.f32 %v1572, %v2364
        %v3121 = vmul.f32 %v1573, %v2369
        %v3122 = vmul.f32 %v1574, %v2369
        %v3123 = vmul.f32 %v1575, %v2369
        %v3124 = vmul.f32 %v1576, %v2369
        %v3125 = vmul.f32 %v1577, %v2369
        %v3126 = vmul.f32 %v1578, %v2369
        %v3127 = vmul.f32 %v1579, %v2374
        %v3128 = vmul.f32 %v1580, %v2374
        %v3129 = vmul.f32 %v1581, %v2374
        %v3130 = vmul.f32 %v1582, %v2374
        %v3131 = vmul.f32 %v1583, %v2374
        %v3132 = vmul.f32 %v1584, %v2374
        %v3133 = vmul.f32 %v1585, %v2379
        %v3134 = vmul.f32 %v1586, %v2379
        %v3135 = vmul.f32 %v1587, %v2379
        %v3136 = vmul.f32 %v1588, %v2379
        %v3137 = vmul.f32 %v1589, %v2379
        %v3138 = vmul.f32 %v1590, %v2379
        %v3139 = vmul.f32 %v1591, %v2384
        %v3140 = vmul.f32 %v1592, %v2384
        %v3141 = vmul.f32 %v1593, %v2384
        %v3142 = vmul.f32 %v1594, %v2384
        %v3143 = vmul.f32 %v1595, %v2384
        %v3144 = vmul.f32 %v1596, %v2384
        %v3145 = vmul.f32 %v1597, %v2389
        %v3146 = vmul.f32 %v1598, %v2389
        %v3147 = vmul.f32 %v1599, %v2389
        %v3148 = vmul.f32 %v1600, %v2389
        %v3149 = vmul.f32 %v1601, %v2389
        %v3150 = vmul.f32 %v1602, %v2389
        %v3151 = vmul.f32 %v1603, %v2394
        %v3152 = vmul.f32 %v1604, %v2394
        %v3153 = vmul.f32 %v1605, %v2394
        %v3154 = vmul.f32 %v1606, %v2394
        %v3155 = vmul.f32 %v1607, %v2394
        %v3156 = vmul.f32 %v1608, %v2394
        %v3157 = vmul.f32 %v1609, %v2399
        %v3158 = vmul.f32 %v1610, %v2399
        %v3159 = vmul.f32 %v1611, %v2399
        %v3160 = vmul.f32 %v1612, %v2399
        %v3161 = vmul.f32 %v1613, %v2399
        %v3162 = vmul.f32 %v1614, %v2399
        %v3163 = vmul.f32 %v1615, %v2404
        %v3164 = vmul.f32 %v1616, %v2404
        %v3165 = vmul.f32 %v1617, %v2404
        %v3166 = vmul.f32 %v1618, %v2404
        %v3167 = vmul.f32 %v1619, %v2404
        %v3168 = vmul.f32 %v1620, %v2404
        %v3169 = vmul.f32 %v1621, %v2409
        %v3170 = vmul.f32 %v1622, %v2409
        %v3171 = vmul.f32 %v1623, %v2409
        %v3172 = vmul.f32 %v1624, %v2409
        %v3173 = vmul.f32 %v1625, %v2409
        %v3174 = vmul.f32 %v1626, %v2409
        %v3175 = vmul.f32 %v1627, %v2414
        %v3176 = vmul.f32 %v1628, %v2414
        %v3177 = vmul.f32 %v1629, %v2414
        %v3178 = vmul.f32 %v1630, %v2414
        %v3179 = vmul.f32 %v1631, %v2414
        %v3180 = vmul.f32 %v1632, %v2414
        %v3181 = vmul.f32 %v1633, %v2419
        %v3182 = vmul.f32 %v1634, %v2419
        %v3183 = vmul.f32 %v1635, %v2419
        %v3184 = vmul.f32 %v1636, %v2419
        %v3185 = vmul.f32 %v1637, %v2419
        %v3186 = vmul.f32 %v1638, %v2419
        %v3187 = vmul.f32 %v1639, %v2424
        %v3188 = vmul.f32 %v1640, %v2424
        %v3189 = vmul.f32 %v1641, %v2424
        %v3190 = vmul.f32 %v1642, %v2424
        %v3191 = vmul.f32 %v1643, %v2424
        %v3192 = vmul.f32 %v1644, %v2424
        %v3193 = vmul.f32 %v1645, %v2429
        %v3194 = vmul.f32 %v1646, %v2429
        %v3195 = vmul.f32 %v1647, %v2429
        %v3196 = vmul.f32 %v1648, %v2429
        %v3197 = vmul.f32 %v1649, %v2429
        %v3198 = vmul.f32 %v1650, %v2429
        %v3199 = vadd.f32 %v2431, %v2437
        %v3200 = vadd.f32 %v3199, %v2443
        %v3201 = vadd.f32 %v3200, %v2449
        %v3202 = vadd.f32 %v3201, %v2455
        %v3203 = vadd.f32 %v3202, %v2461
        %v3204 = vadd.f32 %v3203, %v2467
        %v3205 = vadd.f32 %v3204, %v2473
        %v3206 = vrot.slane %v3205, 4
        %v3207 = vadd.f32 %v3205, %v3206
        %v3208 = vrot.slane %v3207, 2
        %v3209 = vadd.f32 %v3207, %v3208
        %v3210 = vrot.slane %v3209, 1
        %v3211 = vadd.f32 %v3209, %v3210
        %v3212 = vadd.f32 %v2432, %v2438
        %v3213 = vadd.f32 %v3212, %v2444
        %v3214 = vadd.f32 %v3213, %v2450
        %v3215 = vadd.f32 %v3214, %v2456
        %v3216 = vadd.f32 %v3215, %v2462
        %v3217 = vadd.f32 %v3216, %v2468
        %v3218 = vadd.f32 %v3217, %v2474
        %v3219 = vrot.slane %v3218, 4
        %v3220 = vadd.f32 %v3218, %v3219
        %v3221 = vrot.slane %v3220, 2
        %v3222 = vadd.f32 %v3220, %v3221
        %v3223 = vrot.slane %v3222, 1
        %v3224 = vadd.f32 %v3222, %v3223
        %v3225 = vadd.f32 %v2433, %v2439
        %v3226 = vadd.f32 %v3225, %v2445
        %v3227 = vadd.f32 %v3226, %v2451
        %v3228 = vadd.f32 %v3227, %v2457
        %v3229 = vadd.f32 %v3228, %v2463
        %v3230 = vadd.f32 %v3229, %v2469
        %v3231 = vadd.f32 %v3230, %v2475
        %v3232 = vrot.slane %v3231, 4
        %v3233 = vadd.f32 %v3231, %v3232
        %v3234 = vrot.slane %v3233, 2
        %v3235 = vadd.f32 %v3233, %v3234
        %v3236 = vrot.slane %v3235, 1
        %v3237 = vadd.f32 %v3235, %v3236
        %v3238 = vadd.f32 %v2434, %v2440
        %v3239 = vadd.f32 %v3238, %v2446
        %v3240 = vadd.f32 %v3239, %v2452
        %v3241 = vadd.f32 %v3240, %v2458
        %v3242 = vadd.f32 %v3241, %v2464
        %v3243 = vadd.f32 %v3242, %v2470
        %v3244 = vadd.f32 %v3243, %v2476
        %v3245 = vrot.slane %v3244, 4
        %v3246 = vadd.f32 %v3244, %v3245
        %v3247 = vrot.slane %v3246, 2
        %v3248 = vadd.f32 %v3246, %v3247
        %v3249 = vrot.slane %v3248, 1
        %v3250 = vadd.f32 %v3248, %v3249
        %v3251 = vadd.f32 %v2435, %v2441
        %v3252 = vadd.f32 %v3251, %v2447
        %v3253 = vadd.f32 %v3252, %v2453
        %v3254 = vadd.f32 %v3253, %v2459
        %v3255 = vadd.f32 %v3254, %v2465
        %v3256 = vadd.f32 %v3255, %v2471
        %v3257 = vadd.f32 %v3256, %v2477
        %v3258 = vrot.slane %v3257, 4
        %v3259 = vadd.f32 %v3257, %v3258
        %v3260 = vrot.slane %v3259, 2
        %v3261 = vadd.f32 %v3259, %v3260
        %v3262 = vrot.slane %v3261, 1
        %v3263 = vadd.f32 %v3261, %v3262
        %v3264 = vadd.f32 %v2436, %v2442
        %v3265 = vadd.f32 %v3264, %v2448
        %v3266 = vadd.f32 %v3265, %v2454
        %v3267 = vadd.f32 %v3266, %v2460
        %v3268 = vadd.f32 %v3267, %v2466
        %v3269 = vadd.f32 %v3268, %v2472
        %v3270 = vadd.f32 %v3269, %v2478
        %v3271 = vrot.slane %v3270, 4
        %v3272 = vadd.f32 %v3270, %v3271
        %v3273 = vrot.slane %v3272, 2
        %v3274 = vadd.f32 %v3272, %v3273
        %v3275 = vrot.slane %v3274, 1
        %v3276 = vadd.f32 %v3274, %v3275
        %v3277 = vadd.f32 %v2479, %v2485
        %v3278 = vadd.f32 %v3277, %v2491
        %v3279 = vadd.f32 %v3278, %v2497
        %v3280 = vadd.f32 %v3279, %v2503
        %v3281 = vadd.f32 %v3280, %v2509
        %v3282 = vadd.f32 %v3281, %v2515
        %v3283 = vadd.f32 %v3282, %v2521
        %v3284 = vrot.slane %v3283, 4
        %v3285 = vadd.f32 %v3283, %v3284
        %v3286 = vrot.slane %v3285, 2
        %v3287 = vadd.f32 %v3285, %v3286
        %v3288 = vrot.slane %v3287, 1
        %v3289 = vadd.f32 %v3287, %v3288
        %v3290 = vadd.f32 %v2480, %v2486
        %v3291 = vadd.f32 %v3290, %v2492
        %v3292 = vadd.f32 %v3291, %v2498
        %v3293 = vadd.f32 %v3292, %v2504
        %v3294 = vadd.f32 %v3293, %v2510
        %v3295 = vadd.f32 %v3294, %v2516
        %v3296 = vadd.f32 %v3295, %v2522
        %v3297 = vrot.slane %v3296, 4
        %v3298 = vadd.f32 %v3296, %v3297
        %v3299 = vrot.slane %v3298, 2
        %v3300 = vadd.f32 %v3298, %v3299
        %v3301 = vrot.slane %v3300, 1
        %v3302 = vadd.f32 %v3300, %v3301
        %v3303 = vadd.f32 %v2481, %v2487
        %v3304 = vadd.f32 %v3303, %v2493
        %v3305 = vadd.f32 %v3304, %v2499
        %v3306 = vadd.f32 %v3305, %v2505
        %v3307 = vadd.f32 %v3306, %v2511
        %v3308 = vadd.f32 %v3307, %v2517
        %v3309 = vadd.f32 %v3308, %v2523
        %v3310 = vrot.slane %v3309, 4
        %v3311 = vadd.f32 %v3309, %v3310
        %v3312 = vrot.slane %v3311, 2
        %v3313 = vadd.f32 %v3311, %v3312
        %v3314 = vrot.slane %v3313, 1
        %v3315 = vadd.f32 %v3313, %v3314
        %v3316 = vadd.f32 %v2482, %v2488
        %v3317 = vadd.f32 %v3316, %v2494
        %v3318 = vadd.f32 %v3317, %v2500
        %v3319 = vadd.f32 %v3318, %v2506
        %v3320 = vadd.f32 %v3319, %v2512
        %v3321 = vadd.f32 %v3320, %v2518
        %v3322 = vadd.f32 %v3321, %v2524
        %v3323 = vrot.slane %v3322, 4
        %v3324 = vadd.f32 %v3322, %v3323
        %v3325 = vrot.slane %v3324, 2
        %v3326 = vadd.f32 %v3324, %v3325
        %v3327 = vrot.slane %v3326, 1
        %v3328 = vadd.f32 %v3326, %v3327
        %v3329 = vadd.f32 %v2483, %v2489
        %v3330 = vadd.f32 %v3329, %v2495
        %v3331 = vadd.f32 %v3330, %v2501
        %v3332 = vadd.f32 %v3331, %v2507
        %v3333 = vadd.f32 %v3332, %v2513
        %v3334 = vadd.f32 %v3333, %v2519
        %v3335 = vadd.f32 %v3334, %v2525
        %v3336 = vrot.slane %v3335, 4
        %v3337 = vadd.f32 %v3335, %v3336
        %v3338 = vrot.slane %v3337, 2
        %v3339 = vadd.f32 %v3337, %v3338
        %v3340 = vrot.slane %v3339, 1
        %v3341 = vadd.f32 %v3339, %v3340
        %v3342 = vadd.f32 %v2484, %v2490
        %v3343 = vadd.f32 %v3342, %v2496
        %v3344 = vadd.f32 %v3343, %v2502
        %v3345 = vadd.f32 %v3344, %v2508
        %v3346 = vadd.f32 %v3345, %v2514
        %v3347 = vadd.f32 %v3346, %v2520
        %v3348 = vadd.f32 %v3347, %v2526
        %v3349 = vrot.slane %v3348, 4
        %v3350 = vadd.f32 %v3348, %v3349
        %v3351 = vrot.slane %v3350, 2
        %v3352 = vadd.f32 %v3350, %v3351
        %v3353 = vrot.slane %v3352, 1
        %v3354 = vadd.f32 %v3352, %v3353
        %v3355 = vadd.f32 %v2527, %v2533
        %v3356 = vadd.f32 %v3355, %v2539
        %v3357 = vadd.f32 %v3356, %v2545
        %v3358 = vadd.f32 %v3357, %v2551
        %v3359 = vadd.f32 %v3358, %v2557
        %v3360 = vadd.f32 %v3359, %v2563
        %v3361 = vadd.f32 %v3360, %v2569
        %v3362 = vrot.slane %v3361, 4
        %v3363 = vadd.f32 %v3361, %v3362
        %v3364 = vrot.slane %v3363, 2
        %v3365 = vadd.f32 %v3363, %v3364
        %v3366 = vrot.slane %v3365, 1
        %v3367 = vadd.f32 %v3365, %v3366
        %v3368 = vadd.f32 %v2528, %v2534
        %v3369 = vadd.f32 %v3368, %v2540
        %v3370 = vadd.f32 %v3369, %v2546
        %v3371 = vadd.f32 %v3370, %v2552
        %v3372 = vadd.f32 %v3371, %v2558
        %v3373 = vadd.f32 %v3372, %v2564
        %v3374 = vadd.f32 %v3373, %v2570
        %v3375 = vrot.slane %v3374, 4
        %v3376 = vadd.f32 %v3374, %v3375
        %v3377 = vrot.slane %v3376, 2
        %v3378 = vadd.f32 %v3376, %v3377
        %v3379 = vrot.slane %v3378, 1
        %v3380 = vadd.f32 %v3378, %v3379
        %v3381 = vadd.f32 %v2529, %v2535
        %v3382 = vadd.f32 %v3381, %v2541
        %v3383 = vadd.f32 %v3382, %v2547
        %v3384 = vadd.f32 %v3383, %v2553
        %v3385 = vadd.f32 %v3384, %v2559
        %v3386 = vadd.f32 %v3385, %v2565
        %v3387 = vadd.f32 %v3386, %v2571
        %v3388 = vrot.slane %v3387, 4
        %v3389 = vadd.f32 %v3387, %v3388
        %v3390 = vrot.slane %v3389, 2
        %v3391 = vadd.f32 %v3389, %v3390
        %v3392 = vrot.slane %v3391, 1
        %v3393 = vadd.f32 %v3391, %v3392
        %v3394 = vadd.f32 %v2530, %v2536
        %v3395 = vadd.f32 %v3394, %v2542
        %v3396 = vadd.f32 %v3395, %v2548
        %v3397 = vadd.f32 %v3396, %v2554
        %v3398 = vadd.f32 %v3397, %v2560
        %v3399 = vadd.f32 %v3398, %v2566
        %v3400 = vadd.f32 %v3399, %v2572
        %v3401 = vrot.slane %v3400, 4
        %v3402 = vadd.f32 %v3400, %v3401
        %v3403 = vrot.slane %v3402, 2
        %v3404 = vadd.f32 %v3402, %v3403
        %v3405 = vrot.slane %v3404, 1
        %v3406 = vadd.f32 %v3404, %v3405
        %v3407 = vadd.f32 %v2531, %v2537
        %v3408 = vadd.f32 %v3407, %v2543
        %v3409 = vadd.f32 %v3408, %v2549
        %v3410 = vadd.f32 %v3409, %v2555
        %v3411 = vadd.f32 %v3410, %v2561
        %v3412 = vadd.f32 %v3411, %v2567
        %v3413 = vadd.f32 %v3412, %v2573
        %v3414 = vrot.slane %v3413, 4
        %v3415 = vadd.f32 %v3413, %v3414
        %v3416 = vrot.slane %v3415, 2
        %v3417 = vadd.f32 %v3415, %v3416
        %v3418 = vrot.slane %v3417, 1
        %v3419 = vadd.f32 %v3417, %v3418
        %v3420 = vadd.f32 %v2532, %v2538
        %v3421 = vadd.f32 %v3420, %v2544
        %v3422 = vadd.f32 %v3421, %v2550
        %v3423 = vadd.f32 %v3422, %v2556
        %v3424 = vadd.f32 %v3423, %v2562
        %v3425 = vadd.f32 %v3424, %v2568
        %v3426 = vadd.f32 %v3425, %v2574
        %v3427 = vrot.slane %v3426, 4
        %v3428 = vadd.f32 %v3426, %v3427
        %v3429 = vrot.slane %v3428, 2
        %v3430 = vadd.f32 %v3428, %v3429
        %v3431 = vrot.slane %v3430, 1
        %v3432 = vadd.f32 %v3430, %v3431
        %v3433 = vadd.f32 %v2575, %v2581
        %v3434 = vadd.f32 %v3433, %v2587
        %v3435 = vadd.f32 %v3434, %v2593
        %v3436 = vadd.f32 %v3435, %v2599
        %v3437 = vadd.f32 %v3436, %v2605
        %v3438 = vadd.f32 %v3437, %v2611
        %v3439 = vadd.f32 %v3438, %v2617
        %v3440 = vrot.slane %v3439, 4
        %v3441 = vadd.f32 %v3439, %v3440
        %v3442 = vrot.slane %v3441, 2
        %v3443 = vadd.f32 %v3441, %v3442
        %v3444 = vrot.slane %v3443, 1
        %v3445 = vadd.f32 %v3443, %v3444
        %v3446 = vadd.f32 %v2576, %v2582
        %v3447 = vadd.f32 %v3446, %v2588
        %v3448 = vadd.f32 %v3447, %v2594
        %v3449 = vadd.f32 %v3448, %v2600
        %v3450 = vadd.f32 %v3449, %v2606
        %v3451 = vadd.f32 %v3450, %v2612
        %v3452 = vadd.f32 %v3451, %v2618
        %v3453 = vrot.slane %v3452, 4
        %v3454 = vadd.f32 %v3452, %v3453
        %v3455 = vrot.slane %v3454, 2
        %v3456 = vadd.f32 %v3454, %v3455
        %v3457 = vrot.slane %v3456, 1
        %v3458 = vadd.f32 %v3456, %v3457
        %v3459 = vadd.f32 %v2577, %v2583
        %v3460 = vadd.f32 %v3459, %v2589
        %v3461 = vadd.f32 %v3460, %v2595
        %v3462 = vadd.f32 %v3461, %v2601
        %v3463 = vadd.f32 %v3462, %v2607
        %v3464 = vadd.f32 %v3463, %v2613
        %v3465 = vadd.f32 %v3464, %v2619
        %v3466 = vrot.slane %v3465, 4
        %v3467 = vadd.f32 %v3465, %v3466
        %v3468 = vrot.slane %v3467, 2
        %v3469 = vadd.f32 %v3467, %v3468
        %v3470 = vrot.slane %v3469, 1
        %v3471 = vadd.f32 %v3469, %v3470
        %v3472 = vadd.f32 %v2578, %v2584
        %v3473 = vadd.f32 %v3472, %v2590
        %v3474 = vadd.f32 %v3473, %v2596
        %v3475 = vadd.f32 %v3474, %v2602
        %v3476 = vadd.f32 %v3475, %v2608
        %v3477 = vadd.f32 %v3476, %v2614
        %v3478 = vadd.f32 %v3477, %v2620
        %v3479 = vrot.slane %v3478, 4
        %v3480 = vadd.f32 %v3478, %v3479
        %v3481 = vrot.slane %v3480, 2
        %v3482 = vadd.f32 %v3480, %v3481
        %v3483 = vrot.slane %v3482, 1
        %v3484 = vadd.f32 %v3482, %v3483
        %v3485 = vadd.f32 %v2579, %v2585
        %v3486 = vadd.f32 %v3485, %v2591
        %v3487 = vadd.f32 %v3486, %v2597
        %v3488 = vadd.f32 %v3487, %v2603
        %v3489 = vadd.f32 %v3488, %v2609
        %v3490 = vadd.f32 %v3489, %v2615
        %v3491 = vadd.f32 %v3490, %v2621
        %v3492 = vrot.slane %v3491, 4
        %v3493 = vadd.f32 %v3491, %v3492
        %v3494 = vrot.slane %v3493, 2
        %v3495 = vadd.f32 %v3493, %v3494
        %v3496 = vrot.slane %v3495, 1
        %v3497 = vadd.f32 %v3495, %v3496
        %v3498 = vadd.f32 %v2580, %v2586
        %v3499 = vadd.f32 %v3498, %v2592
        %v3500 = vadd.f32 %v3499, %v2598
        %v3501 = vadd.f32 %v3500, %v2604
        %v3502 = vadd.f32 %v3501, %v2610
        %v3503 = vadd.f32 %v3502, %v2616
        %v3504 = vadd.f32 %v3503, %v2622
        %v3505 = vrot.slane %v3504, 4
        %v3506 = vadd.f32 %v3504, %v3505
        %v3507 = vrot.slane %v3506, 2
        %v3508 = vadd.f32 %v3506, %v3507
        %v3509 = vrot.slane %v3508, 1
        %v3510 = vadd.f32 %v3508, %v3509
        %v3511 = vadd.f32 %v2623, %v2629
        %v3512 = vadd.f32 %v3511, %v2635
        %v3513 = vadd.f32 %v3512, %v2641
        %v3514 = vadd.f32 %v3513, %v2647
        %v3515 = vadd.f32 %v3514, %v2653
        %v3516 = vadd.f32 %v3515, %v2659
        %v3517 = vadd.f32 %v3516, %v2665
        %v3518 = vrot.slane %v3517, 4
        %v3519 = vadd.f32 %v3517, %v3518
        %v3520 = vrot.slane %v3519, 2
        %v3521 = vadd.f32 %v3519, %v3520
        %v3522 = vrot.slane %v3521, 1
        %v3523 = vadd.f32 %v3521, %v3522
        %v3524 = vadd.f32 %v2624, %v2630
        %v3525 = vadd.f32 %v3524, %v2636
        %v3526 = vadd.f32 %v3525, %v2642
        %v3527 = vadd.f32 %v3526, %v2648
        %v3528 = vadd.f32 %v3527, %v2654
        %v3529 = vadd.f32 %v3528, %v2660
        %v3530 = vadd.f32 %v3529, %v2666
        %v3531 = vrot.slane %v3530, 4
        %v3532 = vadd.f32 %v3530, %v3531
        %v3533 = vrot.slane %v3532, 2
        %v3534 = vadd.f32 %v3532, %v3533
        %v3535 = vrot.slane %v3534, 1
        %v3536 = vadd.f32 %v3534, %v3535
        %v3537 = vadd.f32 %v2625, %v2631
        %v3538 = vadd.f32 %v3537, %v2637
        %v3539 = vadd.f32 %v3538, %v2643
        %v3540 = vadd.f32 %v3539, %v2649
        %v3541 = vadd.f32 %v3540, %v2655
        %v3542 = vadd.f32 %v3541, %v2661
        %v3543 = vadd.f32 %v3542, %v2667
        %v3544 = vrot.slane %v3543, 4
        %v3545 = vadd.f32 %v3543, %v3544
        %v3546 = vrot.slane %v3545, 2
        %v3547 = vadd.f32 %v3545, %v3546
        %v3548 = vrot.slane %v3547, 1
        %v3549 = vadd.f32 %v3547, %v3548
        %v3550 = vadd.f32 %v2626, %v2632
        %v3551 = vadd.f32 %v3550, %v2638
        %v3552 = vadd.f32 %v3551, %v2644
        %v3553 = vadd.f32 %v3552, %v2650
        %v3554 = vadd.f32 %v3553, %v2656
        %v3555 = vadd.f32 %v3554, %v2662
        %v3556 = vadd.f32 %v3555, %v2668
        %v3557 = vrot.slane %v3556, 4
        %v3558 = vadd.f32 %v3556, %v3557
        %v3559 = vrot.slane %v3558, 2
        %v3560 = vadd.f32 %v3558, %v3559
        %v3561 = vrot.slane %v3560, 1
        %v3562 = vadd.f32 %v3560, %v3561
        %v3563 = vadd.f32 %v2627, %v2633
        %v3564 = vadd.f32 %v3563, %v2639
        %v3565 = vadd.f32 %v3564, %v2645
        %v3566 = vadd.f32 %v3565, %v2651
        %v3567 = vadd.f32 %v3566, %v2657
        %v3568 = vadd.f32 %v3567, %v2663
        %v3569 = vadd.f32 %v3568, %v2669
        %v3570 = vrot.slane %v3569, 4
        %v3571 = vadd.f32 %v3569, %v3570
        %v3572 = vrot.slane %v3571, 2
        %v3573 = vadd.f32 %v3571, %v3572
        %v3574 = vrot.slane %v3573, 1
        %v3575 = vadd.f32 %v3573, %v3574
        %v3576 = vadd.f32 %v2628, %v2634
        %v3577 = vadd.f32 %v3576, %v2640
        %v3578 = vadd.f32 %v3577, %v2646
        %v3579 = vadd.f32 %v3578, %v2652
        %v3580 = vadd.f32 %v3579, %v2658
        %v3581 = vadd.f32 %v3580, %v2664
        %v3582 = vadd.f32 %v3581, %v2670
        %v3583 = vrot.slane %v3582, 4
        %v3584 = vadd.f32 %v3582, %v3583
        %v3585 = vrot.slane %v3584, 2
        %v3586 = vadd.f32 %v3584, %v3585
        %v3587 = vrot.slane %v3586, 1
        %v3588 = vadd.f32 %v3586, %v3587
        %v3589 = vadd.f32 %v2671, %v2677
        %v3590 = vadd.f32 %v3589, %v2683
        %v3591 = vadd.f32 %v3590, %v2689
        %v3592 = vadd.f32 %v3591, %v2695
        %v3593 = vadd.f32 %v3592, %v2701
        %v3594 = vadd.f32 %v3593, %v2707
        %v3595 = vadd.f32 %v3594, %v2713
        %v3596 = vrot.slane %v3595, 4
        %v3597 = vadd.f32 %v3595, %v3596
        %v3598 = vrot.slane %v3597, 2
        %v3599 = vadd.f32 %v3597, %v3598
        %v3600 = vrot.slane %v3599, 1
        %v3601 = vadd.f32 %v3599, %v3600
        %v3602 = vadd.f32 %v2672, %v2678
        %v3603 = vadd.f32 %v3602, %v2684
        %v3604 = vadd.f32 %v3603, %v2690
        %v3605 = vadd.f32 %v3604, %v2696
        %v3606 = vadd.f32 %v3605, %v2702
        %v3607 = vadd.f32 %v3606, %v2708
        %v3608 = vadd.f32 %v3607, %v2714
        %v3609 = vrot.slane %v3608, 4
        %v3610 = vadd.f32 %v3608, %v3609
        %v3611 = vrot.slane %v3610, 2
        %v3612 = vadd.f32 %v3610, %v3611
        %v3613 = vrot.slane %v3612, 1
        %v3614 = vadd.f32 %v3612, %v3613
        %v3615 = vadd.f32 %v2673, %v2679
        %v3616 = vadd.f32 %v3615, %v2685
        %v3617 = vadd.f32 %v3616, %v2691
        %v3618 = vadd.f32 %v3617, %v2697
        %v3619 = vadd.f32 %v3618, %v2703
        %v3620 = vadd.f32 %v3619, %v2709
        %v3621 = vadd.f32 %v3620, %v2715
        %v3622 = vrot.slane %v3621, 4
        %v3623 = vadd.f32 %v3621, %v3622
        %v3624 = vrot.slane %v3623, 2
        %v3625 = vadd.f32 %v3623, %v3624
        %v3626 = vrot.slane %v3625, 1
        %v3627 = vadd.f32 %v3625, %v3626
        %v3628 = vadd.f32 %v2674, %v2680
        %v3629 = vadd.f32 %v3628, %v2686
        %v3630 = vadd.f32 %v3629, %v2692
        %v3631 = vadd.f32 %v3630, %v2698
        %v3632 = vadd.f32 %v3631, %v2704
        %v3633 = vadd.f32 %v3632, %v2710
        %v3634 = vadd.f32 %v3633, %v2716
        %v3635 = vrot.slane %v3634, 4
        %v3636 = vadd.f32 %v3634, %v3635
        %v3637 = vrot.slane %v3636, 2
        %v3638 = vadd.f32 %v3636, %v3637
        %v3639 = vrot.slane %v3638, 1
        %v3640 = vadd.f32 %v3638, %v3639
        %v3641 = vadd.f32 %v2675, %v2681
        %v3642 = vadd.f32 %v3641, %v2687
        %v3643 = vadd.f32 %v3642, %v2693
        %v3644 = vadd.f32 %v3643, %v2699
        %v3645 = vadd.f32 %v3644, %v2705
        %v3646 = vadd.f32 %v3645, %v2711
        %v3647 = vadd.f32 %v3646, %v2717
        %v3648 = vrot.slane %v3647, 4
        %v3649 = vadd.f32 %v3647, %v3648
        %v3650 = vrot.slane %v3649, 2
        %v3651 = vadd.f32 %v3649, %v3650
        %v3652 = vrot.slane %v3651, 1
        %v3653 = vadd.f32 %v3651, %v3652
        %v3654 = vadd.f32 %v2676, %v2682
        %v3655 = vadd.f32 %v3654, %v2688
        %v3656 = vadd.f32 %v3655, %v2694
        %v3657 = vadd.f32 %v3656, %v2700
        %v3658 = vadd.f32 %v3657, %v2706
        %v3659 = vadd.f32 %v3658, %v2712
        %v3660 = vadd.f32 %v3659, %v2718
        %v3661 = vrot.slane %v3660, 4
        %v3662 = vadd.f32 %v3660, %v3661
        %v3663 = vrot.slane %v3662, 2
        %v3664 = vadd.f32 %v3662, %v3663
        %v3665 = vrot.slane %v3664, 1
        %v3666 = vadd.f32 %v3664, %v3665
        %v3667 = vadd.f32 %v2719, %v2725
        %v3668 = vadd.f32 %v3667, %v2731
        %v3669 = vadd.f32 %v3668, %v2737
        %v3670 = vadd.f32 %v3669, %v2743
        %v3671 = vadd.f32 %v3670, %v2749
        %v3672 = vadd.f32 %v3671, %v2755
        %v3673 = vadd.f32 %v3672, %v2761
        %v3674 = vrot.slane %v3673, 4
        %v3675 = vadd.f32 %v3673, %v3674
        %v3676 = vrot.slane %v3675, 2
        %v3677 = vadd.f32 %v3675, %v3676
        %v3678 = vrot.slane %v3677, 1
        %v3679 = vadd.f32 %v3677, %v3678
        %v3680 = vadd.f32 %v2720, %v2726
        %v3681 = vadd.f32 %v3680, %v2732
        %v3682 = vadd.f32 %v3681, %v2738
        %v3683 = vadd.f32 %v3682, %v2744
        %v3684 = vadd.f32 %v3683, %v2750
        %v3685 = vadd.f32 %v3684, %v2756
        %v3686 = vadd.f32 %v3685, %v2762
        %v3687 = vrot.slane %v3686, 4
        %v3688 = vadd.f32 %v3686, %v3687
        %v3689 = vrot.slane %v3688, 2
        %v3690 = vadd.f32 %v3688, %v3689
        %v3691 = vrot.slane %v3690, 1
        %v3692 = vadd.f32 %v3690, %v3691
        %v3693 = vadd.f32 %v2721, %v2727
        %v3694 = vadd.f32 %v3693, %v2733
        %v3695 = vadd.f32 %v3694, %v2739
        %v3696 = vadd.f32 %v3695, %v2745
        %v3697 = vadd.f32 %v3696, %v2751
        %v3698 = vadd.f32 %v3697, %v2757
        %v3699 = vadd.f32 %v3698, %v2763
        %v3700 = vrot.slane %v3699, 4
        %v3701 = vadd.f32 %v3699, %v3700
        %v3702 = vrot.slane %v3701, 2
        %v3703 = vadd.f32 %v3701, %v3702
        %v3704 = vrot.slane %v3703, 1
        %v3705 = vadd.f32 %v3703, %v3704
        %v3706 = vadd.f32 %v2722, %v2728
        %v3707 = vadd.f32 %v3706, %v2734
        %v3708 = vadd.f32 %v3707, %v2740
        %v3709 = vadd.f32 %v3708, %v2746
        %v3710 = vadd.f32 %v3709, %v2752
        %v3711 = vadd.f32 %v3710, %v2758
        %v3712 = vadd.f32 %v3711, %v2764
        %v3713 = vrot.slane %v3712, 4
        %v3714 = vadd.f32 %v3712, %v3713
        %v3715 = vrot.slane %v3714, 2
        %v3716 = vadd.f32 %v3714, %v3715
        %v3717 = vrot.slane %v3716, 1
        %v3718 = vadd.f32 %v3716, %v3717
        %v3719 = vadd.f32 %v2723, %v2729
        %v3720 = vadd.f32 %v3719, %v2735
        %v3721 = vadd.f32 %v3720, %v2741
        %v3722 = vadd.f32 %v3721, %v2747
        %v3723 = vadd.f32 %v3722, %v2753
        %v3724 = vadd.f32 %v3723, %v2759
        %v3725 = vadd.f32 %v3724, %v2765
        %v3726 = vrot.slane %v3725, 4
        %v3727 = vadd.f32 %v3725, %v3726
        %v3728 = vrot.slane %v3727, 2
        %v3729 = vadd.f32 %v3727, %v3728
        %v3730 = vrot.slane %v3729, 1
        %v3731 = vadd.f32 %v3729, %v3730
        %v3732 = vadd.f32 %v2724, %v2730
        %v3733 = vadd.f32 %v3732, %v2736
        %v3734 = vadd.f32 %v3733, %v2742
        %v3735 = vadd.f32 %v3734, %v2748
        %v3736 = vadd.f32 %v3735, %v2754
        %v3737 = vadd.f32 %v3736, %v2760
        %v3738 = vadd.f32 %v3737, %v2766
        %v3739 = vrot.slane %v3738, 4
        %v3740 = vadd.f32 %v3738, %v3739
        %v3741 = vrot.slane %v3740, 2
        %v3742 = vadd.f32 %v3740, %v3741
        %v3743 = vrot.slane %v3742, 1
        %v3744 = vadd.f32 %v3742, %v3743
        %v3745 = vadd.f32 %v2767, %v2773
        %v3746 = vadd.f32 %v3745, %v2779
        %v3747 = vadd.f32 %v3746, %v2785
        %v3748 = vadd.f32 %v3747, %v2791
        %v3749 = vadd.f32 %v3748, %v2797
        %v3750 = vadd.f32 %v3749, %v2803
        %v3751 = vadd.f32 %v3750, %v2809
        %v3752 = vrot.slane %v3751, 4
        %v3753 = vadd.f32 %v3751, %v3752
        %v3754 = vrot.slane %v3753, 2
        %v3755 = vadd.f32 %v3753, %v3754
        %v3756 = vrot.slane %v3755, 1
        %v3757 = vadd.f32 %v3755, %v3756
        %v3758 = vadd.f32 %v2768, %v2774
        %v3759 = vadd.f32 %v3758, %v2780
        %v3760 = vadd.f32 %v3759, %v2786
        %v3761 = vadd.f32 %v3760, %v2792
        %v3762 = vadd.f32 %v3761, %v2798
        %v3763 = vadd.f32 %v3762, %v2804
        %v3764 = vadd.f32 %v3763, %v2810
        %v3765 = vrot.slane %v3764, 4
        %v3766 = vadd.f32 %v3764, %v3765
        %v3767 = vrot.slane %v3766, 2
        %v3768 = vadd.f32 %v3766, %v3767
        %v3769 = vrot.slane %v3768, 1
        %v3770 = vadd.f32 %v3768, %v3769
        %v3771 = vadd.f32 %v2769, %v2775
        %v3772 = vadd.f32 %v3771, %v2781
        %v3773 = vadd.f32 %v3772, %v2787
        %v3774 = vadd.f32 %v3773, %v2793
        %v3775 = vadd.f32 %v3774, %v2799
        %v3776 = vadd.f32 %v3775, %v2805
        %v3777 = vadd.f32 %v3776, %v2811
        %v3778 = vrot.slane %v3777, 4
        %v3779 = vadd.f32 %v3777, %v3778
        %v3780 = vrot.slane %v3779, 2
        %v3781 = vadd.f32 %v3779, %v3780
        %v3782 = vrot.slane %v3781, 1
        %v3783 = vadd.f32 %v3781, %v3782
        %v3784 = vadd.f32 %v2770, %v2776
        %v3785 = vadd.f32 %v3784, %v2782
        %v3786 = vadd.f32 %v3785, %v2788
        %v3787 = vadd.f32 %v3786, %v2794
        %v3788 = vadd.f32 %v3787, %v2800
        %v3789 = vadd.f32 %v3788, %v2806
        %v3790 = vadd.f32 %v3789, %v2812
        %v3791 = vrot.slane %v3790, 4
        %v3792 = vadd.f32 %v3790, %v3791
        %v3793 = vrot.slane %v3792, 2
        %v3794 = vadd.f32 %v3792, %v3793
        %v3795 = vrot.slane %v3794, 1
        %v3796 = vadd.f32 %v3794, %v3795
        %v3797 = vadd.f32 %v2771, %v2777
        %v3798 = vadd.f32 %v3797, %v2783
        %v3799 = vadd.f32 %v3798, %v2789
        %v3800 = vadd.f32 %v3799, %v2795
        %v3801 = vadd.f32 %v3800, %v2801
        %v3802 = vadd.f32 %v3801, %v2807
        %v3803 = vadd.f32 %v3802, %v2813
        %v3804 = vrot.slane %v3803, 4
        %v3805 = vadd.f32 %v3803, %v3804
        %v3806 = vrot.slane %v3805, 2
        %v3807 = vadd.f32 %v3805, %v3806
        %v3808 = vrot.slane %v3807, 1
        %v3809 = vadd.f32 %v3807, %v3808
        %v3810 = vadd.f32 %v2772, %v2778
        %v3811 = vadd.f32 %v3810, %v2784
        %v3812 = vadd.f32 %v3811, %v2790
        %v3813 = vadd.f32 %v3812, %v2796
        %v3814 = vadd.f32 %v3813, %v2802
        %v3815 = vadd.f32 %v3814, %v2808
        %v3816 = vadd.f32 %v3815, %v2814
        %v3817 = vrot.slane %v3816, 4
        %v3818 = vadd.f32 %v3816, %v3817
        %v3819 = vrot.slane %v3818, 2
        %v3820 = vadd.f32 %v3818, %v3819
        %v3821 = vrot.slane %v3820, 1
        %v3822 = vadd.f32 %v3820, %v3821
        %v3823 = vadd.f32 %v2815, %v2821
        %v3824 = vadd.f32 %v3823, %v2827
        %v3825 = vadd.f32 %v3824, %v2833
        %v3826 = vadd.f32 %v3825, %v2839
        %v3827 = vadd.f32 %v3826, %v2845
        %v3828 = vadd.f32 %v3827, %v2851
        %v3829 = vadd.f32 %v3828, %v2857
        %v3830 = vrot.slane %v3829, 4
        %v3831 = vadd.f32 %v3829, %v3830
        %v3832 = vrot.slane %v3831, 2
        %v3833 = vadd.f32 %v3831, %v3832
        %v3834 = vrot.slane %v3833, 1
        %v3835 = vadd.f32 %v3833, %v3834
        %v3836 = vadd.f32 %v2816, %v2822
        %v3837 = vadd.f32 %v3836, %v2828
        %v3838 = vadd.f32 %v3837, %v2834
        %v3839 = vadd.f32 %v3838, %v2840
        %v3840 = vadd.f32 %v3839, %v2846
        %v3841 = vadd.f32 %v3840, %v2852
        %v3842 = vadd.f32 %v3841, %v2858
        %v3843 = vrot.slane %v3842, 4
        %v3844 = vadd.f32 %v3842, %v3843
        %v3845 = vrot.slane %v3844, 2
        %v3846 = vadd.f32 %v3844, %v3845
        %v3847 = vrot.slane %v3846, 1
        %v3848 = vadd.f32 %v3846, %v3847
        %v3849 = vadd.f32 %v2817, %v2823
        %v3850 = vadd.f32 %v3849, %v2829
        %v3851 = vadd.f32 %v3850, %v2835
        %v3852 = vadd.f32 %v3851, %v2841
        %v3853 = vadd.f32 %v3852, %v2847
        %v3854 = vadd.f32 %v3853, %v2853
        %v3855 = vadd.f32 %v3854, %v2859
        %v3856 = vrot.slane %v3855, 4
        %v3857 = vadd.f32 %v3855, %v3856
        %v3858 = vrot.slane %v3857, 2
        %v3859 = vadd.f32 %v3857, %v3858
        %v3860 = vrot.slane %v3859, 1
        %v3861 = vadd.f32 %v3859, %v3860
        %v3862 = vadd.f32 %v2818, %v2824
        %v3863 = vadd.f32 %v3862, %v2830
        %v3864 = vadd.f32 %v3863, %v2836
        %v3865 = vadd.f32 %v3864, %v2842
        %v3866 = vadd.f32 %v3865, %v2848
        %v3867 = vadd.f32 %v3866, %v2854
        %v3868 = vadd.f32 %v3867, %v2860
        %v3869 = vrot.slane %v3868, 4
        %v3870 = vadd.f32 %v3868, %v3869
        %v3871 = vrot.slane %v3870, 2
        %v3872 = vadd.f32 %v3870, %v3871
        %v3873 = vrot.slane %v3872, 1
        %v3874 = vadd.f32 %v3872, %v3873
        %v3875 = vadd.f32 %v2819, %v2825
        %v3876 = vadd.f32 %v3875, %v2831
        %v3877 = vadd.f32 %v3876, %v2837
        %v3878 = vadd.f32 %v3877, %v2843
        %v3879 = vadd.f32 %v3878, %v2849
        %v3880 = vadd.f32 %v3879, %v2855
        %v3881 = vadd.f32 %v3880, %v2861
        %v3882 = vrot.slane %v3881, 4
        %v3883 = vadd.f32 %v3881, %v3882
        %v3884 = vrot.slane %v3883, 2
        %v3885 = vadd.f32 %v3883, %v3884
        %v3886 = vrot.slane %v3885, 1
        %v3887 = vadd.f32 %v3885, %v3886
        %v3888 = vadd.f32 %v2820, %v2826
        %v3889 = vadd.f32 %v3888, %v2832
        %v3890 = vadd.f32 %v3889, %v2838
        %v3891 = vadd.f32 %v3890, %v2844
        %v3892 = vadd.f32 %v3891, %v2850
        %v3893 = vadd.f32 %v3892, %v2856
        %v3894 = vadd.f32 %v3893, %v2862
        %v3895 = vrot.slane %v3894, 4
        %v3896 = vadd.f32 %v3894, %v3895
        %v3897 = vrot.slane %v3896, 2
        %v3898 = vadd.f32 %v3896, %v3897
        %v3899 = vrot.slane %v3898, 1
        %v3900 = vadd.f32 %v3898, %v3899
        %v3901 = vadd.f32 %v2863, %v2869
        %v3902 = vadd.f32 %v3901, %v2875
        %v3903 = vadd.f32 %v3902, %v2881
        %v3904 = vadd.f32 %v3903, %v2887
        %v3905 = vadd.f32 %v3904, %v2893
        %v3906 = vadd.f32 %v3905, %v2899
        %v3907 = vadd.f32 %v3906, %v2905
        %v3908 = vrot.slane %v3907, 4
        %v3909 = vadd.f32 %v3907, %v3908
        %v3910 = vrot.slane %v3909, 2
        %v3911 = vadd.f32 %v3909, %v3910
        %v3912 = vrot.slane %v3911, 1
        %v3913 = vadd.f32 %v3911, %v3912
        %v3914 = vadd.f32 %v2864, %v2870
        %v3915 = vadd.f32 %v3914, %v2876
        %v3916 = vadd.f32 %v3915, %v2882
        %v3917 = vadd.f32 %v3916, %v2888
        %v3918 = vadd.f32 %v3917, %v2894
        %v3919 = vadd.f32 %v3918, %v2900
        %v3920 = vadd.f32 %v3919, %v2906
        %v3921 = vrot.slane %v3920, 4
        %v3922 = vadd.f32 %v3920, %v3921
        %v3923 = vrot.slane %v3922, 2
        %v3924 = vadd.f32 %v3922, %v3923
        %v3925 = vrot.slane %v3924, 1
        %v3926 = vadd.f32 %v3924, %v3925
        %v3927 = vadd.f32 %v2865, %v2871
        %v3928 = vadd.f32 %v3927, %v2877
        %v3929 = vadd.f32 %v3928, %v2883
        %v3930 = vadd.f32 %v3929, %v2889
        %v3931 = vadd.f32 %v3930, %v2895
        %v3932 = vadd.f32 %v3931, %v2901
        %v3933 = vadd.f32 %v3932, %v2907
        %v3934 = vrot.slane %v3933, 4
        %v3935 = vadd.f32 %v3933, %v3934
        %v3936 = vrot.slane %v3935, 2
        %v3937 = vadd.f32 %v3935, %v3936
        %v3938 = vrot.slane %v3937, 1
        %v3939 = vadd.f32 %v3937, %v3938
        %v3940 = vadd.f32 %v2866, %v2872
        %v3941 = vadd.f32 %v3940, %v2878
        %v3942 = vadd.f32 %v3941, %v2884
        %v3943 = vadd.f32 %v3942, %v2890
        %v3944 = vadd.f32 %v3943, %v2896
        %v3945 = vadd.f32 %v3944, %v2902
        %v3946 = vadd.f32 %v3945, %v2908
        %v3947 = vrot.slane %v3946, 4
        %v3948 = vadd.f32 %v3946, %v3947
        %v3949 = vrot.slane %v3948, 2
        %v3950 = vadd.f32 %v3948, %v3949
        %v3951 = vrot.slane %v3950, 1
        %v3952 = vadd.f32 %v3950, %v3951
        %v3953 = vadd.f32 %v2867, %v2873
        %v3954 = vadd.f32 %v3953, %v2879
        %v3955 = vadd.f32 %v3954, %v2885
        %v3956 = vadd.f32 %v3955, %v2891
        %v3957 = vadd.f32 %v3956, %v2897
        %v3958 = vadd.f32 %v3957, %v2903
        %v3959 = vadd.f32 %v3958, %v2909
        %v3960 = vrot.slane %v3959, 4
        %v3961 = vadd.f32 %v3959, %v3960
        %v3962 = vrot.slane %v3961, 2
        %v3963 = vadd.f32 %v3961, %v3962
        %v3964 = vrot.slane %v3963, 1
        %v3965 = vadd.f32 %v3963, %v3964
        %v3966 = vadd.f32 %v2868, %v2874
        %v3967 = vadd.f32 %v3966, %v2880
        %v3968 = vadd.f32 %v3967, %v2886
        %v3969 = vadd.f32 %v3968, %v2892
        %v3970 = vadd.f32 %v3969, %v2898
        %v3971 = vadd.f32 %v3970, %v2904
        %v3972 = vadd.f32 %v3971, %v2910
        %v3973 = vrot.slane %v3972, 4
        %v3974 = vadd.f32 %v3972, %v3973
        %v3975 = vrot.slane %v3974, 2
        %v3976 = vadd.f32 %v3974, %v3975
        %v3977 = vrot.slane %v3976, 1
        %v3978 = vadd.f32 %v3976, %v3977
        %v3979 = vadd.f32 %v2911, %v2917
        %v3980 = vadd.f32 %v3979, %v2923
        %v3981 = vadd.f32 %v3980, %v2929
        %v3982 = vadd.f32 %v3981, %v2935
        %v3983 = vadd.f32 %v3982, %v2941
        %v3984 = vadd.f32 %v3983, %v2947
        %v3985 = vadd.f32 %v3984, %v2953
        %v3986 = vrot.slane %v3985, 4
        %v3987 = vadd.f32 %v3985, %v3986
        %v3988 = vrot.slane %v3987, 2
        %v3989 = vadd.f32 %v3987, %v3988
        %v3990 = vrot.slane %v3989, 1
        %v3991 = vadd.f32 %v3989, %v3990
        %v3992 = vadd.f32 %v2912, %v2918
        %v3993 = vadd.f32 %v3992, %v2924
        %v3994 = vadd.f32 %v3993, %v2930
        %v3995 = vadd.f32 %v3994, %v2936
        %v3996 = vadd.f32 %v3995, %v2942
        %v3997 = vadd.f32 %v3996, %v2948
        %v3998 = vadd.f32 %v3997, %v2954
        %v3999 = vrot.slane %v3998, 4
        %v4000 = vadd.f32 %v3998, %v3999
        %v4001 = vrot.slane %v4000, 2
        %v4002 = vadd.f32 %v4000, %v4001
        %v4003 = vrot.slane %v4002, 1
        %v4004 = vadd.f32 %v4002, %v4003
        %v4005 = vadd.f32 %v2913, %v2919
        %v4006 = vadd.f32 %v4005, %v2925
        %v4007 = vadd.f32 %v4006, %v2931
        %v4008 = vadd.f32 %v4007, %v2937
        %v4009 = vadd.f32 %v4008, %v2943
        %v4010 = vadd.f32 %v4009, %v2949
        %v4011 = vadd.f32 %v4010, %v2955
        %v4012 = vrot.slane %v4011, 4
        %v4013 = vadd.f32 %v4011, %v4012
        %v4014 = vrot.slane %v4013, 2
        %v4015 = vadd.f32 %v4013, %v4014
        %v4016 = vrot.slane %v4015, 1
        %v4017 = vadd.f32 %v4015, %v4016
        %v4018 = vadd.f32 %v2914, %v2920
        %v4019 = vadd.f32 %v4018, %v2926
        %v4020 = vadd.f32 %v4019, %v2932
        %v4021 = vadd.f32 %v4020, %v2938
        %v4022 = vadd.f32 %v4021, %v2944
        %v4023 = vadd.f32 %v4022, %v2950
        %v4024 = vadd.f32 %v4023, %v2956
        %v4025 = vrot.slane %v4024, 4
        %v4026 = vadd.f32 %v4024, %v4025
        %v4027 = vrot.slane %v4026, 2
        %v4028 = vadd.f32 %v4026, %v4027
        %v4029 = vrot.slane %v4028, 1
        %v4030 = vadd.f32 %v4028, %v4029
        %v4031 = vadd.f32 %v2915, %v2921
        %v4032 = vadd.f32 %v4031, %v2927
        %v4033 = vadd.f32 %v4032, %v2933
        %v4034 = vadd.f32 %v4033, %v2939
        %v4035 = vadd.f32 %v4034, %v2945
        %v4036 = vadd.f32 %v4035, %v2951
        %v4037 = vadd.f32 %v4036, %v2957
        %v4038 = vrot.slane %v4037, 4
        %v4039 = vadd.f32 %v4037, %v4038
        %v4040 = vrot.slane %v4039, 2
        %v4041 = vadd.f32 %v4039, %v4040
        %v4042 = vrot.slane %v4041, 1
        %v4043 = vadd.f32 %v4041, %v4042
        %v4044 = vadd.f32 %v2916, %v2922
        %v4045 = vadd.f32 %v4044, %v2928
        %v4046 = vadd.f32 %v4045, %v2934
        %v4047 = vadd.f32 %v4046, %v2940
        %v4048 = vadd.f32 %v4047, %v2946
        %v4049 = vadd.f32 %v4048, %v2952
        %v4050 = vadd.f32 %v4049, %v2958
        %v4051 = vrot.slane %v4050, 4
        %v4052 = vadd.f32 %v4050, %v4051
        %v4053 = vrot.slane %v4052, 2
        %v4054 = vadd.f32 %v4052, %v4053
        %v4055 = vrot.slane %v4054, 1
        %v4056 = vadd.f32 %v4054, %v4055
        %v4057 = vadd.f32 %v2959, %v2965
        %v4058 = vadd.f32 %v4057, %v2971
        %v4059 = vadd.f32 %v4058, %v2977
        %v4060 = vadd.f32 %v4059, %v2983
        %v4061 = vadd.f32 %v4060, %v2989
        %v4062 = vadd.f32 %v4061, %v2995
        %v4063 = vadd.f32 %v4062, %v3001
        %v4064 = vrot.slane %v4063, 4
        %v4065 = vadd.f32 %v4063, %v4064
        %v4066 = vrot.slane %v4065, 2
        %v4067 = vadd.f32 %v4065, %v4066
        %v4068 = vrot.slane %v4067, 1
        %v4069 = vadd.f32 %v4067, %v4068
        %v4070 = vadd.f32 %v2960, %v2966
        %v4071 = vadd.f32 %v4070, %v2972
        %v4072 = vadd.f32 %v4071, %v2978
        %v4073 = vadd.f32 %v4072, %v2984
        %v4074 = vadd.f32 %v4073, %v2990
        %v4075 = vadd.f32 %v4074, %v2996
        %v4076 = vadd.f32 %v4075, %v3002
        %v4077 = vrot.slane %v4076, 4
        %v4078 = vadd.f32 %v4076, %v4077
        %v4079 = vrot.slane %v4078, 2
        %v4080 = vadd.f32 %v4078, %v4079
        %v4081 = vrot.slane %v4080, 1
        %v4082 = vadd.f32 %v4080, %v4081
        %v4083 = vadd.f32 %v2961, %v2967
        %v4084 = vadd.f32 %v4083, %v2973
        %v4085 = vadd.f32 %v4084, %v2979
        %v4086 = vadd.f32 %v4085, %v2985
        %v4087 = vadd.f32 %v4086, %v2991
        %v4088 = vadd.f32 %v4087, %v2997
        %v4089 = vadd.f32 %v4088, %v3003
        %v4090 = vrot.slane %v4089, 4
        %v4091 = vadd.f32 %v4089, %v4090
        %v4092 = vrot.slane %v4091, 2
        %v4093 = vadd.f32 %v4091, %v4092
        %v4094 = vrot.slane %v4093, 1
        %v4095 = vadd.f32 %v4093, %v4094
        %v4096 = vadd.f32 %v2962, %v2968
        %v4097 = vadd.f32 %v4096, %v2974
        %v4098 = vadd.f32 %v4097, %v2980
        %v4099 = vadd.f32 %v4098, %v2986
        %v4100 = vadd.f32 %v4099, %v2992
        %v4101 = vadd.f32 %v4100, %v2998
        %v4102 = vadd.f32 %v4101, %v3004
        %v4103 = vrot.slane %v4102, 4
        %v4104 = vadd.f32 %v4102, %v4103
        %v4105 = vrot.slane %v4104, 2
        %v4106 = vadd.f32 %v4104, %v4105
        %v4107 = vrot.slane %v4106, 1
        %v4108 = vadd.f32 %v4106, %v4107
        %v4109 = vadd.f32 %v2963, %v2969
        %v4110 = vadd.f32 %v4109, %v2975
        %v4111 = vadd.f32 %v4110, %v2981
        %v4112 = vadd.f32 %v4111, %v2987
        %v4113 = vadd.f32 %v4112, %v2993
        %v4114 = vadd.f32 %v4113, %v2999
        %v4115 = vadd.f32 %v4114, %v3005
        %v4116 = vrot.slane %v4115, 4
        %v4117 = vadd.f32 %v4115, %v4116
        %v4118 = vrot.slane %v4117, 2
        %v4119 = vadd.f32 %v4117, %v4118
        %v4120 = vrot.slane %v4119, 1
        %v4121 = vadd.f32 %v4119, %v4120
        %v4122 = vadd.f32 %v2964, %v2970
        %v4123 = vadd.f32 %v4122, %v2976
        %v4124 = vadd.f32 %v4123, %v2982
        %v4125 = vadd.f32 %v4124, %v2988
        %v4126 = vadd.f32 %v4125, %v2994
        %v4127 = vadd.f32 %v4126, %v3000
        %v4128 = vadd.f32 %v4127, %v3006
        %v4129 = vrot.slane %v4128, 4
        %v4130 = vadd.f32 %v4128, %v4129
        %v4131 = vrot.slane %v4130, 2
        %v4132 = vadd.f32 %v4130, %v4131
        %v4133 = vrot.slane %v4132, 1
        %v4134 = vadd.f32 %v4132, %v4133
        %v4135 = vadd.f32 %v3007, %v3013
        %v4136 = vadd.f32 %v4135, %v3019
        %v4137 = vadd.f32 %v4136, %v3025
        %v4138 = vadd.f32 %v4137, %v3031
        %v4139 = vadd.f32 %v4138, %v3037
        %v4140 = vadd.f32 %v4139, %v3043
        %v4141 = vadd.f32 %v4140, %v3049
        %v4142 = vrot.slane %v4141, 4
        %v4143 = vadd.f32 %v4141, %v4142
        %v4144 = vrot.slane %v4143, 2
        %v4145 = vadd.f32 %v4143, %v4144
        %v4146 = vrot.slane %v4145, 1
        %v4147 = vadd.f32 %v4145, %v4146
        %v4148 = vadd.f32 %v3008, %v3014
        %v4149 = vadd.f32 %v4148, %v3020
        %v4150 = vadd.f32 %v4149, %v3026
        %v4151 = vadd.f32 %v4150, %v3032
        %v4152 = vadd.f32 %v4151, %v3038
        %v4153 = vadd.f32 %v4152, %v3044
        %v4154 = vadd.f32 %v4153, %v3050
        %v4155 = vrot.slane %v4154, 4
        %v4156 = vadd.f32 %v4154, %v4155
        %v4157 = vrot.slane %v4156, 2
        %v4158 = vadd.f32 %v4156, %v4157
        %v4159 = vrot.slane %v4158, 1
        %v4160 = vadd.f32 %v4158, %v4159
        %v4161 = vadd.f32 %v3009, %v3015
        %v4162 = vadd.f32 %v4161, %v3021
        %v4163 = vadd.f32 %v4162, %v3027
        %v4164 = vadd.f32 %v4163, %v3033
        %v4165 = vadd.f32 %v4164, %v3039
        %v4166 = vadd.f32 %v4165, %v3045
        %v4167 = vadd.f32 %v4166, %v3051
        %v4168 = vrot.slane %v4167, 4
        %v4169 = vadd.f32 %v4167, %v4168
        %v4170 = vrot.slane %v4169, 2
        %v4171 = vadd.f32 %v4169, %v4170
        %v4172 = vrot.slane %v4171, 1
        %v4173 = vadd.f32 %v4171, %v4172
        %v4174 = vadd.f32 %v3010, %v3016
        %v4175 = vadd.f32 %v4174, %v3022
        %v4176 = vadd.f32 %v4175, %v3028
        %v4177 = vadd.f32 %v4176, %v3034
        %v4178 = vadd.f32 %v4177, %v3040
        %v4179 = vadd.f32 %v4178, %v3046
        %v4180 = vadd.f32 %v4179, %v3052
        %v4181 = vrot.slane %v4180, 4
        %v4182 = vadd.f32 %v4180, %v4181
        %v4183 = vrot.slane %v4182, 2
        %v4184 = vadd.f32 %v4182, %v4183
        %v4185 = vrot.slane %v4184, 1
        %v4186 = vadd.f32 %v4184, %v4185
        %v4187 = vadd.f32 %v3011, %v3017
        %v4188 = vadd.f32 %v4187, %v3023
        %v4189 = vadd.f32 %v4188, %v3029
        %v4190 = vadd.f32 %v4189, %v3035
        %v4191 = vadd.f32 %v4190, %v3041
        %v4192 = vadd.f32 %v4191, %v3047
        %v4193 = vadd.f32 %v4192, %v3053
        %v4194 = vrot.slane %v4193, 4
        %v4195 = vadd.f32 %v4193, %v4194
        %v4196 = vrot.slane %v4195, 2
        %v4197 = vadd.f32 %v4195, %v4196
        %v4198 = vrot.slane %v4197, 1
        %v4199 = vadd.f32 %v4197, %v4198
        %v4200 = vadd.f32 %v3012, %v3018
        %v4201 = vadd.f32 %v4200, %v3024
        %v4202 = vadd.f32 %v4201, %v3030
        %v4203 = vadd.f32 %v4202, %v3036
        %v4204 = vadd.f32 %v4203, %v3042
        %v4205 = vadd.f32 %v4204, %v3048
        %v4206 = vadd.f32 %v4205, %v3054
        %v4207 = vrot.slane %v4206, 4
        %v4208 = vadd.f32 %v4206, %v4207
        %v4209 = vrot.slane %v4208, 2
        %v4210 = vadd.f32 %v4208, %v4209
        %v4211 = vrot.slane %v4210, 1
        %v4212 = vadd.f32 %v4210, %v4211
        %v4213 = vadd.f32 %v3055, %v3061
        %v4214 = vadd.f32 %v4213, %v3067
        %v4215 = vadd.f32 %v4214, %v3073
        %v4216 = vadd.f32 %v4215, %v3079
        %v4217 = vadd.f32 %v4216, %v3085
        %v4218 = vadd.f32 %v4217, %v3091
        %v4219 = vadd.f32 %v4218, %v3097
        %v4220 = vrot.slane %v4219, 4
        %v4221 = vadd.f32 %v4219, %v4220
        %v4222 = vrot.slane %v4221, 2
        %v4223 = vadd.f32 %v4221, %v4222
        %v4224 = vrot.slane %v4223, 1
        %v4225 = vadd.f32 %v4223, %v4224
        %v4226 = vadd.f32 %v3056, %v3062
        %v4227 = vadd.f32 %v4226, %v3068
        %v4228 = vadd.f32 %v4227, %v3074
        %v4229 = vadd.f32 %v4228, %v3080
        %v4230 = vadd.f32 %v4229, %v3086
        %v4231 = vadd.f32 %v4230, %v3092
        %v4232 = vadd.f32 %v4231, %v3098
        %v4233 = vrot.slane %v4232, 4
        %v4234 = vadd.f32 %v4232, %v4233
        %v4235 = vrot.slane %v4234, 2
        %v4236 = vadd.f32 %v4234, %v4235
        %v4237 = vrot.slane %v4236, 1
        %v4238 = vadd.f32 %v4236, %v4237
        %v4239 = vadd.f32 %v3057, %v3063
        %v4240 = vadd.f32 %v4239, %v3069
        %v4241 = vadd.f32 %v4240, %v3075
        %v4242 = vadd.f32 %v4241, %v3081
        %v4243 = vadd.f32 %v4242, %v3087
        %v4244 = vadd.f32 %v4243, %v3093
        %v4245 = vadd.f32 %v4244, %v3099
        %v4246 = vrot.slane %v4245, 4
        %v4247 = vadd.f32 %v4245, %v4246
        %v4248 = vrot.slane %v4247, 2
        %v4249 = vadd.f32 %v4247, %v4248
        %v4250 = vrot.slane %v4249, 1
        %v4251 = vadd.f32 %v4249, %v4250
        %v4252 = vadd.f32 %v3058, %v3064
        %v4253 = vadd.f32 %v4252, %v3070
        %v4254 = vadd.f32 %v4253, %v3076
        %v4255 = vadd.f32 %v4254, %v3082
        %v4256 = vadd.f32 %v4255, %v3088
        %v4257 = vadd.f32 %v4256, %v3094
        %v4258 = vadd.f32 %v4257, %v3100
        %v4259 = vrot.slane %v4258, 4
        %v4260 = vadd.f32 %v4258, %v4259
        %v4261 = vrot.slane %v4260, 2
        %v4262 = vadd.f32 %v4260, %v4261
        %v4263 = vrot.slane %v4262, 1
        %v4264 = vadd.f32 %v4262, %v4263
        %v4265 = vadd.f32 %v3059, %v3065
        %v4266 = vadd.f32 %v4265, %v3071
        %v4267 = vadd.f32 %v4266, %v3077
        %v4268 = vadd.f32 %v4267, %v3083
        %v4269 = vadd.f32 %v4268, %v3089
        %v4270 = vadd.f32 %v4269, %v3095
        %v4271 = vadd.f32 %v4270, %v3101
        %v4272 = vrot.slane %v4271, 4
        %v4273 = vadd.f32 %v4271, %v4272
        %v4274 = vrot.slane %v4273, 2
        %v4275 = vadd.f32 %v4273, %v4274
        %v4276 = vrot.slane %v4275, 1
        %v4277 = vadd.f32 %v4275, %v4276
        %v4278 = vadd.f32 %v3060, %v3066
        %v4279 = vadd.f32 %v4278, %v3072
        %v4280 = vadd.f32 %v4279, %v3078
        %v4281 = vadd.f32 %v4280, %v3084
        %v4282 = vadd.f32 %v4281, %v3090
        %v4283 = vadd.f32 %v4282, %v3096
        %v4284 = vadd.f32 %v4283, %v3102
        %v4285 = vrot.slane %v4284, 4
        %v4286 = vadd.f32 %v4284, %v4285
        %v4287 = vrot.slane %v4286, 2
        %v4288 = vadd.f32 %v4286, %v4287
        %v4289 = vrot.slane %v4288, 1
        %v4290 = vadd.f32 %v4288, %v4289
        %v4291 = vadd.f32 %v3103, %v3109
        %v4292 = vadd.f32 %v4291, %v3115
        %v4293 = vadd.f32 %v4292, %v3121
        %v4294 = vadd.f32 %v4293, %v3127
        %v4295 = vadd.f32 %v4294, %v3133
        %v4296 = vadd.f32 %v4295, %v3139
        %v4297 = vadd.f32 %v4296, %v3145
        %v4298 = vrot.slane %v4297, 4
        %v4299 = vadd.f32 %v4297, %v4298
        %v4300 = vrot.slane %v4299, 2
        %v4301 = vadd.f32 %v4299, %v4300
        %v4302 = vrot.slane %v4301, 1
        %v4303 = vadd.f32 %v4301, %v4302
        %v4304 = vadd.f32 %v3104, %v3110
        %v4305 = vadd.f32 %v4304, %v3116
        %v4306 = vadd.f32 %v4305, %v3122
        %v4307 = vadd.f32 %v4306, %v3128
        %v4308 = vadd.f32 %v4307, %v3134
        %v4309 = vadd.f32 %v4308, %v3140
        %v4310 = vadd.f32 %v4309, %v3146
        %v4311 = vrot.slane %v4310, 4
        %v4312 = vadd.f32 %v4310, %v4311
        %v4313 = vrot.slane %v4312, 2
        %v4314 = vadd.f32 %v4312, %v4313
        %v4315 = vrot.slane %v4314, 1
        %v4316 = vadd.f32 %v4314, %v4315
        %v4317 = vadd.f32 %v3105, %v3111
        %v4318 = vadd.f32 %v4317, %v3117
        %v4319 = vadd.f32 %v4318, %v3123
        %v4320 = vadd.f32 %v4319, %v3129
        %v4321 = vadd.f32 %v4320, %v3135
        %v4322 = vadd.f32 %v4321, %v3141
        %v4323 = vadd.f32 %v4322, %v3147
        %v4324 = vrot.slane %v4323, 4
        %v4325 = vadd.f32 %v4323, %v4324
        %v4326 = vrot.slane %v4325, 2
        %v4327 = vadd.f32 %v4325, %v4326
        %v4328 = vrot.slane %v4327, 1
        %v4329 = vadd.f32 %v4327, %v4328
        %v4330 = vadd.f32 %v3106, %v3112
        %v4331 = vadd.f32 %v4330, %v3118
        %v4332 = vadd.f32 %v4331, %v3124
        %v4333 = vadd.f32 %v4332, %v3130
        %v4334 = vadd.f32 %v4333, %v3136
        %v4335 = vadd.f32 %v4334, %v3142
        %v4336 = vadd.f32 %v4335, %v3148
        %v4337 = vrot.slane %v4336, 4
        %v4338 = vadd.f32 %v4336, %v4337
        %v4339 = vrot.slane %v4338, 2
        %v4340 = vadd.f32 %v4338, %v4339
        %v4341 = vrot.slane %v4340, 1
        %v4342 = vadd.f32 %v4340, %v4341
        %v4343 = vadd.f32 %v3107, %v3113
        %v4344 = vadd.f32 %v4343, %v3119
        %v4345 = vadd.f32 %v4344, %v3125
        %v4346 = vadd.f32 %v4345, %v3131
        %v4347 = vadd.f32 %v4346, %v3137
        %v4348 = vadd.f32 %v4347, %v3143
        %v4349 = vadd.f32 %v4348, %v3149
        %v4350 = vrot.slane %v4349, 4
        %v4351 = vadd.f32 %v4349, %v4350
        %v4352 = vrot.slane %v4351, 2
        %v4353 = vadd.f32 %v4351, %v4352
        %v4354 = vrot.slane %v4353, 1
        %v4355 = vadd.f32 %v4353, %v4354
        %v4356 = vadd.f32 %v3108, %v3114
        %v4357 = vadd.f32 %v4356, %v3120
        %v4358 = vadd.f32 %v4357, %v3126
        %v4359 = vadd.f32 %v4358, %v3132
        %v4360 = vadd.f32 %v4359, %v3138
        %v4361 = vadd.f32 %v4360, %v3144
        %v4362 = vadd.f32 %v4361, %v3150
        %v4363 = vrot.slane %v4362, 4
        %v4364 = vadd.f32 %v4362, %v4363
        %v4365 = vrot.slane %v4364, 2
        %v4366 = vadd.f32 %v4364, %v4365
        %v4367 = vrot.slane %v4366, 1
        %v4368 = vadd.f32 %v4366, %v4367
        %v4369 = vadd.f32 %v3151, %v3157
        %v4370 = vadd.f32 %v4369, %v3163
        %v4371 = vadd.f32 %v4370, %v3169
        %v4372 = vadd.f32 %v4371, %v3175
        %v4373 = vadd.f32 %v4372, %v3181
        %v4374 = vadd.f32 %v4373, %v3187
        %v4375 = vadd.f32 %v4374, %v3193
        %v4376 = vrot.slane %v4375, 4
        %v4377 = vadd.f32 %v4375, %v4376
        %v4378 = vrot.slane %v4377, 2
        %v4379 = vadd.f32 %v4377, %v4378
        %v4380 = vrot.slane %v4379, 1
        %v4381 = vadd.f32 %v4379, %v4380
        %v4382 = vadd.f32 %v3152, %v3158
        %v4383 = vadd.f32 %v4382, %v3164
        %v4384 = vadd.f32 %v4383, %v3170
        %v4385 = vadd.f32 %v4384, %v3176
        %v4386 = vadd.f32 %v4385, %v3182
        %v4387 = vadd.f32 %v4386, %v3188
        %v4388 = vadd.f32 %v4387, %v3194
        %v4389 = vrot.slane %v4388, 4
        %v4390 = vadd.f32 %v4388, %v4389
        %v4391 = vrot.slane %v4390, 2
        %v4392 = vadd.f32 %v4390, %v4391
        %v4393 = vrot.slane %v4392, 1
        %v4394 = vadd.f32 %v4392, %v4393
        %v4395 = vadd.f32 %v3153, %v3159
        %v4396 = vadd.f32 %v4395, %v3165
        %v4397 = vadd.f32 %v4396, %v3171
        %v4398 = vadd.f32 %v4397, %v3177
        %v4399 = vadd.f32 %v4398, %v3183
        %v4400 = vadd.f32 %v4399, %v3189
        %v4401 = vadd.f32 %v4400, %v3195
        %v4402 = vrot.slane %v4401, 4
        %v4403 = vadd.f32 %v4401, %v4402
        %v4404 = vrot.slane %v4403, 2
        %v4405 = vadd.f32 %v4403, %v4404
        %v4406 = vrot.slane %v4405, 1
        %v4407 = vadd.f32 %v4405, %v4406
        %v4408 = vadd.f32 %v3154, %v3160
        %v4409 = vadd.f32 %v4408, %v3166
        %v4410 = vadd.f32 %v4409, %v3172
        %v4411 = vadd.f32 %v4410, %v3178
        %v4412 = vadd.f32 %v4411, %v3184
        %v4413 = vadd.f32 %v4412, %v3190
        %v4414 = vadd.f32 %v4413, %v3196
        %v4415 = vrot.slane %v4414, 4
        %v4416 = vadd.f32 %v4414, %v4415
        %v4417 = vrot.slane %v4416, 2
        %v4418 = vadd.f32 %v4416, %v4417
        %v4419 = vrot.slane %v4418, 1
        %v4420 = vadd.f32 %v4418, %v4419
        %v4421 = vadd.f32 %v3155, %v3161
        %v4422 = vadd.f32 %v4421, %v3167
        %v4423 = vadd.f32 %v4422, %v3173
        %v4424 = vadd.f32 %v4423, %v3179
        %v4425 = vadd.f32 %v4424, %v3185
        %v4426 = vadd.f32 %v4425, %v3191
        %v4427 = vadd.f32 %v4426, %v3197
        %v4428 = vrot.slane %v4427, 4
        %v4429 = vadd.f32 %v4427, %v4428
        %v4430 = vrot.slane %v4429, 2
        %v4431 = vadd.f32 %v4429, %v4430
        %v4432 = vrot.slane %v4431, 1
        %v4433 = vadd.f32 %v4431, %v4432
        %v4434 = vadd.f32 %v3156, %v3162
        %v4435 = vadd.f32 %v4434, %v3168
        %v4436 = vadd.f32 %v4435, %v3174
        %v4437 = vadd.f32 %v4436, %v3180
        %v4438 = vadd.f32 %v4437, %v3186
        %v4439 = vadd.f32 %v4438, %v3192
        %v4440 = vadd.f32 %v4439, %v3198
        %v4441 = vrot.slane %v4440, 4
        %v4442 = vadd.f32 %v4440, %v4441
        %v4443 = vrot.slane %v4442, 2
        %v4444 = vadd.f32 %v4442, %v4443
        %v4445 = vrot.slane %v4444, 1
        %v4446 = vadd.f32 %v4444, %v4445
        %vm4543 = vcmask 1041409
        %v4544 = vsel %vm4543, %v3289, %v3211
        %vm4545 = vcmask 1042434
        %v4546 = vsel %vm4545, %v3367, %v4544
        %vm4547 = vcmask 1043459
        %v4548 = vsel %vm4547, %v3445, %v4546
        %vm4549 = vcmask 1044484
        %v4550 = vsel %vm4549, %v3523, %v4548
        %vm4551 = vcmask 1045509
        %v4552 = vsel %vm4551, %v3601, %v4550
        %vm4553 = vcmask 1046534
        %v4554 = vsel %vm4553, %v3679, %v4552
        %vm4555 = vcmask 1047559
        %v4556 = vsel %vm4555, %v3757, %v4554
        %v4557 = vsel %vm4543, %v3302, %v3224
        %v4558 = vsel %vm4545, %v3380, %v4557
        %v4559 = vsel %vm4547, %v3458, %v4558
        %v4560 = vsel %vm4549, %v3536, %v4559
        %v4561 = vsel %vm4551, %v3614, %v4560
        %v4562 = vsel %vm4553, %v3692, %v4561
        %v4563 = vsel %vm4555, %v3770, %v4562
        %v4564 = vsel %vm4543, %v3315, %v3237
        %v4565 = vsel %vm4545, %v3393, %v4564
        %v4566 = vsel %vm4547, %v3471, %v4565
        %v4567 = vsel %vm4549, %v3549, %v4566
        %v4568 = vsel %vm4551, %v3627, %v4567
        %v4569 = vsel %vm4553, %v3705, %v4568
        %v4570 = vsel %vm4555, %v3783, %v4569
        %v4571 = vsel %vm4543, %v3328, %v3250
        %v4572 = vsel %vm4545, %v3406, %v4571
        %v4573 = vsel %vm4547, %v3484, %v4572
        %v4574 = vsel %vm4549, %v3562, %v4573
        %v4575 = vsel %vm4551, %v3640, %v4574
        %v4576 = vsel %vm4553, %v3718, %v4575
        %v4577 = vsel %vm4555, %v3796, %v4576
        %v4578 = vsel %vm4543, %v3341, %v3263
        %v4579 = vsel %vm4545, %v3419, %v4578
        %v4580 = vsel %vm4547, %v3497, %v4579
        %v4581 = vsel %vm4549, %v3575, %v4580
        %v4582 = vsel %vm4551, %v3653, %v4581
        %v4583 = vsel %vm4553, %v3731, %v4582
        %v4584 = vsel %vm4555, %v3809, %v4583
        %v4585 = vsel %vm4543, %v3354, %v3276
        %v4586 = vsel %vm4545, %v3432, %v4585
        %v4587 = vsel %vm4547, %v3510, %v4586
        %v4588 = vsel %vm4549, %v3588, %v4587
        %v4589 = vsel %vm4551, %v3666, %v4588
        %v4590 = vsel %vm4553, %v3744, %v4589
        %v4591 = vsel %vm4555, %v3822, %v4590
        %v4592 = vsel %vm4543, %v3913, %v3835
        %v4593 = vsel %vm4545, %v3991, %v4592
        %v4594 = vsel %vm4547, %v4069, %v4593
        %v4595 = vsel %vm4549, %v4147, %v4594
        %v4596 = vsel %vm4551, %v4225, %v4595
        %v4597 = vsel %vm4553, %v4303, %v4596
        %v4598 = vsel %vm4555, %v4381, %v4597
        %v4599 = vsel %vm4543, %v3926, %v3848
        %v4600 = vsel %vm4545, %v4004, %v4599
        %v4601 = vsel %vm4547, %v4082, %v4600
        %v4602 = vsel %vm4549, %v4160, %v4601
        %v4603 = vsel %vm4551, %v4238, %v4602
        %v4604 = vsel %vm4553, %v4316, %v4603
        %v4605 = vsel %vm4555, %v4394, %v4604
        %v4606 = vsel %vm4543, %v3939, %v3861
        %v4607 = vsel %vm4545, %v4017, %v4606
        %v4608 = vsel %vm4547, %v4095, %v4607
        %v4609 = vsel %vm4549, %v4173, %v4608
        %v4610 = vsel %vm4551, %v4251, %v4609
        %v4611 = vsel %vm4553, %v4329, %v4610
        %v4612 = vsel %vm4555, %v4407, %v4611
        %v4613 = vsel %vm4543, %v3952, %v3874
        %v4614 = vsel %vm4545, %v4030, %v4613
        %v4615 = vsel %vm4547, %v4108, %v4614
        %v4616 = vsel %vm4549, %v4186, %v4615
        %v4617 = vsel %vm4551, %v4264, %v4616
        %v4618 = vsel %vm4553, %v4342, %v4617
        %v4619 = vsel %vm4555, %v4420, %v4618
        %v4620 = vsel %vm4543, %v3965, %v3887
        %v4621 = vsel %vm4545, %v4043, %v4620
        %v4622 = vsel %vm4547, %v4121, %v4621
        %v4623 = vsel %vm4549, %v4199, %v4622
        %v4624 = vsel %vm4551, %v4277, %v4623
        %v4625 = vsel %vm4553, %v4355, %v4624
        %v4626 = vsel %vm4555, %v4433, %v4625
        %v4627 = vsel %vm4543, %v3978, %v3900
        %v4628 = vsel %vm4545, %v4056, %v4627
        %v4629 = vsel %vm4547, %v4134, %v4628
        %v4630 = vsel %vm4549, %v4212, %v4629
        %v4631 = vsel %vm4551, %v4290, %v4630
        %v4632 = vsel %vm4553, %v4368, %v4631
        %v4633 = vsel %vm4555, %v4446, %v4632
        %v4646 = vadd.f32 %v1651, %v4556
        %v4647 = vadd.f32 %v1652, %v4563
        %v4648 = vadd.f32 %v1653, %v4570
        %v4649 = vadd.f32 %v1654, %v4577
        %v4650 = vadd.f32 %v1655, %v4584
        %v4651 = vadd.f32 %v1656, %v4591
        %v4652 = vadd.f32 %v1657, %v4598
        %v4653 = vadd.f32 %v1658, %v4605
        %v4654 = vadd.f32 %v1659, %v4612
        %v4655 = vadd.f32 %v1660, %v4619
        %v4656 = vadd.f32 %v1661, %v4626
        %v4657 = vadd.f32 %v1662, %v4633
        %4658 = vst [vmem:[#allocation2] sm:$0xff] %v4646
        %4659 = vst [vmem:[#allocation2 + $0x8] sm:$0xff] %v4647
        %4660 = vst [vmem:[#allocation2 + $0x10] sm:$0xff] %v4648
        %4661 = vst [vmem:[#allocation2 + $0x18] sm:$0xff] %v4649
        %4662 = vst [vmem:[#allocation2 + $0x20] sm:$0xff] %v4650
        %4663 = vst [vmem:[#allocation2 + $0x28] sm:$0xff] %v4651
        %4664 = vst [vmem:[#allocation2 + $0x30] sm:$0xff] %v4652
        %4665 = vst [vmem:[#allocation2 + $0x38] sm:$0xff] %v4653
        %4666 = vst [vmem:[#allocation2 + $0x40] sm:$0xff] %v4654
        %4667 = vst [vmem:[#allocation2 + $0x48] sm:$0xff] %v4655
        %4668 = vst [vmem:[#allocation2 + $0x50] sm:$0xff] %v4656
        %4669 = vst [vmem:[#allocation2 + $0x58] sm:$0xff] %v4657
        // Predicated region
        $region85: #{bert_arch_forward.1} parent=51 // pred_check
          %p4670 = pneg %p483
        $region86: #{bert_arch_forward.1} parent=51 // pred_check_branch
          %4672 = sbr.rel (%p4670) target = $region88
        $region87: #{bert_arch_forward.1} parent=51 // pred_region
          %v4673 = vld [vmem:[#allocation2] sm:$0xff]
          %v4674 = vld [vmem:[#allocation2 + $0x8] sm:$0xff]
          %v4675 = vld [vmem:[#allocation2 + $0x10] sm:$0xff]
          %v4676 = vld [vmem:[#allocation2 + $0x18] sm:$0xff]
          %v4677 = vld [vmem:[#allocation2 + $0x20] sm:$0xff]
          %v4678 = vld [vmem:[#allocation2 + $0x28] sm:$0xff]
          %v4679 = vld [vmem:[#allocation2 + $0x30] sm:$0xff]
          %v4680 = vld [vmem:[#allocation2 + $0x38] sm:$0xff]
          %v4681 = vld [vmem:[#allocation2 + $0x40] sm:$0xff]
          %v4682 = vld [vmem:[#allocation2 + $0x48] sm:$0xff]
          %v4683 = vld [vmem:[#allocation2 + $0x50] sm:$0xff]
          %v4684 = vld [vmem:[#allocation2 + $0x58] sm:$0xff]
          %v4685 = vpack.c.bf16 %v4679, %v4673
          %v4686 = vpack.c.bf16 %v4680, %v4674
          %v4687 = vpack.c.bf16 %v4681, %v4675
          %v4688 = vpack.c.bf16 %v4682, %v4676
          %v4689 = vpack.c.bf16 %v4683, %v4677
          %v4690 = vpack.c.bf16 %v4684, %v4678
          %v4691 = vld [vmem:[#allocation5] sm:$0xff]
          %v4692 = vld [vmem:[#allocation5 + $0x8] sm:$0xff]
          %v4693 = vld [vmem:[#allocation5 + $0x10] sm:$0xff]
          %v4694 = vld [vmem:[#allocation5 + $0x18] sm:$0xff]
          %v4695 = vld [vmem:[#allocation5 + $0x20] sm:$0xff]
          %v4696 = vld [vmem:[#allocation5 + $0x28] sm:$0xff]
          %v4697 = vld [vmem:[#allocation5 + $0x30] sm:$0xff]
          %v4698 = vld [vmem:[#allocation5 + $0x38] sm:$0xff]
          %v4699 = vld [vmem:[#allocation5 + $0x40] sm:$0xff]
          %v4700 = vld [vmem:[#allocation5 + $0x48] sm:$0xff]
          %v4701 = vld [vmem:[#allocation5 + $0x50] sm:$0xff]
          %v4702 = vld [vmem:[#allocation5 + $0x58] sm:$0xff]
          %v4703 = vld [vmem:[#allocation5 + $0x60] sm:$0xff]
          %v4704 = vld [vmem:[#allocation5 + $0x68] sm:$0xff]
          %v4705 = vld [vmem:[#allocation5 + $0x70] sm:$0xff]
          %v4706 = vld [vmem:[#allocation5 + $0x78] sm:$0xff]
          %v4707 = vld [vmem:[#allocation5 + $0x80] sm:$0xff]
          %v4708 = vld [vmem:[#allocation5 + $0x88] sm:$0xff]
          %v4709 = vld [vmem:[#allocation5 + $0x90] sm:$0xff]
          %v4710 = vld [vmem:[#allocation5 + $0x98] sm:$0xff]
          %v4711 = vld [vmem:[#allocation5 + $0xa0] sm:$0xff]
          %v4712 = vld [vmem:[#allocation5 + $0xa8] sm:$0xff]
          %v4713 = vld [vmem:[#allocation5 + $0xb0] sm:$0xff]
          %v4714 = vld [vmem:[#allocation5 + $0xb8] sm:$0xff]
          %v4715 = vld [vmem:[#allocation5 + $0xc0] sm:$0xff]
          %v4716 = vld [vmem:[#allocation5 + $0xc8] sm:$0xff]
          %v4717 = vld [vmem:[#allocation5 + $0xd0] sm:$0xff]
          %v4718 = vld [vmem:[#allocation5 + $0xd8] sm:$0xff]
          %v4719 = vld [vmem:[#allocation5 + $0xe0] sm:$0xff]
          %v4720 = vld [vmem:[#allocation5 + $0xe8] sm:$0xff]
          %v4721 = vld [vmem:[#allocation5 + $0xf0] sm:$0xff]
          %v4722 = vld [vmem:[#allocation5 + $0xf8] sm:$0xff]
          %v4723 = vld [vmem:[#allocation5 + $0x100] sm:$0xff]
          %v4724 = vld [vmem:[#allocation5 + $0x108] sm:$0xff]
          %v4725 = vld [vmem:[#allocation5 + $0x110] sm:$0xff]
          %v4726 = vld [vmem:[#allocation5 + $0x118] sm:$0xff]
          %v4727 = vld [vmem:[#allocation5 + $0x120] sm:$0xff]
          %v4728 = vld [vmem:[#allocation5 + $0x128] sm:$0xff]
          %v4729 = vld [vmem:[#allocation5 + $0x130] sm:$0xff]
          %v4730 = vld [vmem:[#allocation5 + $0x138] sm:$0xff]
          %v4731 = vld [vmem:[#allocation5 + $0x140] sm:$0xff]
          %v4732 = vld [vmem:[#allocation5 + $0x148] sm:$0xff]
          %v4733 = vld [vmem:[#allocation5 + $0x150] sm:$0xff]
          %v4734 = vld [vmem:[#allocation5 + $0x158] sm:$0xff]
          %v4735 = vld [vmem:[#allocation5 + $0x160] sm:$0xff]
          %v4736 = vld [vmem:[#allocation5 + $0x168] sm:$0xff]
          %v4737 = vld [vmem:[#allocation5 + $0x170] sm:$0xff]
          %v4738 = vld [vmem:[#allocation5 + $0x178] sm:$0xff]
          %v4739 = vld [vmem:[#allocation5 + $0x180] sm:$0xff]
          %v4740 = vld [vmem:[#allocation5 + $0x188] sm:$0xff]
          %v4741 = vld [vmem:[#allocation5 + $0x190] sm:$0xff]
          %v4742 = vld [vmem:[#allocation5 + $0x198] sm:$0xff]
          %v4743 = vld [vmem:[#allocation5 + $0x1a0] sm:$0xff]
          %v4744 = vld [vmem:[#allocation5 + $0x1a8] sm:$0xff]
          %v4745 = vld [vmem:[#allocation5 + $0x1b0] sm:$0xff]
          %v4746 = vld [vmem:[#allocation5 + $0x1b8] sm:$0xff]
          %v4747 = vld [vmem:[#allocation5 + $0x1c0] sm:$0xff]
          %v4748 = vld [vmem:[#allocation5 + $0x1c8] sm:$0xff]
          %v4749 = vld [vmem:[#allocation5 + $0x1d0] sm:$0xff]
          %v4750 = vld [vmem:[#allocation5 + $0x1d8] sm:$0xff]
          %v4751 = vld [vmem:[#allocation5 + $0x1e0] sm:$0xff]
          %v4752 = vld [vmem:[#allocation5 + $0x1e8] sm:$0xff]
          %v4753 = vld [vmem:[#allocation5 + $0x1f0] sm:$0xff]
          %v4754 = vld [vmem:[#allocation5 + $0x1f8] sm:$0xff]
          %v4755 = vld [vmem:[#allocation5 + $0x200] sm:$0xff]
          %v4756 = vld [vmem:[#allocation5 + $0x208] sm:$0xff]
          %v4757 = vld [vmem:[#allocation5 + $0x210] sm:$0xff]
          %v4758 = vld [vmem:[#allocation5 + $0x218] sm:$0xff]
          %v4759 = vld [vmem:[#allocation5 + $0x220] sm:$0xff]
          %v4760 = vld [vmem:[#allocation5 + $0x228] sm:$0xff]
          %v4761 = vld [vmem:[#allocation5 + $0x230] sm:$0xff]
          %v4762 = vld [vmem:[#allocation5 + $0x238] sm:$0xff]
          %v4763 = vld [vmem:[#allocation5 + $0x240] sm:$0xff]
          %v4764 = vld [vmem:[#allocation5 + $0x248] sm:$0xff]
          %v4765 = vld [vmem:[#allocation5 + $0x250] sm:$0xff]
          %v4766 = vld [vmem:[#allocation5 + $0x258] sm:$0xff]
          %v4767 = vld [vmem:[#allocation5 + $0x260] sm:$0xff]
          %v4768 = vld [vmem:[#allocation5 + $0x268] sm:$0xff]
          %v4769 = vld [vmem:[#allocation5 + $0x270] sm:$0xff]
          %v4770 = vld [vmem:[#allocation5 + $0x278] sm:$0xff]
          %v4771 = vld [vmem:[#allocation5 + $0x280] sm:$0xff]
          %v4772 = vld [vmem:[#allocation5 + $0x288] sm:$0xff]
          %v4773 = vld [vmem:[#allocation5 + $0x290] sm:$0xff]
          %v4774 = vld [vmem:[#allocation5 + $0x298] sm:$0xff]
          %v4775 = vld [vmem:[#allocation5 + $0x2a0] sm:$0xff]
          %v4776 = vld [vmem:[#allocation5 + $0x2a8] sm:$0xff]
          %v4777 = vld [vmem:[#allocation5 + $0x2b0] sm:$0xff]
          %v4778 = vld [vmem:[#allocation5 + $0x2b8] sm:$0xff]
          %v4779 = vld [vmem:[#allocation5 + $0x2c0] sm:$0xff]
          %v4780 = vld [vmem:[#allocation5 + $0x2c8] sm:$0xff]
          %v4781 = vld [vmem:[#allocation5 + $0x2d0] sm:$0xff]
          %v4782 = vld [vmem:[#allocation5 + $0x2d8] sm:$0xff]
          %v4783 = vld [vmem:[#allocation5 + $0x2e0] sm:$0xff]
          %v4784 = vld [vmem:[#allocation5 + $0x2e8] sm:$0xff]
          %v4785 = vld [vmem:[#allocation5 + $0x2f0] sm:$0xff]
          %v4786 = vld [vmem:[#allocation5 + $0x2f8] sm:$0xff]
          %v4787 = vld [vmem:[#allocation5 + $0x300] sm:$0xff]
          %v4788 = vld [vmem:[#allocation5 + $0x308] sm:$0xff]
          %v4789 = vld [vmem:[#allocation5 + $0x310] sm:$0xff]
          %v4790 = vld [vmem:[#allocation5 + $0x318] sm:$0xff]
          %v4791 = vld [vmem:[#allocation5 + $0x320] sm:$0xff]
          %v4792 = vld [vmem:[#allocation5 + $0x328] sm:$0xff]
          %v4793 = vld [vmem:[#allocation5 + $0x330] sm:$0xff]
          %v4794 = vld [vmem:[#allocation5 + $0x338] sm:$0xff]
          %v4795 = vld [vmem:[#allocation5 + $0x340] sm:$0xff]
          %v4796 = vld [vmem:[#allocation5 + $0x348] sm:$0xff]
          %v4797 = vld [vmem:[#allocation5 + $0x350] sm:$0xff]
          %v4798 = vld [vmem:[#allocation5 + $0x358] sm:$0xff]
          %v4799 = vld [vmem:[#allocation5 + $0x360] sm:$0xff]
          %v4800 = vld [vmem:[#allocation5 + $0x368] sm:$0xff]
          %v4801 = vld [vmem:[#allocation5 + $0x370] sm:$0xff]
          %v4802 = vld [vmem:[#allocation5 + $0x378] sm:$0xff]
          %v4803 = vld [vmem:[#allocation5 + $0x380] sm:$0xff]
          %v4804 = vld [vmem:[#allocation5 + $0x388] sm:$0xff]
          %v4805 = vld [vmem:[#allocation5 + $0x390] sm:$0xff]
          %v4806 = vld [vmem:[#allocation5 + $0x398] sm:$0xff]
          %v4807 = vld [vmem:[#allocation5 + $0x3a0] sm:$0xff]
          %v4808 = vld [vmem:[#allocation5 + $0x3a8] sm:$0xff]
          %v4809 = vld [vmem:[#allocation5 + $0x3b0] sm:$0xff]
          %v4810 = vld [vmem:[#allocation5 + $0x3b8] sm:$0xff]
          %v4811 = vld [vmem:[#allocation5 + $0x3c0] sm:$0xff]
          %v4812 = vld [vmem:[#allocation5 + $0x3c8] sm:$0xff]
          %v4813 = vld [vmem:[#allocation5 + $0x3d0] sm:$0xff]
          %v4814 = vld [vmem:[#allocation5 + $0x3d8] sm:$0xff]
          %v4815 = vld [vmem:[#allocation5 + $0x3e0] sm:$0xff]
          %v4816 = vld [vmem:[#allocation5 + $0x3e8] sm:$0xff]
          %v4817 = vld [vmem:[#allocation5 + $0x3f0] sm:$0xff]
          %v4818 = vld [vmem:[#allocation5 + $0x3f8] sm:$0xff]
          %v4819 = vld [vmem:[#allocation5 + $0x400] sm:$0xff]
          %v4820 = vld [vmem:[#allocation5 + $0x408] sm:$0xff]
          %v4821 = vld [vmem:[#allocation5 + $0x410] sm:$0xff]
          %v4822 = vld [vmem:[#allocation5 + $0x418] sm:$0xff]
          %v4823 = vld [vmem:[#allocation5 + $0x420] sm:$0xff]
          %v4824 = vld [vmem:[#allocation5 + $0x428] sm:$0xff]
          %v4825 = vld [vmem:[#allocation5 + $0x430] sm:$0xff]
          %v4826 = vld [vmem:[#allocation5 + $0x438] sm:$0xff]
          %v4827 = vld [vmem:[#allocation5 + $0x440] sm:$0xff]
          %v4828 = vld [vmem:[#allocation5 + $0x448] sm:$0xff]
          %v4829 = vld [vmem:[#allocation5 + $0x450] sm:$0xff]
          %v4830 = vld [vmem:[#allocation5 + $0x458] sm:$0xff]
          %v4831 = vld [vmem:[#allocation5 + $0x460] sm:$0xff]
          %v4832 = vld [vmem:[#allocation5 + $0x468] sm:$0xff]
          %v4833 = vld [vmem:[#allocation5 + $0x470] sm:$0xff]
          %v4834 = vld [vmem:[#allocation5 + $0x478] sm:$0xff]
          %v4835 = vld [vmem:[#allocation5 + $0x480] sm:$0xff]
          %v4836 = vld [vmem:[#allocation5 + $0x488] sm:$0xff]
          %v4837 = vld [vmem:[#allocation5 + $0x490] sm:$0xff]
          %v4838 = vld [vmem:[#allocation5 + $0x498] sm:$0xff]
          %v4839 = vld [vmem:[#allocation5 + $0x4a0] sm:$0xff]
          %v4840 = vld [vmem:[#allocation5 + $0x4a8] sm:$0xff]
          %v4841 = vld [vmem:[#allocation5 + $0x4b0] sm:$0xff]
          %v4842 = vld [vmem:[#allocation5 + $0x4b8] sm:$0xff]
          %v4843 = vld [vmem:[#allocation5 + $0x4c0] sm:$0xff]
          %v4844 = vld [vmem:[#allocation5 + $0x4c8] sm:$0xff]
          %v4845 = vld [vmem:[#allocation5 + $0x4d0] sm:$0xff]
          %v4846 = vld [vmem:[#allocation5 + $0x4d8] sm:$0xff]
          %v4847 = vld [vmem:[#allocation5 + $0x4e0] sm:$0xff]
          %v4848 = vld [vmem:[#allocation5 + $0x4e8] sm:$0xff]
          %v4849 = vld [vmem:[#allocation5 + $0x4f0] sm:$0xff]
          %v4850 = vld [vmem:[#allocation5 + $0x4f8] sm:$0xff]
          %v4851 = vld [vmem:[#allocation5 + $0x500] sm:$0xff]
          %v4852 = vld [vmem:[#allocation5 + $0x508] sm:$0xff]
          %v4853 = vld [vmem:[#allocation5 + $0x510] sm:$0xff]
          %v4854 = vld [vmem:[#allocation5 + $0x518] sm:$0xff]
          %v4855 = vld [vmem:[#allocation5 + $0x520] sm:$0xff]
          %v4856 = vld [vmem:[#allocation5 + $0x528] sm:$0xff]
          %v4857 = vld [vmem:[#allocation5 + $0x530] sm:$0xff]
          %v4858 = vld [vmem:[#allocation5 + $0x538] sm:$0xff]
          %v4859 = vld [vmem:[#allocation5 + $0x540] sm:$0xff]
          %v4860 = vld [vmem:[#allocation5 + $0x548] sm:$0xff]
          %v4861 = vld [vmem:[#allocation5 + $0x550] sm:$0xff]
          %v4862 = vld [vmem:[#allocation5 + $0x558] sm:$0xff]
          %v4863 = vld [vmem:[#allocation5 + $0x560] sm:$0xff]
          %v4864 = vld [vmem:[#allocation5 + $0x568] sm:$0xff]
          %v4865 = vld [vmem:[#allocation5 + $0x570] sm:$0xff]
          %v4866 = vld [vmem:[#allocation5 + $0x578] sm:$0xff]
          %v4867 = vld [vmem:[#allocation5 + $0x580] sm:$0xff]
          %v4868 = vld [vmem:[#allocation5 + $0x588] sm:$0xff]
          %v4869 = vld [vmem:[#allocation5 + $0x590] sm:$0xff]
          %v4870 = vld [vmem:[#allocation5 + $0x598] sm:$0xff]
          %v4871 = vld [vmem:[#allocation5 + $0x5a0] sm:$0xff]
          %v4872 = vld [vmem:[#allocation5 + $0x5a8] sm:$0xff]
          %v4873 = vld [vmem:[#allocation5 + $0x5b0] sm:$0xff]
          %v4874 = vld [vmem:[#allocation5 + $0x5b8] sm:$0xff]
          %v4875 = vld [vmem:[#allocation5 + $0x5c0] sm:$0xff]
          %v4876 = vld [vmem:[#allocation5 + $0x5c8] sm:$0xff]
          %v4877 = vld [vmem:[#allocation5 + $0x5d0] sm:$0xff]
          %v4878 = vld [vmem:[#allocation5 + $0x5d8] sm:$0xff]
          %v4879 = vld [vmem:[#allocation5 + $0x5e0] sm:$0xff]
          %v4880 = vld [vmem:[#allocation5 + $0x5e8] sm:$0xff]
          %v4881 = vld [vmem:[#allocation5 + $0x5f0] sm:$0xff]
          %v4882 = vld [vmem:[#allocation5 + $0x5f8] sm:$0xff]
          %v4883 = vld [vmem:[#allocation5 + $0x600] sm:$0xff]
          %v4884 = vld [vmem:[#allocation5 + $0x608] sm:$0xff]
          %v4885 = vld [vmem:[#allocation5 + $0x610] sm:$0xff]
          %v4886 = vld [vmem:[#allocation5 + $0x618] sm:$0xff]
          %v4887 = vld [vmem:[#allocation5 + $0x620] sm:$0xff]
          %v4888 = vld [vmem:[#allocation5 + $0x628] sm:$0xff]
          %v4889 = vld [vmem:[#allocation5 + $0x630] sm:$0xff]
          %v4890 = vld [vmem:[#allocation5 + $0x638] sm:$0xff]
          %v4891 = vld [vmem:[#allocation5 + $0x640] sm:$0xff]
          %v4892 = vld [vmem:[#allocation5 + $0x648] sm:$0xff]
          %v4893 = vld [vmem:[#allocation5 + $0x650] sm:$0xff]
          %v4894 = vld [vmem:[#allocation5 + $0x658] sm:$0xff]
          %v4895 = vld [vmem:[#allocation5 + $0x660] sm:$0xff]
          %v4896 = vld [vmem:[#allocation5 + $0x668] sm:$0xff]
          %v4897 = vld [vmem:[#allocation5 + $0x670] sm:$0xff]
          %v4898 = vld [vmem:[#allocation5 + $0x678] sm:$0xff]
          %v4899 = vld [vmem:[#allocation5 + $0x680] sm:$0xff]
          %v4900 = vld [vmem:[#allocation5 + $0x688] sm:$0xff]
          %v4901 = vld [vmem:[#allocation5 + $0x690] sm:$0xff]
          %v4902 = vld [vmem:[#allocation5 + $0x698] sm:$0xff]
          %v4903 = vld [vmem:[#allocation5 + $0x6a0] sm:$0xff]
          %v4904 = vld [vmem:[#allocation5 + $0x6a8] sm:$0xff]
          %v4905 = vld [vmem:[#allocation5 + $0x6b0] sm:$0xff]
          %v4906 = vld [vmem:[#allocation5 + $0x6b8] sm:$0xff]
          %v4907 = vld [vmem:[#allocation5 + $0x6c0] sm:$0xff]
          %v4908 = vld [vmem:[#allocation5 + $0x6c8] sm:$0xff]
          %v4909 = vld [vmem:[#allocation5 + $0x6d0] sm:$0xff]
          %v4910 = vld [vmem:[#allocation5 + $0x6d8] sm:$0xff]
          %v4911 = vld [vmem:[#allocation5 + $0x6e0] sm:$0xff]
          %v4912 = vld [vmem:[#allocation5 + $0x6e8] sm:$0xff]
          %v4913 = vld [vmem:[#allocation5 + $0x6f0] sm:$0xff]
          %v4914 = vld [vmem:[#allocation5 + $0x6f8] sm:$0xff]
          %v4915 = vld [vmem:[#allocation5 + $0x700] sm:$0xff]
          %v4916 = vld [vmem:[#allocation5 + $0x708] sm:$0xff]
          %v4917 = vld [vmem:[#allocation5 + $0x710] sm:$0xff]
          %v4918 = vld [vmem:[#allocation5 + $0x718] sm:$0xff]
          %v4919 = vld [vmem:[#allocation5 + $0x720] sm:$0xff]
          %v4920 = vld [vmem:[#allocation5 + $0x728] sm:$0xff]
          %v4921 = vld [vmem:[#allocation5 + $0x730] sm:$0xff]
          %v4922 = vld [vmem:[#allocation5 + $0x738] sm:$0xff]
          %v4923 = vld [vmem:[#allocation5 + $0x740] sm:$0xff]
          %v4924 = vld [vmem:[#allocation5 + $0x748] sm:$0xff]
          %v4925 = vld [vmem:[#allocation5 + $0x750] sm:$0xff]
          %v4926 = vld [vmem:[#allocation5 + $0x758] sm:$0xff]
          %v4927 = vld [vmem:[#allocation5 + $0x760] sm:$0xff]
          %v4928 = vld [vmem:[#allocation5 + $0x768] sm:$0xff]
          %v4929 = vld [vmem:[#allocation5 + $0x770] sm:$0xff]
          %v4930 = vld [vmem:[#allocation5 + $0x778] sm:$0xff]
          %v4931 = vld [vmem:[#allocation5 + $0x780] sm:$0xff]
          %v4932 = vld [vmem:[#allocation5 + $0x788] sm:$0xff]
          %v4933 = vld [vmem:[#allocation5 + $0x790] sm:$0xff]
          %v4934 = vld [vmem:[#allocation5 + $0x798] sm:$0xff]
          %v4935 = vld [vmem:[#allocation5 + $0x7a0] sm:$0xff]
          %v4936 = vld [vmem:[#allocation5 + $0x7a8] sm:$0xff]
          %v4937 = vld [vmem:[#allocation5 + $0x7b0] sm:$0xff]
          %v4938 = vld [vmem:[#allocation5 + $0x7b8] sm:$0xff]
          %v4939 = vld [vmem:[#allocation5 + $0x7c0] sm:$0xff]
          %v4940 = vld [vmem:[#allocation5 + $0x7c8] sm:$0xff]
          %v4941 = vld [vmem:[#allocation5 + $0x7d0] sm:$0xff]
          %v4942 = vld [vmem:[#allocation5 + $0x7d8] sm:$0xff]
          %v4943 = vld [vmem:[#allocation5 + $0x7e0] sm:$0xff]
          %v4944 = vld [vmem:[#allocation5 + $0x7e8] sm:$0xff]
          %v4945 = vld [vmem:[#allocation5 + $0x7f0] sm:$0xff]
          %v4946 = vld [vmem:[#allocation5 + $0x7f8] sm:$0xff]
          %v4947 = vld [vmem:[#allocation5 + $0x800] sm:$0xff]
          %v4948 = vld [vmem:[#allocation5 + $0x808] sm:$0xff]
          %v4949 = vld [vmem:[#allocation5 + $0x810] sm:$0xff]
          %v4950 = vld [vmem:[#allocation5 + $0x818] sm:$0xff]
          %v4951 = vld [vmem:[#allocation5 + $0x820] sm:$0xff]
          %v4952 = vld [vmem:[#allocation5 + $0x828] sm:$0xff]
          %v4953 = vld [vmem:[#allocation5 + $0x830] sm:$0xff]
          %v4954 = vld [vmem:[#allocation5 + $0x838] sm:$0xff]
          %v4955 = vld [vmem:[#allocation5 + $0x840] sm:$0xff]
          %v4956 = vld [vmem:[#allocation5 + $0x848] sm:$0xff]
          %v4957 = vld [vmem:[#allocation5 + $0x850] sm:$0xff]
          %v4958 = vld [vmem:[#allocation5 + $0x858] sm:$0xff]
          %v4959 = vld [vmem:[#allocation5 + $0x860] sm:$0xff]
          %v4960 = vld [vmem:[#allocation5 + $0x868] sm:$0xff]
          %v4961 = vld [vmem:[#allocation5 + $0x870] sm:$0xff]
          %v4962 = vld [vmem:[#allocation5 + $0x878] sm:$0xff]
          %v4963 = vld [vmem:[#allocation5 + $0x880] sm:$0xff]
          %v4964 = vld [vmem:[#allocation5 + $0x888] sm:$0xff]
          %v4965 = vld [vmem:[#allocation5 + $0x890] sm:$0xff]
          %v4966 = vld [vmem:[#allocation5 + $0x898] sm:$0xff]
          %v4967 = vld [vmem:[#allocation5 + $0x8a0] sm:$0xff]
          %v4968 = vld [vmem:[#allocation5 + $0x8a8] sm:$0xff]
          %v4969 = vld [vmem:[#allocation5 + $0x8b0] sm:$0xff]
          %v4970 = vld [vmem:[#allocation5 + $0x8b8] sm:$0xff]
          %v4971 = vld [vmem:[#allocation5 + $0x8c0] sm:$0xff]
          %v4972 = vld [vmem:[#allocation5 + $0x8c8] sm:$0xff]
          %v4973 = vld [vmem:[#allocation5 + $0x8d0] sm:$0xff]
          %v4974 = vld [vmem:[#allocation5 + $0x8d8] sm:$0xff]
          %v4975 = vld [vmem:[#allocation5 + $0x8e0] sm:$0xff]
          %v4976 = vld [vmem:[#allocation5 + $0x8e8] sm:$0xff]
          %v4977 = vld [vmem:[#allocation5 + $0x8f0] sm:$0xff]
          %v4978 = vld [vmem:[#allocation5 + $0x8f8] sm:$0xff]
          %v4979 = vld [vmem:[#allocation7] sm:$0x3f]
          %v4981 = vperm.slane %v4979, 0
          %v4982 = vperm.slane %v4979, 1
          %v4983 = vperm.slane %v4979, 2
          %v4984 = vperm.slane %v4979, 3
          %v4985 = vperm.slane %v4979, 4
          %v4986 = vperm.slane %v4979, 5
          %v5281 = vunpack.c.l.b16 %v4691
          %v5282 = vunpack.c.h.b16 %v4691
          %v5283 = vunpack.c.l.b16 %v4692
          %v5284 = vunpack.c.h.b16 %v4692
          %v5285 = vunpack.c.l.b16 %v4693
          %v5286 = vunpack.c.h.b16 %v4693
          %v5287 = vunpack.c.l.b16 %v4694
          %v5288 = vunpack.c.h.b16 %v4694
          %v5289 = vunpack.c.l.b16 %v4695
          %v5290 = vunpack.c.h.b16 %v4695
          %v5291 = vunpack.c.l.b16 %v4696
          %v5292 = vunpack.c.h.b16 %v4696
          %v5293 = vunpack.c.l.b16 %v4697
          %v5294 = vunpack.c.h.b16 %v4697
          %v5295 = vunpack.c.l.b16 %v4698
          %v5296 = vunpack.c.h.b16 %v4698
          %v5297 = vunpack.c.l.b16 %v4699
          %v5298 = vunpack.c.h.b16 %v4699
          %v5299 = vunpack.c.l.b16 %v4700
          %v5300 = vunpack.c.h.b16 %v4700
          %v5301 = vunpack.c.l.b16 %v4701
          %v5302 = vunpack.c.h.b16 %v4701
          %v5303 = vunpack.c.l.b16 %v4702
          %v5304 = vunpack.c.h.b16 %v4702
          %v5305 = vunpack.c.l.b16 %v4703
          %v5306 = vunpack.c.h.b16 %v4703
          %v5307 = vunpack.c.l.b16 %v4704
          %v5308 = vunpack.c.h.b16 %v4704
          %v5309 = vunpack.c.l.b16 %v4705
          %v5310 = vunpack.c.h.b16 %v4705
          %v5311 = vunpack.c.l.b16 %v4706
          %v5312 = vunpack.c.h.b16 %v4706
          %v5313 = vunpack.c.l.b16 %v4707
          %v5314 = vunpack.c.h.b16 %v4707
          %v5315 = vunpack.c.l.b16 %v4708
          %v5316 = vunpack.c.h.b16 %v4708
          %v5317 = vunpack.c.l.b16 %v4709
          %v5318 = vunpack.c.h.b16 %v4709
          %v5319 = vunpack.c.l.b16 %v4710
          %v5320 = vunpack.c.h.b16 %v4710
          %v5321 = vunpack.c.l.b16 %v4711
          %v5322 = vunpack.c.h.b16 %v4711
          %v5323 = vunpack.c.l.b16 %v4712
          %v5324 = vunpack.c.h.b16 %v4712
          %v5325 = vunpack.c.l.b16 %v4713
          %v5326 = vunpack.c.h.b16 %v4713
          %v5327 = vunpack.c.l.b16 %v4714
          %v5328 = vunpack.c.h.b16 %v4714
          %v5329 = vunpack.c.l.b16 %v4715
          %v5330 = vunpack.c.h.b16 %v4715
          %v5331 = vunpack.c.l.b16 %v4716
          %v5332 = vunpack.c.h.b16 %v4716
          %v5333 = vunpack.c.l.b16 %v4717
          %v5334 = vunpack.c.h.b16 %v4717
          %v5335 = vunpack.c.l.b16 %v4718
          %v5336 = vunpack.c.h.b16 %v4718
          %v5337 = vunpack.c.l.b16 %v4719
          %v5338 = vunpack.c.h.b16 %v4719
          %v5339 = vunpack.c.l.b16 %v4720
          %v5340 = vunpack.c.h.b16 %v4720
          %v5341 = vunpack.c.l.b16 %v4721
          %v5342 = vunpack.c.h.b16 %v4721
          %v5343 = vunpack.c.l.b16 %v4722
          %v5344 = vunpack.c.h.b16 %v4722
          %v5345 = vunpack.c.l.b16 %v4723
          %v5346 = vunpack.c.h.b16 %v4723
          %v5347 = vunpack.c.l.b16 %v4724
          %v5348 = vunpack.c.h.b16 %v4724
          %v5349 = vunpack.c.l.b16 %v4725
          %v5350 = vunpack.c.h.b16 %v4725
          %v5351 = vunpack.c.l.b16 %v4726
          %v5352 = vunpack.c.h.b16 %v4726
          %v5353 = vunpack.c.l.b16 %v4727
          %v5354 = vunpack.c.h.b16 %v4727
          %v5355 = vunpack.c.l.b16 %v4728
          %v5356 = vunpack.c.h.b16 %v4728
          %v5357 = vunpack.c.l.b16 %v4729
          %v5358 = vunpack.c.h.b16 %v4729
          %v5359 = vunpack.c.l.b16 %v4730
          %v5360 = vunpack.c.h.b16 %v4730
          %v5361 = vunpack.c.l.b16 %v4731
          %v5362 = vunpack.c.h.b16 %v4731
          %v5363 = vunpack.c.l.b16 %v4732
          %v5364 = vunpack.c.h.b16 %v4732
          %v5365 = vunpack.c.l.b16 %v4733
          %v5366 = vunpack.c.h.b16 %v4733
          %v5367 = vunpack.c.l.b16 %v4734
          %v5368 = vunpack.c.h.b16 %v4734
          %v5369 = vunpack.c.l.b16 %v4735
          %v5370 = vunpack.c.h.b16 %v4735
          %v5371 = vunpack.c.l.b16 %v4736
          %v5372 = vunpack.c.h.b16 %v4736
          %v5373 = vunpack.c.l.b16 %v4737
          %v5374 = vunpack.c.h.b16 %v4737
          %v5375 = vunpack.c.l.b16 %v4738
          %v5376 = vunpack.c.h.b16 %v4738
          %v5377 = vunpack.c.l.b16 %v4739
          %v5378 = vunpack.c.h.b16 %v4739
          %v5379 = vunpack.c.l.b16 %v4740
          %v5380 = vunpack.c.h.b16 %v4740
          %v5381 = vunpack.c.l.b16 %v4741
          %v5382 = vunpack.c.h.b16 %v4741
          %v5383 = vunpack.c.l.b16 %v4742
          %v5384 = vunpack.c.h.b16 %v4742
          %v5385 = vunpack.c.l.b16 %v4743
          %v5386 = vunpack.c.h.b16 %v4743
          %v5387 = vunpack.c.l.b16 %v4744
          %v5388 = vunpack.c.h.b16 %v4744
          %v5389 = vunpack.c.l.b16 %v4745
          %v5390 = vunpack.c.h.b16 %v4745
          %v5391 = vunpack.c.l.b16 %v4746
          %v5392 = vunpack.c.h.b16 %v4746
          %v5393 = vunpack.c.l.b16 %v4747
          %v5394 = vunpack.c.h.b16 %v4747
          %v5395 = vunpack.c.l.b16 %v4748
          %v5396 = vunpack.c.h.b16 %v4748
          %v5397 = vunpack.c.l.b16 %v4749
          %v5398 = vunpack.c.h.b16 %v4749
          %v5399 = vunpack.c.l.b16 %v4750
          %v5400 = vunpack.c.h.b16 %v4750
          %v5401 = vunpack.c.l.b16 %v4751
          %v5402 = vunpack.c.h.b16 %v4751
          %v5403 = vunpack.c.l.b16 %v4752
          %v5404 = vunpack.c.h.b16 %v4752
          %v5405 = vunpack.c.l.b16 %v4753
          %v5406 = vunpack.c.h.b16 %v4753
          %v5407 = vunpack.c.l.b16 %v4754
          %v5408 = vunpack.c.h.b16 %v4754
          %v5409 = vunpack.c.l.b16 %v4755
          %v5410 = vunpack.c.h.b16 %v4755
          %v5411 = vunpack.c.l.b16 %v4756
          %v5412 = vunpack.c.h.b16 %v4756
          %v5413 = vunpack.c.l.b16 %v4757
          %v5414 = vunpack.c.h.b16 %v4757
          %v5415 = vunpack.c.l.b16 %v4758
          %v5416 = vunpack.c.h.b16 %v4758
          %v5417 = vunpack.c.l.b16 %v4759
          %v5418 = vunpack.c.h.b16 %v4759
          %v5419 = vunpack.c.l.b16 %v4760
          %v5420 = vunpack.c.h.b16 %v4760
          %v5421 = vunpack.c.l.b16 %v4761
          %v5422 = vunpack.c.h.b16 %v4761
          %v5423 = vunpack.c.l.b16 %v4762
          %v5424 = vunpack.c.h.b16 %v4762
          %v5425 = vunpack.c.l.b16 %v4763
          %v5426 = vunpack.c.h.b16 %v4763
          %v5427 = vunpack.c.l.b16 %v4764
          %v5428 = vunpack.c.h.b16 %v4764
          %v5429 = vunpack.c.l.b16 %v4765
          %v5430 = vunpack.c.h.b16 %v4765
          %v5431 = vunpack.c.l.b16 %v4766
          %v5432 = vunpack.c.h.b16 %v4766
          %v5433 = vunpack.c.l.b16 %v4767
          %v5434 = vunpack.c.h.b16 %v4767
          %v5435 = vunpack.c.l.b16 %v4768
          %v5436 = vunpack.c.h.b16 %v4768
          %v5437 = vunpack.c.l.b16 %v4769
          %v5438 = vunpack.c.h.b16 %v4769
          %v5439 = vunpack.c.l.b16 %v4770
          %v5440 = vunpack.c.h.b16 %v4770
          %v5441 = vunpack.c.l.b16 %v4771
          %v5442 = vunpack.c.h.b16 %v4771
          %v5443 = vunpack.c.l.b16 %v4772
          %v5444 = vunpack.c.h.b16 %v4772
          %v5445 = vunpack.c.l.b16 %v4773
          %v5446 = vunpack.c.h.b16 %v4773
          %v5447 = vunpack.c.l.b16 %v4774
          %v5448 = vunpack.c.h.b16 %v4774
          %v5449 = vunpack.c.l.b16 %v4775
          %v5450 = vunpack.c.h.b16 %v4775
          %v5451 = vunpack.c.l.b16 %v4776
          %v5452 = vunpack.c.h.b16 %v4776
          %v5453 = vunpack.c.l.b16 %v4777
          %v5454 = vunpack.c.h.b16 %v4777
          %v5455 = vunpack.c.l.b16 %v4778
          %v5456 = vunpack.c.h.b16 %v4778
          %v5457 = vunpack.c.l.b16 %v4779
          %v5458 = vunpack.c.h.b16 %v4779
          %v5459 = vunpack.c.l.b16 %v4780
          %v5460 = vunpack.c.h.b16 %v4780
          %v5461 = vunpack.c.l.b16 %v4781
          %v5462 = vunpack.c.h.b16 %v4781
          %v5463 = vunpack.c.l.b16 %v4782
          %v5464 = vunpack.c.h.b16 %v4782
          %v5465 = vunpack.c.l.b16 %v4783
          %v5466 = vunpack.c.h.b16 %v4783
          %v5467 = vunpack.c.l.b16 %v4784
          %v5468 = vunpack.c.h.b16 %v4784
          %v5469 = vunpack.c.l.b16 %v4785
          %v5470 = vunpack.c.h.b16 %v4785
          %v5471 = vunpack.c.l.b16 %v4786
          %v5472 = vunpack.c.h.b16 %v4786
          %v5473 = vunpack.c.l.b16 %v4787
          %v5474 = vunpack.c.h.b16 %v4787
          %v5475 = vunpack.c.l.b16 %v4788
          %v5476 = vunpack.c.h.b16 %v4788
          %v5477 = vunpack.c.l.b16 %v4789
          %v5478 = vunpack.c.h.b16 %v4789
          %v5479 = vunpack.c.l.b16 %v4790
          %v5480 = vunpack.c.h.b16 %v4790
          %v5481 = vunpack.c.l.b16 %v4791
          %v5482 = vunpack.c.h.b16 %v4791
          %v5483 = vunpack.c.l.b16 %v4792
          %v5484 = vunpack.c.h.b16 %v4792
          %v5485 = vunpack.c.l.b16 %v4793
          %v5486 = vunpack.c.h.b16 %v4793
          %v5487 = vunpack.c.l.b16 %v4794
          %v5488 = vunpack.c.h.b16 %v4794
          %v5489 = vunpack.c.l.b16 %v4795
          %v5490 = vunpack.c.h.b16 %v4795
          %v5491 = vunpack.c.l.b16 %v4796
          %v5492 = vunpack.c.h.b16 %v4796
          %v5493 = vunpack.c.l.b16 %v4797
          %v5494 = vunpack.c.h.b16 %v4797
          %v5495 = vunpack.c.l.b16 %v4798
          %v5496 = vunpack.c.h.b16 %v4798
          %v5497 = vunpack.c.l.b16 %v4799
          %v5498 = vunpack.c.h.b16 %v4799
          %v5499 = vunpack.c.l.b16 %v4800
          %v5500 = vunpack.c.h.b16 %v4800
          %v5501 = vunpack.c.l.b16 %v4801
          %v5502 = vunpack.c.h.b16 %v4801
          %v5503 = vunpack.c.l.b16 %v4802
          %v5504 = vunpack.c.h.b16 %v4802
          %v5505 = vunpack.c.l.b16 %v4803
          %v5506 = vunpack.c.h.b16 %v4803
          %v5507 = vunpack.c.l.b16 %v4804
          %v5508 = vunpack.c.h.b16 %v4804
          %v5509 = vunpack.c.l.b16 %v4805
          %v5510 = vunpack.c.h.b16 %v4805
          %v5511 = vunpack.c.l.b16 %v4806
          %v5512 = vunpack.c.h.b16 %v4806
          %v5513 = vunpack.c.l.b16 %v4807
          %v5514 = vunpack.c.h.b16 %v4807
          %v5515 = vunpack.c.l.b16 %v4808
          %v5516 = vunpack.c.h.b16 %v4808
          %v5517 = vunpack.c.l.b16 %v4809
          %v5518 = vunpack.c.h.b16 %v4809
          %v5519 = vunpack.c.l.b16 %v4810
          %v5520 = vunpack.c.h.b16 %v4810
          %v5521 = vunpack.c.l.b16 %v4811
          %v5522 = vunpack.c.h.b16 %v4811
          %v5523 = vunpack.c.l.b16 %v4812
          %v5524 = vunpack.c.h.b16 %v4812
          %v5525 = vunpack.c.l.b16 %v4813
          %v5526 = vunpack.c.h.b16 %v4813
          %v5527 = vunpack.c.l.b16 %v4814
          %v5528 = vunpack.c.h.b16 %v4814
          %v5529 = vunpack.c.l.b16 %v4815
          %v5530 = vunpack.c.h.b16 %v4815
          %v5531 = vunpack.c.l.b16 %v4816
          %v5532 = vunpack.c.h.b16 %v4816
          %v5533 = vunpack.c.l.b16 %v4817
          %v5534 = vunpack.c.h.b16 %v4817
          %v5535 = vunpack.c.l.b16 %v4818
          %v5536 = vunpack.c.h.b16 %v4818
          %v5537 = vunpack.c.l.b16 %v4819
          %v5538 = vunpack.c.h.b16 %v4819
          %v5539 = vunpack.c.l.b16 %v4820
          %v5540 = vunpack.c.h.b16 %v4820
          %v5541 = vunpack.c.l.b16 %v4821
          %v5542 = vunpack.c.h.b16 %v4821
          %v5543 = vunpack.c.l.b16 %v4822
          %v5544 = vunpack.c.h.b16 %v4822
          %v5545 = vunpack.c.l.b16 %v4823
          %v5546 = vunpack.c.h.b16 %v4823
          %v5547 = vunpack.c.l.b16 %v4824
          %v5548 = vunpack.c.h.b16 %v4824
          %v5549 = vunpack.c.l.b16 %v4825
          %v5550 = vunpack.c.h.b16 %v4825
          %v5551 = vunpack.c.l.b16 %v4826
          %v5552 = vunpack.c.h.b16 %v4826
          %v5553 = vunpack.c.l.b16 %v4827
          %v5554 = vunpack.c.h.b16 %v4827
          %v5555 = vunpack.c.l.b16 %v4828
          %v5556 = vunpack.c.h.b16 %v4828
          %v5557 = vunpack.c.l.b16 %v4829
          %v5558 = vunpack.c.h.b16 %v4829
          %v5559 = vunpack.c.l.b16 %v4830
          %v5560 = vunpack.c.h.b16 %v4830
          %v5561 = vunpack.c.l.b16 %v4831
          %v5562 = vunpack.c.h.b16 %v4831
          %v5563 = vunpack.c.l.b16 %v4832
          %v5564 = vunpack.c.h.b16 %v4832
          %v5565 = vunpack.c.l.b16 %v4833
          %v5566 = vunpack.c.h.b16 %v4833
          %v5567 = vunpack.c.l.b16 %v4834
          %v5568 = vunpack.c.h.b16 %v4834
          %v5569 = vunpack.c.l.b16 %v4835
          %v5570 = vunpack.c.h.b16 %v4835
          %v5571 = vunpack.c.l.b16 %v4836
          %v5572 = vunpack.c.h.b16 %v4836
          %v5573 = vunpack.c.l.b16 %v4837
          %v5574 = vunpack.c.h.b16 %v4837
          %v5575 = vunpack.c.l.b16 %v4838
          %v5576 = vunpack.c.h.b16 %v4838
          %v5577 = vunpack.c.l.b16 %v4839
          %v5578 = vunpack.c.h.b16 %v4839
          %v5579 = vunpack.c.l.b16 %v4840
          %v5580 = vunpack.c.h.b16 %v4840
          %v5581 = vunpack.c.l.b16 %v4841
          %v5582 = vunpack.c.h.b16 %v4841
          %v5583 = vunpack.c.l.b16 %v4842
          %v5584 = vunpack.c.h.b16 %v4842
          %v5585 = vunpack.c.l.b16 %v4843
          %v5586 = vunpack.c.h.b16 %v4843
          %v5587 = vunpack.c.l.b16 %v4844
          %v5588 = vunpack.c.h.b16 %v4844
          %v5589 = vunpack.c.l.b16 %v4845
          %v5590 = vunpack.c.h.b16 %v4845
          %v5591 = vunpack.c.l.b16 %v4846
          %v5592 = vunpack.c.h.b16 %v4846
          %v5593 = vunpack.c.l.b16 %v4847
          %v5594 = vunpack.c.h.b16 %v4847
          %v5595 = vunpack.c.l.b16 %v4848
          %v5596 = vunpack.c.h.b16 %v4848
          %v5597 = vunpack.c.l.b16 %v4849
          %v5598 = vunpack.c.h.b16 %v4849
          %v5599 = vunpack.c.l.b16 %v4850
          %v5600 = vunpack.c.h.b16 %v4850
          %v5601 = vunpack.c.l.b16 %v4851
          %v5602 = vunpack.c.h.b16 %v4851
          %v5603 = vunpack.c.l.b16 %v4852
          %v5604 = vunpack.c.h.b16 %v4852
          %v5605 = vunpack.c.l.b16 %v4853
          %v5606 = vunpack.c.h.b16 %v4853
          %v5607 = vunpack.c.l.b16 %v4854
          %v5608 = vunpack.c.h.b16 %v4854
          %v5609 = vunpack.c.l.b16 %v4855
          %v5610 = vunpack.c.h.b16 %v4855
          %v5611 = vunpack.c.l.b16 %v4856
          %v5612 = vunpack.c.h.b16 %v4856
          %v5613 = vunpack.c.l.b16 %v4857
          %v5614 = vunpack.c.h.b16 %v4857
          %v5615 = vunpack.c.l.b16 %v4858
          %v5616 = vunpack.c.h.b16 %v4858
          %v5617 = vunpack.c.l.b16 %v4859
          %v5618 = vunpack.c.h.b16 %v4859
          %v5619 = vunpack.c.l.b16 %v4860
          %v5620 = vunpack.c.h.b16 %v4860
          %v5621 = vunpack.c.l.b16 %v4861
          %v5622 = vunpack.c.h.b16 %v4861
          %v5623 = vunpack.c.l.b16 %v4862
          %v5624 = vunpack.c.h.b16 %v4862
          %v5625 = vunpack.c.l.b16 %v4863
          %v5626 = vunpack.c.h.b16 %v4863
          %v5627 = vunpack.c.l.b16 %v4864
          %v5628 = vunpack.c.h.b16 %v4864
          %v5629 = vunpack.c.l.b16 %v4865
          %v5630 = vunpack.c.h.b16 %v4865
          %v5631 = vunpack.c.l.b16 %v4866
          %v5632 = vunpack.c.h.b16 %v4866
          %v5633 = vunpack.c.l.b16 %v4867
          %v5634 = vunpack.c.h.b16 %v4867
          %v5635 = vunpack.c.l.b16 %v4868
          %v5636 = vunpack.c.h.b16 %v4868
          %v5637 = vunpack.c.l.b16 %v4869
          %v5638 = vunpack.c.h.b16 %v4869
          %v5639 = vunpack.c.l.b16 %v4870
          %v5640 = vunpack.c.h.b16 %v4870
          %v5641 = vunpack.c.l.b16 %v4871
          %v5642 = vunpack.c.h.b16 %v4871
          %v5643 = vunpack.c.l.b16 %v4872
          %v5644 = vunpack.c.h.b16 %v4872
          %v5645 = vunpack.c.l.b16 %v4873
          %v5646 = vunpack.c.h.b16 %v4873
          %v5647 = vunpack.c.l.b16 %v4874
          %v5648 = vunpack.c.h.b16 %v4874
          %v5649 = vunpack.c.l.b16 %v4875
          %v5650 = vunpack.c.h.b16 %v4875
          %v5651 = vunpack.c.l.b16 %v4876
          %v5652 = vunpack.c.h.b16 %v4876
          %v5653 = vunpack.c.l.b16 %v4877
          %v5654 = vunpack.c.h.b16 %v4877
          %v5655 = vunpack.c.l.b16 %v4878
          %v5656 = vunpack.c.h.b16 %v4878
          %v5657 = vunpack.c.l.b16 %v4879
          %v5658 = vunpack.c.h.b16 %v4879
          %v5659 = vunpack.c.l.b16 %v4880
          %v5660 = vunpack.c.h.b16 %v4880
          %v5661 = vunpack.c.l.b16 %v4881
          %v5662 = vunpack.c.h.b16 %v4881
          %v5663 = vunpack.c.l.b16 %v4882
          %v5664 = vunpack.c.h.b16 %v4882
          %v5665 = vunpack.c.l.b16 %v4883
          %v5666 = vunpack.c.h.b16 %v4883
          %v5667 = vunpack.c.l.b16 %v4884
          %v5668 = vunpack.c.h.b16 %v4884
          %v5669 = vunpack.c.l.b16 %v4885
          %v5670 = vunpack.c.h.b16 %v4885
          %v5671 = vunpack.c.l.b16 %v4886
          %v5672 = vunpack.c.h.b16 %v4886
          %v5673 = vunpack.c.l.b16 %v4887
          %v5674 = vunpack.c.h.b16 %v4887
          %v5675 = vunpack.c.l.b16 %v4888
          %v5676 = vunpack.c.h.b16 %v4888
          %v5677 = vunpack.c.l.b16 %v4889
          %v5678 = vunpack.c.h.b16 %v4889
          %v5679 = vunpack.c.l.b16 %v4890
          %v5680 = vunpack.c.h.b16 %v4890
          %v5681 = vunpack.c.l.b16 %v4891
          %v5682 = vunpack.c.h.b16 %v4891
          %v5683 = vunpack.c.l.b16 %v4892
          %v5684 = vunpack.c.h.b16 %v4892
          %v5685 = vunpack.c.l.b16 %v4893
          %v5686 = vunpack.c.h.b16 %v4893
          %v5687 = vunpack.c.l.b16 %v4894
          %v5688 = vunpack.c.h.b16 %v4894
          %v5689 = vunpack.c.l.b16 %v4895
          %v5690 = vunpack.c.h.b16 %v4895
          %v5691 = vunpack.c.l.b16 %v4896
          %v5692 = vunpack.c.h.b16 %v4896
          %v5693 = vunpack.c.l.b16 %v4897
          %v5694 = vunpack.c.h.b16 %v4897
          %v5695 = vunpack.c.l.b16 %v4898
          %v5696 = vunpack.c.h.b16 %v4898
          %v5697 = vunpack.c.l.b16 %v4899
          %v5698 = vunpack.c.h.b16 %v4899
          %v5699 = vunpack.c.l.b16 %v4900
          %v5700 = vunpack.c.h.b16 %v4900
          %v5701 = vunpack.c.l.b16 %v4901
          %v5702 = vunpack.c.h.b16 %v4901
          %v5703 = vunpack.c.l.b16 %v4902
          %v5704 = vunpack.c.h.b16 %v4902
          %v5705 = vunpack.c.l.b16 %v4903
          %v5706 = vunpack.c.h.b16 %v4903
          %v5707 = vunpack.c.l.b16 %v4904
          %v5708 = vunpack.c.h.b16 %v4904
          %v5709 = vunpack.c.l.b16 %v4905
          %v5710 = vunpack.c.h.b16 %v4905
          %v5711 = vunpack.c.l.b16 %v4906
          %v5712 = vunpack.c.h.b16 %v4906
          %v5713 = vunpack.c.l.b16 %v4907
          %v5714 = vunpack.c.h.b16 %v4907
          %v5715 = vunpack.c.l.b16 %v4908
          %v5716 = vunpack.c.h.b16 %v4908
          %v5717 = vunpack.c.l.b16 %v4909
          %v5718 = vunpack.c.h.b16 %v4909
          %v5719 = vunpack.c.l.b16 %v4910
          %v5720 = vunpack.c.h.b16 %v4910
          %v5721 = vunpack.c.l.b16 %v4911
          %v5722 = vunpack.c.h.b16 %v4911
          %v5723 = vunpack.c.l.b16 %v4912
          %v5724 = vunpack.c.h.b16 %v4912
          %v5725 = vunpack.c.l.b16 %v4913
          %v5726 = vunpack.c.h.b16 %v4913
          %v5727 = vunpack.c.l.b16 %v4914
          %v5728 = vunpack.c.h.b16 %v4914
          %v5729 = vunpack.c.l.b16 %v4915
          %v5730 = vunpack.c.h.b16 %v4915
          %v5731 = vunpack.c.l.b16 %v4916
          %v5732 = vunpack.c.h.b16 %v4916
          %v5733 = vunpack.c.l.b16 %v4917
          %v5734 = vunpack.c.h.b16 %v4917
          %v5735 = vunpack.c.l.b16 %v4918
          %v5736 = vunpack.c.h.b16 %v4918
          %v5737 = vunpack.c.l.b16 %v4919
          %v5738 = vunpack.c.h.b16 %v4919
          %v5739 = vunpack.c.l.b16 %v4920
          %v5740 = vunpack.c.h.b16 %v4920
          %v5741 = vunpack.c.l.b16 %v4921
          %v5742 = vunpack.c.h.b16 %v4921
          %v5743 = vunpack.c.l.b16 %v4922
          %v5744 = vunpack.c.h.b16 %v4922
          %v5745 = vunpack.c.l.b16 %v4923
          %v5746 = vunpack.c.h.b16 %v4923
          %v5747 = vunpack.c.l.b16 %v4924
          %v5748 = vunpack.c.h.b16 %v4924
          %v5749 = vunpack.c.l.b16 %v4925
          %v5750 = vunpack.c.h.b16 %v4925
          %v5751 = vunpack.c.l.b16 %v4926
          %v5752 = vunpack.c.h.b16 %v4926
          %v5753 = vunpack.c.l.b16 %v4927
          %v5754 = vunpack.c.h.b16 %v4927
          %v5755 = vunpack.c.l.b16 %v4928
          %v5756 = vunpack.c.h.b16 %v4928
          %v5757 = vunpack.c.l.b16 %v4929
          %v5758 = vunpack.c.h.b16 %v4929
          %v5759 = vunpack.c.l.b16 %v4930
          %v5760 = vunpack.c.h.b16 %v4930
          %v5761 = vunpack.c.l.b16 %v4931
          %v5762 = vunpack.c.h.b16 %v4931
          %v5763 = vunpack.c.l.b16 %v4932
          %v5764 = vunpack.c.h.b16 %v4932
          %v5765 = vunpack.c.l.b16 %v4933
          %v5766 = vunpack.c.h.b16 %v4933
          %v5767 = vunpack.c.l.b16 %v4934
          %v5768 = vunpack.c.h.b16 %v4934
          %v5769 = vunpack.c.l.b16 %v4935
          %v5770 = vunpack.c.h.b16 %v4935
          %v5771 = vunpack.c.l.b16 %v4936
          %v5772 = vunpack.c.h.b16 %v4936
          %v5773 = vunpack.c.l.b16 %v4937
          %v5774 = vunpack.c.h.b16 %v4937
          %v5775 = vunpack.c.l.b16 %v4938
          %v5776 = vunpack.c.h.b16 %v4938
          %v5777 = vunpack.c.l.b16 %v4939
          %v5778 = vunpack.c.h.b16 %v4939
          %v5779 = vunpack.c.l.b16 %v4940
          %v5780 = vunpack.c.h.b16 %v4940
          %v5781 = vunpack.c.l.b16 %v4941
          %v5782 = vunpack.c.h.b16 %v4941
          %v5783 = vunpack.c.l.b16 %v4942
          %v5784 = vunpack.c.h.b16 %v4942
          %v5785 = vunpack.c.l.b16 %v4943
          %v5786 = vunpack.c.h.b16 %v4943
          %v5787 = vunpack.c.l.b16 %v4944
          %v5788 = vunpack.c.h.b16 %v4944
          %v5789 = vunpack.c.l.b16 %v4945
          %v5790 = vunpack.c.h.b16 %v4945
          %v5791 = vunpack.c.l.b16 %v4946
          %v5792 = vunpack.c.h.b16 %v4946
          %v5793 = vunpack.c.l.b16 %v4947
          %v5794 = vunpack.c.h.b16 %v4947
          %v5795 = vunpack.c.l.b16 %v4948
          %v5796 = vunpack.c.h.b16 %v4948
          %v5797 = vunpack.c.l.b16 %v4949
          %v5798 = vunpack.c.h.b16 %v4949
          %v5799 = vunpack.c.l.b16 %v4950
          %v5800 = vunpack.c.h.b16 %v4950
          %v5801 = vunpack.c.l.b16 %v4951
          %v5802 = vunpack.c.h.b16 %v4951
          %v5803 = vunpack.c.l.b16 %v4952
          %v5804 = vunpack.c.h.b16 %v4952
          %v5805 = vunpack.c.l.b16 %v4953
          %v5806 = vunpack.c.h.b16 %v4953
          %v5807 = vunpack.c.l.b16 %v4954
          %v5808 = vunpack.c.h.b16 %v4954
          %v5809 = vunpack.c.l.b16 %v4955
          %v5810 = vunpack.c.h.b16 %v4955
          %v5811 = vunpack.c.l.b16 %v4956
          %v5812 = vunpack.c.h.b16 %v4956
          %v5813 = vunpack.c.l.b16 %v4957
          %v5814 = vunpack.c.h.b16 %v4957
          %v5815 = vunpack.c.l.b16 %v4958
          %v5816 = vunpack.c.h.b16 %v4958
          %v5817 = vunpack.c.l.b16 %v4959
          %v5818 = vunpack.c.h.b16 %v4959
          %v5819 = vunpack.c.l.b16 %v4960
          %v5820 = vunpack.c.h.b16 %v4960
          %v5821 = vunpack.c.l.b16 %v4961
          %v5822 = vunpack.c.h.b16 %v4961
          %v5823 = vunpack.c.l.b16 %v4962
          %v5824 = vunpack.c.h.b16 %v4962
          %v5825 = vunpack.c.l.b16 %v4963
          %v5826 = vunpack.c.h.b16 %v4963
          %v5827 = vunpack.c.l.b16 %v4964
          %v5828 = vunpack.c.h.b16 %v4964
          %v5829 = vunpack.c.l.b16 %v4965
          %v5830 = vunpack.c.h.b16 %v4965
          %v5831 = vunpack.c.l.b16 %v4966
          %v5832 = vunpack.c.h.b16 %v4966
          %v5833 = vunpack.c.l.b16 %v4967
          %v5834 = vunpack.c.h.b16 %v4967
          %v5835 = vunpack.c.l.b16 %v4968
          %v5836 = vunpack.c.h.b16 %v4968
          %v5837 = vunpack.c.l.b16 %v4969
          %v5838 = vunpack.c.h.b16 %v4969
          %v5839 = vunpack.c.l.b16 %v4970
          %v5840 = vunpack.c.h.b16 %v4970
          %v5841 = vunpack.c.l.b16 %v4971
          %v5842 = vunpack.c.h.b16 %v4971
          %v5843 = vunpack.c.l.b16 %v4972
          %v5844 = vunpack.c.h.b16 %v4972
          %v5845 = vunpack.c.l.b16 %v4973
          %v5846 = vunpack.c.h.b16 %v4973
          %v5847 = vunpack.c.l.b16 %v4974
          %v5848 = vunpack.c.h.b16 %v4974
          %v5849 = vunpack.c.l.b16 %v4975
          %v5850 = vunpack.c.h.b16 %v4975
          %v5851 = vunpack.c.l.b16 %v4976
          %v5852 = vunpack.c.h.b16 %v4976
          %v5853 = vunpack.c.l.b16 %v4977
          %v5854 = vunpack.c.h.b16 %v4977
          %v5855 = vunpack.c.l.b16 %v4978
          %v5856 = vunpack.c.h.b16 %v4978
          %v5857 = vpack.c.b16 %v5287, %v5281
          %v5858 = vpack.c.b16 %v5288, %v5282
          %v5859 = vpack.c.b16 %v5289, %v5283
          %v5860 = vpack.c.b16 %v5290, %v5284
          %v5861 = vpack.c.b16 %v5291, %v5285
          %v5862 = vpack.c.b16 %v5292, %v5286
          %v5863 = vpack.c.b16 %v5299, %v5293
          %v5864 = vpack.c.b16 %v5300, %v5294
          %v5865 = vpack.c.b16 %v5301, %v5295
          %v5866 = vpack.c.b16 %v5302, %v5296
          %v5867 = vpack.c.b16 %v5303, %v5297
          %v5868 = vpack.c.b16 %v5304, %v5298
          %v5869 = vpack.c.b16 %v5311, %v5305
          %v5870 = vpack.c.b16 %v5312, %v5306
          %v5871 = vpack.c.b16 %v5313, %v5307
          %v5872 = vpack.c.b16 %v5314, %v5308
          %v5873 = vpack.c.b16 %v5315, %v5309
          %v5874 = vpack.c.b16 %v5316, %v5310
          %v5875 = vpack.c.b16 %v5323, %v5317
          %v5876 = vpack.c.b16 %v5324, %v5318
          %v5877 = vpack.c.b16 %v5325, %v5319
          %v5878 = vpack.c.b16 %v5326, %v5320
          %v5879 = vpack.c.b16 %v5327, %v5321
          %v5880 = vpack.c.b16 %v5328, %v5322
          %v5881 = vpack.c.b16 %v5335, %v5329
          %v5882 = vpack.c.b16 %v5336, %v5330
          %v5883 = vpack.c.b16 %v5337, %v5331
          %v5884 = vpack.c.b16 %v5338, %v5332
          %v5885 = vpack.c.b16 %v5339, %v5333
          %v5886 = vpack.c.b16 %v5340, %v5334
          %v5887 = vpack.c.b16 %v5347, %v5341
          %v5888 = vpack.c.b16 %v5348, %v5342
          %v5889 = vpack.c.b16 %v5349, %v5343
          %v5890 = vpack.c.b16 %v5350, %v5344
          %v5891 = vpack.c.b16 %v5351, %v5345
          %v5892 = vpack.c.b16 %v5352, %v5346
          %v5893 = vpack.c.b16 %v5359, %v5353
          %v5894 = vpack.c.b16 %v5360, %v5354
          %v5895 = vpack.c.b16 %v5361, %v5355
          %v5896 = vpack.c.b16 %v5362, %v5356
          %v5897 = vpack.c.b16 %v5363, %v5357
          %v5898 = vpack.c.b16 %v5364, %v5358
          %v5899 = vpack.c.b16 %v5371, %v5365
          %v5900 = vpack.c.b16 %v5372, %v5366
          %v5901 = vpack.c.b16 %v5373, %v5367
          %v5902 = vpack.c.b16 %v5374, %v5368
          %v5903 = vpack.c.b16 %v5375, %v5369
          %v5904 = vpack.c.b16 %v5376, %v5370
          %v5905 = vpack.c.b16 %v5383, %v5377
          %v5906 = vpack.c.b16 %v5384, %v5378
          %v5907 = vpack.c.b16 %v5385, %v5379
          %v5908 = vpack.c.b16 %v5386, %v5380
          %v5909 = vpack.c.b16 %v5387, %v5381
          %v5910 = vpack.c.b16 %v5388, %v5382
          %v5911 = vpack.c.b16 %v5395, %v5389
          %v5912 = vpack.c.b16 %v5396, %v5390
          %v5913 = vpack.c.b16 %v5397, %v5391
          %v5914 = vpack.c.b16 %v5398, %v5392
          %v5915 = vpack.c.b16 %v5399, %v5393
          %v5916 = vpack.c.b16 %v5400, %v5394
          %v5917 = vpack.c.b16 %v5407, %v5401
          %v5918 = vpack.c.b16 %v5408, %v5402
          %v5919 = vpack.c.b16 %v5409, %v5403
          %v5920 = vpack.c.b16 %v5410, %v5404
          %v5921 = vpack.c.b16 %v5411, %v5405
          %v5922 = vpack.c.b16 %v5412, %v5406
          %v5923 = vpack.c.b16 %v5419, %v5413
          %v5924 = vpack.c.b16 %v5420, %v5414
          %v5925 = vpack.c.b16 %v5421, %v5415
          %v5926 = vpack.c.b16 %v5422, %v5416
          %v5927 = vpack.c.b16 %v5423, %v5417
          %v5928 = vpack.c.b16 %v5424, %v5418
          %v5929 = vpack.c.b16 %v5431, %v5425
          %v5930 = vpack.c.b16 %v5432, %v5426
          %v5931 = vpack.c.b16 %v5433, %v5427
          %v5932 = vpack.c.b16 %v5434, %v5428
          %v5933 = vpack.c.b16 %v5435, %v5429
          %v5934 = vpack.c.b16 %v5436, %v5430
          %v5935 = vpack.c.b16 %v5443, %v5437
          %v5936 = vpack.c.b16 %v5444, %v5438
          %v5937 = vpack.c.b16 %v5445, %v5439
          %v5938 = vpack.c.b16 %v5446, %v5440
          %v5939 = vpack.c.b16 %v5447, %v5441
          %v5940 = vpack.c.b16 %v5448, %v5442
          %v5941 = vpack.c.b16 %v5455, %v5449
          %v5942 = vpack.c.b16 %v5456, %v5450
          %v5943 = vpack.c.b16 %v5457, %v5451
          %v5944 = vpack.c.b16 %v5458, %v5452
          %v5945 = vpack.c.b16 %v5459, %v5453
          %v5946 = vpack.c.b16 %v5460, %v5454
          %v5947 = vpack.c.b16 %v5467, %v5461
          %v5948 = vpack.c.b16 %v5468, %v5462
          %v5949 = vpack.c.b16 %v5469, %v5463
          %v5950 = vpack.c.b16 %v5470, %v5464
          %v5951 = vpack.c.b16 %v5471, %v5465
          %v5952 = vpack.c.b16 %v5472, %v5466
          %v5953 = vpack.c.b16 %v5479, %v5473
          %v5954 = vpack.c.b16 %v5480, %v5474
          %v5955 = vpack.c.b16 %v5481, %v5475
          %v5956 = vpack.c.b16 %v5482, %v5476
          %v5957 = vpack.c.b16 %v5483, %v5477
          %v5958 = vpack.c.b16 %v5484, %v5478
          %v5959 = vpack.c.b16 %v5491, %v5485
          %v5960 = vpack.c.b16 %v5492, %v5486
          %v5961 = vpack.c.b16 %v5493, %v5487
          %v5962 = vpack.c.b16 %v5494, %v5488
          %v5963 = vpack.c.b16 %v5495, %v5489
          %v5964 = vpack.c.b16 %v5496, %v5490
          %v5965 = vpack.c.b16 %v5503, %v5497
          %v5966 = vpack.c.b16 %v5504, %v5498
          %v5967 = vpack.c.b16 %v5505, %v5499
          %v5968 = vpack.c.b16 %v5506, %v5500
          %v5969 = vpack.c.b16 %v5507, %v5501
          %v5970 = vpack.c.b16 %v5508, %v5502
          %v5971 = vpack.c.b16 %v5515, %v5509
          %v5972 = vpack.c.b16 %v5516, %v5510
          %v5973 = vpack.c.b16 %v5517, %v5511
          %v5974 = vpack.c.b16 %v5518, %v5512
          %v5975 = vpack.c.b16 %v5519, %v5513
          %v5976 = vpack.c.b16 %v5520, %v5514
          %v5977 = vpack.c.b16 %v5527, %v5521
          %v5978 = vpack.c.b16 %v5528, %v5522
          %v5979 = vpack.c.b16 %v5529, %v5523
          %v5980 = vpack.c.b16 %v5530, %v5524
          %v5981 = vpack.c.b16 %v5531, %v5525
          %v5982 = vpack.c.b16 %v5532, %v5526
          %v5983 = vpack.c.b16 %v5539, %v5533
          %v5984 = vpack.c.b16 %v5540, %v5534
          %v5985 = vpack.c.b16 %v5541, %v5535
          %v5986 = vpack.c.b16 %v5542, %v5536
          %v5987 = vpack.c.b16 %v5543, %v5537
          %v5988 = vpack.c.b16 %v5544, %v5538
          %v5989 = vpack.c.b16 %v5551, %v5545
          %v5990 = vpack.c.b16 %v5552, %v5546
          %v5991 = vpack.c.b16 %v5553, %v5547
          %v5992 = vpack.c.b16 %v5554, %v5548
          %v5993 = vpack.c.b16 %v5555, %v5549
          %v5994 = vpack.c.b16 %v5556, %v5550
          %v5995 = vpack.c.b16 %v5563, %v5557
          %v5996 = vpack.c.b16 %v5564, %v5558
          %v5997 = vpack.c.b16 %v5565, %v5559
          %v5998 = vpack.c.b16 %v5566, %v5560
          %v5999 = vpack.c.b16 %v5567, %v5561
          %v6000 = vpack.c.b16 %v5568, %v5562
          %v6001 = vpack.c.b16 %v5575, %v5569
          %v6002 = vpack.c.b16 %v5576, %v5570
          %v6003 = vpack.c.b16 %v5577, %v5571
          %v6004 = vpack.c.b16 %v5578, %v5572
          %v6005 = vpack.c.b16 %v5579, %v5573
          %v6006 = vpack.c.b16 %v5580, %v5574
          %v6007 = vpack.c.b16 %v5587, %v5581
          %v6008 = vpack.c.b16 %v5588, %v5582
          %v6009 = vpack.c.b16 %v5589, %v5583
          %v6010 = vpack.c.b16 %v5590, %v5584
          %v6011 = vpack.c.b16 %v5591, %v5585
          %v6012 = vpack.c.b16 %v5592, %v5586
          %v6013 = vpack.c.b16 %v5599, %v5593
          %v6014 = vpack.c.b16 %v5600, %v5594
          %v6015 = vpack.c.b16 %v5601, %v5595
          %v6016 = vpack.c.b16 %v5602, %v5596
          %v6017 = vpack.c.b16 %v5603, %v5597
          %v6018 = vpack.c.b16 %v5604, %v5598
          %v6019 = vpack.c.b16 %v5611, %v5605
          %v6020 = vpack.c.b16 %v5612, %v5606
          %v6021 = vpack.c.b16 %v5613, %v5607
          %v6022 = vpack.c.b16 %v5614, %v5608
          %v6023 = vpack.c.b16 %v5615, %v5609
          %v6024 = vpack.c.b16 %v5616, %v5610
          %v6025 = vpack.c.b16 %v5623, %v5617
          %v6026 = vpack.c.b16 %v5624, %v5618
          %v6027 = vpack.c.b16 %v5625, %v5619
          %v6028 = vpack.c.b16 %v5626, %v5620
          %v6029 = vpack.c.b16 %v5627, %v5621
          %v6030 = vpack.c.b16 %v5628, %v5622
          %v6031 = vpack.c.b16 %v5635, %v5629
          %v6032 = vpack.c.b16 %v5636, %v5630
          %v6033 = vpack.c.b16 %v5637, %v5631
          %v6034 = vpack.c.b16 %v5638, %v5632
          %v6035 = vpack.c.b16 %v5639, %v5633
          %v6036 = vpack.c.b16 %v5640, %v5634
          %v6037 = vpack.c.b16 %v5647, %v5641
          %v6038 = vpack.c.b16 %v5648, %v5642
          %v6039 = vpack.c.b16 %v5649, %v5643
          %v6040 = vpack.c.b16 %v5650, %v5644
          %v6041 = vpack.c.b16 %v5651, %v5645
          %v6042 = vpack.c.b16 %v5652, %v5646
          %v6043 = vpack.c.b16 %v5659, %v5653
          %v6044 = vpack.c.b16 %v5660, %v5654
          %v6045 = vpack.c.b16 %v5661, %v5655
          %v6046 = vpack.c.b16 %v5662, %v5656
          %v6047 = vpack.c.b16 %v5663, %v5657
          %v6048 = vpack.c.b16 %v5664, %v5658
          %v6049 = vpack.c.b16 %v5671, %v5665
          %v6050 = vpack.c.b16 %v5672, %v5666
          %v6051 = vpack.c.b16 %v5673, %v5667
          %v6052 = vpack.c.b16 %v5674, %v5668
          %v6053 = vpack.c.b16 %v5675, %v5669
          %v6054 = vpack.c.b16 %v5676, %v5670
          %v6055 = vpack.c.b16 %v5683, %v5677
          %v6056 = vpack.c.b16 %v5684, %v5678
          %v6057 = vpack.c.b16 %v5685, %v5679
          %v6058 = vpack.c.b16 %v5686, %v5680
          %v6059 = vpack.c.b16 %v5687, %v5681
          %v6060 = vpack.c.b16 %v5688, %v5682
          %v6061 = vpack.c.b16 %v5695, %v5689
          %v6062 = vpack.c.b16 %v5696, %v5690
          %v6063 = vpack.c.b16 %v5697, %v5691
          %v6064 = vpack.c.b16 %v5698, %v5692
          %v6065 = vpack.c.b16 %v5699, %v5693
          %v6066 = vpack.c.b16 %v5700, %v5694
          %v6067 = vpack.c.b16 %v5707, %v5701
          %v6068 = vpack.c.b16 %v5708, %v5702
          %v6069 = vpack.c.b16 %v5709, %v5703
          %v6070 = vpack.c.b16 %v5710, %v5704
          %v6071 = vpack.c.b16 %v5711, %v5705
          %v6072 = vpack.c.b16 %v5712, %v5706
          %v6073 = vpack.c.b16 %v5719, %v5713
          %v6074 = vpack.c.b16 %v5720, %v5714
          %v6075 = vpack.c.b16 %v5721, %v5715
          %v6076 = vpack.c.b16 %v5722, %v5716
          %v6077 = vpack.c.b16 %v5723, %v5717
          %v6078 = vpack.c.b16 %v5724, %v5718
          %v6079 = vpack.c.b16 %v5731, %v5725
          %v6080 = vpack.c.b16 %v5732, %v5726
          %v6081 = vpack.c.b16 %v5733, %v5727
          %v6082 = vpack.c.b16 %v5734, %v5728
          %v6083 = vpack.c.b16 %v5735, %v5729
          %v6084 = vpack.c.b16 %v5736, %v5730
          %v6085 = vpack.c.b16 %v5743, %v5737
          %v6086 = vpack.c.b16 %v5744, %v5738
          %v6087 = vpack.c.b16 %v5745, %v5739
          %v6088 = vpack.c.b16 %v5746, %v5740
          %v6089 = vpack.c.b16 %v5747, %v5741
          %v6090 = vpack.c.b16 %v5748, %v5742
          %v6091 = vpack.c.b16 %v5755, %v5749
          %v6092 = vpack.c.b16 %v5756, %v5750
          %v6093 = vpack.c.b16 %v5757, %v5751
          %v6094 = vpack.c.b16 %v5758, %v5752
          %v6095 = vpack.c.b16 %v5759, %v5753
          %v6096 = vpack.c.b16 %v5760, %v5754
          %v6097 = vpack.c.b16 %v5767, %v5761
          %v6098 = vpack.c.b16 %v5768, %v5762
          %v6099 = vpack.c.b16 %v5769, %v5763
          %v6100 = vpack.c.b16 %v5770, %v5764
          %v6101 = vpack.c.b16 %v5771, %v5765
          %v6102 = vpack.c.b16 %v5772, %v5766
          %v6103 = vpack.c.b16 %v5779, %v5773
          %v6104 = vpack.c.b16 %v5780, %v5774
          %v6105 = vpack.c.b16 %v5781, %v5775
          %v6106 = vpack.c.b16 %v5782, %v5776
          %v6107 = vpack.c.b16 %v5783, %v5777
          %v6108 = vpack.c.b16 %v5784, %v5778
          %v6109 = vpack.c.b16 %v5791, %v5785
          %v6110 = vpack.c.b16 %v5792, %v5786
          %v6111 = vpack.c.b16 %v5793, %v5787
          %v6112 = vpack.c.b16 %v5794, %v5788
          %v6113 = vpack.c.b16 %v5795, %v5789
          %v6114 = vpack.c.b16 %v5796, %v5790
          %v6115 = vpack.c.b16 %v5803, %v5797
          %v6116 = vpack.c.b16 %v5804, %v5798
          %v6117 = vpack.c.b16 %v5805, %v5799
          %v6118 = vpack.c.b16 %v5806, %v5800
          %v6119 = vpack.c.b16 %v5807, %v5801
          %v6120 = vpack.c.b16 %v5808, %v5802
          %v6121 = vpack.c.b16 %v5815, %v5809
          %v6122 = vpack.c.b16 %v5816, %v5810
          %v6123 = vpack.c.b16 %v5817, %v5811
          %v6124 = vpack.c.b16 %v5818, %v5812
          %v6125 = vpack.c.b16 %v5819, %v5813
          %v6126 = vpack.c.b16 %v5820, %v5814
          %v6127 = vpack.c.b16 %v5827, %v5821
          %v6128 = vpack.c.b16 %v5828, %v5822
          %v6129 = vpack.c.b16 %v5829, %v5823
          %v6130 = vpack.c.b16 %v5830, %v5824
          %v6131 = vpack.c.b16 %v5831, %v5825
          %v6132 = vpack.c.b16 %v5832, %v5826
          %v6133 = vpack.c.b16 %v5839, %v5833
          %v6134 = vpack.c.b16 %v5840, %v5834
          %v6135 = vpack.c.b16 %v5841, %v5835
          %v6136 = vpack.c.b16 %v5842, %v5836
          %v6137 = vpack.c.b16 %v5843, %v5837
          %v6138 = vpack.c.b16 %v5844, %v5838
          %v6139 = vpack.c.b16 %v5851, %v5845
          %v6140 = vpack.c.b16 %v5852, %v5846
          %v6141 = vpack.c.b16 %v5853, %v5847
          %v6142 = vpack.c.b16 %v5854, %v5848
          %v6143 = vpack.c.b16 %v5855, %v5849
          %v6144 = vpack.c.b16 %v5856, %v5850
          %6433 = vmatpush.bf16.msra.mxu0 %v5899
          %6434 = vmatpush.bf16.msra.mxu0 %v5893
          %6435 = vmatpush.bf16.msra.mxu0 %v5887
          %6436 = vmatpush.bf16.msra.mxu0 %v5881
          %6437 = vmatpush.bf16.msra.mxu0 %v5875
          %6438 = vmatpush.bf16.msra.mxu0 %v5869
          %6439 = vmatpush.bf16.msra.mxu0 %v5863
          %6440 = vmatpush.bf16.msra.mxu0 %v5857
          %6441 = vmatmul.bf16.gmra.mxu0 %v4685
          %v6442 = vpop.f32.mrf.mxu0
          %v6443 = vadd.f32 %v4981, %v6442
          %v6444 = vpop.f32.mrf.mxu0
          %v6445 = vadd.f32 %v4981, %v6444
          %6446 = vdwg.mxu0
          %6447 = vmatpush.bf16.msra.mxu0 %v5947
          %6448 = vmatpush.bf16.msra.mxu0 %v5941
          %6449 = vmatpush.bf16.msra.mxu0 %v5935
          %6450 = vmatpush.bf16.msra.mxu0 %v5929
          %6451 = vmatpush.bf16.msra.mxu0 %v5923
          %6452 = vmatpush.bf16.msra.mxu0 %v5917
          %6453 = vmatpush.bf16.msra.mxu0 %v5911
          %6454 = vmatpush.bf16.msra.mxu0 %v5905
          %6455 = vmatmul.bf16.gmra.mxu0 %v4686
          %v6456 = vpop.f32.mrf.mxu0
          %v6457 = vadd.f32 %v6443, %v6456
          %v6458 = vpop.f32.mrf.mxu0
          %v6459 = vadd.f32 %v6445, %v6458
          %6460 = vdwg.mxu0
          %6461 = vmatpush.bf16.msra.mxu0 %v5995
          %6462 = vmatpush.bf16.msra.mxu0 %v5989
          %6463 = vmatpush.bf16.msra.mxu0 %v5983
          %6464 = vmatpush.bf16.msra.mxu0 %v5977
          %6465 = vmatpush.bf16.msra.mxu0 %v5971
          %6466 = vmatpush.bf16.msra.mxu0 %v5965
          %6467 = vmatpush.bf16.msra.mxu0 %v5959
          %6468 = vmatpush.bf16.msra.mxu0 %v5953
          %6469 = vmatmul.bf16.gmra.mxu0 %v4687
          %v6470 = vpop.f32.mrf.mxu0
          %v6471 = vadd.f32 %v6457, %v6470
          %v6472 = vpop.f32.mrf.mxu0
          %v6473 = vadd.f32 %v6459, %v6472
          %6474 = vdwg.mxu0
          %6475 = vmatpush.bf16.msra.mxu0 %v6043
          %6476 = vmatpush.bf16.msra.mxu0 %v6037
          %6477 = vmatpush.bf16.msra.mxu0 %v6031
          %6478 = vmatpush.bf16.msra.mxu0 %v6025
          %6479 = vmatpush.bf16.msra.mxu0 %v6019
          %6480 = vmatpush.bf16.msra.mxu0 %v6013
          %6481 = vmatpush.bf16.msra.mxu0 %v6007
          %6482 = vmatpush.bf16.msra.mxu0 %v6001
          %6483 = vmatmul.bf16.gmra.mxu0 %v4688
          %v6484 = vpop.f32.mrf.mxu0
          %v6485 = vadd.f32 %v6471, %v6484
          %v6486 = vpop.f32.mrf.mxu0
          %v6487 = vadd.f32 %v6473, %v6486
          %6488 = vdwg.mxu0
          %6489 = vmatpush.bf16.msra.mxu0 %v6091
          %6490 = vmatpush.bf16.msra.mxu0 %v6085
          %6491 = vmatpush.bf16.msra.mxu0 %v6079
          %6492 = vmatpush.bf16.msra.mxu0 %v6073
          %6493 = vmatpush.bf16.msra.mxu0 %v6067
          %6494 = vmatpush.bf16.msra.mxu0 %v6061
          %6495 = vmatpush.bf16.msra.mxu0 %v6055
          %6496 = vmatpush.bf16.msra.mxu0 %v6049
          %6497 = vmatmul.bf16.gmra.mxu0 %v4689
          %v6498 = vpop.f32.mrf.mxu0
          %v6499 = vadd.f32 %v6485, %v6498
          %v6500 = vpop.f32.mrf.mxu0
          %v6501 = vadd.f32 %v6487, %v6500
          %6502 = vdwg.mxu0
          %6503 = vmatpush.bf16.msra.mxu0 %v6139
          %6504 = vmatpush.bf16.msra.mxu0 %v6133
          %6505 = vmatpush.bf16.msra.mxu0 %v6127
          %6506 = vmatpush.bf16.msra.mxu0 %v6121
          %6507 = vmatpush.bf16.msra.mxu0 %v6115
          %6508 = vmatpush.bf16.msra.mxu0 %v6109
          %6509 = vmatpush.bf16.msra.mxu0 %v6103
          %6510 = vmatpush.bf16.msra.mxu0 %v6097
          %6511 = vmatmul.bf16.gmra.mxu0 %v4690
          %v6512 = vpop.f32.mrf.mxu0
          %v6513 = vadd.f32 %v6499, %v6512
          %v6514 = vpop.f32.mrf.mxu0
          %v6515 = vadd.f32 %v6501, %v6514
          %6516 = vdwg.mxu0
          %6517 = vmatpush.bf16.msra.mxu0 %v5900
          %6518 = vmatpush.bf16.msra.mxu0 %v5894
          %6519 = vmatpush.bf16.msra.mxu0 %v5888
          %6520 = vmatpush.bf16.msra.mxu0 %v5882
          %6521 = vmatpush.bf16.msra.mxu0 %v5876
          %6522 = vmatpush.bf16.msra.mxu0 %v5870
          %6523 = vmatpush.bf16.msra.mxu0 %v5864
          %6524 = vmatpush.bf16.msra.mxu0 %v5858
          %6525 = vmatmul.bf16.gmra.mxu0 %v4685
          %v6526 = vpop.f32.mrf.mxu0
          %v6527 = vadd.f32 %v4982, %v6526
          %v6528 = vpop.f32.mrf.mxu0
          %v6529 = vadd.f32 %v4982, %v6528
          %6530 = vdwg.mxu0
          %6531 = vmatpush.bf16.msra.mxu0 %v5948
          %6532 = vmatpush.bf16.msra.mxu0 %v5942
          %6533 = vmatpush.bf16.msra.mxu0 %v5936
          %6534 = vmatpush.bf16.msra.mxu0 %v5930
          %6535 = vmatpush.bf16.msra.mxu0 %v5924
          %6536 = vmatpush.bf16.msra.mxu0 %v5918
          %6537 = vmatpush.bf16.msra.mxu0 %v5912
          %6538 = vmatpush.bf16.msra.mxu0 %v5906
          %6539 = vmatmul.bf16.gmra.mxu0 %v4686
          %v6540 = vpop.f32.mrf.mxu0
          %v6541 = vadd.f32 %v6527, %v6540
          %v6542 = vpop.f32.mrf.mxu0
          %v6543 = vadd.f32 %v6529, %v6542
          %6544 = vdwg.mxu0
          %6545 = vmatpush.bf16.msra.mxu0 %v5996
          %6546 = vmatpush.bf16.msra.mxu0 %v5990
          %6547 = vmatpush.bf16.msra.mxu0 %v5984
          %6548 = vmatpush.bf16.msra.mxu0 %v5978
          %6549 = vmatpush.bf16.msra.mxu0 %v5972
          %6550 = vmatpush.bf16.msra.mxu0 %v5966
          %6551 = vmatpush.bf16.msra.mxu0 %v5960
          %6552 = vmatpush.bf16.msra.mxu0 %v5954
          %6553 = vmatmul.bf16.gmra.mxu0 %v4687
          %v6554 = vpop.f32.mrf.mxu0
          %v6555 = vadd.f32 %v6541, %v6554
          %v6556 = vpop.f32.mrf.mxu0
          %v6557 = vadd.f32 %v6543, %v6556
          %6558 = vdwg.mxu0
          %6559 = vmatpush.bf16.msra.mxu0 %v6044
          %6560 = vmatpush.bf16.msra.mxu0 %v6038
          %6561 = vmatpush.bf16.msra.mxu0 %v6032
          %6562 = vmatpush.bf16.msra.mxu0 %v6026
          %6563 = vmatpush.bf16.msra.mxu0 %v6020
          %6564 = vmatpush.bf16.msra.mxu0 %v6014
          %6565 = vmatpush.bf16.msra.mxu0 %v6008
          %6566 = vmatpush.bf16.msra.mxu0 %v6002
          %6567 = vmatmul.bf16.gmra.mxu0 %v4688
          %v6568 = vpop.f32.mrf.mxu0
          %v6569 = vadd.f32 %v6555, %v6568
          %v6570 = vpop.f32.mrf.mxu0
          %v6571 = vadd.f32 %v6557, %v6570
          %6572 = vdwg.mxu0
          %6573 = vmatpush.bf16.msra.mxu0 %v6092
          %6574 = vmatpush.bf16.msra.mxu0 %v6086
          %6575 = vmatpush.bf16.msra.mxu0 %v6080
          %6576 = vmatpush.bf16.msra.mxu0 %v6074
          %6577 = vmatpush.bf16.msra.mxu0 %v6068
          %6578 = vmatpush.bf16.msra.mxu0 %v6062
          %6579 = vmatpush.bf16.msra.mxu0 %v6056
          %6580 = vmatpush.bf16.msra.mxu0 %v6050
          %6581 = vmatmul.bf16.gmra.mxu0 %v4689
          %v6582 = vpop.f32.mrf.mxu0
          %v6583 = vadd.f32 %v6569, %v6582
          %v6584 = vpop.f32.mrf.mxu0
          %v6585 = vadd.f32 %v6571, %v6584
          %6586 = vdwg.mxu0
          %6587 = vmatpush.bf16.msra.mxu0 %v6140
          %6588 = vmatpush.bf16.msra.mxu0 %v6134
          %6589 = vmatpush.bf16.msra.mxu0 %v6128
          %6590 = vmatpush.bf16.msra.mxu0 %v6122
          %6591 = vmatpush.bf16.msra.mxu0 %v6116
          %6592 = vmatpush.bf16.msra.mxu0 %v6110
          %6593 = vmatpush.bf16.msra.mxu0 %v6104
          %6594 = vmatpush.bf16.msra.mxu0 %v6098
          %6595 = vmatmul.bf16.gmra.mxu0 %v4690
          %v6596 = vpop.f32.mrf.mxu0
          %v6597 = vadd.f32 %v6583, %v6596
          %v6598 = vpop.f32.mrf.mxu0
          %v6599 = vadd.f32 %v6585, %v6598
          %6600 = vdwg.mxu0
          %6601 = vmatpush.bf16.msra.mxu0 %v5901
          %6602 = vmatpush.bf16.msra.mxu0 %v5895
          %6603 = vmatpush.bf16.msra.mxu0 %v5889
          %6604 = vmatpush.bf16.msra.mxu0 %v5883
          %6605 = vmatpush.bf16.msra.mxu0 %v5877
          %6606 = vmatpush.bf16.msra.mxu0 %v5871
          %6607 = vmatpush.bf16.msra.mxu0 %v5865
          %6608 = vmatpush.bf16.msra.mxu0 %v5859
          %6609 = vmatmul.bf16.gmra.mxu0 %v4685
          %v6610 = vpop.f32.mrf.mxu0
          %v6611 = vadd.f32 %v4983, %v6610
          %v6612 = vpop.f32.mrf.mxu0
          %v6613 = vadd.f32 %v4983, %v6612
          %6614 = vdwg.mxu0
          %6615 = vmatpush.bf16.msra.mxu0 %v5949
          %6616 = vmatpush.bf16.msra.mxu0 %v5943
          %6617 = vmatpush.bf16.msra.mxu0 %v5937
          %6618 = vmatpush.bf16.msra.mxu0 %v5931
          %6619 = vmatpush.bf16.msra.mxu0 %v5925
          %6620 = vmatpush.bf16.msra.mxu0 %v5919
          %6621 = vmatpush.bf16.msra.mxu0 %v5913
          %6622 = vmatpush.bf16.msra.mxu0 %v5907
          %6623 = vmatmul.bf16.gmra.mxu0 %v4686
          %v6624 = vpop.f32.mrf.mxu0
          %v6625 = vadd.f32 %v6611, %v6624
          %v6626 = vpop.f32.mrf.mxu0
          %v6627 = vadd.f32 %v6613, %v6626
          %6628 = vdwg.mxu0
          %6629 = vmatpush.bf16.msra.mxu0 %v5997
          %6630 = vmatpush.bf16.msra.mxu0 %v5991
          %6631 = vmatpush.bf16.msra.mxu0 %v5985
          %6632 = vmatpush.bf16.msra.mxu0 %v5979
          %6633 = vmatpush.bf16.msra.mxu0 %v5973
          %6634 = vmatpush.bf16.msra.mxu0 %v5967
          %6635 = vmatpush.bf16.msra.mxu0 %v5961
          %6636 = vmatpush.bf16.msra.mxu0 %v5955
          %6637 = vmatmul.bf16.gmra.mxu0 %v4687
          %v6638 = vpop.f32.mrf.mxu0
          %v6639 = vadd.f32 %v6625, %v6638
          %v6640 = vpop.f32.mrf.mxu0
          %v6641 = vadd.f32 %v6627, %v6640
          %6642 = vdwg.mxu0
          %6643 = vmatpush.bf16.msra.mxu0 %v6045
          %6644 = vmatpush.bf16.msra.mxu0 %v6039
          %6645 = vmatpush.bf16.msra.mxu0 %v6033
          %6646 = vmatpush.bf16.msra.mxu0 %v6027
          %6647 = vmatpush.bf16.msra.mxu0 %v6021
          %6648 = vmatpush.bf16.msra.mxu0 %v6015
          %6649 = vmatpush.bf16.msra.mxu0 %v6009
          %6650 = vmatpush.bf16.msra.mxu0 %v6003
          %6651 = vmatmul.bf16.gmra.mxu0 %v4688
          %v6652 = vpop.f32.mrf.mxu0
          %v6653 = vadd.f32 %v6639, %v6652
          %v6654 = vpop.f32.mrf.mxu0
          %v6655 = vadd.f32 %v6641, %v6654
          %6656 = vdwg.mxu0
          %6657 = vmatpush.bf16.msra.mxu0 %v6093
          %6658 = vmatpush.bf16.msra.mxu0 %v6087
          %6659 = vmatpush.bf16.msra.mxu0 %v6081
          %6660 = vmatpush.bf16.msra.mxu0 %v6075
          %6661 = vmatpush.bf16.msra.mxu0 %v6069
          %6662 = vmatpush.bf16.msra.mxu0 %v6063
          %6663 = vmatpush.bf16.msra.mxu0 %v6057
          %6664 = vmatpush.bf16.msra.mxu0 %v6051
          %6665 = vmatmul.bf16.gmra.mxu0 %v4689
          %v6666 = vpop.f32.mrf.mxu0
          %v6667 = vadd.f32 %v6653, %v6666
          %v6668 = vpop.f32.mrf.mxu0
          %v6669 = vadd.f32 %v6655, %v6668
          %6670 = vdwg.mxu0
          %6671 = vmatpush.bf16.msra.mxu0 %v6141
          %6672 = vmatpush.bf16.msra.mxu0 %v6135
          %6673 = vmatpush.bf16.msra.mxu0 %v6129
          %6674 = vmatpush.bf16.msra.mxu0 %v6123
          %6675 = vmatpush.bf16.msra.mxu0 %v6117
          %6676 = vmatpush.bf16.msra.mxu0 %v6111
          %6677 = vmatpush.bf16.msra.mxu0 %v6105
          %6678 = vmatpush.bf16.msra.mxu0 %v6099
          %6679 = vmatmul.bf16.gmra.mxu0 %v4690
          %v6680 = vpop.f32.mrf.mxu0
          %v6681 = vadd.f32 %v6667, %v6680
          %v6682 = vpop.f32.mrf.mxu0
          %v6683 = vadd.f32 %v6669, %v6682
          %6684 = vdwg.mxu0
          %6685 = vmatpush.bf16.msra.mxu0 %v5902
          %6686 = vmatpush.bf16.msra.mxu0 %v5896
          %6687 = vmatpush.bf16.msra.mxu0 %v5890
          %6688 = vmatpush.bf16.msra.mxu0 %v5884
          %6689 = vmatpush.bf16.msra.mxu0 %v5878
          %6690 = vmatpush.bf16.msra.mxu0 %v5872
          %6691 = vmatpush.bf16.msra.mxu0 %v5866
          %6692 = vmatpush.bf16.msra.mxu0 %v5860
          %6693 = vmatmul.bf16.gmra.mxu0 %v4685
          %v6694 = vpop.f32.mrf.mxu0
          %v6695 = vadd.f32 %v4984, %v6694
          %v6696 = vpop.f32.mrf.mxu0
          %v6697 = vadd.f32 %v4984, %v6696
          %6698 = vdwg.mxu0
          %6699 = vmatpush.bf16.msra.mxu0 %v5950
          %6700 = vmatpush.bf16.msra.mxu0 %v5944
          %6701 = vmatpush.bf16.msra.mxu0 %v5938
          %6702 = vmatpush.bf16.msra.mxu0 %v5932
          %6703 = vmatpush.bf16.msra.mxu0 %v5926
          %6704 = vmatpush.bf16.msra.mxu0 %v5920
          %6705 = vmatpush.bf16.msra.mxu0 %v5914
          %6706 = vmatpush.bf16.msra.mxu0 %v5908
          %6707 = vmatmul.bf16.gmra.mxu0 %v4686
          %v6708 = vpop.f32.mrf.mxu0
          %v6709 = vadd.f32 %v6695, %v6708
          %v6710 = vpop.f32.mrf.mxu0
          %v6711 = vadd.f32 %v6697, %v6710
          %6712 = vdwg.mxu0
          %6713 = vmatpush.bf16.msra.mxu0 %v5998
          %6714 = vmatpush.bf16.msra.mxu0 %v5992
          %6715 = vmatpush.bf16.msra.mxu0 %v5986
          %6716 = vmatpush.bf16.msra.mxu0 %v5980
          %6717 = vmatpush.bf16.msra.mxu0 %v5974
          %6718 = vmatpush.bf16.msra.mxu0 %v5968
          %6719 = vmatpush.bf16.msra.mxu0 %v5962
          %6720 = vmatpush.bf16.msra.mxu0 %v5956
          %6721 = vmatmul.bf16.gmra.mxu0 %v4687
          %v6722 = vpop.f32.mrf.mxu0
          %v6723 = vadd.f32 %v6709, %v6722
          %v6724 = vpop.f32.mrf.mxu0
          %v6725 = vadd.f32 %v6711, %v6724
          %6726 = vdwg.mxu0
          %6727 = vmatpush.bf16.msra.mxu0 %v6046
          %6728 = vmatpush.bf16.msra.mxu0 %v6040
          %6729 = vmatpush.bf16.msra.mxu0 %v6034
          %6730 = vmatpush.bf16.msra.mxu0 %v6028
          %6731 = vmatpush.bf16.msra.mxu0 %v6022
          %6732 = vmatpush.bf16.msra.mxu0 %v6016
          %6733 = vmatpush.bf16.msra.mxu0 %v6010
          %6734 = vmatpush.bf16.msra.mxu0 %v6004
          %6735 = vmatmul.bf16.gmra.mxu0 %v4688
          %v6736 = vpop.f32.mrf.mxu0
          %v6737 = vadd.f32 %v6723, %v6736
          %v6738 = vpop.f32.mrf.mxu0
          %v6739 = vadd.f32 %v6725, %v6738
          %6740 = vdwg.mxu0
          %6741 = vmatpush.bf16.msra.mxu0 %v6094
          %6742 = vmatpush.bf16.msra.mxu0 %v6088
          %6743 = vmatpush.bf16.msra.mxu0 %v6082
          %6744 = vmatpush.bf16.msra.mxu0 %v6076
          %6745 = vmatpush.bf16.msra.mxu0 %v6070
          %6746 = vmatpush.bf16.msra.mxu0 %v6064
          %6747 = vmatpush.bf16.msra.mxu0 %v6058
          %6748 = vmatpush.bf16.msra.mxu0 %v6052
          %6749 = vmatmul.bf16.gmra.mxu0 %v4689
          %v6750 = vpop.f32.mrf.mxu0
          %v6751 = vadd.f32 %v6737, %v6750
          %v6752 = vpop.f32.mrf.mxu0
          %v6753 = vadd.f32 %v6739, %v6752
          %6754 = vdwg.mxu0
          %6755 = vmatpush.bf16.msra.mxu0 %v6142
          %6756 = vmatpush.bf16.msra.mxu0 %v6136
          %6757 = vmatpush.bf16.msra.mxu0 %v6130
          %6758 = vmatpush.bf16.msra.mxu0 %v6124
          %6759 = vmatpush.bf16.msra.mxu0 %v6118
          %6760 = vmatpush.bf16.msra.mxu0 %v6112
          %6761 = vmatpush.bf16.msra.mxu0 %v6106
          %6762 = vmatpush.bf16.msra.mxu0 %v6100
          %6763 = vmatmul.bf16.gmra.mxu0 %v4690
          %v6764 = vpop.f32.mrf.mxu0
          %v6765 = vadd.f32 %v6751, %v6764
          %v6766 = vpop.f32.mrf.mxu0
          %v6767 = vadd.f32 %v6753, %v6766
          %6768 = vdwg.mxu0
          %6769 = vmatpush.bf16.msra.mxu0 %v5903
          %6770 = vmatpush.bf16.msra.mxu0 %v5897
          %6771 = vmatpush.bf16.msra.mxu0 %v5891
          %6772 = vmatpush.bf16.msra.mxu0 %v5885
          %6773 = vmatpush.bf16.msra.mxu0 %v5879
          %6774 = vmatpush.bf16.msra.mxu0 %v5873
          %6775 = vmatpush.bf16.msra.mxu0 %v5867
          %6776 = vmatpush.bf16.msra.mxu0 %v5861
          %6777 = vmatmul.bf16.gmra.mxu0 %v4685
          %v6778 = vpop.f32.mrf.mxu0
          %v6779 = vadd.f32 %v4985, %v6778
          %v6780 = vpop.f32.mrf.mxu0
          %v6781 = vadd.f32 %v4985, %v6780
          %6782 = vdwg.mxu0
          %6783 = vmatpush.bf16.msra.mxu0 %v5951
          %6784 = vmatpush.bf16.msra.mxu0 %v5945
          %6785 = vmatpush.bf16.msra.mxu0 %v5939
          %6786 = vmatpush.bf16.msra.mxu0 %v5933
          %6787 = vmatpush.bf16.msra.mxu0 %v5927
          %6788 = vmatpush.bf16.msra.mxu0 %v5921
          %6789 = vmatpush.bf16.msra.mxu0 %v5915
          %6790 = vmatpush.bf16.msra.mxu0 %v5909
          %6791 = vmatmul.bf16.gmra.mxu0 %v4686
          %v6792 = vpop.f32.mrf.mxu0
          %v6793 = vadd.f32 %v6779, %v6792
          %v6794 = vpop.f32.mrf.mxu0
          %v6795 = vadd.f32 %v6781, %v6794
          %6796 = vdwg.mxu0
          %6797 = vmatpush.bf16.msra.mxu0 %v5999
          %6798 = vmatpush.bf16.msra.mxu0 %v5993
          %6799 = vmatpush.bf16.msra.mxu0 %v5987
          %6800 = vmatpush.bf16.msra.mxu0 %v5981
          %6801 = vmatpush.bf16.msra.mxu0 %v5975
          %6802 = vmatpush.bf16.msra.mxu0 %v5969
          %6803 = vmatpush.bf16.msra.mxu0 %v5963
          %6804 = vmatpush.bf16.msra.mxu0 %v5957
          %6805 = vmatmul.bf16.gmra.mxu0 %v4687
          %v6806 = vpop.f32.mrf.mxu0
          %v6807 = vadd.f32 %v6793, %v6806
          %v6808 = vpop.f32.mrf.mxu0
          %v6809 = vadd.f32 %v6795, %v6808
          %6810 = vdwg.mxu0
          %6811 = vmatpush.bf16.msra.mxu0 %v6047
          %6812 = vmatpush.bf16.msra.mxu0 %v6041
          %6813 = vmatpush.bf16.msra.mxu0 %v6035
          %6814 = vmatpush.bf16.msra.mxu0 %v6029
          %6815 = vmatpush.bf16.msra.mxu0 %v6023
          %6816 = vmatpush.bf16.msra.mxu0 %v6017
          %6817 = vmatpush.bf16.msra.mxu0 %v6011
          %6818 = vmatpush.bf16.msra.mxu0 %v6005
          %6819 = vmatmul.bf16.gmra.mxu0 %v4688
          %v6820 = vpop.f32.mrf.mxu0
          %v6821 = vadd.f32 %v6807, %v6820
          %v6822 = vpop.f32.mrf.mxu0
          %v6823 = vadd.f32 %v6809, %v6822
          %6824 = vdwg.mxu0
          %6825 = vmatpush.bf16.msra.mxu0 %v6095
          %6826 = vmatpush.bf16.msra.mxu0 %v6089
          %6827 = vmatpush.bf16.msra.mxu0 %v6083
          %6828 = vmatpush.bf16.msra.mxu0 %v6077
          %6829 = vmatpush.bf16.msra.mxu0 %v6071
          %6830 = vmatpush.bf16.msra.mxu0 %v6065
          %6831 = vmatpush.bf16.msra.mxu0 %v6059
          %6832 = vmatpush.bf16.msra.mxu0 %v6053
          %6833 = vmatmul.bf16.gmra.mxu0 %v4689
          %v6834 = vpop.f32.mrf.mxu0
          %v6835 = vadd.f32 %v6821, %v6834
          %v6836 = vpop.f32.mrf.mxu0
          %v6837 = vadd.f32 %v6823, %v6836
          %6838 = vdwg.mxu0
          %6839 = vmatpush.bf16.msra.mxu0 %v6143
          %6840 = vmatpush.bf16.msra.mxu0 %v6137
          %6841 = vmatpush.bf16.msra.mxu0 %v6131
          %6842 = vmatpush.bf16.msra.mxu0 %v6125
          %6843 = vmatpush.bf16.msra.mxu0 %v6119
          %6844 = vmatpush.bf16.msra.mxu0 %v6113
          %6845 = vmatpush.bf16.msra.mxu0 %v6107
          %6846 = vmatpush.bf16.msra.mxu0 %v6101
          %6847 = vmatmul.bf16.gmra.mxu0 %v4690
          %v6848 = vpop.f32.mrf.mxu0
          %v6849 = vadd.f32 %v6835, %v6848
          %v6850 = vpop.f32.mrf.mxu0
          %v6851 = vadd.f32 %v6837, %v6850
          %6852 = vdwg.mxu0
          %6853 = vmatpush.bf16.msra.mxu0 %v5904
          %6854 = vmatpush.bf16.msra.mxu0 %v5898
          %6855 = vmatpush.bf16.msra.mxu0 %v5892
          %6856 = vmatpush.bf16.msra.mxu0 %v5886
          %6857 = vmatpush.bf16.msra.mxu0 %v5880
          %6858 = vmatpush.bf16.msra.mxu0 %v5874
          %6859 = vmatpush.bf16.msra.mxu0 %v5868
          %6860 = vmatpush.bf16.msra.mxu0 %v5862
          %6861 = vmatmul.bf16.gmra.mxu0 %v4685
          %v6862 = vpop.f32.mrf.mxu0
          %v6863 = vadd.f32 %v4986, %v6862
          %v6864 = vpop.f32.mrf.mxu0
          %v6865 = vadd.f32 %v4986, %v6864
          %6866 = vdwg.mxu0
          %6867 = vmatpush.bf16.msra.mxu0 %v5952
          %6868 = vmatpush.bf16.msra.mxu0 %v5946
          %6869 = vmatpush.bf16.msra.mxu0 %v5940
          %6870 = vmatpush.bf16.msra.mxu0 %v5934
          %6871 = vmatpush.bf16.msra.mxu0 %v5928
          %6872 = vmatpush.bf16.msra.mxu0 %v5922
          %6873 = vmatpush.bf16.msra.mxu0 %v5916
          %6874 = vmatpush.bf16.msra.mxu0 %v5910
          %6875 = vmatmul.bf16.gmra.mxu0 %v4686
          %v6876 = vpop.f32.mrf.mxu0
          %v6877 = vadd.f32 %v6863, %v6876
          %v6878 = vpop.f32.mrf.mxu0
          %v6879 = vadd.f32 %v6865, %v6878
          %6880 = vdwg.mxu0
          %6881 = vmatpush.bf16.msra.mxu0 %v6000
          %6882 = vmatpush.bf16.msra.mxu0 %v5994
          %6883 = vmatpush.bf16.msra.mxu0 %v5988
          %6884 = vmatpush.bf16.msra.mxu0 %v5982
          %6885 = vmatpush.bf16.msra.mxu0 %v5976
          %6886 = vmatpush.bf16.msra.mxu0 %v5970
          %6887 = vmatpush.bf16.msra.mxu0 %v5964
          %6888 = vmatpush.bf16.msra.mxu0 %v5958
          %6889 = vmatmul.bf16.gmra.mxu0 %v4687
          %v6890 = vpop.f32.mrf.mxu0
          %v6891 = vadd.f32 %v6877, %v6890
          %v6892 = vpop.f32.mrf.mxu0
          %v6893 = vadd.f32 %v6879, %v6892
          %6894 = vdwg.mxu0
          %6895 = vmatpush.bf16.msra.mxu0 %v6048
          %6896 = vmatpush.bf16.msra.mxu0 %v6042
          %6897 = vmatpush.bf16.msra.mxu0 %v6036
          %6898 = vmatpush.bf16.msra.mxu0 %v6030
          %6899 = vmatpush.bf16.msra.mxu0 %v6024
          %6900 = vmatpush.bf16.msra.mxu0 %v6018
          %6901 = vmatpush.bf16.msra.mxu0 %v6012
          %6902 = vmatpush.bf16.msra.mxu0 %v6006
          %6903 = vmatmul.bf16.gmra.mxu0 %v4688
          %v6904 = vpop.f32.mrf.mxu0
          %v6905 = vadd.f32 %v6891, %v6904
          %v6906 = vpop.f32.mrf.mxu0
          %v6907 = vadd.f32 %v6893, %v6906
          %6908 = vdwg.mxu0
          %6909 = vmatpush.bf16.msra.mxu0 %v6096
          %6910 = vmatpush.bf16.msra.mxu0 %v6090
          %6911 = vmatpush.bf16.msra.mxu0 %v6084
          %6912 = vmatpush.bf16.msra.mxu0 %v6078
          %6913 = vmatpush.bf16.msra.mxu0 %v6072
          %6914 = vmatpush.bf16.msra.mxu0 %v6066
          %6915 = vmatpush.bf16.msra.mxu0 %v6060
          %6916 = vmatpush.bf16.msra.mxu0 %v6054
          %6917 = vmatmul.bf16.gmra.mxu0 %v4689
          %v6918 = vpop.f32.mrf.mxu0
          %v6919 = vadd.f32 %v6905, %v6918
          %v6920 = vpop.f32.mrf.mxu0
          %v6921 = vadd.f32 %v6907, %v6920
          %6922 = vdwg.mxu0
          %6923 = vmatpush.bf16.msra.mxu0 %v6144
          %6924 = vmatpush.bf16.msra.mxu0 %v6138
          %6925 = vmatpush.bf16.msra.mxu0 %v6132
          %6926 = vmatpush.bf16.msra.mxu0 %v6126
          %6927 = vmatpush.bf16.msra.mxu0 %v6120
          %6928 = vmatpush.bf16.msra.mxu0 %v6114
          %6929 = vmatpush.bf16.msra.mxu0 %v6108
          %6930 = vmatpush.bf16.msra.mxu0 %v6102
          %6931 = vmatmul.bf16.gmra.mxu0 %v4690
          %v6932 = vpop.f32.mrf.mxu0
          %v6933 = vadd.f32 %v6919, %v6932
          %v6934 = vpop.f32.mrf.mxu0
          %v6935 = vadd.f32 %v6921, %v6934
          %6936 = vdwg.mxu0
          %v6937 = vtanh.pop %v6513
          %v6938 = vtanh.pop %v6597
          %v6939 = vtanh.pop %v6681
          %v6940 = vtanh.pop %v6765
          %v6941 = vtanh.pop %v6849
          %v6942 = vtanh.pop %v6933
          %v6943 = vtanh.pop %v6515
          %v6944 = vtanh.pop %v6599
          %v6945 = vtanh.pop %v6683
          %v6946 = vtanh.pop %v6767
          %v6947 = vtanh.pop %v6851
          %v6948 = vtanh.pop %v6935
          %v6949 = vpack.c.bf16 %v6943, %v6937
          %v6950 = vpack.c.bf16 %v6944, %v6938
          %v6951 = vpack.c.bf16 %v6945, %v6939
          %v6952 = vpack.c.bf16 %v6946, %v6940
          %v6953 = vpack.c.bf16 %v6947, %v6941
          %v6954 = vpack.c.bf16 %v6948, %v6942
          %v6955 = vld [vmem:[#allocation8] sm:$0xff]
          %v6956 = vld [vmem:[#allocation8 + $0x8] sm:$0xff]
          %v6957 = vld [vmem:[#allocation8 + $0x10] sm:$0xff]
          %v6958 = vld [vmem:[#allocation8 + $0x18] sm:$0xff]
          %v6959 = vld [vmem:[#allocation8 + $0x20] sm:$0xff]
          %v6960 = vld [vmem:[#allocation8 + $0x28] sm:$0xff]
          %v6961 = vld [vmem:[#allocation8 + $0x30] sm:$0xff]
          %v6962 = vld [vmem:[#allocation8 + $0x38] sm:$0xff]
          %v6963 = vld [vmem:[#allocation8 + $0x40] sm:$0xff]
          %v6964 = vld [vmem:[#allocation8 + $0x48] sm:$0xff]
          %v6965 = vld [vmem:[#allocation8 + $0x50] sm:$0xff]
          %v6966 = vld [vmem:[#allocation8 + $0x58] sm:$0xff]
          %v6967 = vld [vmem:[#allocation8 + $0x60] sm:$0xff]
          %v6968 = vld [vmem:[#allocation8 + $0x68] sm:$0xff]
          %v6969 = vld [vmem:[#allocation8 + $0x70] sm:$0xff]
          %v6970 = vld [vmem:[#allocation8 + $0x78] sm:$0xff]
          %v6971 = vld [vmem:[#allocation8 + $0x80] sm:$0xff]
          %v6972 = vld [vmem:[#allocation8 + $0x88] sm:$0xff]
          %v6973 = vld [vmem:[#allocation8 + $0x90] sm:$0xff]
          %v6974 = vld [vmem:[#allocation8 + $0x98] sm:$0xff]
          %v6975 = vld [vmem:[#allocation8 + $0xa0] sm:$0xff]
          %v6976 = vld [vmem:[#allocation8 + $0xa8] sm:$0xff]
          %v6977 = vld [vmem:[#allocation8 + $0xb0] sm:$0xff]
          %v6978 = vld [vmem:[#allocation8 + $0xb8] sm:$0xff]
          %v6979 = vld [vmem:[#allocation8 + $0xc0] sm:$0xff]
          %v6980 = vld [vmem:[#allocation8 + $0xc8] sm:$0xff]
          %v6981 = vld [vmem:[#allocation8 + $0xd0] sm:$0xff]
          %v6982 = vld [vmem:[#allocation8 + $0xd8] sm:$0xff]
          %v6983 = vld [vmem:[#allocation8 + $0xe0] sm:$0xff]
          %v6984 = vld [vmem:[#allocation8 + $0xe8] sm:$0xff]
          %v6985 = vld [vmem:[#allocation8 + $0xf0] sm:$0xff]
          %v6986 = vld [vmem:[#allocation8 + $0xf8] sm:$0xff]
          %v6987 = vld [vmem:[#allocation8 + $0x100] sm:$0xff]
          %v6988 = vld [vmem:[#allocation8 + $0x108] sm:$0xff]
          %v6989 = vld [vmem:[#allocation8 + $0x110] sm:$0xff]
          %v6990 = vld [vmem:[#allocation8 + $0x118] sm:$0xff]
          %v6991 = vld [vmem:[#allocation8 + $0x120] sm:$0xff]
          %v6992 = vld [vmem:[#allocation8 + $0x128] sm:$0xff]
          %v6993 = vld [vmem:[#allocation8 + $0x130] sm:$0xff]
          %v6994 = vld [vmem:[#allocation8 + $0x138] sm:$0xff]
          %v6995 = vld [vmem:[#allocation8 + $0x140] sm:$0xff]
          %v6996 = vld [vmem:[#allocation8 + $0x148] sm:$0xff]
          %v6997 = vld [vmem:[#allocation8 + $0x150] sm:$0xff]
          %v6998 = vld [vmem:[#allocation8 + $0x158] sm:$0xff]
          %v6999 = vld [vmem:[#allocation8 + $0x160] sm:$0xff]
          %v7000 = vld [vmem:[#allocation8 + $0x168] sm:$0xff]
          %v7001 = vld [vmem:[#allocation8 + $0x170] sm:$0xff]
          %v7002 = vld [vmem:[#allocation8 + $0x178] sm:$0xff]
          %v7003 = vld [vmem:[#allocation8 + $0x180] sm:$0xff]
          %v7004 = vld [vmem:[#allocation8 + $0x188] sm:$0xff]
          %v7005 = vld [vmem:[#allocation8 + $0x190] sm:$0xff]
          %v7006 = vld [vmem:[#allocation8 + $0x198] sm:$0xff]
          %v7007 = vld [vmem:[#allocation8 + $0x1a0] sm:$0xff]
          %v7008 = vld [vmem:[#allocation8 + $0x1a8] sm:$0xff]
          %v7009 = vld [vmem:[#allocation8 + $0x1b0] sm:$0xff]
          %v7010 = vld [vmem:[#allocation8 + $0x1b8] sm:$0xff]
          %v7011 = vld [vmem:[#allocation8 + $0x1c0] sm:$0xff]
          %v7012 = vld [vmem:[#allocation8 + $0x1c8] sm:$0xff]
          %v7013 = vld [vmem:[#allocation8 + $0x1d0] sm:$0xff]
          %v7014 = vld [vmem:[#allocation8 + $0x1d8] sm:$0xff]
          %v7015 = vld [vmem:[#allocation8 + $0x1e0] sm:$0xff]
          %v7016 = vld [vmem:[#allocation8 + $0x1e8] sm:$0xff]
          %v7017 = vld [vmem:[#allocation8 + $0x1f0] sm:$0xff]
          %v7018 = vld [vmem:[#allocation8 + $0x1f8] sm:$0xff]
          %v7019 = vld [vmem:[#allocation8 + $0x200] sm:$0xff]
          %v7020 = vld [vmem:[#allocation8 + $0x208] sm:$0xff]
          %v7021 = vld [vmem:[#allocation8 + $0x210] sm:$0xff]
          %v7022 = vld [vmem:[#allocation8 + $0x218] sm:$0xff]
          %v7023 = vld [vmem:[#allocation8 + $0x220] sm:$0xff]
          %v7024 = vld [vmem:[#allocation8 + $0x228] sm:$0xff]
          %v7025 = vld [vmem:[#allocation8 + $0x230] sm:$0xff]
          %v7026 = vld [vmem:[#allocation8 + $0x238] sm:$0xff]
          %v7027 = vld [vmem:[#allocation8 + $0x240] sm:$0xff]
          %v7028 = vld [vmem:[#allocation8 + $0x248] sm:$0xff]
          %v7029 = vld [vmem:[#allocation8 + $0x250] sm:$0xff]
          %v7030 = vld [vmem:[#allocation8 + $0x258] sm:$0xff]
          %v7031 = vld [vmem:[#allocation8 + $0x260] sm:$0xff]
          %v7032 = vld [vmem:[#allocation8 + $0x268] sm:$0xff]
          %v7033 = vld [vmem:[#allocation8 + $0x270] sm:$0xff]
          %v7034 = vld [vmem:[#allocation8 + $0x278] sm:$0xff]
          %v7035 = vld [vmem:[#allocation8 + $0x280] sm:$0xff]
          %v7036 = vld [vmem:[#allocation8 + $0x288] sm:$0xff]
          %v7037 = vld [vmem:[#allocation8 + $0x290] sm:$0xff]
          %v7038 = vld [vmem:[#allocation8 + $0x298] sm:$0xff]
          %v7039 = vld [vmem:[#allocation8 + $0x2a0] sm:$0xff]
          %v7040 = vld [vmem:[#allocation8 + $0x2a8] sm:$0xff]
          %v7041 = vld [vmem:[#allocation8 + $0x2b0] sm:$0xff]
          %v7042 = vld [vmem:[#allocation8 + $0x2b8] sm:$0xff]
          %v7043 = vld [vmem:[#allocation8 + $0x2c0] sm:$0xff]
          %v7044 = vld [vmem:[#allocation8 + $0x2c8] sm:$0xff]
          %v7045 = vld [vmem:[#allocation8 + $0x2d0] sm:$0xff]
          %v7046 = vld [vmem:[#allocation8 + $0x2d8] sm:$0xff]
          %v7047 = vld [vmem:[#allocation8 + $0x2e0] sm:$0xff]
          %v7048 = vld [vmem:[#allocation8 + $0x2e8] sm:$0xff]
          %v7049 = vld [vmem:[#allocation8 + $0x2f0] sm:$0xff]
          %v7050 = vld [vmem:[#allocation8 + $0x2f8] sm:$0xff]
          %v7051 = vld [vmem:[#allocation8 + $0x300] sm:$0xff]
          %v7052 = vld [vmem:[#allocation8 + $0x308] sm:$0xff]
          %v7053 = vld [vmem:[#allocation8 + $0x310] sm:$0xff]
          %v7054 = vld [vmem:[#allocation8 + $0x318] sm:$0xff]
          %v7055 = vld [vmem:[#allocation8 + $0x320] sm:$0xff]
          %v7056 = vld [vmem:[#allocation8 + $0x328] sm:$0xff]
          %v7057 = vld [vmem:[#allocation8 + $0x330] sm:$0xff]
          %v7058 = vld [vmem:[#allocation8 + $0x338] sm:$0xff]
          %v7059 = vld [vmem:[#allocation8 + $0x340] sm:$0xff]
          %v7060 = vld [vmem:[#allocation8 + $0x348] sm:$0xff]
          %v7061 = vld [vmem:[#allocation8 + $0x350] sm:$0xff]
          %v7062 = vld [vmem:[#allocation8 + $0x358] sm:$0xff]
          %v7063 = vld [vmem:[#allocation8 + $0x360] sm:$0xff]
          %v7064 = vld [vmem:[#allocation8 + $0x368] sm:$0xff]
          %v7065 = vld [vmem:[#allocation8 + $0x370] sm:$0xff]
          %v7066 = vld [vmem:[#allocation8 + $0x378] sm:$0xff]
          %v7067 = vld [vmem:[#allocation8 + $0x380] sm:$0xff]
          %v7068 = vld [vmem:[#allocation8 + $0x388] sm:$0xff]
          %v7069 = vld [vmem:[#allocation8 + $0x390] sm:$0xff]
          %v7070 = vld [vmem:[#allocation8 + $0x398] sm:$0xff]
          %v7071 = vld [vmem:[#allocation8 + $0x3a0] sm:$0xff]
          %v7072 = vld [vmem:[#allocation8 + $0x3a8] sm:$0xff]
          %v7073 = vld [vmem:[#allocation8 + $0x3b0] sm:$0xff]
          %v7074 = vld [vmem:[#allocation8 + $0x3b8] sm:$0xff]
          %v7075 = vld [vmem:[#allocation8 + $0x3c0] sm:$0xff]
          %v7076 = vld [vmem:[#allocation8 + $0x3c8] sm:$0xff]
          %v7077 = vld [vmem:[#allocation8 + $0x3d0] sm:$0xff]
          %v7078 = vld [vmem:[#allocation8 + $0x3d8] sm:$0xff]
          %v7079 = vld [vmem:[#allocation8 + $0x3e0] sm:$0xff]
          %v7080 = vld [vmem:[#allocation8 + $0x3e8] sm:$0xff]
          %v7081 = vld [vmem:[#allocation8 + $0x3f0] sm:$0xff]
          %v7082 = vld [vmem:[#allocation8 + $0x3f8] sm:$0xff]
          %v7083 = vld [vmem:[#allocation8 + $0x400] sm:$0xff]
          %v7084 = vld [vmem:[#allocation8 + $0x408] sm:$0xff]
          %v7085 = vld [vmem:[#allocation8 + $0x410] sm:$0xff]
          %v7086 = vld [vmem:[#allocation8 + $0x418] sm:$0xff]
          %v7087 = vld [vmem:[#allocation8 + $0x420] sm:$0xff]
          %v7088 = vld [vmem:[#allocation8 + $0x428] sm:$0xff]
          %v7089 = vld [vmem:[#allocation8 + $0x430] sm:$0xff]
          %v7090 = vld [vmem:[#allocation8 + $0x438] sm:$0xff]
          %v7091 = vld [vmem:[#allocation8 + $0x440] sm:$0xff]
          %v7092 = vld [vmem:[#allocation8 + $0x448] sm:$0xff]
          %v7093 = vld [vmem:[#allocation8 + $0x450] sm:$0xff]
          %v7094 = vld [vmem:[#allocation8 + $0x458] sm:$0xff]
          %v7095 = vld [vmem:[#allocation8 + $0x460] sm:$0xff]
          %v7096 = vld [vmem:[#allocation8 + $0x468] sm:$0xff]
          %v7097 = vld [vmem:[#allocation8 + $0x470] sm:$0xff]
          %v7098 = vld [vmem:[#allocation8 + $0x478] sm:$0xff]
          %v7099 = vld [vmem:[#allocation8 + $0x480] sm:$0xff]
          %v7100 = vld [vmem:[#allocation8 + $0x488] sm:$0xff]
          %v7101 = vld [vmem:[#allocation8 + $0x490] sm:$0xff]
          %v7102 = vld [vmem:[#allocation8 + $0x498] sm:$0xff]
          %v7103 = vld [vmem:[#allocation8 + $0x4a0] sm:$0xff]
          %v7104 = vld [vmem:[#allocation8 + $0x4a8] sm:$0xff]
          %v7105 = vld [vmem:[#allocation8 + $0x4b0] sm:$0xff]
          %v7106 = vld [vmem:[#allocation8 + $0x4b8] sm:$0xff]
          %v7107 = vld [vmem:[#allocation8 + $0x4c0] sm:$0xff]
          %v7108 = vld [vmem:[#allocation8 + $0x4c8] sm:$0xff]
          %v7109 = vld [vmem:[#allocation8 + $0x4d0] sm:$0xff]
          %v7110 = vld [vmem:[#allocation8 + $0x4d8] sm:$0xff]
          %v7111 = vld [vmem:[#allocation8 + $0x4e0] sm:$0xff]
          %v7112 = vld [vmem:[#allocation8 + $0x4e8] sm:$0xff]
          %v7113 = vld [vmem:[#allocation8 + $0x4f0] sm:$0xff]
          %v7114 = vld [vmem:[#allocation8 + $0x4f8] sm:$0xff]
          %v7115 = vld [vmem:[#allocation8 + $0x500] sm:$0xff]
          %v7116 = vld [vmem:[#allocation8 + $0x508] sm:$0xff]
          %v7117 = vld [vmem:[#allocation8 + $0x510] sm:$0xff]
          %v7118 = vld [vmem:[#allocation8 + $0x518] sm:$0xff]
          %v7119 = vld [vmem:[#allocation8 + $0x520] sm:$0xff]
          %v7120 = vld [vmem:[#allocation8 + $0x528] sm:$0xff]
          %v7121 = vld [vmem:[#allocation8 + $0x530] sm:$0xff]
          %v7122 = vld [vmem:[#allocation8 + $0x538] sm:$0xff]
          %v7123 = vld [vmem:[#allocation8 + $0x540] sm:$0xff]
          %v7124 = vld [vmem:[#allocation8 + $0x548] sm:$0xff]
          %v7125 = vld [vmem:[#allocation8 + $0x550] sm:$0xff]
          %v7126 = vld [vmem:[#allocation8 + $0x558] sm:$0xff]
          %v7127 = vld [vmem:[#allocation8 + $0x560] sm:$0xff]
          %v7128 = vld [vmem:[#allocation8 + $0x568] sm:$0xff]
          %v7129 = vld [vmem:[#allocation8 + $0x570] sm:$0xff]
          %v7130 = vld [vmem:[#allocation8 + $0x578] sm:$0xff]
          %v7131 = vld [vmem:[#allocation8 + $0x580] sm:$0xff]
          %v7132 = vld [vmem:[#allocation8 + $0x588] sm:$0xff]
          %v7133 = vld [vmem:[#allocation8 + $0x590] sm:$0xff]
          %v7134 = vld [vmem:[#allocation8 + $0x598] sm:$0xff]
          %v7135 = vld [vmem:[#allocation8 + $0x5a0] sm:$0xff]
          %v7136 = vld [vmem:[#allocation8 + $0x5a8] sm:$0xff]
          %v7137 = vld [vmem:[#allocation8 + $0x5b0] sm:$0xff]
          %v7138 = vld [vmem:[#allocation8 + $0x5b8] sm:$0xff]
          %v7139 = vld [vmem:[#allocation8 + $0x5c0] sm:$0xff]
          %v7140 = vld [vmem:[#allocation8 + $0x5c8] sm:$0xff]
          %v7141 = vld [vmem:[#allocation8 + $0x5d0] sm:$0xff]
          %v7142 = vld [vmem:[#allocation8 + $0x5d8] sm:$0xff]
          %v7143 = vld [vmem:[#allocation8 + $0x5e0] sm:$0xff]
          %v7144 = vld [vmem:[#allocation8 + $0x5e8] sm:$0xff]
          %v7145 = vld [vmem:[#allocation8 + $0x5f0] sm:$0xff]
          %v7146 = vld [vmem:[#allocation8 + $0x5f8] sm:$0xff]
          %v7147 = vld [vmem:[#allocation10] sm:$0xf]
          %v7149 = vperm.slane %v7147, 0
          %v7150 = vperm.slane %v7147, 1
          %v7151 = vperm.slane %v7147, 2
          %v7152 = vperm.slane %v7147, 3
          %v7349 = vunpack.c.l.b16 %v6955
          %v7350 = vunpack.c.h.b16 %v6955
          %v7351 = vunpack.c.l.b16 %v6956
          %v7352 = vunpack.c.h.b16 %v6956
          %v7353 = vunpack.c.l.b16 %v6957
          %v7354 = vunpack.c.h.b16 %v6957
          %v7355 = vunpack.c.l.b16 %v6958
          %v7356 = vunpack.c.h.b16 %v6958
          %v7357 = vunpack.c.l.b16 %v6959
          %v7358 = vunpack.c.h.b16 %v6959
          %v7359 = vunpack.c.l.b16 %v6960
          %v7360 = vunpack.c.h.b16 %v6960
          %v7361 = vunpack.c.l.b16 %v6961
          %v7362 = vunpack.c.h.b16 %v6961
          %v7363 = vunpack.c.l.b16 %v6962
          %v7364 = vunpack.c.h.b16 %v6962
          %v7365 = vunpack.c.l.b16 %v6963
          %v7366 = vunpack.c.h.b16 %v6963
          %v7367 = vunpack.c.l.b16 %v6964
          %v7368 = vunpack.c.h.b16 %v6964
          %v7369 = vunpack.c.l.b16 %v6965
          %v7370 = vunpack.c.h.b16 %v6965
          %v7371 = vunpack.c.l.b16 %v6966
          %v7372 = vunpack.c.h.b16 %v6966
          %v7373 = vunpack.c.l.b16 %v6967
          %v7374 = vunpack.c.h.b16 %v6967
          %v7375 = vunpack.c.l.b16 %v6968
          %v7376 = vunpack.c.h.b16 %v6968
          %v7377 = vunpack.c.l.b16 %v6969
          %v7378 = vunpack.c.h.b16 %v6969
          %v7379 = vunpack.c.l.b16 %v6970
          %v7380 = vunpack.c.h.b16 %v6970
          %v7381 = vunpack.c.l.b16 %v6971
          %v7382 = vunpack.c.h.b16 %v6971
          %v7383 = vunpack.c.l.b16 %v6972
          %v7384 = vunpack.c.h.b16 %v6972
          %v7385 = vunpack.c.l.b16 %v6973
          %v7386 = vunpack.c.h.b16 %v6973
          %v7387 = vunpack.c.l.b16 %v6974
          %v7388 = vunpack.c.h.b16 %v6974
          %v7389 = vunpack.c.l.b16 %v6975
          %v7390 = vunpack.c.h.b16 %v6975
          %v7391 = vunpack.c.l.b16 %v6976
          %v7392 = vunpack.c.h.b16 %v6976
          %v7393 = vunpack.c.l.b16 %v6977
          %v7394 = vunpack.c.h.b16 %v6977
          %v7395 = vunpack.c.l.b16 %v6978
          %v7396 = vunpack.c.h.b16 %v6978
          %v7397 = vunpack.c.l.b16 %v6979
          %v7398 = vunpack.c.h.b16 %v6979
          %v7399 = vunpack.c.l.b16 %v6980
          %v7400 = vunpack.c.h.b16 %v6980
          %v7401 = vunpack.c.l.b16 %v6981
          %v7402 = vunpack.c.h.b16 %v6981
          %v7403 = vunpack.c.l.b16 %v6982
          %v7404 = vunpack.c.h.b16 %v6982
          %v7405 = vunpack.c.l.b16 %v6983
          %v7406 = vunpack.c.h.b16 %v6983
          %v7407 = vunpack.c.l.b16 %v6984
          %v7408 = vunpack.c.h.b16 %v6984
          %v7409 = vunpack.c.l.b16 %v6985
          %v7410 = vunpack.c.h.b16 %v6985
          %v7411 = vunpack.c.l.b16 %v6986
          %v7412 = vunpack.c.h.b16 %v6986
          %v7413 = vunpack.c.l.b16 %v6987
          %v7414 = vunpack.c.h.b16 %v6987
          %v7415 = vunpack.c.l.b16 %v6988
          %v7416 = vunpack.c.h.b16 %v6988
          %v7417 = vunpack.c.l.b16 %v6989
          %v7418 = vunpack.c.h.b16 %v6989
          %v7419 = vunpack.c.l.b16 %v6990
          %v7420 = vunpack.c.h.b16 %v6990
          %v7421 = vunpack.c.l.b16 %v6991
          %v7422 = vunpack.c.h.b16 %v6991
          %v7423 = vunpack.c.l.b16 %v6992
          %v7424 = vunpack.c.h.b16 %v6992
          %v7425 = vunpack.c.l.b16 %v6993
          %v7426 = vunpack.c.h.b16 %v6993
          %v7427 = vunpack.c.l.b16 %v6994
          %v7428 = vunpack.c.h.b16 %v6994
          %v7429 = vunpack.c.l.b16 %v6995
          %v7430 = vunpack.c.h.b16 %v6995
          %v7431 = vunpack.c.l.b16 %v6996
          %v7432 = vunpack.c.h.b16 %v6996
          %v7433 = vunpack.c.l.b16 %v6997
          %v7434 = vunpack.c.h.b16 %v6997
          %v7435 = vunpack.c.l.b16 %v6998
          %v7436 = vunpack.c.h.b16 %v6998
          %v7437 = vunpack.c.l.b16 %v6999
          %v7438 = vunpack.c.h.b16 %v6999
          %v7439 = vunpack.c.l.b16 %v7000
          %v7440 = vunpack.c.h.b16 %v7000
          %v7441 = vunpack.c.l.b16 %v7001
          %v7442 = vunpack.c.h.b16 %v7001
          %v7443 = vunpack.c.l.b16 %v7002
          %v7444 = vunpack.c.h.b16 %v7002
          %v7445 = vunpack.c.l.b16 %v7003
          %v7446 = vunpack.c.h.b16 %v7003
          %v7447 = vunpack.c.l.b16 %v7004
          %v7448 = vunpack.c.h.b16 %v7004
          %v7449 = vunpack.c.l.b16 %v7005
          %v7450 = vunpack.c.h.b16 %v7005
          %v7451 = vunpack.c.l.b16 %v7006
          %v7452 = vunpack.c.h.b16 %v7006
          %v7453 = vunpack.c.l.b16 %v7007
          %v7454 = vunpack.c.h.b16 %v7007
          %v7455 = vunpack.c.l.b16 %v7008
          %v7456 = vunpack.c.h.b16 %v7008
          %v7457 = vunpack.c.l.b16 %v7009
          %v7458 = vunpack.c.h.b16 %v7009
          %v7459 = vunpack.c.l.b16 %v7010
          %v7460 = vunpack.c.h.b16 %v7010
          %v7461 = vunpack.c.l.b16 %v7011
          %v7462 = vunpack.c.h.b16 %v7011
          %v7463 = vunpack.c.l.b16 %v7012
          %v7464 = vunpack.c.h.b16 %v7012
          %v7465 = vunpack.c.l.b16 %v7013
          %v7466 = vunpack.c.h.b16 %v7013
          %v7467 = vunpack.c.l.b16 %v7014
          %v7468 = vunpack.c.h.b16 %v7014
          %v7469 = vunpack.c.l.b16 %v7015
          %v7470 = vunpack.c.h.b16 %v7015
          %v7471 = vunpack.c.l.b16 %v7016
          %v7472 = vunpack.c.h.b16 %v7016
          %v7473 = vunpack.c.l.b16 %v7017
          %v7474 = vunpack.c.h.b16 %v7017
          %v7475 = vunpack.c.l.b16 %v7018
          %v7476 = vunpack.c.h.b16 %v7018
          %v7477 = vunpack.c.l.b16 %v7019
          %v7478 = vunpack.c.h.b16 %v7019
          %v7479 = vunpack.c.l.b16 %v7020
          %v7480 = vunpack.c.h.b16 %v7020
          %v7481 = vunpack.c.l.b16 %v7021
          %v7482 = vunpack.c.h.b16 %v7021
          %v7483 = vunpack.c.l.b16 %v7022
          %v7484 = vunpack.c.h.b16 %v7022
          %v7485 = vunpack.c.l.b16 %v7023
          %v7486 = vunpack.c.h.b16 %v7023
          %v7487 = vunpack.c.l.b16 %v7024
          %v7488 = vunpack.c.h.b16 %v7024
          %v7489 = vunpack.c.l.b16 %v7025
          %v7490 = vunpack.c.h.b16 %v7025
          %v7491 = vunpack.c.l.b16 %v7026
          %v7492 = vunpack.c.h.b16 %v7026
          %v7493 = vunpack.c.l.b16 %v7027
          %v7494 = vunpack.c.h.b16 %v7027
          %v7495 = vunpack.c.l.b16 %v7028
          %v7496 = vunpack.c.h.b16 %v7028
          %v7497 = vunpack.c.l.b16 %v7029
          %v7498 = vunpack.c.h.b16 %v7029
          %v7499 = vunpack.c.l.b16 %v7030
          %v7500 = vunpack.c.h.b16 %v7030
          %v7501 = vunpack.c.l.b16 %v7031
          %v7502 = vunpack.c.h.b16 %v7031
          %v7503 = vunpack.c.l.b16 %v7032
          %v7504 = vunpack.c.h.b16 %v7032
          %v7505 = vunpack.c.l.b16 %v7033
          %v7506 = vunpack.c.h.b16 %v7033
          %v7507 = vunpack.c.l.b16 %v7034
          %v7508 = vunpack.c.h.b16 %v7034
          %v7509 = vunpack.c.l.b16 %v7035
          %v7510 = vunpack.c.h.b16 %v7035
          %v7511 = vunpack.c.l.b16 %v7036
          %v7512 = vunpack.c.h.b16 %v7036
          %v7513 = vunpack.c.l.b16 %v7037
          %v7514 = vunpack.c.h.b16 %v7037
          %v7515 = vunpack.c.l.b16 %v7038
          %v7516 = vunpack.c.h.b16 %v7038
          %v7517 = vunpack.c.l.b16 %v7039
          %v7518 = vunpack.c.h.b16 %v7039
          %v7519 = vunpack.c.l.b16 %v7040
          %v7520 = vunpack.c.h.b16 %v7040
          %v7521 = vunpack.c.l.b16 %v7041
          %v7522 = vunpack.c.h.b16 %v7041
          %v7523 = vunpack.c.l.b16 %v7042
          %v7524 = vunpack.c.h.b16 %v7042
          %v7525 = vunpack.c.l.b16 %v7043
          %v7526 = vunpack.c.h.b16 %v7043
          %v7527 = vunpack.c.l.b16 %v7044
          %v7528 = vunpack.c.h.b16 %v7044
          %v7529 = vunpack.c.l.b16 %v7045
          %v7530 = vunpack.c.h.b16 %v7045
          %v7531 = vunpack.c.l.b16 %v7046
          %v7532 = vunpack.c.h.b16 %v7046
          %v7533 = vunpack.c.l.b16 %v7047
          %v7534 = vunpack.c.h.b16 %v7047
          %v7535 = vunpack.c.l.b16 %v7048
          %v7536 = vunpack.c.h.b16 %v7048
          %v7537 = vunpack.c.l.b16 %v7049
          %v7538 = vunpack.c.h.b16 %v7049
          %v7539 = vunpack.c.l.b16 %v7050
          %v7540 = vunpack.c.h.b16 %v7050
          %v7541 = vunpack.c.l.b16 %v7051
          %v7542 = vunpack.c.h.b16 %v7051
          %v7543 = vunpack.c.l.b16 %v7052
          %v7544 = vunpack.c.h.b16 %v7052
          %v7545 = vunpack.c.l.b16 %v7053
          %v7546 = vunpack.c.h.b16 %v7053
          %v7547 = vunpack.c.l.b16 %v7054
          %v7548 = vunpack.c.h.b16 %v7054
          %v7549 = vunpack.c.l.b16 %v7055
          %v7550 = vunpack.c.h.b16 %v7055
          %v7551 = vunpack.c.l.b16 %v7056
          %v7552 = vunpack.c.h.b16 %v7056
          %v7553 = vunpack.c.l.b16 %v7057
          %v7554 = vunpack.c.h.b16 %v7057
          %v7555 = vunpack.c.l.b16 %v7058
          %v7556 = vunpack.c.h.b16 %v7058
          %v7557 = vunpack.c.l.b16 %v7059
          %v7558 = vunpack.c.h.b16 %v7059
          %v7559 = vunpack.c.l.b16 %v7060
          %v7560 = vunpack.c.h.b16 %v7060
          %v7561 = vunpack.c.l.b16 %v7061
          %v7562 = vunpack.c.h.b16 %v7061
          %v7563 = vunpack.c.l.b16 %v7062
          %v7564 = vunpack.c.h.b16 %v7062
          %v7565 = vunpack.c.l.b16 %v7063
          %v7566 = vunpack.c.h.b16 %v7063
          %v7567 = vunpack.c.l.b16 %v7064
          %v7568 = vunpack.c.h.b16 %v7064
          %v7569 = vunpack.c.l.b16 %v7065
          %v7570 = vunpack.c.h.b16 %v7065
          %v7571 = vunpack.c.l.b16 %v7066
          %v7572 = vunpack.c.h.b16 %v7066
          %v7573 = vunpack.c.l.b16 %v7067
          %v7574 = vunpack.c.h.b16 %v7067
          %v7575 = vunpack.c.l.b16 %v7068
          %v7576 = vunpack.c.h.b16 %v7068
          %v7577 = vunpack.c.l.b16 %v7069
          %v7578 = vunpack.c.h.b16 %v7069
          %v7579 = vunpack.c.l.b16 %v7070
          %v7580 = vunpack.c.h.b16 %v7070
          %v7581 = vunpack.c.l.b16 %v7071
          %v7582 = vunpack.c.h.b16 %v7071
          %v7583 = vunpack.c.l.b16 %v7072
          %v7584 = vunpack.c.h.b16 %v7072
          %v7585 = vunpack.c.l.b16 %v7073
          %v7586 = vunpack.c.h.b16 %v7073
          %v7587 = vunpack.c.l.b16 %v7074
          %v7588 = vunpack.c.h.b16 %v7074
          %v7589 = vunpack.c.l.b16 %v7075
          %v7590 = vunpack.c.h.b16 %v7075
          %v7591 = vunpack.c.l.b16 %v7076
          %v7592 = vunpack.c.h.b16 %v7076
          %v7593 = vunpack.c.l.b16 %v7077
          %v7594 = vunpack.c.h.b16 %v7077
          %v7595 = vunpack.c.l.b16 %v7078
          %v7596 = vunpack.c.h.b16 %v7078
          %v7597 = vunpack.c.l.b16 %v7079
          %v7598 = vunpack.c.h.b16 %v7079
          %v7599 = vunpack.c.l.b16 %v7080
          %v7600 = vunpack.c.h.b16 %v7080
          %v7601 = vunpack.c.l.b16 %v7081
          %v7602 = vunpack.c.h.b16 %v7081
          %v7603 = vunpack.c.l.b16 %v7082
          %v7604 = vunpack.c.h.b16 %v7082
          %v7605 = vunpack.c.l.b16 %v7083
          %v7606 = vunpack.c.h.b16 %v7083
          %v7607 = vunpack.c.l.b16 %v7084
          %v7608 = vunpack.c.h.b16 %v7084
          %v7609 = vunpack.c.l.b16 %v7085
          %v7610 = vunpack.c.h.b16 %v7085
          %v7611 = vunpack.c.l.b16 %v7086
          %v7612 = vunpack.c.h.b16 %v7086
          %v7613 = vunpack.c.l.b16 %v7087
          %v7614 = vunpack.c.h.b16 %v7087
          %v7615 = vunpack.c.l.b16 %v7088
          %v7616 = vunpack.c.h.b16 %v7088
          %v7617 = vunpack.c.l.b16 %v7089
          %v7618 = vunpack.c.h.b16 %v7089
          %v7619 = vunpack.c.l.b16 %v7090
          %v7620 = vunpack.c.h.b16 %v7090
          %v7621 = vunpack.c.l.b16 %v7091
          %v7622 = vunpack.c.h.b16 %v7091
          %v7623 = vunpack.c.l.b16 %v7092
          %v7624 = vunpack.c.h.b16 %v7092
          %v7625 = vunpack.c.l.b16 %v7093
          %v7626 = vunpack.c.h.b16 %v7093
          %v7627 = vunpack.c.l.b16 %v7094
          %v7628 = vunpack.c.h.b16 %v7094
          %v7629 = vunpack.c.l.b16 %v7095
          %v7630 = vunpack.c.h.b16 %v7095
          %v7631 = vunpack.c.l.b16 %v7096
          %v7632 = vunpack.c.h.b16 %v7096
          %v7633 = vunpack.c.l.b16 %v7097
          %v7634 = vunpack.c.h.b16 %v7097
          %v7635 = vunpack.c.l.b16 %v7098
          %v7636 = vunpack.c.h.b16 %v7098
          %v7637 = vunpack.c.l.b16 %v7099
          %v7638 = vunpack.c.h.b16 %v7099
          %v7639 = vunpack.c.l.b16 %v7100
          %v7640 = vunpack.c.h.b16 %v7100
          %v7641 = vunpack.c.l.b16 %v7101
          %v7642 = vunpack.c.h.b16 %v7101
          %v7643 = vunpack.c.l.b16 %v7102
          %v7644 = vunpack.c.h.b16 %v7102
          %v7645 = vunpack.c.l.b16 %v7103
          %v7646 = vunpack.c.h.b16 %v7103
          %v7647 = vunpack.c.l.b16 %v7104
          %v7648 = vunpack.c.h.b16 %v7104
          %v7649 = vunpack.c.l.b16 %v7105
          %v7650 = vunpack.c.h.b16 %v7105
          %v7651 = vunpack.c.l.b16 %v7106
          %v7652 = vunpack.c.h.b16 %v7106
          %v7653 = vunpack.c.l.b16 %v7107
          %v7654 = vunpack.c.h.b16 %v7107
          %v7655 = vunpack.c.l.b16 %v7108
          %v7656 = vunpack.c.h.b16 %v7108
          %v7657 = vunpack.c.l.b16 %v7109
          %v7658 = vunpack.c.h.b16 %v7109
          %v7659 = vunpack.c.l.b16 %v7110
          %v7660 = vunpack.c.h.b16 %v7110
          %v7661 = vunpack.c.l.b16 %v7111
          %v7662 = vunpack.c.h.b16 %v7111
          %v7663 = vunpack.c.l.b16 %v7112
          %v7664 = vunpack.c.h.b16 %v7112
          %v7665 = vunpack.c.l.b16 %v7113
          %v7666 = vunpack.c.h.b16 %v7113
          %v7667 = vunpack.c.l.b16 %v7114
          %v7668 = vunpack.c.h.b16 %v7114
          %v7669 = vunpack.c.l.b16 %v7115
          %v7670 = vunpack.c.h.b16 %v7115
          %v7671 = vunpack.c.l.b16 %v7116
          %v7672 = vunpack.c.h.b16 %v7116
          %v7673 = vunpack.c.l.b16 %v7117
          %v7674 = vunpack.c.h.b16 %v7117
          %v7675 = vunpack.c.l.b16 %v7118
          %v7676 = vunpack.c.h.b16 %v7118
          %v7677 = vunpack.c.l.b16 %v7119
          %v7678 = vunpack.c.h.b16 %v7119
          %v7679 = vunpack.c.l.b16 %v7120
          %v7680 = vunpack.c.h.b16 %v7120
          %v7681 = vunpack.c.l.b16 %v7121
          %v7682 = vunpack.c.h.b16 %v7121
          %v7683 = vunpack.c.l.b16 %v7122
          %v7684 = vunpack.c.h.b16 %v7122
          %v7685 = vunpack.c.l.b16 %v7123
          %v7686 = vunpack.c.h.b16 %v7123
          %v7687 = vunpack.c.l.b16 %v7124
          %v7688 = vunpack.c.h.b16 %v7124
          %v7689 = vunpack.c.l.b16 %v7125
          %v7690 = vunpack.c.h.b16 %v7125
          %v7691 = vunpack.c.l.b16 %v7126
          %v7692 = vunpack.c.h.b16 %v7126
          %v7693 = vunpack.c.l.b16 %v7127
          %v7694 = vunpack.c.h.b16 %v7127
          %v7695 = vunpack.c.l.b16 %v7128
          %v7696 = vunpack.c.h.b16 %v7128
          %v7697 = vunpack.c.l.b16 %v7129
          %v7698 = vunpack.c.h.b16 %v7129
          %v7699 = vunpack.c.l.b16 %v7130
          %v7700 = vunpack.c.h.b16 %v7130
          %v7701 = vunpack.c.l.b16 %v7131
          %v7702 = vunpack.c.h.b16 %v7131
          %v7703 = vunpack.c.l.b16 %v7132
          %v7704 = vunpack.c.h.b16 %v7132
          %v7705 = vunpack.c.l.b16 %v7133
          %v7706 = vunpack.c.h.b16 %v7133
          %v7707 = vunpack.c.l.b16 %v7134
          %v7708 = vunpack.c.h.b16 %v7134
          %v7709 = vunpack.c.l.b16 %v7135
          %v7710 = vunpack.c.h.b16 %v7135
          %v7711 = vunpack.c.l.b16 %v7136
          %v7712 = vunpack.c.h.b16 %v7136
          %v7713 = vunpack.c.l.b16 %v7137
          %v7714 = vunpack.c.h.b16 %v7137
          %v7715 = vunpack.c.l.b16 %v7138
          %v7716 = vunpack.c.h.b16 %v7138
          %v7717 = vunpack.c.l.b16 %v7139
          %v7718 = vunpack.c.h.b16 %v7139
          %v7719 = vunpack.c.l.b16 %v7140
          %v7720 = vunpack.c.h.b16 %v7140
          %v7721 = vunpack.c.l.b16 %v7141
          %v7722 = vunpack.c.h.b16 %v7141
          %v7723 = vunpack.c.l.b16 %v7142
          %v7724 = vunpack.c.h.b16 %v7142
          %v7725 = vunpack.c.l.b16 %v7143
          %v7726 = vunpack.c.h.b16 %v7143
          %v7727 = vunpack.c.l.b16 %v7144
          %v7728 = vunpack.c.h.b16 %v7144
          %v7729 = vunpack.c.l.b16 %v7145
          %v7730 = vunpack.c.h.b16 %v7145
          %v7731 = vunpack.c.l.b16 %v7146
          %v7732 = vunpack.c.h.b16 %v7146
          %v7733 = vpack.c.b16 %v7353, %v7349
          %v7734 = vpack.c.b16 %v7354, %v7350
          %v7735 = vpack.c.b16 %v7355, %v7351
          %v7736 = vpack.c.b16 %v7356, %v7352
          %v7737 = vpack.c.b16 %v7361, %v7357
          %v7738 = vpack.c.b16 %v7362, %v7358
          %v7739 = vpack.c.b16 %v7363, %v7359
          %v7740 = vpack.c.b16 %v7364, %v7360
          %v7741 = vpack.c.b16 %v7369, %v7365
          %v7742 = vpack.c.b16 %v7370, %v7366
          %v7743 = vpack.c.b16 %v7371, %v7367
          %v7744 = vpack.c.b16 %v7372, %v7368
          %v7745 = vpack.c.b16 %v7377, %v7373
          %v7746 = vpack.c.b16 %v7378, %v7374
          %v7747 = vpack.c.b16 %v7379, %v7375
          %v7748 = vpack.c.b16 %v7380, %v7376
          %v7749 = vpack.c.b16 %v7385, %v7381
          %v7750 = vpack.c.b16 %v7386, %v7382
          %v7751 = vpack.c.b16 %v7387, %v7383
          %v7752 = vpack.c.b16 %v7388, %v7384
          %v7753 = vpack.c.b16 %v7393, %v7389
          %v7754 = vpack.c.b16 %v7394, %v7390
          %v7755 = vpack.c.b16 %v7395, %v7391
          %v7756 = vpack.c.b16 %v7396, %v7392
          %v7757 = vpack.c.b16 %v7401, %v7397
          %v7758 = vpack.c.b16 %v7402, %v7398
          %v7759 = vpack.c.b16 %v7403, %v7399
          %v7760 = vpack.c.b16 %v7404, %v7400
          %v7761 = vpack.c.b16 %v7409, %v7405
          %v7762 = vpack.c.b16 %v7410, %v7406
          %v7763 = vpack.c.b16 %v7411, %v7407
          %v7764 = vpack.c.b16 %v7412, %v7408
          %v7765 = vpack.c.b16 %v7417, %v7413
          %v7766 = vpack.c.b16 %v7418, %v7414
          %v7767 = vpack.c.b16 %v7419, %v7415
          %v7768 = vpack.c.b16 %v7420, %v7416
          %v7769 = vpack.c.b16 %v7425, %v7421
          %v7770 = vpack.c.b16 %v7426, %v7422
          %v7771 = vpack.c.b16 %v7427, %v7423
          %v7772 = vpack.c.b16 %v7428, %v7424
          %v7773 = vpack.c.b16 %v7433, %v7429
          %v7774 = vpack.c.b16 %v7434, %v7430
          %v7775 = vpack.c.b16 %v7435, %v7431
          %v7776 = vpack.c.b16 %v7436, %v7432
          %v7777 = vpack.c.b16 %v7441, %v7437
          %v7778 = vpack.c.b16 %v7442, %v7438
          %v7779 = vpack.c.b16 %v7443, %v7439
          %v7780 = vpack.c.b16 %v7444, %v7440
          %v7781 = vpack.c.b16 %v7449, %v7445
          %v7782 = vpack.c.b16 %v7450, %v7446
          %v7783 = vpack.c.b16 %v7451, %v7447
          %v7784 = vpack.c.b16 %v7452, %v7448
          %v7785 = vpack.c.b16 %v7457, %v7453
          %v7786 = vpack.c.b16 %v7458, %v7454
          %v7787 = vpack.c.b16 %v7459, %v7455
          %v7788 = vpack.c.b16 %v7460, %v7456
          %v7789 = vpack.c.b16 %v7465, %v7461
          %v7790 = vpack.c.b16 %v7466, %v7462
          %v7791 = vpack.c.b16 %v7467, %v7463
          %v7792 = vpack.c.b16 %v7468, %v7464
          %v7793 = vpack.c.b16 %v7473, %v7469
          %v7794 = vpack.c.b16 %v7474, %v7470
          %v7795 = vpack.c.b16 %v7475, %v7471
          %v7796 = vpack.c.b16 %v7476, %v7472
          %v7797 = vpack.c.b16 %v7481, %v7477
          %v7798 = vpack.c.b16 %v7482, %v7478
          %v7799 = vpack.c.b16 %v7483, %v7479
          %v7800 = vpack.c.b16 %v7484, %v7480
          %v7801 = vpack.c.b16 %v7489, %v7485
          %v7802 = vpack.c.b16 %v7490, %v7486
          %v7803 = vpack.c.b16 %v7491, %v7487
          %v7804 = vpack.c.b16 %v7492, %v7488
          %v7805 = vpack.c.b16 %v7497, %v7493
          %v7806 = vpack.c.b16 %v7498, %v7494
          %v7807 = vpack.c.b16 %v7499, %v7495
          %v7808 = vpack.c.b16 %v7500, %v7496
          %v7809 = vpack.c.b16 %v7505, %v7501
          %v7810 = vpack.c.b16 %v7506, %v7502
          %v7811 = vpack.c.b16 %v7507, %v7503
          %v7812 = vpack.c.b16 %v7508, %v7504
          %v7813 = vpack.c.b16 %v7513, %v7509
          %v7814 = vpack.c.b16 %v7514, %v7510
          %v7815 = vpack.c.b16 %v7515, %v7511
          %v7816 = vpack.c.b16 %v7516, %v7512
          %v7817 = vpack.c.b16 %v7521, %v7517
          %v7818 = vpack.c.b16 %v7522, %v7518
          %v7819 = vpack.c.b16 %v7523, %v7519
          %v7820 = vpack.c.b16 %v7524, %v7520
          %v7821 = vpack.c.b16 %v7529, %v7525
          %v7822 = vpack.c.b16 %v7530, %v7526
          %v7823 = vpack.c.b16 %v7531, %v7527
          %v7824 = vpack.c.b16 %v7532, %v7528
          %v7825 = vpack.c.b16 %v7537, %v7533
          %v7826 = vpack.c.b16 %v7538, %v7534
          %v7827 = vpack.c.b16 %v7539, %v7535
          %v7828 = vpack.c.b16 %v7540, %v7536
          %v7829 = vpack.c.b16 %v7545, %v7541
          %v7830 = vpack.c.b16 %v7546, %v7542
          %v7831 = vpack.c.b16 %v7547, %v7543
          %v7832 = vpack.c.b16 %v7548, %v7544
          %v7833 = vpack.c.b16 %v7553, %v7549
          %v7834 = vpack.c.b16 %v7554, %v7550
          %v7835 = vpack.c.b16 %v7555, %v7551
          %v7836 = vpack.c.b16 %v7556, %v7552
          %v7837 = vpack.c.b16 %v7561, %v7557
          %v7838 = vpack.c.b16 %v7562, %v7558
          %v7839 = vpack.c.b16 %v7563, %v7559
          %v7840 = vpack.c.b16 %v7564, %v7560
          %v7841 = vpack.c.b16 %v7569, %v7565
          %v7842 = vpack.c.b16 %v7570, %v7566
          %v7843 = vpack.c.b16 %v7571, %v7567
          %v7844 = vpack.c.b16 %v7572, %v7568
          %v7845 = vpack.c.b16 %v7577, %v7573
          %v7846 = vpack.c.b16 %v7578, %v7574
          %v7847 = vpack.c.b16 %v7579, %v7575
          %v7848 = vpack.c.b16 %v7580, %v7576
          %v7849 = vpack.c.b16 %v7585, %v7581
          %v7850 = vpack.c.b16 %v7586, %v7582
          %v7851 = vpack.c.b16 %v7587, %v7583
          %v7852 = vpack.c.b16 %v7588, %v7584
          %v7853 = vpack.c.b16 %v7593, %v7589
          %v7854 = vpack.c.b16 %v7594, %v7590
          %v7855 = vpack.c.b16 %v7595, %v7591
          %v7856 = vpack.c.b16 %v7596, %v7592
          %v7857 = vpack.c.b16 %v7601, %v7597
          %v7858 = vpack.c.b16 %v7602, %v7598
          %v7859 = vpack.c.b16 %v7603, %v7599
          %v7860 = vpack.c.b16 %v7604, %v7600
          %v7861 = vpack.c.b16 %v7609, %v7605
          %v7862 = vpack.c.b16 %v7610, %v7606
          %v7863 = vpack.c.b16 %v7611, %v7607
          %v7864 = vpack.c.b16 %v7612, %v7608
          %v7865 = vpack.c.b16 %v7617, %v7613
          %v7866 = vpack.c.b16 %v7618, %v7614
          %v7867 = vpack.c.b16 %v7619, %v7615
          %v7868 = vpack.c.b16 %v7620, %v7616
          %v7869 = vpack.c.b16 %v7625, %v7621
          %v7870 = vpack.c.b16 %v7626, %v7622
          %v7871 = vpack.c.b16 %v7627, %v7623
          %v7872 = vpack.c.b16 %v7628, %v7624
          %v7873 = vpack.c.b16 %v7633, %v7629
          %v7874 = vpack.c.b16 %v7634, %v7630
          %v7875 = vpack.c.b16 %v7635, %v7631
          %v7876 = vpack.c.b16 %v7636, %v7632
          %v7877 = vpack.c.b16 %v7641, %v7637
          %v7878 = vpack.c.b16 %v7642, %v7638
          %v7879 = vpack.c.b16 %v7643, %v7639
          %v7880 = vpack.c.b16 %v7644, %v7640
          %v7881 = vpack.c.b16 %v7649, %v7645
          %v7882 = vpack.c.b16 %v7650, %v7646
          %v7883 = vpack.c.b16 %v7651, %v7647
          %v7884 = vpack.c.b16 %v7652, %v7648
          %v7885 = vpack.c.b16 %v7657, %v7653
          %v7886 = vpack.c.b16 %v7658, %v7654
          %v7887 = vpack.c.b16 %v7659, %v7655
          %v7888 = vpack.c.b16 %v7660, %v7656
          %v7889 = vpack.c.b16 %v7665, %v7661
          %v7890 = vpack.c.b16 %v7666, %v7662
          %v7891 = vpack.c.b16 %v7667, %v7663
          %v7892 = vpack.c.b16 %v7668, %v7664
          %v7893 = vpack.c.b16 %v7673, %v7669
          %v7894 = vpack.c.b16 %v7674, %v7670
          %v7895 = vpack.c.b16 %v7675, %v7671
          %v7896 = vpack.c.b16 %v7676, %v7672
          %v7897 = vpack.c.b16 %v7681, %v7677
          %v7898 = vpack.c.b16 %v7682, %v7678
          %v7899 = vpack.c.b16 %v7683, %v7679
          %v7900 = vpack.c.b16 %v7684, %v7680
          %v7901 = vpack.c.b16 %v7689, %v7685
          %v7902 = vpack.c.b16 %v7690, %v7686
          %v7903 = vpack.c.b16 %v7691, %v7687
          %v7904 = vpack.c.b16 %v7692, %v7688
          %v7905 = vpack.c.b16 %v7697, %v7693
          %v7906 = vpack.c.b16 %v7698, %v7694
          %v7907 = vpack.c.b16 %v7699, %v7695
          %v7908 = vpack.c.b16 %v7700, %v7696
          %v7909 = vpack.c.b16 %v7705, %v7701
          %v7910 = vpack.c.b16 %v7706, %v7702
          %v7911 = vpack.c.b16 %v7707, %v7703
          %v7912 = vpack.c.b16 %v7708, %v7704
          %v7913 = vpack.c.b16 %v7713, %v7709
          %v7914 = vpack.c.b16 %v7714, %v7710
          %v7915 = vpack.c.b16 %v7715, %v7711
          %v7916 = vpack.c.b16 %v7716, %v7712
          %v7917 = vpack.c.b16 %v7721, %v7717
          %v7918 = vpack.c.b16 %v7722, %v7718
          %v7919 = vpack.c.b16 %v7723, %v7719
          %v7920 = vpack.c.b16 %v7724, %v7720
          %v7921 = vpack.c.b16 %v7729, %v7725
          %v7922 = vpack.c.b16 %v7730, %v7726
          %v7923 = vpack.c.b16 %v7731, %v7727
          %v7924 = vpack.c.b16 %v7732, %v7728
          %8117 = vmatpush.bf16.msra.mxu0 %v7761
          %8118 = vmatpush.bf16.msra.mxu0 %v7757
          %8119 = vmatpush.bf16.msra.mxu0 %v7753
          %8120 = vmatpush.bf16.msra.mxu0 %v7749
          %8121 = vmatpush.bf16.msra.mxu0 %v7745
          %8122 = vmatpush.bf16.msra.mxu0 %v7741
          %8123 = vmatpush.bf16.msra.mxu0 %v7737
          %8124 = vmatpush.bf16.msra.mxu0 %v7733
          %8125 = vmatmul.bf16.gmra.mxu0 %v6949
          %v8126 = vpop.f32.mrf.mxu0
          %v8127 = vadd.f32 %v7149, %v8126
          %v8128 = vpop.f32.mrf.mxu0
          %v8129 = vadd.f32 %v7149, %v8128
          %8130 = vdwg.mxu0
          %8131 = vmatpush.bf16.msra.mxu0 %v7793
          %8132 = vmatpush.bf16.msra.mxu0 %v7789
          %8133 = vmatpush.bf16.msra.mxu0 %v7785
          %8134 = vmatpush.bf16.msra.mxu0 %v7781
          %8135 = vmatpush.bf16.msra.mxu0 %v7777
          %8136 = vmatpush.bf16.msra.mxu0 %v7773
          %8137 = vmatpush.bf16.msra.mxu0 %v7769
          %8138 = vmatpush.bf16.msra.mxu0 %v7765
          %8139 = vmatmul.bf16.gmra.mxu0 %v6950
          %v8140 = vpop.f32.mrf.mxu0
          %v8141 = vadd.f32 %v8127, %v8140
          %v8142 = vpop.f32.mrf.mxu0
          %v8143 = vadd.f32 %v8129, %v8142
          %8144 = vdwg.mxu0
          %8145 = vmatpush.bf16.msra.mxu0 %v7825
          %8146 = vmatpush.bf16.msra.mxu0 %v7821
          %8147 = vmatpush.bf16.msra.mxu0 %v7817
          %8148 = vmatpush.bf16.msra.mxu0 %v7813
          %8149 = vmatpush.bf16.msra.mxu0 %v7809
          %8150 = vmatpush.bf16.msra.mxu0 %v7805
          %8151 = vmatpush.bf16.msra.mxu0 %v7801
          %8152 = vmatpush.bf16.msra.mxu0 %v7797
          %8153 = vmatmul.bf16.gmra.mxu0 %v6951
          %v8154 = vpop.f32.mrf.mxu0
          %v8155 = vadd.f32 %v8141, %v8154
          %v8156 = vpop.f32.mrf.mxu0
          %v8157 = vadd.f32 %v8143, %v8156
          %8158 = vdwg.mxu0
          %8159 = vmatpush.bf16.msra.mxu0 %v7857
          %8160 = vmatpush.bf16.msra.mxu0 %v7853
          %8161 = vmatpush.bf16.msra.mxu0 %v7849
          %8162 = vmatpush.bf16.msra.mxu0 %v7845
          %8163 = vmatpush.bf16.msra.mxu0 %v7841
          %8164 = vmatpush.bf16.msra.mxu0 %v7837
          %8165 = vmatpush.bf16.msra.mxu0 %v7833
          %8166 = vmatpush.bf16.msra.mxu0 %v7829
          %8167 = vmatmul.bf16.gmra.mxu0 %v6952
          %v8168 = vpop.f32.mrf.mxu0
          %v8169 = vadd.f32 %v8155, %v8168
          %v8170 = vpop.f32.mrf.mxu0
          %v8171 = vadd.f32 %v8157, %v8170
          %8172 = vdwg.mxu0
          %8173 = vmatpush.bf16.msra.mxu0 %v7889
          %8174 = vmatpush.bf16.msra.mxu0 %v7885
          %8175 = vmatpush.bf16.msra.mxu0 %v7881
          %8176 = vmatpush.bf16.msra.mxu0 %v7877
          %8177 = vmatpush.bf16.msra.mxu0 %v7873
          %8178 = vmatpush.bf16.msra.mxu0 %v7869
          %8179 = vmatpush.bf16.msra.mxu0 %v7865
          %8180 = vmatpush.bf16.msra.mxu0 %v7861
          %8181 = vmatmul.bf16.gmra.mxu0 %v6953
          %v8182 = vpop.f32.mrf.mxu0
          %v8183 = vadd.f32 %v8169, %v8182
          %v8184 = vpop.f32.mrf.mxu0
          %v8185 = vadd.f32 %v8171, %v8184
          %8186 = vdwg.mxu0
          %8187 = vmatpush.bf16.msra.mxu0 %v7921
          %8188 = vmatpush.bf16.msra.mxu0 %v7917
          %8189 = vmatpush.bf16.msra.mxu0 %v7913
          %8190 = vmatpush.bf16.msra.mxu0 %v7909
          %8191 = vmatpush.bf16.msra.mxu0 %v7905
          %8192 = vmatpush.bf16.msra.mxu0 %v7901
          %8193 = vmatpush.bf16.msra.mxu0 %v7897
          %8194 = vmatpush.bf16.msra.mxu0 %v7893
          %8195 = vmatmul.bf16.gmra.mxu0 %v6954
          %v8196 = vpop.f32.mrf.mxu0
          %v8197 = vadd.f32 %v8183, %v8196
          %v8198 = vpop.f32.mrf.mxu0
          %v8199 = vadd.f32 %v8185, %v8198
          %8200 = vdwg.mxu0
          %8201 = vmatpush.bf16.msra.mxu0 %v7762
          %8202 = vmatpush.bf16.msra.mxu0 %v7758
          %8203 = vmatpush.bf16.msra.mxu0 %v7754
          %8204 = vmatpush.bf16.msra.mxu0 %v7750
          %8205 = vmatpush.bf16.msra.mxu0 %v7746
          %8206 = vmatpush.bf16.msra.mxu0 %v7742
          %8207 = vmatpush.bf16.msra.mxu0 %v7738
          %8208 = vmatpush.bf16.msra.mxu0 %v7734
          %8209 = vmatmul.bf16.gmra.mxu0 %v6949
          %v8210 = vpop.f32.mrf.mxu0
          %v8211 = vadd.f32 %v7150, %v8210
          %v8212 = vpop.f32.mrf.mxu0
          %v8213 = vadd.f32 %v7150, %v8212
          %8214 = vdwg.mxu0
          %8215 = vmatpush.bf16.msra.mxu0 %v7794
          %8216 = vmatpush.bf16.msra.mxu0 %v7790
          %8217 = vmatpush.bf16.msra.mxu0 %v7786
          %8218 = vmatpush.bf16.msra.mxu0 %v7782
          %8219 = vmatpush.bf16.msra.mxu0 %v7778
          %8220 = vmatpush.bf16.msra.mxu0 %v7774
          %8221 = vmatpush.bf16.msra.mxu0 %v7770
          %8222 = vmatpush.bf16.msra.mxu0 %v7766
          %8223 = vmatmul.bf16.gmra.mxu0 %v6950
          %v8224 = vpop.f32.mrf.mxu0
          %v8225 = vadd.f32 %v8211, %v8224
          %v8226 = vpop.f32.mrf.mxu0
          %v8227 = vadd.f32 %v8213, %v8226
          %8228 = vdwg.mxu0
          %8229 = vmatpush.bf16.msra.mxu0 %v7826
          %8230 = vmatpush.bf16.msra.mxu0 %v7822
          %8231 = vmatpush.bf16.msra.mxu0 %v7818
          %8232 = vmatpush.bf16.msra.mxu0 %v7814
          %8233 = vmatpush.bf16.msra.mxu0 %v7810
          %8234 = vmatpush.bf16.msra.mxu0 %v7806
          %8235 = vmatpush.bf16.msra.mxu0 %v7802
          %8236 = vmatpush.bf16.msra.mxu0 %v7798
          %8237 = vmatmul.bf16.gmra.mxu0 %v6951
          %v8238 = vpop.f32.mrf.mxu0
          %v8239 = vadd.f32 %v8225, %v8238
          %v8240 = vpop.f32.mrf.mxu0
          %v8241 = vadd.f32 %v8227, %v8240
          %8242 = vdwg.mxu0
          %8243 = vmatpush.bf16.msra.mxu0 %v7858
          %8244 = vmatpush.bf16.msra.mxu0 %v7854
          %8245 = vmatpush.bf16.msra.mxu0 %v7850
          %8246 = vmatpush.bf16.msra.mxu0 %v7846
          %8247 = vmatpush.bf16.msra.mxu0 %v7842
          %8248 = vmatpush.bf16.msra.mxu0 %v7838
          %8249 = vmatpush.bf16.msra.mxu0 %v7834
          %8250 = vmatpush.bf16.msra.mxu0 %v7830
          %8251 = vmatmul.bf16.gmra.mxu0 %v6952
          %v8252 = vpop.f32.mrf.mxu0
          %v8253 = vadd.f32 %v8239, %v8252
          %v8254 = vpop.f32.mrf.mxu0
          %v8255 = vadd.f32 %v8241, %v8254
          %8256 = vdwg.mxu0
          %8257 = vmatpush.bf16.msra.mxu0 %v7890
          %8258 = vmatpush.bf16.msra.mxu0 %v7886
          %8259 = vmatpush.bf16.msra.mxu0 %v7882
          %8260 = vmatpush.bf16.msra.mxu0 %v7878
          %8261 = vmatpush.bf16.msra.mxu0 %v7874
          %8262 = vmatpush.bf16.msra.mxu0 %v7870
          %8263 = vmatpush.bf16.msra.mxu0 %v7866
          %8264 = vmatpush.bf16.msra.mxu0 %v7862
          %8265 = vmatmul.bf16.gmra.mxu0 %v6953
          %v8266 = vpop.f32.mrf.mxu0
          %v8267 = vadd.f32 %v8253, %v8266
          %v8268 = vpop.f32.mrf.mxu0
          %v8269 = vadd.f32 %v8255, %v8268
          %8270 = vdwg.mxu0
          %8271 = vmatpush.bf16.msra.mxu0 %v7922
          %8272 = vmatpush.bf16.msra.mxu0 %v7918
          %8273 = vmatpush.bf16.msra.mxu0 %v7914
          %8274 = vmatpush.bf16.msra.mxu0 %v7910
          %8275 = vmatpush.bf16.msra.mxu0 %v7906
          %8276 = vmatpush.bf16.msra.mxu0 %v7902
          %8277 = vmatpush.bf16.msra.mxu0 %v7898
          %8278 = vmatpush.bf16.msra.mxu0 %v7894
          %8279 = vmatmul.bf16.gmra.mxu0 %v6954
          %v8280 = vpop.f32.mrf.mxu0
          %v8281 = vadd.f32 %v8267, %v8280
          %v8282 = vpop.f32.mrf.mxu0
          %v8283 = vadd.f32 %v8269, %v8282
          %8284 = vdwg.mxu0
          %8285 = vmatpush.bf16.msra.mxu0 %v7763
          %8286 = vmatpush.bf16.msra.mxu0 %v7759
          %8287 = vmatpush.bf16.msra.mxu0 %v7755
          %8288 = vmatpush.bf16.msra.mxu0 %v7751
          %8289 = vmatpush.bf16.msra.mxu0 %v7747
          %8290 = vmatpush.bf16.msra.mxu0 %v7743
          %8291 = vmatpush.bf16.msra.mxu0 %v7739
          %8292 = vmatpush.bf16.msra.mxu0 %v7735
          %8293 = vmatmul.bf16.gmra.mxu0 %v6949
          %v8294 = vpop.f32.mrf.mxu0
          %v8295 = vadd.f32 %v7151, %v8294
          %v8296 = vpop.f32.mrf.mxu0
          %v8297 = vadd.f32 %v7151, %v8296
          %8298 = vdwg.mxu0
          %8299 = vmatpush.bf16.msra.mxu0 %v7795
          %8300 = vmatpush.bf16.msra.mxu0 %v7791
          %8301 = vmatpush.bf16.msra.mxu0 %v7787
          %8302 = vmatpush.bf16.msra.mxu0 %v7783
          %8303 = vmatpush.bf16.msra.mxu0 %v7779
          %8304 = vmatpush.bf16.msra.mxu0 %v7775
          %8305 = vmatpush.bf16.msra.mxu0 %v7771
          %8306 = vmatpush.bf16.msra.mxu0 %v7767
          %8307 = vmatmul.bf16.gmra.mxu0 %v6950
          %v8308 = vpop.f32.mrf.mxu0
          %v8309 = vadd.f32 %v8295, %v8308
          %v8310 = vpop.f32.mrf.mxu0
          %v8311 = vadd.f32 %v8297, %v8310
          %8312 = vdwg.mxu0
          %8313 = vmatpush.bf16.msra.mxu0 %v7827
          %8314 = vmatpush.bf16.msra.mxu0 %v7823
          %8315 = vmatpush.bf16.msra.mxu0 %v7819
          %8316 = vmatpush.bf16.msra.mxu0 %v7815
          %8317 = vmatpush.bf16.msra.mxu0 %v7811
          %8318 = vmatpush.bf16.msra.mxu0 %v7807
          %8319 = vmatpush.bf16.msra.mxu0 %v7803
          %8320 = vmatpush.bf16.msra.mxu0 %v7799
          %8321 = vmatmul.bf16.gmra.mxu0 %v6951
          %v8322 = vpop.f32.mrf.mxu0
          %v8323 = vadd.f32 %v8309, %v8322
          %v8324 = vpop.f32.mrf.mxu0
          %v8325 = vadd.f32 %v8311, %v8324
          %8326 = vdwg.mxu0
          %8327 = vmatpush.bf16.msra.mxu0 %v7859
          %8328 = vmatpush.bf16.msra.mxu0 %v7855
          %8329 = vmatpush.bf16.msra.mxu0 %v7851
          %8330 = vmatpush.bf16.msra.mxu0 %v7847
          %8331 = vmatpush.bf16.msra.mxu0 %v7843
          %8332 = vmatpush.bf16.msra.mxu0 %v7839
          %8333 = vmatpush.bf16.msra.mxu0 %v7835
          %8334 = vmatpush.bf16.msra.mxu0 %v7831
          %8335 = vmatmul.bf16.gmra.mxu0 %v6952
          %v8336 = vpop.f32.mrf.mxu0
          %v8337 = vadd.f32 %v8323, %v8336
          %v8338 = vpop.f32.mrf.mxu0
          %v8339 = vadd.f32 %v8325, %v8338
          %8340 = vdwg.mxu0
          %8341 = vmatpush.bf16.msra.mxu0 %v7891
          %8342 = vmatpush.bf16.msra.mxu0 %v7887
          %8343 = vmatpush.bf16.msra.mxu0 %v7883
          %8344 = vmatpush.bf16.msra.mxu0 %v7879
          %8345 = vmatpush.bf16.msra.mxu0 %v7875
          %8346 = vmatpush.bf16.msra.mxu0 %v7871
          %8347 = vmatpush.bf16.msra.mxu0 %v7867
          %8348 = vmatpush.bf16.msra.mxu0 %v7863
          %8349 = vmatmul.bf16.gmra.mxu0 %v6953
          %v8350 = vpop.f32.mrf.mxu0
          %v8351 = vadd.f32 %v8337, %v8350
          %v8352 = vpop.f32.mrf.mxu0
          %v8353 = vadd.f32 %v8339, %v8352
          %8354 = vdwg.mxu0
          %8355 = vmatpush.bf16.msra.mxu0 %v7923
          %8356 = vmatpush.bf16.msra.mxu0 %v7919
          %8357 = vmatpush.bf16.msra.mxu0 %v7915
          %8358 = vmatpush.bf16.msra.mxu0 %v7911
          %8359 = vmatpush.bf16.msra.mxu0 %v7907
          %8360 = vmatpush.bf16.msra.mxu0 %v7903
          %8361 = vmatpush.bf16.msra.mxu0 %v7899
          %8362 = vmatpush.bf16.msra.mxu0 %v7895
          %8363 = vmatmul.bf16.gmra.mxu0 %v6954
          %v8364 = vpop.f32.mrf.mxu0
          %v8365 = vadd.f32 %v8351, %v8364
          %v8366 = vpop.f32.mrf.mxu0
          %v8367 = vadd.f32 %v8353, %v8366
          %8368 = vdwg.mxu0
          %8369 = vmatpush.bf16.msra.mxu0 %v7764
          %8370 = vmatpush.bf16.msra.mxu0 %v7760
          %8371 = vmatpush.bf16.msra.mxu0 %v7756
          %8372 = vmatpush.bf16.msra.mxu0 %v7752
          %8373 = vmatpush.bf16.msra.mxu0 %v7748
          %8374 = vmatpush.bf16.msra.mxu0 %v7744
          %8375 = vmatpush.bf16.msra.mxu0 %v7740
          %8376 = vmatpush.bf16.msra.mxu0 %v7736
          %8377 = vmatmul.bf16.gmra.mxu0 %v6949
          %v8378 = vpop.f32.mrf.mxu0
          %v8379 = vadd.f32 %v7152, %v8378
          %v8380 = vpop.f32.mrf.mxu0
          %v8381 = vadd.f32 %v7152, %v8380
          %8382 = vdwg.mxu0
          %8383 = vmatpush.bf16.msra.mxu0 %v7796
          %8384 = vmatpush.bf16.msra.mxu0 %v7792
          %8385 = vmatpush.bf16.msra.mxu0 %v7788
          %8386 = vmatpush.bf16.msra.mxu0 %v7784
          %8387 = vmatpush.bf16.msra.mxu0 %v7780
          %8388 = vmatpush.bf16.msra.mxu0 %v7776
          %8389 = vmatpush.bf16.msra.mxu0 %v7772
          %8390 = vmatpush.bf16.msra.mxu0 %v7768
          %8391 = vmatmul.bf16.gmra.mxu0 %v6950
          %v8392 = vpop.f32.mrf.mxu0
          %v8393 = vadd.f32 %v8379, %v8392
          %v8394 = vpop.f32.mrf.mxu0
          %v8395 = vadd.f32 %v8381, %v8394
          %8396 = vdwg.mxu0
          %8397 = vmatpush.bf16.msra.mxu0 %v7828
          %8398 = vmatpush.bf16.msra.mxu0 %v7824
          %8399 = vmatpush.bf16.msra.mxu0 %v7820
          %8400 = vmatpush.bf16.msra.mxu0 %v7816
          %8401 = vmatpush.bf16.msra.mxu0 %v7812
          %8402 = vmatpush.bf16.msra.mxu0 %v7808
          %8403 = vmatpush.bf16.msra.mxu0 %v7804
          %8404 = vmatpush.bf16.msra.mxu0 %v7800
          %8405 = vmatmul.bf16.gmra.mxu0 %v6951
          %v8406 = vpop.f32.mrf.mxu0
          %v8407 = vadd.f32 %v8393, %v8406
          %v8408 = vpop.f32.mrf.mxu0
          %v8409 = vadd.f32 %v8395, %v8408
          %8410 = vdwg.mxu0
          %8411 = vmatpush.bf16.msra.mxu0 %v7860
          %8412 = vmatpush.bf16.msra.mxu0 %v7856
          %8413 = vmatpush.bf16.msra.mxu0 %v7852
          %8414 = vmatpush.bf16.msra.mxu0 %v7848
          %8415 = vmatpush.bf16.msra.mxu0 %v7844
          %8416 = vmatpush.bf16.msra.mxu0 %v7840
          %8417 = vmatpush.bf16.msra.mxu0 %v7836
          %8418 = vmatpush.bf16.msra.mxu0 %v7832
          %8419 = vmatmul.bf16.gmra.mxu0 %v6952
          %v8420 = vpop.f32.mrf.mxu0
          %v8421 = vadd.f32 %v8407, %v8420
          %v8422 = vpop.f32.mrf.mxu0
          %v8423 = vadd.f32 %v8409, %v8422
          %8424 = vdwg.mxu0
          %8425 = vmatpush.bf16.msra.mxu0 %v7892
          %8426 = vmatpush.bf16.msra.mxu0 %v7888
          %8427 = vmatpush.bf16.msra.mxu0 %v7884
          %8428 = vmatpush.bf16.msra.mxu0 %v7880
          %8429 = vmatpush.bf16.msra.mxu0 %v7876
          %8430 = vmatpush.bf16.msra.mxu0 %v7872
          %8431 = vmatpush.bf16.msra.mxu0 %v7868
          %8432 = vmatpush.bf16.msra.mxu0 %v7864
          %8433 = vmatmul.bf16.gmra.mxu0 %v6953
          %v8434 = vpop.f32.mrf.mxu0
          %v8435 = vadd.f32 %v8421, %v8434
          %v8436 = vpop.f32.mrf.mxu0
          %v8437 = vadd.f32 %v8423, %v8436
          %8438 = vdwg.mxu0
          %8439 = vmatpush.bf16.msra.mxu0 %v7924
          %8440 = vmatpush.bf16.msra.mxu0 %v7920
          %8441 = vmatpush.bf16.msra.mxu0 %v7916
          %8442 = vmatpush.bf16.msra.mxu0 %v7912
          %8443 = vmatpush.bf16.msra.mxu0 %v7908
          %8444 = vmatpush.bf16.msra.mxu0 %v7904
          %8445 = vmatpush.bf16.msra.mxu0 %v7900
          %8446 = vmatpush.bf16.msra.mxu0 %v7896
          %8447 = vmatmul.bf16.gmra.mxu0 %v6954
          %v8448 = vpop.f32.mrf.mxu0
          %v8449 = vadd.f32 %v8435, %v8448
          %v8450 = vpop.f32.mrf.mxu0
          %v8451 = vadd.f32 %v8437, %v8450
          %8452 = vdwg.mxu0
          %v8453 = vmax.f32 %v8197, 0.0
          %v8454 = vmax.f32 %v8281, 0.0
          %v8455 = vmax.f32 %v8365, 0.0
          %v8456 = vmax.f32 %v8449, 0.0
          %v8457 = vmax.f32 %v8199, 0.0
          %v8458 = vmax.f32 %v8283, 0.0
          %v8459 = vmax.f32 %v8367, 0.0
          %v8460 = vmax.f32 %v8451, 0.0
          %v8461 = vpack.c.bf16 %v8457, %v8453
          %v8462 = vpack.c.bf16 %v8458, %v8454
          %v8463 = vpack.c.bf16 %v8459, %v8455
          %v8464 = vpack.c.bf16 %v8460, %v8456
          %v8465 = vld [vmem:[#allocation11] sm:$0xf]
          %v8466 = vld [vmem:[#allocation11 + $0x4] sm:$0xf]
          %v8467 = vld [vmem:[#allocation11 + $0x8] sm:$0xf]
          %v8468 = vld [vmem:[#allocation11 + $0xc] sm:$0xf]
          %v8469 = vld [vmem:[#allocation11 + $0x10] sm:$0xf]
          %v8470 = vld [vmem:[#allocation11 + $0x14] sm:$0xf]
          %v8471 = vld [vmem:[#allocation11 + $0x18] sm:$0xf]
          %v8472 = vld [vmem:[#allocation11 + $0x1c] sm:$0xf]
          %v8473 = vld [vmem:[#allocation11 + $0x20] sm:$0xf]
          %v8474 = vld [vmem:[#allocation11 + $0x24] sm:$0xf]
          %v8475 = vld [vmem:[#allocation11 + $0x28] sm:$0xf]
          %v8476 = vld [vmem:[#allocation11 + $0x2c] sm:$0xf]
          %v8477 = vld [vmem:[#allocation11 + $0x30] sm:$0xf]
          %v8478 = vld [vmem:[#allocation11 + $0x34] sm:$0xf]
          %v8479 = vld [vmem:[#allocation11 + $0x38] sm:$0xf]
          %v8480 = vld [vmem:[#allocation11 + $0x3c] sm:$0xf]
          %v8481 = vld [vmem:[#allocation11 + $0x40] sm:$0xf]
          %v8482 = vld [vmem:[#allocation11 + $0x44] sm:$0xf]
          %v8483 = vld [vmem:[#allocation11 + $0x48] sm:$0xf]
          %v8484 = vld [vmem:[#allocation11 + $0x4c] sm:$0xf]
          %v8485 = vld [vmem:[#allocation11 + $0x50] sm:$0xf]
          %v8486 = vld [vmem:[#allocation11 + $0x54] sm:$0xf]
          %v8487 = vld [vmem:[#allocation11 + $0x58] sm:$0xf]
          %v8488 = vld [vmem:[#allocation11 + $0x5c] sm:$0xf]
          %v8489 = vld [vmem:[#allocation11 + $0x60] sm:$0xf]
          %v8490 = vld [vmem:[#allocation11 + $0x64] sm:$0xf]
          %v8491 = vld [vmem:[#allocation11 + $0x68] sm:$0xf]
          %v8492 = vld [vmem:[#allocation11 + $0x6c] sm:$0xf]
          %v8493 = vld [vmem:[#allocation11 + $0x70] sm:$0xf]
          %v8494 = vld [vmem:[#allocation11 + $0x74] sm:$0xf]
          %v8495 = vld [vmem:[#allocation11 + $0x78] sm:$0xf]
          %v8496 = vld [vmem:[#allocation11 + $0x7c] sm:$0xf]
          %v8497 = vld [vmem:[#allocation11 + $0x80] sm:$0xf]
          %v8498 = vld [vmem:[#allocation11 + $0x84] sm:$0xf]
          %v8499 = vld [vmem:[#allocation11 + $0x88] sm:$0xf]
          %v8500 = vld [vmem:[#allocation11 + $0x8c] sm:$0xf]
          %v8501 = vld [vmem:[#allocation11 + $0x90] sm:$0xf]
          %v8502 = vld [vmem:[#allocation11 + $0x94] sm:$0xf]
          %v8503 = vld [vmem:[#allocation11 + $0x98] sm:$0xf]
          %v8504 = vld [vmem:[#allocation11 + $0x9c] sm:$0xf]
          %v8505 = vld [vmem:[#allocation11 + $0xa0] sm:$0xf]
          %v8506 = vld [vmem:[#allocation11 + $0xa4] sm:$0xf]
          %v8507 = vld [vmem:[#allocation11 + $0xa8] sm:$0xf]
          %v8508 = vld [vmem:[#allocation11 + $0xac] sm:$0xf]
          %v8509 = vld [vmem:[#allocation11 + $0xb0] sm:$0xf]
          %v8510 = vld [vmem:[#allocation11 + $0xb4] sm:$0xf]
          %v8511 = vld [vmem:[#allocation11 + $0xb8] sm:$0xf]
          %v8512 = vld [vmem:[#allocation11 + $0xbc] sm:$0xf]
          %v8513 = vld [vmem:[#allocation11 + $0xc0] sm:$0xf]
          %v8514 = vld [vmem:[#allocation11 + $0xc4] sm:$0xf]
          %v8515 = vld [vmem:[#allocation11 + $0xc8] sm:$0xf]
          %v8516 = vld [vmem:[#allocation11 + $0xcc] sm:$0xf]
          %v8517 = vld [vmem:[#allocation11 + $0xd0] sm:$0xf]
          %v8518 = vld [vmem:[#allocation11 + $0xd4] sm:$0xf]
          %v8519 = vld [vmem:[#allocation11 + $0xd8] sm:$0xf]
          %v8520 = vld [vmem:[#allocation11 + $0xdc] sm:$0xf]
          %v8521 = vld [vmem:[#allocation11 + $0xe0] sm:$0xf]
          %v8522 = vld [vmem:[#allocation11 + $0xe4] sm:$0xf]
          %v8523 = vld [vmem:[#allocation11 + $0xe8] sm:$0xf]
          %v8524 = vld [vmem:[#allocation11 + $0xec] sm:$0xf]
          %v8525 = vld [vmem:[#allocation11 + $0xf0] sm:$0xf]
          %v8526 = vld [vmem:[#allocation11 + $0xf4] sm:$0xf]
          %v8527 = vld [vmem:[#allocation11 + $0xf8] sm:$0xf]
          %v8528 = vld [vmem:[#allocation11 + $0xfc] sm:$0xf]
          %v8529 = vld [vmem:[#allocation13] sm:$0x1]
          %v8531 = vperm.slane %v8529, 0
          %v8597 = vunpack.c.l.b16 %v8465
          %v8598 = vunpack.c.l.b16 %v8466
          %v8599 = vunpack.c.l.b16 %v8467
          %v8600 = vunpack.c.l.b16 %v8468
          %v8601 = vunpack.c.l.b16 %v8469
          %v8602 = vunpack.c.l.b16 %v8470
          %v8603 = vunpack.c.l.b16 %v8471
          %v8604 = vunpack.c.l.b16 %v8472
          %v8605 = vunpack.c.l.b16 %v8473
          %v8606 = vunpack.c.l.b16 %v8474
          %v8607 = vunpack.c.l.b16 %v8475
          %v8608 = vunpack.c.l.b16 %v8476
          %v8609 = vunpack.c.l.b16 %v8477
          %v8610 = vunpack.c.l.b16 %v8478
          %v8611 = vunpack.c.l.b16 %v8479
          %v8612 = vunpack.c.l.b16 %v8480
          %v8613 = vunpack.c.l.b16 %v8481
          %v8614 = vunpack.c.l.b16 %v8482
          %v8615 = vunpack.c.l.b16 %v8483
          %v8616 = vunpack.c.l.b16 %v8484
          %v8617 = vunpack.c.l.b16 %v8485
          %v8618 = vunpack.c.l.b16 %v8486
          %v8619 = vunpack.c.l.b16 %v8487
          %v8620 = vunpack.c.l.b16 %v8488
          %v8621 = vunpack.c.l.b16 %v8489
          %v8622 = vunpack.c.l.b16 %v8490
          %v8623 = vunpack.c.l.b16 %v8491
          %v8624 = vunpack.c.l.b16 %v8492
          %v8625 = vunpack.c.l.b16 %v8493
          %v8626 = vunpack.c.l.b16 %v8494
          %v8627 = vunpack.c.l.b16 %v8495
          %v8628 = vunpack.c.l.b16 %v8496
          %v8629 = vunpack.c.l.b16 %v8497
          %v8630 = vunpack.c.l.b16 %v8498
          %v8631 = vunpack.c.l.b16 %v8499
          %v8632 = vunpack.c.l.b16 %v8500
          %v8633 = vunpack.c.l.b16 %v8501
          %v8634 = vunpack.c.l.b16 %v8502
          %v8635 = vunpack.c.l.b16 %v8503
          %v8636 = vunpack.c.l.b16 %v8504
          %v8637 = vunpack.c.l.b16 %v8505
          %v8638 = vunpack.c.l.b16 %v8506
          %v8639 = vunpack.c.l.b16 %v8507
          %v8640 = vunpack.c.l.b16 %v8508
          %v8641 = vunpack.c.l.b16 %v8509
          %v8642 = vunpack.c.l.b16 %v8510
          %v8643 = vunpack.c.l.b16 %v8511
          %v8644 = vunpack.c.l.b16 %v8512
          %v8645 = vunpack.c.l.b16 %v8513
          %v8646 = vunpack.c.l.b16 %v8514
          %v8647 = vunpack.c.l.b16 %v8515
          %v8648 = vunpack.c.l.b16 %v8516
          %v8649 = vunpack.c.l.b16 %v8517
          %v8650 = vunpack.c.l.b16 %v8518
          %v8651 = vunpack.c.l.b16 %v8519
          %v8652 = vunpack.c.l.b16 %v8520
          %v8653 = vunpack.c.l.b16 %v8521
          %v8654 = vunpack.c.l.b16 %v8522
          %v8655 = vunpack.c.l.b16 %v8523
          %v8656 = vunpack.c.l.b16 %v8524
          %v8657 = vunpack.c.l.b16 %v8525
          %v8658 = vunpack.c.l.b16 %v8526
          %v8659 = vunpack.c.l.b16 %v8527
          %v8660 = vunpack.c.l.b16 %v8528
          %v8661 = vpack.c.b16 %v8598, %v8597
          %v8662 = vpack.c.b16 %v8600, %v8599
          %v8663 = vpack.c.b16 %v8602, %v8601
          %v8664 = vpack.c.b16 %v8604, %v8603
          %v8665 = vpack.c.b16 %v8606, %v8605
          %v8666 = vpack.c.b16 %v8608, %v8607
          %v8667 = vpack.c.b16 %v8610, %v8609
          %v8668 = vpack.c.b16 %v8612, %v8611
          %v8669 = vpack.c.b16 %v8614, %v8613
          %v8670 = vpack.c.b16 %v8616, %v8615
          %v8671 = vpack.c.b16 %v8618, %v8617
          %v8672 = vpack.c.b16 %v8620, %v8619
          %v8673 = vpack.c.b16 %v8622, %v8621
          %v8674 = vpack.c.b16 %v8624, %v8623
          %v8675 = vpack.c.b16 %v8626, %v8625
          %v8676 = vpack.c.b16 %v8628, %v8627
          %v8677 = vpack.c.b16 %v8630, %v8629
          %v8678 = vpack.c.b16 %v8632, %v8631
          %v8679 = vpack.c.b16 %v8634, %v8633
          %v8680 = vpack.c.b16 %v8636, %v8635
          %v8681 = vpack.c.b16 %v8638, %v8637
          %v8682 = vpack.c.b16 %v8640, %v8639
          %v8683 = vpack.c.b16 %v8642, %v8641
          %v8684 = vpack.c.b16 %v8644, %v8643
          %v8685 = vpack.c.b16 %v8646, %v8645
          %v8686 = vpack.c.b16 %v8648, %v8647
          %v8687 = vpack.c.b16 %v8650, %v8649
          %v8688 = vpack.c.b16 %v8652, %v8651
          %v8689 = vpack.c.b16 %v8654, %v8653
          %v8690 = vpack.c.b16 %v8656, %v8655
          %v8691 = vpack.c.b16 %v8658, %v8657
          %v8692 = vpack.c.b16 %v8660, %v8659
          %8725 = vmatpush.bf16.msra.mxu0 %v8668
          %8726 = vmatpush.bf16.msra.mxu0 %v8667
          %8727 = vmatpush.bf16.msra.mxu0 %v8666
          %8728 = vmatpush.bf16.msra.mxu0 %v8665
          %8729 = vmatpush.bf16.msra.mxu0 %v8664
          %8730 = vmatpush.bf16.msra.mxu0 %v8663
          %8731 = vmatpush.bf16.msra.mxu0 %v8662
          %8732 = vmatpush.bf16.msra.mxu0 %v8661
          %8733 = vmatmul.bf16.gmra.mxu0 %v8461
          %v8734 = vpop.f32.mrf.mxu0
          %v8735 = vadd.f32 %v8531, %v8734
          %v8736 = vpop.f32.mrf.mxu0
          %v8737 = vadd.f32 %v8531, %v8736
          %8738 = vdwg.mxu0
          %8739 = vmatpush.bf16.msra.mxu0 %v8676
          %8740 = vmatpush.bf16.msra.mxu0 %v8675
          %8741 = vmatpush.bf16.msra.mxu0 %v8674
          %8742 = vmatpush.bf16.msra.mxu0 %v8673
          %8743 = vmatpush.bf16.msra.mxu0 %v8672
          %8744 = vmatpush.bf16.msra.mxu0 %v8671
          %8745 = vmatpush.bf16.msra.mxu0 %v8670
          %8746 = vmatpush.bf16.msra.mxu0 %v8669
          %8747 = vmatmul.bf16.gmra.mxu0 %v8462
          %v8748 = vpop.f32.mrf.mxu0
          %v8749 = vadd.f32 %v8735, %v8748
          %v8750 = vpop.f32.mrf.mxu0
          %v8751 = vadd.f32 %v8737, %v8750
          %8752 = vdwg.mxu0
          %8753 = vmatpush.bf16.msra.mxu0 %v8684
          %8754 = vmatpush.bf16.msra.mxu0 %v8683
          %8755 = vmatpush.bf16.msra.mxu0 %v8682
          %8756 = vmatpush.bf16.msra.mxu0 %v8681
          %8757 = vmatpush.bf16.msra.mxu0 %v8680
          %8758 = vmatpush.bf16.msra.mxu0 %v8679
          %8759 = vmatpush.bf16.msra.mxu0 %v8678
          %8760 = vmatpush.bf16.msra.mxu0 %v8677
          %8761 = vmatmul.bf16.gmra.mxu0 %v8463
          %v8762 = vpop.f32.mrf.mxu0
          %v8763 = vadd.f32 %v8749, %v8762
          %v8764 = vpop.f32.mrf.mxu0
          %v8765 = vadd.f32 %v8751, %v8764
          %8766 = vdwg.mxu0
          %8767 = vmatpush.bf16.msra.mxu0 %v8692
          %8768 = vmatpush.bf16.msra.mxu0 %v8691
          %8769 = vmatpush.bf16.msra.mxu0 %v8690
          %8770 = vmatpush.bf16.msra.mxu0 %v8689
          %8771 = vmatpush.bf16.msra.mxu0 %v8688
          %8772 = vmatpush.bf16.msra.mxu0 %v8687
          %8773 = vmatpush.bf16.msra.mxu0 %v8686
          %8774 = vmatpush.bf16.msra.mxu0 %v8685
          %8775 = vmatmul.bf16.gmra.mxu0 %v8464
          %v8776 = vpop.f32.mrf.mxu0
          %v8777 = vadd.f32 %v8763, %v8776
          %v8778 = vpop.f32.mrf.mxu0
          %v8779 = vadd.f32 %v8765, %v8778
          %8780 = vdwg.mxu0
          %8781 = vmax.xlane.f32.xlu0 %v8777
          %v8782 = vpop.xlane.xlu0 %8781
          %8783 = vmax.xlane.f32.xlu0 %v8779
          %v8784 = vpop.xlane.xlu0 %8783
          %v8785 = vsub.f32 %v8777, %v8782
          %v8786 = vsub.f32 %v8779, %v8784
          %v8787 = vmul.f32 %v8785, 1.442695
          %v8788 = vpow.pop %v8787
          %v8789 = vmul.f32 %v8786, 1.442695
          %v8790 = vpow.pop %v8789
          %8791 = vadd.xlane.f32.xlu0 %v8788
          %v8792 = vpop.xlane.xlu0 %8791
          %8793 = vadd.xlane.f32.xlu0 %v8790
          %v8794 = vpop.xlane.xlu0 %8793
          %v8795 = vlog2.pop %v8792
          %v8796 = vmul.f32 %v8795, 0.6931472
          %v8797 = vlog2.pop %v8794
          %v8798 = vmul.f32 %v8797, 0.6931472
          %v8799 = vsub.f32 %v8785, %v8796
          %v8800 = vsub.f32 %v8786, %v8798
          %8801 = vst [vmem:[%s481] sm:$0xff] %v8799
          %8802 = vst [vmem:[%s481 + $0x8] sm:$0xff] %v8800
        $region88: #{bert_arch_forward.1} parent=51 // pred_fallthru
          _
        %s8803 = smul.u32 2, %s29
        %p8804 = scmp.lt.s32.totalorder %s8803, 3
        %s8805 = scalar_select %p8804, %s8803, 3
        %s8806 = smul.addr %s8805, 8
        %s8807 = scalar_lea.vmem %s8, %s8806
        // Predicated region
        $region89: #{bert_arch_forward.1} parent=51 // pred_check
          %p8808 = pneg %p237
        $region90: #{bert_arch_forward.1} parent=51 // pred_check_branch
          %8810 = sbr.rel (%p8808) target = $region92
        $region91: #{bert_arch_forward.1} parent=51 // pred_region
          %s8811 = smul.u32 2, %s29
        $region92: #{bert_arch_forward.1} parent=51 // pred_fallthru
          _
      $region52: #{bert_arch_forward.1} parent=5 // pred_fallthru
        _
      %p8812 = scmp.le.s32.totalorder 2, %s20
      // Predicated region
      $region93: #{bert_arch_forward.1} parent=5 // pred_check
        %p8813 = pneg %p8812
      $region94: #{bert_arch_forward.1} parent=5 // pred_check_branch
        %8815 = sbr.rel (%p8813) target = $region96
      $region95: #{bert_arch_forward.1} parent=5 // pred_region
        %s8816 = ssub.s32 %s20, 2
        // Predicated region
        $region97: #{bert_arch_forward.1} parent=95 // pred_check
          %p8817 = pneg %p243
        $region98: #{bert_arch_forward.1} parent=95 // pred_check_branch
          %8819 = sbr.rel (%p8817) target = $region100
        $region99: #{bert_arch_forward.1} parent=95 // pred_region
          %s8820 = smul.u32 2, %s31
          %p8821 = scmp.lt.s32.totalorder %s8820, 3
          %s8822 = scalar_select %p8821, %s8820, 3
          %s8823 = smul.addr %s8822, 8
          %s8824 = scalar_lea.vmem %s8, %s8823
        $region100: #{bert_arch_forward.1} parent=95 // pred_fallthru
          _
      $region96: #{bert_arch_forward.1} parent=5 // pred_fallthru
        _
    $region6: #{bert_arch_forward.1} parent=1 // loop_footer
      %s24 = sadd.s32 1, %s20
    $region7: #{bert_arch_forward.1} parent=1 // loop_footer_branch
      %19 = sbr.rel target = $region3
    $region8: #{bert_arch_forward.1} parent=1 // loop_exit
      _
    %8825 = vsyncpa [#allocation4], 1
    %s8826 = scalar_lea.sflag [#allocation4], 1
    %8827 = vsyncpa %s8826, 1
    %8828 = vsyncpa [#allocation6], 1
    %8829 = vsyncpa [#allocation9], 1
    %8830 = vsyncpa [#allocation12], 1

</llo_original>
